<compile_context>
chip_gen: v6e
topology: v6e:2x2x1
jax: 0.10.0
libtpu: 0.0.40
codegen_flags: <defaults>
</compile_context>

<pallas_src>
import jax
import jax.numpy as jnp
from jax.experimental import pallas as pl
from jax.experimental.pallas import tpu as pltpu


def _ffn_kernel(x_ref, w1_ref, b1_ref, w2_ref, b2_ref, o_ref):
    # x_ref: (tm, D) f32, w1_ref: (D, F) bf16, b1_ref: (1, F) f32
    # w2_ref: (F, D) bf16, b2_ref: (1, D) f32, o_ref: (tm, D) f32
    x = x_ref[...].astype(jnp.bfloat16)                 # VPU cast, hidden under MXU
    h = jnp.dot(x, w1_ref[...], preferred_element_type=jnp.float32)
    h = jnp.maximum(h + b1_ref[...], 0.0)               # bias + ReLU in f32
    y = jnp.dot(h.astype(jnp.bfloat16), w2_ref[...],
                preferred_element_type=jnp.float32) + b2_ref[...]
    o_ref[...] = y.astype(o_ref.dtype)


def _round_up(a, b):
    return (a + b - 1) // b * b


def _const_spec(shape):
    """BlockSpec for an input whose block index never changes (resident weights).

    Single-buffered: a second pipeline buffer would be pure wasted VMEM.
    Falls back to the default (double-buffered) spec on older jax that lacks
    the pipeline_mode kwarg.
    """
    idx_map = lambda i: (0,) * len(shape)
    try:
        return pl.BlockSpec(shape, idx_map, pipeline_mode=pl.Buffered(1))
    except TypeError:
        return pl.BlockSpec(shape, idx_map)


def positionwise_ffn(x, w1_bf16, b1_f32, w2_bf16, b2_f32, *, tm=None):
    """x: (B, S, d_model) float32. Weights pre-cast bf16, biases f32 (1, dim).

    Returns (B, S, d_model) in x.dtype (f32).
    """
    B, S, D = x.shape
    F = w1_bf16.shape[1]
    M = B * S

    # Row tile: 512 for realistic M (MXU-aligned, per-step overhead amortized);
    # for small M use a single full-extent block (legal even when not a
    # multiple of 8) so no padding copy is ever made for tiny inputs.
    if tm is None:
        tm = 512 if M >= 512 else M
    M_pad = _round_up(M, tm)

    x2 = x.reshape(M, D)
    if M_pad != M:
        # Only hit when M > tm and M % tm != 0 (see TODO on masked tail).
        x2 = jnp.pad(x2, ((0, M_pad - M), (0, 0)))

    # VMEM budget (bytes): double-buffered f32 x/out tiles, single-buffered
    # bf16 weights + f32 biases, plus the (tm, F) f32 hidden intermediate.
    # ~1.5x headroom + 8 MiB, capped at 48 MiB (safe under v7x's 64 MiB).
    tile_bytes = 2 * (tm * D * 4 + tm * D * 4)
    weight_bytes = (D * F + F * D) * 2 + (F + D) * 4
    hidden_bytes = tm * F * 4
    vmem_limit = min(int(1.5 * (tile_bytes + weight_bytes + hidden_bytes)) + (8 << 20),
                     48 << 20)

    flops = 4 * M_pad * D * F                       # two matmuls, 2*M*D*F each
    bytes_accessed = (M_pad * D * (4 + 4)           # x in (f32) + out (f32)
                      + (D * F + F * D) * 2         # bf16 weights
                      + (F + D) * 4)                # f32 biases

    out = pl.pallas_call(
        _ffn_kernel,
        out_shape=jax.ShapeDtypeStruct((M_pad, D), x.dtype),
        grid_spec=pltpu.PrefetchScalarGridSpec(
            num_scalar_prefetch=0,
            grid=(M_pad // tm,),
            in_specs=[
                pl.BlockSpec((tm, D), lambda i: (i, 0)),   # x tile streams over rows
                _const_spec((D, F)),                       # W1 resident, 1 buffer
                _const_spec((1, F)),                       # b1 resident
                _const_spec((F, D)),                       # W2 resident
                _const_spec((1, D)),                       # b2 resident
            ],
            out_specs=pl.BlockSpec((tm, D), lambda i: (i, 0)),  # lane-dense (D=512)
        ),
        compiler_params=pltpu.CompilerParams(
            dimension_semantics=("parallel",),   # row axis shards across TCs
            vmem_limit_bytes=vmem_limit,
        ),
        cost_estimate=pl.CostEstimate(
            flops=flops, transcendentals=0, bytes_accessed=bytes_accessed),
    )(x2, w1_bf16, b1_f32, w2_bf16, b2_f32)

    if M_pad != M:
        out = out[:M]
    return out.reshape(B, S, D)


def init_ffn_params(key, d_model, d_ff, dtype=jnp.float32):
    """Deterministic init matching torch.nn.Linear defaults (uniform +/- 1/sqrt(fan_in))."""
    k1, k2, k3, k4 = jax.random.split(key, 4)
    bound1 = 1.0 / (d_model ** 0.5)
    bound2 = 1.0 / (d_ff ** 0.5)
    # Stored already transposed for x @ W: (in, out)
    w1 = jax.random.uniform(k1, (d_model, d_ff), dtype, -bound1, bound1)
    b1 = jax.random.uniform(k2, (1, d_ff), dtype, -bound1, bound1)
    w2 = jax.random.uniform(k3, (d_ff, d_model), dtype, -bound2, bound2)
    b2 = jax.random.uniform(k4, (1, d_model), dtype, -bound2, bound2)
    return w1, b1, w2, b2


def prepare_ffn_params(w1, b1, w2, b2):
    """One-time cast: bf16 weights (MXU-native, half the HBM/VMEM), f32 biases."""
    return (w1.astype(jnp.bfloat16), b1.astype(jnp.float32).reshape(1, -1),
            w2.astype(jnp.bfloat16), b2.astype(jnp.float32).reshape(1, -1))


if __name__ == "__main__":
    d_model = 512
    d_ff = 2048
    batch_size = 2
    seq_len = 10

    key = jax.random.PRNGKey(0)
    kx, kp = jax.random.split(key)

    # PositionwiseFeedForward consumes (batch, seq, d_model) embeddings; build
    # them directly (the token-id embedding lookup is outside this module).
    x = jax.random.normal(kx, (batch_size, seq_len, d_model), dtype=jnp.float32)
    w1, b1, w2, b2 = init_ffn_params(kp, d_model, d_ff)
    w1b, b1f, w2b, b2f = prepare_ffn_params(w1, b1, w2, b2)   # done once, not per call

    y = jax.block_until_ready(positionwise_ffn(x, w1b, b1f, w2b, b2f))

    # Pure-JAX reference using the same bf16-matmul / f32-accumulate recipe.
    x2 = x.reshape(-1, d_model)
    h = jnp.dot(x2.astype(jnp.bfloat16), w1b,
                preferred_element_type=jnp.float32) + b1f
    h = jnp.maximum(h, 0.0)
    ref = jnp.dot(h.astype(jnp.bfloat16), w2b,
                  preferred_element_type=jnp.float32) + b2f
    ref = ref.reshape(batch_size, seq_len, d_model)

    assert y.shape == (batch_size, seq_len, d_model)
    assert y.dtype == x.dtype
    err = float(jnp.max(jnp.abs(y - ref)))
    assert jnp.allclose(y, ref, atol=1e-2, rtol=1e-2), f"max abs err {err}"
    print("KERNEL_OK")
</pallas_src>

<mosaic_0001>
module attributes {stable_mosaic.version = 11 : i64} {
  func.func @_ffn_kernel(%arg0: i32, %arg1: memref<20x512xf32, #tpu.memory_space<vmem>>, %arg2: memref<512x2048xbf16, #tpu.memory_space<vmem>>, %arg3: memref<1x2048xf32, #tpu.memory_space<vmem>>, %arg4: memref<2048x512xbf16, #tpu.memory_space<vmem>>, %arg5: memref<1x512xf32, #tpu.memory_space<vmem>>, %arg6: memref<20x512xf32, #tpu.memory_space<vmem>>) attributes {dimension_semantics = [#tpu.dimension_semantics<parallel>], iteration_bounds = array<i64: 1>, scalar_prefetch = 0 : i64, scratch_operands = 0 : i64, tpu.core_type = #tpu.core_type<tc>, window_params = [{transform_indices = @transform_0, window_bounds = array<i64: 20, 512>}, {pipeline_mode = #tpu.pipeline_mode<synchronous>, transform_indices = @transform_1, window_bounds = array<i64: 512, 2048>}, {pipeline_mode = #tpu.pipeline_mode<synchronous>, transform_indices = @transform_2, window_bounds = array<i64: 1, 2048>}, {pipeline_mode = #tpu.pipeline_mode<synchronous>, transform_indices = @transform_3, window_bounds = array<i64: 2048, 512>}, {pipeline_mode = #tpu.pipeline_mode<synchronous>, transform_indices = @transform_4, window_bounds = array<i64: 1, 512>}, {transform_indices = @transform_5, window_bounds = array<i64: 20, 512>}]} {
    %c0 = arith.constant 0 : index
    %c0_0 = arith.constant 0 : index
    %0 = vector.load %arg1[%c0, %c0_0] : memref<20x512xf32, #tpu.memory_space<vmem>>, vector<20x512xf32>
    %1 = arith.truncf %0 : vector<20x512xf32> to vector<20x512xbf16>
    %c0_1 = arith.constant 0 : index
    %c0_2 = arith.constant 0 : index
    %2 = vector.load %arg2[%c0_1, %c0_2] : memref<512x2048xbf16, #tpu.memory_space<vmem>>, vector<512x2048xbf16>
    %cst = arith.constant dense<0.000000e+00> : vector<20x2048xf32>
    %3 = tpu.matmul %1, %2, %cst {dimension_numbers = #tpu.dot_dimension_numbers<[1], [0], [0], [1], [0, 0, 1, 1], [], []>} : vector<20x512xbf16>, vector<512x2048xbf16>, vector<20x2048xf32> -> vector<20x2048xf32>
    %c0_3 = arith.constant 0 : index
    %c0_4 = arith.constant 0 : index
    %4 = vector.load %arg3[%c0_3, %c0_4] : memref<1x2048xf32, #tpu.memory_space<vmem>>, vector<1x2048xf32>
    %5 = vector.broadcast %4 : vector<1x2048xf32> to vector<20x2048xf32>
    %6 = arith.addf %3, %5 : vector<20x2048xf32>
    %cst_5 = arith.constant 0.000000e+00 : f32
    %7 = vector.broadcast %cst_5 : f32 to vector<20x2048xf32>
    %8 = arith.maximumf %6, %7 : vector<20x2048xf32>
    %9 = arith.truncf %8 : vector<20x2048xf32> to vector<20x2048xbf16>
    %c0_6 = arith.constant 0 : index
    %c0_7 = arith.constant 0 : index
    %10 = vector.load %arg4[%c0_6, %c0_7] : memref<2048x512xbf16, #tpu.memory_space<vmem>>, vector<2048x512xbf16>
    %cst_8 = arith.constant dense<0.000000e+00> : vector<20x512xf32>
    %11 = tpu.matmul %9, %10, %cst_8 {dimension_numbers = #tpu.dot_dimension_numbers<[1], [0], [0], [1], [0, 0, 1, 1], [], []>} : vector<20x2048xbf16>, vector<2048x512xbf16>, vector<20x512xf32> -> vector<20x512xf32>
    %c0_9 = arith.constant 0 : index
    %c0_10 = arith.constant 0 : index
    %12 = vector.load %arg5[%c0_9, %c0_10] : memref<1x512xf32, #tpu.memory_space<vmem>>, vector<1x512xf32>
    %13 = vector.broadcast %12 : vector<1x512xf32> to vector<20x512xf32>
    %14 = arith.addf %11, %13 : vector<20x512xf32>
    %c0_11 = arith.constant 0 : index
    %c0_12 = arith.constant 0 : index
    %15 = vector.load %arg6[%c0_11, %c0_12] : memref<20x512xf32, #tpu.memory_space<vmem>>, vector<20x512xf32>
    tpu.vector_store %arg6[%c0_11, %c0_12], %14 {strides = array<i32>} : memref<20x512xf32, #tpu.memory_space<vmem>>, vector<20x512xf32>,
    return
  }
  func.func @transform_0(%arg0: i32) -> (i32, i32) {
    %c0_i32 = arith.constant 0 : i32
    %c0_i32_0 = arith.constant 0 : i32
    return %arg0, %c0_i32 : i32, i32
  }
  func.func @transform_1(%arg0: i32) -> (i32, i32) {
    %c0_i32 = arith.constant 0 : i32
    %c0_i32_0 = arith.constant 0 : i32
    %c0_i32_1 = arith.constant 0 : i32
    return %c0_i32, %c0_i32_0 : i32, i32
  }
  func.func @transform_2(%arg0: i32) -> (i32, i32) {
    %c0_i32 = arith.constant 0 : i32
    %c0_i32_0 = arith.constant 0 : i32
    %c0_i32_1 = arith.constant 0 : i32
    return %c0_i32, %c0_i32_0 : i32, i32
  }
  func.func @transform_3(%arg0: i32) -> (i32, i32) {
    %c0_i32 = arith.constant 0 : i32
    %c0_i32_0 = arith.constant 0 : i32
    %c0_i32_1 = arith.constant 0 : i32
    return %c0_i32, %c0_i32_0 : i32, i32
  }
  func.func @transform_4(%arg0: i32) -> (i32, i32) {
    %c0_i32 = arith.constant 0 : i32
    %c0_i32_0 = arith.constant 0 : i32
    %c0_i32_1 = arith.constant 0 : i32
    return %c0_i32, %c0_i32_0 : i32, i32
  }
  func.func @transform_5(%arg0: i32) -> (i32, i32) {
    %c0_i32 = arith.constant 0 : i32
    %c0_i32_0 = arith.constant 0 : i32
    return %arg0, %c0_i32 : i32, i32
  }
}

</mosaic_0001>

<llo_original>
// kernel: tpu_custom_call.1
$region0: #{tpu_custom_call.1}
  #allocation0 [shape = 'u32[]', space=smem, size = 0x4, offset = 0x4, fixed_abs, tag = 'smem constant byte address 0x4 - core index']
  #allocation1 [shape = 'u32[144,128]{1,0:T(1,128)}', space=vmem, size = 0x12000, scoped, tag = 'internal scratch']
  %s0 = inlined_call_operand.hbm [shape: f32[20,512], index: 0, kind: input, shape index: {}]
  %s1 = inlined_call_operand.hbm [shape: bf16[512,2048], index: 1, kind: input, shape index: {}]
  %s2 = inlined_call_operand.hbm [shape: f32[1,2048], index: 2, kind: input, shape index: {}]
  %s3 = inlined_call_operand.hbm [shape: bf16[2048,512], index: 3, kind: input, shape index: {}]
  %s4 = inlined_call_operand.hbm [shape: f32[1,512], index: 4, kind: input, shape index: {}]
  %s5 = inlined_call_operand.hbm [shape: f32[20,512], index: 5, kind: output, shape index: {}]
  %s6 = sld [smem:[#allocation0]]
  $region50: #{tpu_custom_call.1} parent=0
    _
  %s8 = ssub.s32 1, %s6
  %s9 = scalar_select 0, %s8, %s6
  $region1: #{tpu_custom_call.1} parent=0
    #allocation2 [shape = 'u8[49152]{0}', space=vmem, size = 0xc000, scoped, tag = 'input window, operand 0, single buffered']
    #allocation3 [shape = 's32[1]{0}', space=sflag, size = 0x4, scoped, tag = 'scoped memory for tpu_custom_call.1']
    #allocation4 [shape = 's32[1]{0}', space=sflag, size = 0x4, scoped, tag = 'scoped memory for tpu_custom_call.1']
    #allocation5 [shape = 'u8[2097152]{0}', space=vmem, size = 0x200000, scoped, tag = 'input window, operand 1, single buffered']
    #allocation6 [shape = 's32[1]{0}', space=sflag, size = 0x4, scoped, tag = 'scoped memory for tpu_custom_call.1']
    #allocation7 [shape = 'u8[8192]{0}', space=vmem, size = 0x2000, scoped, tag = 'input window, operand 2, single buffered']
    #allocation8 [shape = 'u8[2097152]{0}', space=vmem, size = 0x200000, scoped, tag = 'input window, operand 3, single buffered']
    #allocation9 [shape = 's32[1]{0}', space=sflag, size = 0x4, scoped, tag = 'scoped memory for tpu_custom_call.1']
    #allocation10 [shape = 'u8[2048]{0}', space=vmem, size = 0x800, scoped, tag = 'input window, operand 4, single buffered']
    #allocation11 [shape = 'u8[49152]{0}', space=vmem, size = 0xc000, scoped, tag = 'output window, operand 0, single buffered']
    %10 = vsyncpa [#allocation3], 0
    %11 = vsyncpa [#allocation6], 0
    %12 = vsyncpa [#allocation9], 0
    %13 = vsyncpa [#allocation4], 0
    // Predicated region
    $region2: #{tpu_custom_call.1} parent=1 // pred_check
      _
    $region3: #{tpu_custom_call.1} parent=1 // pred_check_branch
      %15 = sbr.rel (0) target = $region5
    $region4: #{tpu_custom_call.1} parent=1 // pred_region
      %s17 = ssub.s32 1536, 1536
      %18 = vsyncadd [#allocation3], %s17
      %s19 = sshll.u32 [#allocation2], 4
      %s20 = int_to_ptr.vmem [resolvable:$true] %s19
      %25 = dma.hbm_to_vmem [thread:$0]  %s0, 1536, %s20, [#allocation3], 512, 512, 32
    $region5: #{tpu_custom_call.1} parent=1 // pred_fallthru
      _
    // Predicated region
    $region6: #{tpu_custom_call.1} parent=1 // pred_check
      _
    $region7: #{tpu_custom_call.1} parent=1 // pred_check_branch
      %27 = sbr.rel (0) target = $region9
    $region8: #{tpu_custom_call.1} parent=1 // pred_region
      %s29 = ssub.s32 65536, 65536
      %30 = vsyncadd [#allocation6], %s29
      %s31 = sshll.u32 [#allocation5], 4
      %s32 = int_to_ptr.vmem [resolvable:$true] %s31
      %37 = dma.hbm_to_vmem [thread:$0]  %s1, 65536, %s32, [#allocation6], 1024, 1024, 64
    $region9: #{tpu_custom_call.1} parent=1 // pred_fallthru
      _
    // Predicated region
    $region10: #{tpu_custom_call.1} parent=1 // pred_check
      _
    $region11: #{tpu_custom_call.1} parent=1 // pred_check_branch
      %39 = sbr.rel (0) target = $region13
    $region12: #{tpu_custom_call.1} parent=1 // pred_region
      %s41 = ssub.s32 256, 256
      %42 = vsyncadd [#allocation6], %s41
      %s44 = sshll.u32 [#allocation7], 4
      %s45 = int_to_ptr.vmem [resolvable:$true] %s44
      %47 = dma.hbm_to_vmem [thread:$0]  %s2, 256, %s45, [#allocation6]
    $region13: #{tpu_custom_call.1} parent=1 // pred_fallthru
      _
    // Predicated region
    $region14: #{tpu_custom_call.1} parent=1 // pred_check
      _
    $region15: #{tpu_custom_call.1} parent=1 // pred_check_branch
      %49 = sbr.rel (0) target = $region17
    $region16: #{tpu_custom_call.1} parent=1 // pred_region
      %s51 = ssub.s32 65536, 65536
      %52 = vsyncadd [#allocation9], %s51
      %s53 = sshll.u32 [#allocation8], 4
      %s54 = int_to_ptr.vmem [resolvable:$true] %s53
      %59 = dma.hbm_to_vmem [thread:$0]  %s3, 65536, %s54, [#allocation9], 256, 256, 16
    $region17: #{tpu_custom_call.1} parent=1 // pred_fallthru
      _
    // Predicated region
    $region18: #{tpu_custom_call.1} parent=1 // pred_check
      _
    $region19: #{tpu_custom_call.1} parent=1 // pred_check_branch
      %61 = sbr.rel (0) target = $region21
    $region20: #{tpu_custom_call.1} parent=1 // pred_region
      %s63 = ssub.s32 64, 64
      %64 = vsyncadd [#allocation9], %s63
      %s66 = sshll.u32 [#allocation10], 4
      %s67 = int_to_ptr.vmem [resolvable:$true] %s66
      %69 = dma.hbm_to_vmem [thread:$0]  %s4, 64, %s67, [#allocation9]
    $region21: #{tpu_custom_call.1} parent=1 // pred_fallthru
      _
    // Predicated region
    $region22: #{tpu_custom_call.1} parent=1 // pred_check
      _
    $region23: #{tpu_custom_call.1} parent=1 // pred_check_branch
      %71 = sbr.rel (0) target = $region25
    $region24: #{tpu_custom_call.1} parent=1 // pred_region
      %72 = dma.done [#allocation3], 1536
    $region25: #{tpu_custom_call.1} parent=1 // pred_fallthru
      _
    // Predicated region
    $region26: #{tpu_custom_call.1} parent=1 // pred_check
      _
    $region27: #{tpu_custom_call.1} parent=1 // pred_check_branch
      %74 = sbr.rel (0) target = $region29
    $region28: #{tpu_custom_call.1} parent=1 // pred_region
      %75 = dma.done [#allocation6], 65536
    $region29: #{tpu_custom_call.1} parent=1 // pred_fallthru
      _
    // Predicated region
    $region30: #{tpu_custom_call.1} parent=1 // pred_check
      _
    $region31: #{tpu_custom_call.1} parent=1 // pred_check_branch
      %77 = sbr.rel (0) target = $region33
    $region32: #{tpu_custom_call.1} parent=1 // pred_region
      %78 = dma.done [#allocation6], 256
    $region33: #{tpu_custom_call.1} parent=1 // pred_fallthru
      _
    // Predicated region
    $region34: #{tpu_custom_call.1} parent=1 // pred_check
      _
    $region35: #{tpu_custom_call.1} parent=1 // pred_check_branch
      %80 = sbr.rel (0) target = $region37
    $region36: #{tpu_custom_call.1} parent=1 // pred_region
      %81 = dma.done [#allocation9], 65536
    $region37: #{tpu_custom_call.1} parent=1 // pred_fallthru
      _
    // Predicated region
    $region38: #{tpu_custom_call.1} parent=1 // pred_check
      _
    $region39: #{tpu_custom_call.1} parent=1 // pred_check_branch
      %83 = sbr.rel (0) target = $region41
    $region40: #{tpu_custom_call.1} parent=1 // pred_region
      %84 = dma.done [#allocation9], 64
    $region41: #{tpu_custom_call.1} parent=1 // pred_fallthru
      _
    %v85 = vld [vmem:[#allocation2] sm:$0xff]
    %v86 = vld [vmem:[#allocation2 + $0x8] sm:$0xff]
    %v87 = vld [vmem:[#allocation2 + $0x10] sm:$0xff]
    %v88 = vld [vmem:[#allocation2 + $0x18] sm:$0xff]
    %v89 = vld [vmem:[#allocation2 + $0x20] sm:$0xff]
    %v90 = vld [vmem:[#allocation2 + $0x28] sm:$0xff]
    %v91 = vld [vmem:[#allocation2 + $0x30] sm:$0xff]
    %v92 = vld [vmem:[#allocation2 + $0x38] sm:$0xff]
    %v93 = vld [vmem:[#allocation2 + $0x40] sm:$0xf]
    %v94 = vld [vmem:[#allocation2 + $0x48] sm:$0xf]
    %v95 = vld [vmem:[#allocation2 + $0x50] sm:$0xf]
    %v96 = vld [vmem:[#allocation2 + $0x58] sm:$0xf]
    %v97 = vpack.c.bf16 %v89, %v85
    %v98 = vpack.c.bf16 %v90, %v86
    %v99 = vpack.c.bf16 %v91, %v87
    %v100 = vpack.c.bf16 %v92, %v88
    %v101 = vpack.c.bf16 %v93, %v93
    %v102 = vpack.c.bf16 %v94, %v94
    %v103 = vpack.c.bf16 %v95, %v95
    %v104 = vpack.c.bf16 %v96, %v96
    %v105 = vld [vmem:[#allocation5] sm:$0xff]
    %v106 = vld [vmem:[#allocation5 + $0x8] sm:$0xff]
    %v107 = vld [vmem:[#allocation5 + $0x10] sm:$0xff]
    %v108 = vld [vmem:[#allocation5 + $0x18] sm:$0xff]
    %v109 = vld [vmem:[#allocation5 + $0x20] sm:$0xff]
    %v110 = vld [vmem:[#allocation5 + $0x28] sm:$0xff]
    %v111 = vld [vmem:[#allocation5 + $0x30] sm:$0xff]
    %v112 = vld [vmem:[#allocation5 + $0x38] sm:$0xff]
    %v113 = vld [vmem:[#allocation5 + $0x40] sm:$0xff]
    %v114 = vld [vmem:[#allocation5 + $0x48] sm:$0xff]
    %v115 = vld [vmem:[#allocation5 + $0x50] sm:$0xff]
    %v116 = vld [vmem:[#allocation5 + $0x58] sm:$0xff]
    %v117 = vld [vmem:[#allocation5 + $0x60] sm:$0xff]
    %v118 = vld [vmem:[#allocation5 + $0x68] sm:$0xff]
    %v119 = vld [vmem:[#allocation5 + $0x70] sm:$0xff]
    %v120 = vld [vmem:[#allocation5 + $0x78] sm:$0xff]
    %v121 = vld [vmem:[#allocation5 + $0x80] sm:$0xff]
    %v122 = vld [vmem:[#allocation5 + $0x88] sm:$0xff]
    %v123 = vld [vmem:[#allocation5 + $0x90] sm:$0xff]
    %v124 = vld [vmem:[#allocation5 + $0x98] sm:$0xff]
    %v125 = vld [vmem:[#allocation5 + $0xa0] sm:$0xff]
    %v126 = vld [vmem:[#allocation5 + $0xa8] sm:$0xff]
    %v127 = vld [vmem:[#allocation5 + $0xb0] sm:$0xff]
    %v128 = vld [vmem:[#allocation5 + $0xb8] sm:$0xff]
    %v129 = vld [vmem:[#allocation5 + $0xc0] sm:$0xff]
    %v130 = vld [vmem:[#allocation5 + $0xc8] sm:$0xff]
    %v131 = vld [vmem:[#allocation5 + $0xd0] sm:$0xff]
    %v132 = vld [vmem:[#allocation5 + $0xd8] sm:$0xff]
    %v133 = vld [vmem:[#allocation5 + $0xe0] sm:$0xff]
    %v134 = vld [vmem:[#allocation5 + $0xe8] sm:$0xff]
    %v135 = vld [vmem:[#allocation5 + $0xf0] sm:$0xff]
    %v136 = vld [vmem:[#allocation5 + $0xf8] sm:$0xff]
    %v137 = vld [vmem:[#allocation5 + $0x100] sm:$0xff]
    %v138 = vld [vmem:[#allocation5 + $0x108] sm:$0xff]
    %v139 = vld [vmem:[#allocation5 + $0x110] sm:$0xff]
    %v140 = vld [vmem:[#allocation5 + $0x118] sm:$0xff]
    %v141 = vld [vmem:[#allocation5 + $0x120] sm:$0xff]
    %v142 = vld [vmem:[#allocation5 + $0x128] sm:$0xff]
    %v143 = vld [vmem:[#allocation5 + $0x130] sm:$0xff]
    %v144 = vld [vmem:[#allocation5 + $0x138] sm:$0xff]
    %v145 = vld [vmem:[#allocation5 + $0x140] sm:$0xff]
    %v146 = vld [vmem:[#allocation5 + $0x148] sm:$0xff]
    %v147 = vld [vmem:[#allocation5 + $0x150] sm:$0xff]
    %v148 = vld [vmem:[#allocation5 + $0x158] sm:$0xff]
    %v149 = vld [vmem:[#allocation5 + $0x160] sm:$0xff]
    %v150 = vld [vmem:[#allocation5 + $0x168] sm:$0xff]
    %v151 = vld [vmem:[#allocation5 + $0x170] sm:$0xff]
    %v152 = vld [vmem:[#allocation5 + $0x178] sm:$0xff]
    %v153 = vld [vmem:[#allocation5 + $0x180] sm:$0xff]
    %v154 = vld [vmem:[#allocation5 + $0x188] sm:$0xff]
    %v155 = vld [vmem:[#allocation5 + $0x190] sm:$0xff]
    %v156 = vld [vmem:[#allocation5 + $0x198] sm:$0xff]
    %v157 = vld [vmem:[#allocation5 + $0x1a0] sm:$0xff]
    %v158 = vld [vmem:[#allocation5 + $0x1a8] sm:$0xff]
    %v159 = vld [vmem:[#allocation5 + $0x1b0] sm:$0xff]
    %v160 = vld [vmem:[#allocation5 + $0x1b8] sm:$0xff]
    %v161 = vld [vmem:[#allocation5 + $0x1c0] sm:$0xff]
    %v162 = vld [vmem:[#allocation5 + $0x1c8] sm:$0xff]
    %v163 = vld [vmem:[#allocation5 + $0x1d0] sm:$0xff]
    %v164 = vld [vmem:[#allocation5 + $0x1d8] sm:$0xff]
    %v165 = vld [vmem:[#allocation5 + $0x1e0] sm:$0xff]
    %v166 = vld [vmem:[#allocation5 + $0x1e8] sm:$0xff]
    %v167 = vld [vmem:[#allocation5 + $0x1f0] sm:$0xff]
    %v168 = vld [vmem:[#allocation5 + $0x1f8] sm:$0xff]
    %v169 = vld [vmem:[#allocation5 + $0x200] sm:$0xff]
    %v170 = vld [vmem:[#allocation5 + $0x208] sm:$0xff]
    %v171 = vld [vmem:[#allocation5 + $0x210] sm:$0xff]
    %v172 = vld [vmem:[#allocation5 + $0x218] sm:$0xff]
    %v173 = vld [vmem:[#allocation5 + $0x220] sm:$0xff]
    %v174 = vld [vmem:[#allocation5 + $0x228] sm:$0xff]
    %v175 = vld [vmem:[#allocation5 + $0x230] sm:$0xff]
    %v176 = vld [vmem:[#allocation5 + $0x238] sm:$0xff]
    %v177 = vld [vmem:[#allocation5 + $0x240] sm:$0xff]
    %v178 = vld [vmem:[#allocation5 + $0x248] sm:$0xff]
    %v179 = vld [vmem:[#allocation5 + $0x250] sm:$0xff]
    %v180 = vld [vmem:[#allocation5 + $0x258] sm:$0xff]
    %v181 = vld [vmem:[#allocation5 + $0x260] sm:$0xff]
    %v182 = vld [vmem:[#allocation5 + $0x268] sm:$0xff]
    %v183 = vld [vmem:[#allocation5 + $0x270] sm:$0xff]
    %v184 = vld [vmem:[#allocation5 + $0x278] sm:$0xff]
    %v185 = vld [vmem:[#allocation5 + $0x280] sm:$0xff]
    %v186 = vld [vmem:[#allocation5 + $0x288] sm:$0xff]
    %v187 = vld [vmem:[#allocation5 + $0x290] sm:$0xff]
    %v188 = vld [vmem:[#allocation5 + $0x298] sm:$0xff]
    %v189 = vld [vmem:[#allocation5 + $0x2a0] sm:$0xff]
    %v190 = vld [vmem:[#allocation5 + $0x2a8] sm:$0xff]
    %v191 = vld [vmem:[#allocation5 + $0x2b0] sm:$0xff]
    %v192 = vld [vmem:[#allocation5 + $0x2b8] sm:$0xff]
    %v193 = vld [vmem:[#allocation5 + $0x2c0] sm:$0xff]
    %v194 = vld [vmem:[#allocation5 + $0x2c8] sm:$0xff]
    %v195 = vld [vmem:[#allocation5 + $0x2d0] sm:$0xff]
    %v196 = vld [vmem:[#allocation5 + $0x2d8] sm:$0xff]
    %v197 = vld [vmem:[#allocation5 + $0x2e0] sm:$0xff]
    %v198 = vld [vmem:[#allocation5 + $0x2e8] sm:$0xff]
    %v199 = vld [vmem:[#allocation5 + $0x2f0] sm:$0xff]
    %v200 = vld [vmem:[#allocation5 + $0x2f8] sm:$0xff]
    %v201 = vld [vmem:[#allocation5 + $0x300] sm:$0xff]
    %v202 = vld [vmem:[#allocation5 + $0x308] sm:$0xff]
    %v203 = vld [vmem:[#allocation5 + $0x310] sm:$0xff]
    %v204 = vld [vmem:[#allocation5 + $0x318] sm:$0xff]
    %v205 = vld [vmem:[#allocation5 + $0x320] sm:$0xff]
    %v206 = vld [vmem:[#allocation5 + $0x328] sm:$0xff]
    %v207 = vld [vmem:[#allocation5 + $0x330] sm:$0xff]
    %v208 = vld [vmem:[#allocation5 + $0x338] sm:$0xff]
    %v209 = vld [vmem:[#allocation5 + $0x340] sm:$0xff]
    %v210 = vld [vmem:[#allocation5 + $0x348] sm:$0xff]
    %v211 = vld [vmem:[#allocation5 + $0x350] sm:$0xff]
    %v212 = vld [vmem:[#allocation5 + $0x358] sm:$0xff]
    %v213 = vld [vmem:[#allocation5 + $0x360] sm:$0xff]
    %v214 = vld [vmem:[#allocation5 + $0x368] sm:$0xff]
    %v215 = vld [vmem:[#allocation5 + $0x370] sm:$0xff]
    %v216 = vld [vmem:[#allocation5 + $0x378] sm:$0xff]
    %v217 = vld [vmem:[#allocation5 + $0x380] sm:$0xff]
    %v218 = vld [vmem:[#allocation5 + $0x388] sm:$0xff]
    %v219 = vld [vmem:[#allocation5 + $0x390] sm:$0xff]
    %v220 = vld [vmem:[#allocation5 + $0x398] sm:$0xff]
    %v221 = vld [vmem:[#allocation5 + $0x3a0] sm:$0xff]
    %v222 = vld [vmem:[#allocation5 + $0x3a8] sm:$0xff]
    %v223 = vld [vmem:[#allocation5 + $0x3b0] sm:$0xff]
    %v224 = vld [vmem:[#allocation5 + $0x3b8] sm:$0xff]
    %v225 = vld [vmem:[#allocation5 + $0x3c0] sm:$0xff]
    %v226 = vld [vmem:[#allocation5 + $0x3c8] sm:$0xff]
    %v227 = vld [vmem:[#allocation5 + $0x3d0] sm:$0xff]
    %v228 = vld [vmem:[#allocation5 + $0x3d8] sm:$0xff]
    %v229 = vld [vmem:[#allocation5 + $0x3e0] sm:$0xff]
    %v230 = vld [vmem:[#allocation5 + $0x3e8] sm:$0xff]
    %v231 = vld [vmem:[#allocation5 + $0x3f0] sm:$0xff]
    %v232 = vld [vmem:[#allocation5 + $0x3f8] sm:$0xff]
    %v233 = vld [vmem:[#allocation5 + $0x400] sm:$0xff]
    %v234 = vld [vmem:[#allocation5 + $0x408] sm:$0xff]
    %v235 = vld [vmem:[#allocation5 + $0x410] sm:$0xff]
    %v236 = vld [vmem:[#allocation5 + $0x418] sm:$0xff]
    %v237 = vld [vmem:[#allocation5 + $0x420] sm:$0xff]
    %v238 = vld [vmem:[#allocation5 + $0x428] sm:$0xff]
    %v239 = vld [vmem:[#allocation5 + $0x430] sm:$0xff]
    %v240 = vld [vmem:[#allocation5 + $0x438] sm:$0xff]
    %v241 = vld [vmem:[#allocation5 + $0x440] sm:$0xff]
    %v242 = vld [vmem:[#allocation5 + $0x448] sm:$0xff]
    %v243 = vld [vmem:[#allocation5 + $0x450] sm:$0xff]
    %v244 = vld [vmem:[#allocation5 + $0x458] sm:$0xff]
    %v245 = vld [vmem:[#allocation5 + $0x460] sm:$0xff]
    %v246 = vld [vmem:[#allocation5 + $0x468] sm:$0xff]
    %v247 = vld [vmem:[#allocation5 + $0x470] sm:$0xff]
    %v248 = vld [vmem:[#allocation5 + $0x478] sm:$0xff]
    %v249 = vld [vmem:[#allocation5 + $0x480] sm:$0xff]
    %v250 = vld [vmem:[#allocation5 + $0x488] sm:$0xff]
    %v251 = vld [vmem:[#allocation5 + $0x490] sm:$0xff]
    %v252 = vld [vmem:[#allocation5 + $0x498] sm:$0xff]
    %v253 = vld [vmem:[#allocation5 + $0x4a0] sm:$0xff]
    %v254 = vld [vmem:[#allocation5 + $0x4a8] sm:$0xff]
    %v255 = vld [vmem:[#allocation5 + $0x4b0] sm:$0xff]
    %v256 = vld [vmem:[#allocation5 + $0x4b8] sm:$0xff]
    %v257 = vld [vmem:[#allocation5 + $0x4c0] sm:$0xff]
    %v258 = vld [vmem:[#allocation5 + $0x4c8] sm:$0xff]
    %v259 = vld [vmem:[#allocation5 + $0x4d0] sm:$0xff]
    %v260 = vld [vmem:[#allocation5 + $0x4d8] sm:$0xff]
    %v261 = vld [vmem:[#allocation5 + $0x4e0] sm:$0xff]
    %v262 = vld [vmem:[#allocation5 + $0x4e8] sm:$0xff]
    %v263 = vld [vmem:[#allocation5 + $0x4f0] sm:$0xff]
    %v264 = vld [vmem:[#allocation5 + $0x4f8] sm:$0xff]
    %v265 = vld [vmem:[#allocation5 + $0x500] sm:$0xff]
    %v266 = vld [vmem:[#allocation5 + $0x508] sm:$0xff]
    %v267 = vld [vmem:[#allocation5 + $0x510] sm:$0xff]
    %v268 = vld [vmem:[#allocation5 + $0x518] sm:$0xff]
    %v269 = vld [vmem:[#allocation5 + $0x520] sm:$0xff]
    %v270 = vld [vmem:[#allocation5 + $0x528] sm:$0xff]
    %v271 = vld [vmem:[#allocation5 + $0x530] sm:$0xff]
    %v272 = vld [vmem:[#allocation5 + $0x538] sm:$0xff]
    %v273 = vld [vmem:[#allocation5 + $0x540] sm:$0xff]
    %v274 = vld [vmem:[#allocation5 + $0x548] sm:$0xff]
    %v275 = vld [vmem:[#allocation5 + $0x550] sm:$0xff]
    %v276 = vld [vmem:[#allocation5 + $0x558] sm:$0xff]
    %v277 = vld [vmem:[#allocation5 + $0x560] sm:$0xff]
    %v278 = vld [vmem:[#allocation5 + $0x568] sm:$0xff]
    %v279 = vld [vmem:[#allocation5 + $0x570] sm:$0xff]
    %v280 = vld [vmem:[#allocation5 + $0x578] sm:$0xff]
    %v281 = vld [vmem:[#allocation5 + $0x580] sm:$0xff]
    %v282 = vld [vmem:[#allocation5 + $0x588] sm:$0xff]
    %v283 = vld [vmem:[#allocation5 + $0x590] sm:$0xff]
    %v284 = vld [vmem:[#allocation5 + $0x598] sm:$0xff]
    %v285 = vld [vmem:[#allocation5 + $0x5a0] sm:$0xff]
    %v286 = vld [vmem:[#allocation5 + $0x5a8] sm:$0xff]
    %v287 = vld [vmem:[#allocation5 + $0x5b0] sm:$0xff]
    %v288 = vld [vmem:[#allocation5 + $0x5b8] sm:$0xff]
    %v289 = vld [vmem:[#allocation5 + $0x5c0] sm:$0xff]
    %v290 = vld [vmem:[#allocation5 + $0x5c8] sm:$0xff]
    %v291 = vld [vmem:[#allocation5 + $0x5d0] sm:$0xff]
    %v292 = vld [vmem:[#allocation5 + $0x5d8] sm:$0xff]
    %v293 = vld [vmem:[#allocation5 + $0x5e0] sm:$0xff]
    %v294 = vld [vmem:[#allocation5 + $0x5e8] sm:$0xff]
    %v295 = vld [vmem:[#allocation5 + $0x5f0] sm:$0xff]
    %v296 = vld [vmem:[#allocation5 + $0x5f8] sm:$0xff]
    %v297 = vld [vmem:[#allocation5 + $0x600] sm:$0xff]
    %v298 = vld [vmem:[#allocation5 + $0x608] sm:$0xff]
    %v299 = vld [vmem:[#allocation5 + $0x610] sm:$0xff]
    %v300 = vld [vmem:[#allocation5 + $0x618] sm:$0xff]
    %v301 = vld [vmem:[#allocation5 + $0x620] sm:$0xff]
    %v302 = vld [vmem:[#allocation5 + $0x628] sm:$0xff]
    %v303 = vld [vmem:[#allocation5 + $0x630] sm:$0xff]
    %v304 = vld [vmem:[#allocation5 + $0x638] sm:$0xff]
    %v305 = vld [vmem:[#allocation5 + $0x640] sm:$0xff]
    %v306 = vld [vmem:[#allocation5 + $0x648] sm:$0xff]
    %v307 = vld [vmem:[#allocation5 + $0x650] sm:$0xff]
    %v308 = vld [vmem:[#allocation5 + $0x658] sm:$0xff]
    %v309 = vld [vmem:[#allocation5 + $0x660] sm:$0xff]
    %v310 = vld [vmem:[#allocation5 + $0x668] sm:$0xff]
    %v311 = vld [vmem:[#allocation5 + $0x670] sm:$0xff]
    %v312 = vld [vmem:[#allocation5 + $0x678] sm:$0xff]
    %v313 = vld [vmem:[#allocation5 + $0x680] sm:$0xff]
    %v314 = vld [vmem:[#allocation5 + $0x688] sm:$0xff]
    %v315 = vld [vmem:[#allocation5 + $0x690] sm:$0xff]
    %v316 = vld [vmem:[#allocation5 + $0x698] sm:$0xff]
    %v317 = vld [vmem:[#allocation5 + $0x6a0] sm:$0xff]
    %v318 = vld [vmem:[#allocation5 + $0x6a8] sm:$0xff]
    %v319 = vld [vmem:[#allocation5 + $0x6b0] sm:$0xff]
    %v320 = vld [vmem:[#allocation5 + $0x6b8] sm:$0xff]
    %v321 = vld [vmem:[#allocation5 + $0x6c0] sm:$0xff]
    %v322 = vld [vmem:[#allocation5 + $0x6c8] sm:$0xff]
    %v323 = vld [vmem:[#allocation5 + $0x6d0] sm:$0xff]
    %v324 = vld [vmem:[#allocation5 + $0x6d8] sm:$0xff]
    %v325 = vld [vmem:[#allocation5 + $0x6e0] sm:$0xff]
    %v326 = vld [vmem:[#allocation5 + $0x6e8] sm:$0xff]
    %v327 = vld [vmem:[#allocation5 + $0x6f0] sm:$0xff]
    %v328 = vld [vmem:[#allocation5 + $0x6f8] sm:$0xff]
    %v329 = vld [vmem:[#allocation5 + $0x700] sm:$0xff]
    %v330 = vld [vmem:[#allocation5 + $0x708] sm:$0xff]
    %v331 = vld [vmem:[#allocation5 + $0x710] sm:$0xff]
    %v332 = vld [vmem:[#allocation5 + $0x718] sm:$0xff]
    %v333 = vld [vmem:[#allocation5 + $0x720] sm:$0xff]
    %v334 = vld [vmem:[#allocation5 + $0x728] sm:$0xff]
    %v335 = vld [vmem:[#allocation5 + $0x730] sm:$0xff]
    %v336 = vld [vmem:[#allocation5 + $0x738] sm:$0xff]
    %v337 = vld [vmem:[#allocation5 + $0x740] sm:$0xff]
    %v338 = vld [vmem:[#allocation5 + $0x748] sm:$0xff]
    %v339 = vld [vmem:[#allocation5 + $0x750] sm:$0xff]
    %v340 = vld [vmem:[#allocation5 + $0x758] sm:$0xff]
    %v341 = vld [vmem:[#allocation5 + $0x760] sm:$0xff]
    %v342 = vld [vmem:[#allocation5 + $0x768] sm:$0xff]
    %v343 = vld [vmem:[#allocation5 + $0x770] sm:$0xff]
    %v344 = vld [vmem:[#allocation5 + $0x778] sm:$0xff]
    %v345 = vld [vmem:[#allocation5 + $0x780] sm:$0xff]
    %v346 = vld [vmem:[#allocation5 + $0x788] sm:$0xff]
    %v347 = vld [vmem:[#allocation5 + $0x790] sm:$0xff]
    %v348 = vld [vmem:[#allocation5 + $0x798] sm:$0xff]
    %v349 = vld [vmem:[#allocation5 + $0x7a0] sm:$0xff]
    %v350 = vld [vmem:[#allocation5 + $0x7a8] sm:$0xff]
    %v351 = vld [vmem:[#allocation5 + $0x7b0] sm:$0xff]
    %v352 = vld [vmem:[#allocation5 + $0x7b8] sm:$0xff]
    %v353 = vld [vmem:[#allocation5 + $0x7c0] sm:$0xff]
    %v354 = vld [vmem:[#allocation5 + $0x7c8] sm:$0xff]
    %v355 = vld [vmem:[#allocation5 + $0x7d0] sm:$0xff]
    %v356 = vld [vmem:[#allocation5 + $0x7d8] sm:$0xff]
    %v357 = vld [vmem:[#allocation5 + $0x7e0] sm:$0xff]
    %v358 = vld [vmem:[#allocation5 + $0x7e8] sm:$0xff]
    %v359 = vld [vmem:[#allocation5 + $0x7f0] sm:$0xff]
    %v360 = vld [vmem:[#allocation5 + $0x7f8] sm:$0xff]
    %v361 = vld [vmem:[#allocation5 + $0x800] sm:$0xff]
    %v362 = vld [vmem:[#allocation5 + $0x808] sm:$0xff]
    %v363 = vld [vmem:[#allocation5 + $0x810] sm:$0xff]
    %v364 = vld [vmem:[#allocation5 + $0x818] sm:$0xff]
    %v365 = vld [vmem:[#allocation5 + $0x820] sm:$0xff]
    %v366 = vld [vmem:[#allocation5 + $0x828] sm:$0xff]
    %v367 = vld [vmem:[#allocation5 + $0x830] sm:$0xff]
    %v368 = vld [vmem:[#allocation5 + $0x838] sm:$0xff]
    %v369 = vld [vmem:[#allocation5 + $0x840] sm:$0xff]
    %v370 = vld [vmem:[#allocation5 + $0x848] sm:$0xff]
    %v371 = vld [vmem:[#allocation5 + $0x850] sm:$0xff]
    %v372 = vld [vmem:[#allocation5 + $0x858] sm:$0xff]
    %v373 = vld [vmem:[#allocation5 + $0x860] sm:$0xff]
    %v374 = vld [vmem:[#allocation5 + $0x868] sm:$0xff]
    %v375 = vld [vmem:[#allocation5 + $0x870] sm:$0xff]
    %v376 = vld [vmem:[#allocation5 + $0x878] sm:$0xff]
    %v377 = vld [vmem:[#allocation5 + $0x880] sm:$0xff]
    %v378 = vld [vmem:[#allocation5 + $0x888] sm:$0xff]
    %v379 = vld [vmem:[#allocation5 + $0x890] sm:$0xff]
    %v380 = vld [vmem:[#allocation5 + $0x898] sm:$0xff]
    %v381 = vld [vmem:[#allocation5 + $0x8a0] sm:$0xff]
    %v382 = vld [vmem:[#allocation5 + $0x8a8] sm:$0xff]
    %v383 = vld [vmem:[#allocation5 + $0x8b0] sm:$0xff]
    %v384 = vld [vmem:[#allocation5 + $0x8b8] sm:$0xff]
    %v385 = vld [vmem:[#allocation5 + $0x8c0] sm:$0xff]
    %v386 = vld [vmem:[#allocation5 + $0x8c8] sm:$0xff]
    %v387 = vld [vmem:[#allocation5 + $0x8d0] sm:$0xff]
    %v388 = vld [vmem:[#allocation5 + $0x8d8] sm:$0xff]
    %v389 = vld [vmem:[#allocation5 + $0x8e0] sm:$0xff]
    %v390 = vld [vmem:[#allocation5 + $0x8e8] sm:$0xff]
    %v391 = vld [vmem:[#allocation5 + $0x8f0] sm:$0xff]
    %v392 = vld [vmem:[#allocation5 + $0x8f8] sm:$0xff]
    %v393 = vld [vmem:[#allocation5 + $0x900] sm:$0xff]
    %v394 = vld [vmem:[#allocation5 + $0x908] sm:$0xff]
    %v395 = vld [vmem:[#allocation5 + $0x910] sm:$0xff]
    %v396 = vld [vmem:[#allocation5 + $0x918] sm:$0xff]
    %v397 = vld [vmem:[#allocation5 + $0x920] sm:$0xff]
    %v398 = vld [vmem:[#allocation5 + $0x928] sm:$0xff]
    %v399 = vld [vmem:[#allocation5 + $0x930] sm:$0xff]
    %v400 = vld [vmem:[#allocation5 + $0x938] sm:$0xff]
    %v401 = vld [vmem:[#allocation5 + $0x940] sm:$0xff]
    %v402 = vld [vmem:[#allocation5 + $0x948] sm:$0xff]
    %v403 = vld [vmem:[#allocation5 + $0x950] sm:$0xff]
    %v404 = vld [vmem:[#allocation5 + $0x958] sm:$0xff]
    %v405 = vld [vmem:[#allocation5 + $0x960] sm:$0xff]
    %v406 = vld [vmem:[#allocation5 + $0x968] sm:$0xff]
    %v407 = vld [vmem:[#allocation5 + $0x970] sm:$0xff]
    %v408 = vld [vmem:[#allocation5 + $0x978] sm:$0xff]
    %v409 = vld [vmem:[#allocation5 + $0x980] sm:$0xff]
    %v410 = vld [vmem:[#allocation5 + $0x988] sm:$0xff]
    %v411 = vld [vmem:[#allocation5 + $0x990] sm:$0xff]
    %v412 = vld [vmem:[#allocation5 + $0x998] sm:$0xff]
    %v413 = vld [vmem:[#allocation5 + $0x9a0] sm:$0xff]
    %v414 = vld [vmem:[#allocation5 + $0x9a8] sm:$0xff]
    %v415 = vld [vmem:[#allocation5 + $0x9b0] sm:$0xff]
    %v416 = vld [vmem:[#allocation5 + $0x9b8] sm:$0xff]
    %v417 = vld [vmem:[#allocation5 + $0x9c0] sm:$0xff]
    %v418 = vld [vmem:[#allocation5 + $0x9c8] sm:$0xff]
    %v419 = vld [vmem:[#allocation5 + $0x9d0] sm:$0xff]
    %v420 = vld [vmem:[#allocation5 + $0x9d8] sm:$0xff]
    %v421 = vld [vmem:[#allocation5 + $0x9e0] sm:$0xff]
    %v422 = vld [vmem:[#allocation5 + $0x9e8] sm:$0xff]
    %v423 = vld [vmem:[#allocation5 + $0x9f0] sm:$0xff]
    %v424 = vld [vmem:[#allocation5 + $0x9f8] sm:$0xff]
    %v425 = vld [vmem:[#allocation5 + $0xa00] sm:$0xff]
    %v426 = vld [vmem:[#allocation5 + $0xa08] sm:$0xff]
    %v427 = vld [vmem:[#allocation5 + $0xa10] sm:$0xff]
    %v428 = vld [vmem:[#allocation5 + $0xa18] sm:$0xff]
    %v429 = vld [vmem:[#allocation5 + $0xa20] sm:$0xff]
    %v430 = vld [vmem:[#allocation5 + $0xa28] sm:$0xff]
    %v431 = vld [vmem:[#allocation5 + $0xa30] sm:$0xff]
    %v432 = vld [vmem:[#allocation5 + $0xa38] sm:$0xff]
    %v433 = vld [vmem:[#allocation5 + $0xa40] sm:$0xff]
    %v434 = vld [vmem:[#allocation5 + $0xa48] sm:$0xff]
    %v435 = vld [vmem:[#allocation5 + $0xa50] sm:$0xff]
    %v436 = vld [vmem:[#allocation5 + $0xa58] sm:$0xff]
    %v437 = vld [vmem:[#allocation5 + $0xa60] sm:$0xff]
    %v438 = vld [vmem:[#allocation5 + $0xa68] sm:$0xff]
    %v439 = vld [vmem:[#allocation5 + $0xa70] sm:$0xff]
    %v440 = vld [vmem:[#allocation5 + $0xa78] sm:$0xff]
    %v441 = vld [vmem:[#allocation5 + $0xa80] sm:$0xff]
    %v442 = vld [vmem:[#allocation5 + $0xa88] sm:$0xff]
    %v443 = vld [vmem:[#allocation5 + $0xa90] sm:$0xff]
    %v444 = vld [vmem:[#allocation5 + $0xa98] sm:$0xff]
    %v445 = vld [vmem:[#allocation5 + $0xaa0] sm:$0xff]
    %v446 = vld [vmem:[#allocation5 + $0xaa8] sm:$0xff]
    %v447 = vld [vmem:[#allocation5 + $0xab0] sm:$0xff]
    %v448 = vld [vmem:[#allocation5 + $0xab8] sm:$0xff]
    %v449 = vld [vmem:[#allocation5 + $0xac0] sm:$0xff]
    %v450 = vld [vmem:[#allocation5 + $0xac8] sm:$0xff]
    %v451 = vld [vmem:[#allocation5 + $0xad0] sm:$0xff]
    %v452 = vld [vmem:[#allocation5 + $0xad8] sm:$0xff]
    %v453 = vld [vmem:[#allocation5 + $0xae0] sm:$0xff]
    %v454 = vld [vmem:[#allocation5 + $0xae8] sm:$0xff]
    %v455 = vld [vmem:[#allocation5 + $0xaf0] sm:$0xff]
    %v456 = vld [vmem:[#allocation5 + $0xaf8] sm:$0xff]
    %v457 = vld [vmem:[#allocation5 + $0xb00] sm:$0xff]
    %v458 = vld [vmem:[#allocation5 + $0xb08] sm:$0xff]
    %v459 = vld [vmem:[#allocation5 + $0xb10] sm:$0xff]
    %v460 = vld [vmem:[#allocation5 + $0xb18] sm:$0xff]
    %v461 = vld [vmem:[#allocation5 + $0xb20] sm:$0xff]
    %v462 = vld [vmem:[#allocation5 + $0xb28] sm:$0xff]
    %v463 = vld [vmem:[#allocation5 + $0xb30] sm:$0xff]
    %v464 = vld [vmem:[#allocation5 + $0xb38] sm:$0xff]
    %v465 = vld [vmem:[#allocation5 + $0xb40] sm:$0xff]
    %v466 = vld [vmem:[#allocation5 + $0xb48] sm:$0xff]
    %v467 = vld [vmem:[#allocation5 + $0xb50] sm:$0xff]
    %v468 = vld [vmem:[#allocation5 + $0xb58] sm:$0xff]
    %v469 = vld [vmem:[#allocation5 + $0xb60] sm:$0xff]
    %v470 = vld [vmem:[#allocation5 + $0xb68] sm:$0xff]
    %v471 = vld [vmem:[#allocation5 + $0xb70] sm:$0xff]
    %v472 = vld [vmem:[#allocation5 + $0xb78] sm:$0xff]
    %v473 = vld [vmem:[#allocation5 + $0xb80] sm:$0xff]
    %v474 = vld [vmem:[#allocation5 + $0xb88] sm:$0xff]
    %v475 = vld [vmem:[#allocation5 + $0xb90] sm:$0xff]
    %v476 = vld [vmem:[#allocation5 + $0xb98] sm:$0xff]
    %v477 = vld [vmem:[#allocation5 + $0xba0] sm:$0xff]
    %v478 = vld [vmem:[#allocation5 + $0xba8] sm:$0xff]
    %v479 = vld [vmem:[#allocation5 + $0xbb0] sm:$0xff]
    %v480 = vld [vmem:[#allocation5 + $0xbb8] sm:$0xff]
    %v481 = vld [vmem:[#allocation5 + $0xbc0] sm:$0xff]
    %v482 = vld [vmem:[#allocation5 + $0xbc8] sm:$0xff]
    %v483 = vld [vmem:[#allocation5 + $0xbd0] sm:$0xff]
    %v484 = vld [vmem:[#allocation5 + $0xbd8] sm:$0xff]
    %v485 = vld [vmem:[#allocation5 + $0xbe0] sm:$0xff]
    %v486 = vld [vmem:[#allocation5 + $0xbe8] sm:$0xff]
    %v487 = vld [vmem:[#allocation5 + $0xbf0] sm:$0xff]
    %v488 = vld [vmem:[#allocation5 + $0xbf8] sm:$0xff]
    %v489 = vld [vmem:[#allocation5 + $0xc00] sm:$0xff]
    %v490 = vld [vmem:[#allocation5 + $0xc08] sm:$0xff]
    %v491 = vld [vmem:[#allocation5 + $0xc10] sm:$0xff]
    %v492 = vld [vmem:[#allocation5 + $0xc18] sm:$0xff]
    %v493 = vld [vmem:[#allocation5 + $0xc20] sm:$0xff]
    %v494 = vld [vmem:[#allocation5 + $0xc28] sm:$0xff]
    %v495 = vld [vmem:[#allocation5 + $0xc30] sm:$0xff]
    %v496 = vld [vmem:[#allocation5 + $0xc38] sm:$0xff]
    %v497 = vld [vmem:[#allocation5 + $0xc40] sm:$0xff]
    %v498 = vld [vmem:[#allocation5 + $0xc48] sm:$0xff]
    %v499 = vld [vmem:[#allocation5 + $0xc50] sm:$0xff]
    %v500 = vld [vmem:[#allocation5 + $0xc58] sm:$0xff]
    %v501 = vld [vmem:[#allocation5 + $0xc60] sm:$0xff]
    %v502 = vld [vmem:[#allocation5 + $0xc68] sm:$0xff]
    %v503 = vld [vmem:[#allocation5 + $0xc70] sm:$0xff]
    %v504 = vld [vmem:[#allocation5 + $0xc78] sm:$0xff]
    %v505 = vld [vmem:[#allocation5 + $0xc80] sm:$0xff]
    %v506 = vld [vmem:[#allocation5 + $0xc88] sm:$0xff]
    %v507 = vld [vmem:[#allocation5 + $0xc90] sm:$0xff]
    %v508 = vld [vmem:[#allocation5 + $0xc98] sm:$0xff]
    %v509 = vld [vmem:[#allocation5 + $0xca0] sm:$0xff]
    %v510 = vld [vmem:[#allocation5 + $0xca8] sm:$0xff]
    %v511 = vld [vmem:[#allocation5 + $0xcb0] sm:$0xff]
    %v512 = vld [vmem:[#allocation5 + $0xcb8] sm:$0xff]
    %v513 = vld [vmem:[#allocation5 + $0xcc0] sm:$0xff]
    %v514 = vld [vmem:[#allocation5 + $0xcc8] sm:$0xff]
    %v515 = vld [vmem:[#allocation5 + $0xcd0] sm:$0xff]
    %v516 = vld [vmem:[#allocation5 + $0xcd8] sm:$0xff]
    %v517 = vld [vmem:[#allocation5 + $0xce0] sm:$0xff]
    %v518 = vld [vmem:[#allocation5 + $0xce8] sm:$0xff]
    %v519 = vld [vmem:[#allocation5 + $0xcf0] sm:$0xff]
    %v520 = vld [vmem:[#allocation5 + $0xcf8] sm:$0xff]
    %v521 = vld [vmem:[#allocation5 + $0xd00] sm:$0xff]
    %v522 = vld [vmem:[#allocation5 + $0xd08] sm:$0xff]
    %v523 = vld [vmem:[#allocation5 + $0xd10] sm:$0xff]
    %v524 = vld [vmem:[#allocation5 + $0xd18] sm:$0xff]
    %v525 = vld [vmem:[#allocation5 + $0xd20] sm:$0xff]
    %v526 = vld [vmem:[#allocation5 + $0xd28] sm:$0xff]
    %v527 = vld [vmem:[#allocation5 + $0xd30] sm:$0xff]
    %v528 = vld [vmem:[#allocation5 + $0xd38] sm:$0xff]
    %v529 = vld [vmem:[#allocation5 + $0xd40] sm:$0xff]
    %v530 = vld [vmem:[#allocation5 + $0xd48] sm:$0xff]
    %v531 = vld [vmem:[#allocation5 + $0xd50] sm:$0xff]
    %v532 = vld [vmem:[#allocation5 + $0xd58] sm:$0xff]
    %v533 = vld [vmem:[#allocation5 + $0xd60] sm:$0xff]
    %v534 = vld [vmem:[#allocation5 + $0xd68] sm:$0xff]
    %v535 = vld [vmem:[#allocation5 + $0xd70] sm:$0xff]
    %v536 = vld [vmem:[#allocation5 + $0xd78] sm:$0xff]
    %v537 = vld [vmem:[#allocation5 + $0xd80] sm:$0xff]
    %v538 = vld [vmem:[#allocation5 + $0xd88] sm:$0xff]
    %v539 = vld [vmem:[#allocation5 + $0xd90] sm:$0xff]
    %v540 = vld [vmem:[#allocation5 + $0xd98] sm:$0xff]
    %v541 = vld [vmem:[#allocation5 + $0xda0] sm:$0xff]
    %v542 = vld [vmem:[#allocation5 + $0xda8] sm:$0xff]
    %v543 = vld [vmem:[#allocation5 + $0xdb0] sm:$0xff]
    %v544 = vld [vmem:[#allocation5 + $0xdb8] sm:$0xff]
    %v545 = vld [vmem:[#allocation5 + $0xdc0] sm:$0xff]
    %v546 = vld [vmem:[#allocation5 + $0xdc8] sm:$0xff]
    %v547 = vld [vmem:[#allocation5 + $0xdd0] sm:$0xff]
    %v548 = vld [vmem:[#allocation5 + $0xdd8] sm:$0xff]
    %v549 = vld [vmem:[#allocation5 + $0xde0] sm:$0xff]
    %v550 = vld [vmem:[#allocation5 + $0xde8] sm:$0xff]
    %v551 = vld [vmem:[#allocation5 + $0xdf0] sm:$0xff]
    %v552 = vld [vmem:[#allocation5 + $0xdf8] sm:$0xff]
    %v553 = vld [vmem:[#allocation5 + $0xe00] sm:$0xff]
    %v554 = vld [vmem:[#allocation5 + $0xe08] sm:$0xff]
    %v555 = vld [vmem:[#allocation5 + $0xe10] sm:$0xff]
    %v556 = vld [vmem:[#allocation5 + $0xe18] sm:$0xff]
    %v557 = vld [vmem:[#allocation5 + $0xe20] sm:$0xff]
    %v558 = vld [vmem:[#allocation5 + $0xe28] sm:$0xff]
    %v559 = vld [vmem:[#allocation5 + $0xe30] sm:$0xff]
    %v560 = vld [vmem:[#allocation5 + $0xe38] sm:$0xff]
    %v561 = vld [vmem:[#allocation5 + $0xe40] sm:$0xff]
    %v562 = vld [vmem:[#allocation5 + $0xe48] sm:$0xff]
    %v563 = vld [vmem:[#allocation5 + $0xe50] sm:$0xff]
    %v564 = vld [vmem:[#allocation5 + $0xe58] sm:$0xff]
    %v565 = vld [vmem:[#allocation5 + $0xe60] sm:$0xff]
    %v566 = vld [vmem:[#allocation5 + $0xe68] sm:$0xff]
    %v567 = vld [vmem:[#allocation5 + $0xe70] sm:$0xff]
    %v568 = vld [vmem:[#allocation5 + $0xe78] sm:$0xff]
    %v569 = vld [vmem:[#allocation5 + $0xe80] sm:$0xff]
    %v570 = vld [vmem:[#allocation5 + $0xe88] sm:$0xff]
    %v571 = vld [vmem:[#allocation5 + $0xe90] sm:$0xff]
    %v572 = vld [vmem:[#allocation5 + $0xe98] sm:$0xff]
    %v573 = vld [vmem:[#allocation5 + $0xea0] sm:$0xff]
    %v574 = vld [vmem:[#allocation5 + $0xea8] sm:$0xff]
    %v575 = vld [vmem:[#allocation5 + $0xeb0] sm:$0xff]
    %v576 = vld [vmem:[#allocation5 + $0xeb8] sm:$0xff]
    %v577 = vld [vmem:[#allocation5 + $0xec0] sm:$0xff]
    %v578 = vld [vmem:[#allocation5 + $0xec8] sm:$0xff]
    %v579 = vld [vmem:[#allocation5 + $0xed0] sm:$0xff]
    %v580 = vld [vmem:[#allocation5 + $0xed8] sm:$0xff]
    %v581 = vld [vmem:[#allocation5 + $0xee0] sm:$0xff]
    %v582 = vld [vmem:[#allocation5 + $0xee8] sm:$0xff]
    %v583 = vld [vmem:[#allocation5 + $0xef0] sm:$0xff]
    %v584 = vld [vmem:[#allocation5 + $0xef8] sm:$0xff]
    %v585 = vld [vmem:[#allocation5 + $0xf00] sm:$0xff]
    %v586 = vld [vmem:[#allocation5 + $0xf08] sm:$0xff]
    %v587 = vld [vmem:[#allocation5 + $0xf10] sm:$0xff]
    %v588 = vld [vmem:[#allocation5 + $0xf18] sm:$0xff]
    %v589 = vld [vmem:[#allocation5 + $0xf20] sm:$0xff]
    %v590 = vld [vmem:[#allocation5 + $0xf28] sm:$0xff]
    %v591 = vld [vmem:[#allocation5 + $0xf30] sm:$0xff]
    %v592 = vld [vmem:[#allocation5 + $0xf38] sm:$0xff]
    %v593 = vld [vmem:[#allocation5 + $0xf40] sm:$0xff]
    %v594 = vld [vmem:[#allocation5 + $0xf48] sm:$0xff]
    %v595 = vld [vmem:[#allocation5 + $0xf50] sm:$0xff]
    %v596 = vld [vmem:[#allocation5 + $0xf58] sm:$0xff]
    %v597 = vld [vmem:[#allocation5 + $0xf60] sm:$0xff]
    %v598 = vld [vmem:[#allocation5 + $0xf68] sm:$0xff]
    %v599 = vld [vmem:[#allocation5 + $0xf70] sm:$0xff]
    %v600 = vld [vmem:[#allocation5 + $0xf78] sm:$0xff]
    %v601 = vld [vmem:[#allocation5 + $0xf80] sm:$0xff]
    %v602 = vld [vmem:[#allocation5 + $0xf88] sm:$0xff]
    %v603 = vld [vmem:[#allocation5 + $0xf90] sm:$0xff]
    %v604 = vld [vmem:[#allocation5 + $0xf98] sm:$0xff]
    %v605 = vld [vmem:[#allocation5 + $0xfa0] sm:$0xff]
    %v606 = vld [vmem:[#allocation5 + $0xfa8] sm:$0xff]
    %v607 = vld [vmem:[#allocation5 + $0xfb0] sm:$0xff]
    %v608 = vld [vmem:[#allocation5 + $0xfb8] sm:$0xff]
    %v609 = vld [vmem:[#allocation5 + $0xfc0] sm:$0xff]
    %v610 = vld [vmem:[#allocation5 + $0xfc8] sm:$0xff]
    %v611 = vld [vmem:[#allocation5 + $0xfd0] sm:$0xff]
    %v612 = vld [vmem:[#allocation5 + $0xfd8] sm:$0xff]
    %v613 = vld [vmem:[#allocation5 + $0xfe0] sm:$0xff]
    %v614 = vld [vmem:[#allocation5 + $0xfe8] sm:$0xff]
    %v615 = vld [vmem:[#allocation5 + $0xff0] sm:$0xff]
    %v616 = vld [vmem:[#allocation5 + $0xff8] sm:$0xff]
    %v617 = vld [vmem:[#allocation7] sm:$0xff]
    %v618 = vld [vmem:[#allocation7 + $0x8] sm:$0xff]
    %v621 = vlaneseq
    %v622 = vshrl.u32 %v621, 7
    %v623 = vsub.s32 0, %v622
    %v624 = vrot.slane %v617, %v623
    %v625 = vlaneseq
    %v626 = vshrl.u32 %v625, 7
    %v627 = vsub.s32 1, %v626
    %v628 = vrot.slane %v617, %v627
    %v629 = vlaneseq
    %v630 = vshrl.u32 %v629, 7
    %v631 = vsub.s32 2, %v630
    %v632 = vrot.slane %v617, %v631
    %v633 = vlaneseq
    %v634 = vshrl.u32 %v633, 7
    %v635 = vsub.s32 3, %v634
    %v636 = vrot.slane %v617, %v635
    %v637 = vlaneseq
    %v638 = vshrl.u32 %v637, 7
    %v639 = vsub.s32 4, %v638
    %v640 = vrot.slane %v617, %v639
    %v641 = vlaneseq
    %v642 = vshrl.u32 %v641, 7
    %v643 = vsub.s32 5, %v642
    %v644 = vrot.slane %v617, %v643
    %v645 = vlaneseq
    %v646 = vshrl.u32 %v645, 7
    %v647 = vsub.s32 6, %v646
    %v648 = vrot.slane %v617, %v647
    %v649 = vlaneseq
    %v650 = vshrl.u32 %v649, 7
    %v651 = vsub.s32 7, %v650
    %v652 = vrot.slane %v617, %v651
    %v653 = vlaneseq
    %v654 = vshrl.u32 %v653, 7
    %v655 = vsub.s32 0, %v654
    %v656 = vrot.slane %v618, %v655
    %v657 = vlaneseq
    %v658 = vshrl.u32 %v657, 7
    %v659 = vsub.s32 1, %v658
    %v660 = vrot.slane %v618, %v659
    %v661 = vlaneseq
    %v662 = vshrl.u32 %v661, 7
    %v663 = vsub.s32 2, %v662
    %v664 = vrot.slane %v618, %v663
    %v665 = vlaneseq
    %v666 = vshrl.u32 %v665, 7
    %v667 = vsub.s32 3, %v666
    %v668 = vrot.slane %v618, %v667
    %v669 = vlaneseq
    %v670 = vshrl.u32 %v669, 7
    %v671 = vsub.s32 4, %v670
    %v672 = vrot.slane %v618, %v671
    %v673 = vlaneseq
    %v674 = vshrl.u32 %v673, 7
    %v675 = vsub.s32 5, %v674
    %v676 = vrot.slane %v618, %v675
    %v677 = vlaneseq
    %v678 = vshrl.u32 %v677, 7
    %v679 = vsub.s32 6, %v678
    %v680 = vrot.slane %v618, %v679
    %v681 = vlaneseq
    %v682 = vshrl.u32 %v681, 7
    %v683 = vsub.s32 7, %v682
    %v684 = vrot.slane %v618, %v683
    %v1213 = vunpack.c.l.b16 %v105
    %v1214 = vunpack.c.h.b16 %v105
    %v1215 = vunpack.c.l.b16 %v106
    %v1216 = vunpack.c.h.b16 %v106
    %v1217 = vunpack.c.l.b16 %v107
    %v1218 = vunpack.c.h.b16 %v107
    %v1219 = vunpack.c.l.b16 %v108
    %v1220 = vunpack.c.h.b16 %v108
    %v1221 = vunpack.c.l.b16 %v109
    %v1222 = vunpack.c.h.b16 %v109
    %v1223 = vunpack.c.l.b16 %v110
    %v1224 = vunpack.c.h.b16 %v110
    %v1225 = vunpack.c.l.b16 %v111
    %v1226 = vunpack.c.h.b16 %v111
    %v1227 = vunpack.c.l.b16 %v112
    %v1228 = vunpack.c.h.b16 %v112
    %v1229 = vunpack.c.l.b16 %v113
    %v1230 = vunpack.c.h.b16 %v113
    %v1231 = vunpack.c.l.b16 %v114
    %v1232 = vunpack.c.h.b16 %v114
    %v1233 = vunpack.c.l.b16 %v115
    %v1234 = vunpack.c.h.b16 %v115
    %v1235 = vunpack.c.l.b16 %v116
    %v1236 = vunpack.c.h.b16 %v116
    %v1237 = vunpack.c.l.b16 %v117
    %v1238 = vunpack.c.h.b16 %v117
    %v1239 = vunpack.c.l.b16 %v118
    %v1240 = vunpack.c.h.b16 %v118
    %v1241 = vunpack.c.l.b16 %v119
    %v1242 = vunpack.c.h.b16 %v119
    %v1243 = vunpack.c.l.b16 %v120
    %v1244 = vunpack.c.h.b16 %v120
    %v1245 = vunpack.c.l.b16 %v121
    %v1246 = vunpack.c.h.b16 %v121
    %v1247 = vunpack.c.l.b16 %v122
    %v1248 = vunpack.c.h.b16 %v122
    %v1249 = vunpack.c.l.b16 %v123
    %v1250 = vunpack.c.h.b16 %v123
    %v1251 = vunpack.c.l.b16 %v124
    %v1252 = vunpack.c.h.b16 %v124
    %v1253 = vunpack.c.l.b16 %v125
    %v1254 = vunpack.c.h.b16 %v125
    %v1255 = vunpack.c.l.b16 %v126
    %v1256 = vunpack.c.h.b16 %v126
    %v1257 = vunpack.c.l.b16 %v127
    %v1258 = vunpack.c.h.b16 %v127
    %v1259 = vunpack.c.l.b16 %v128
    %v1260 = vunpack.c.h.b16 %v128
    %v1261 = vunpack.c.l.b16 %v129
    %v1262 = vunpack.c.h.b16 %v129
    %v1263 = vunpack.c.l.b16 %v130
    %v1264 = vunpack.c.h.b16 %v130
    %v1265 = vunpack.c.l.b16 %v131
    %v1266 = vunpack.c.h.b16 %v131
    %v1267 = vunpack.c.l.b16 %v132
    %v1268 = vunpack.c.h.b16 %v132
    %v1269 = vunpack.c.l.b16 %v133
    %v1270 = vunpack.c.h.b16 %v133
    %v1271 = vunpack.c.l.b16 %v134
    %v1272 = vunpack.c.h.b16 %v134
    %v1273 = vunpack.c.l.b16 %v135
    %v1274 = vunpack.c.h.b16 %v135
    %v1275 = vunpack.c.l.b16 %v136
    %v1276 = vunpack.c.h.b16 %v136
    %v1277 = vunpack.c.l.b16 %v137
    %v1278 = vunpack.c.h.b16 %v137
    %v1279 = vunpack.c.l.b16 %v138
    %v1280 = vunpack.c.h.b16 %v138
    %v1281 = vunpack.c.l.b16 %v139
    %v1282 = vunpack.c.h.b16 %v139
    %v1283 = vunpack.c.l.b16 %v140
    %v1284 = vunpack.c.h.b16 %v140
    %v1285 = vunpack.c.l.b16 %v141
    %v1286 = vunpack.c.h.b16 %v141
    %v1287 = vunpack.c.l.b16 %v142
    %v1288 = vunpack.c.h.b16 %v142
    %v1289 = vunpack.c.l.b16 %v143
    %v1290 = vunpack.c.h.b16 %v143
    %v1291 = vunpack.c.l.b16 %v144
    %v1292 = vunpack.c.h.b16 %v144
    %v1293 = vunpack.c.l.b16 %v145
    %v1294 = vunpack.c.h.b16 %v145
    %v1295 = vunpack.c.l.b16 %v146
    %v1296 = vunpack.c.h.b16 %v146
    %v1297 = vunpack.c.l.b16 %v147
    %v1298 = vunpack.c.h.b16 %v147
    %v1299 = vunpack.c.l.b16 %v148
    %v1300 = vunpack.c.h.b16 %v148
    %v1301 = vunpack.c.l.b16 %v149
    %v1302 = vunpack.c.h.b16 %v149
    %v1303 = vunpack.c.l.b16 %v150
    %v1304 = vunpack.c.h.b16 %v150
    %v1305 = vunpack.c.l.b16 %v151
    %v1306 = vunpack.c.h.b16 %v151
    %v1307 = vunpack.c.l.b16 %v152
    %v1308 = vunpack.c.h.b16 %v152
    %v1309 = vunpack.c.l.b16 %v153
    %v1310 = vunpack.c.h.b16 %v153
    %v1311 = vunpack.c.l.b16 %v154
    %v1312 = vunpack.c.h.b16 %v154
    %v1313 = vunpack.c.l.b16 %v155
    %v1314 = vunpack.c.h.b16 %v155
    %v1315 = vunpack.c.l.b16 %v156
    %v1316 = vunpack.c.h.b16 %v156
    %v1317 = vunpack.c.l.b16 %v157
    %v1318 = vunpack.c.h.b16 %v157
    %v1319 = vunpack.c.l.b16 %v158
    %v1320 = vunpack.c.h.b16 %v158
    %v1321 = vunpack.c.l.b16 %v159
    %v1322 = vunpack.c.h.b16 %v159
    %v1323 = vunpack.c.l.b16 %v160
    %v1324 = vunpack.c.h.b16 %v160
    %v1325 = vunpack.c.l.b16 %v161
    %v1326 = vunpack.c.h.b16 %v161
    %v1327 = vunpack.c.l.b16 %v162
    %v1328 = vunpack.c.h.b16 %v162
    %v1329 = vunpack.c.l.b16 %v163
    %v1330 = vunpack.c.h.b16 %v163
    %v1331 = vunpack.c.l.b16 %v164
    %v1332 = vunpack.c.h.b16 %v164
    %v1333 = vunpack.c.l.b16 %v165
    %v1334 = vunpack.c.h.b16 %v165
    %v1335 = vunpack.c.l.b16 %v166
    %v1336 = vunpack.c.h.b16 %v166
    %v1337 = vunpack.c.l.b16 %v167
    %v1338 = vunpack.c.h.b16 %v167
    %v1339 = vunpack.c.l.b16 %v168
    %v1340 = vunpack.c.h.b16 %v168
    %v1341 = vunpack.c.l.b16 %v169
    %v1342 = vunpack.c.h.b16 %v169
    %v1343 = vunpack.c.l.b16 %v170
    %v1344 = vunpack.c.h.b16 %v170
    %v1345 = vunpack.c.l.b16 %v171
    %v1346 = vunpack.c.h.b16 %v171
    %v1347 = vunpack.c.l.b16 %v172
    %v1348 = vunpack.c.h.b16 %v172
    %v1349 = vunpack.c.l.b16 %v173
    %v1350 = vunpack.c.h.b16 %v173
    %v1351 = vunpack.c.l.b16 %v174
    %v1352 = vunpack.c.h.b16 %v174
    %v1353 = vunpack.c.l.b16 %v175
    %v1354 = vunpack.c.h.b16 %v175
    %v1355 = vunpack.c.l.b16 %v176
    %v1356 = vunpack.c.h.b16 %v176
    %v1357 = vunpack.c.l.b16 %v177
    %v1358 = vunpack.c.h.b16 %v177
    %v1359 = vunpack.c.l.b16 %v178
    %v1360 = vunpack.c.h.b16 %v178
    %v1361 = vunpack.c.l.b16 %v179
    %v1362 = vunpack.c.h.b16 %v179
    %v1363 = vunpack.c.l.b16 %v180
    %v1364 = vunpack.c.h.b16 %v180
    %v1365 = vunpack.c.l.b16 %v181
    %v1366 = vunpack.c.h.b16 %v181
    %v1367 = vunpack.c.l.b16 %v182
    %v1368 = vunpack.c.h.b16 %v182
    %v1369 = vunpack.c.l.b16 %v183
    %v1370 = vunpack.c.h.b16 %v183
    %v1371 = vunpack.c.l.b16 %v184
    %v1372 = vunpack.c.h.b16 %v184
    %v1373 = vunpack.c.l.b16 %v185
    %v1374 = vunpack.c.h.b16 %v185
    %v1375 = vunpack.c.l.b16 %v186
    %v1376 = vunpack.c.h.b16 %v186
    %v1377 = vunpack.c.l.b16 %v187
    %v1378 = vunpack.c.h.b16 %v187
    %v1379 = vunpack.c.l.b16 %v188
    %v1380 = vunpack.c.h.b16 %v188
    %v1381 = vunpack.c.l.b16 %v189
    %v1382 = vunpack.c.h.b16 %v189
    %v1383 = vunpack.c.l.b16 %v190
    %v1384 = vunpack.c.h.b16 %v190
    %v1385 = vunpack.c.l.b16 %v191
    %v1386 = vunpack.c.h.b16 %v191
    %v1387 = vunpack.c.l.b16 %v192
    %v1388 = vunpack.c.h.b16 %v192
    %v1389 = vunpack.c.l.b16 %v193
    %v1390 = vunpack.c.h.b16 %v193
    %v1391 = vunpack.c.l.b16 %v194
    %v1392 = vunpack.c.h.b16 %v194
    %v1393 = vunpack.c.l.b16 %v195
    %v1394 = vunpack.c.h.b16 %v195
    %v1395 = vunpack.c.l.b16 %v196
    %v1396 = vunpack.c.h.b16 %v196
    %v1397 = vunpack.c.l.b16 %v197
    %v1398 = vunpack.c.h.b16 %v197
    %v1399 = vunpack.c.l.b16 %v198
    %v1400 = vunpack.c.h.b16 %v198
    %v1401 = vunpack.c.l.b16 %v199
    %v1402 = vunpack.c.h.b16 %v199
    %v1403 = vunpack.c.l.b16 %v200
    %v1404 = vunpack.c.h.b16 %v200
    %v1405 = vunpack.c.l.b16 %v201
    %v1406 = vunpack.c.h.b16 %v201
    %v1407 = vunpack.c.l.b16 %v202
    %v1408 = vunpack.c.h.b16 %v202
    %v1409 = vunpack.c.l.b16 %v203
    %v1410 = vunpack.c.h.b16 %v203
    %v1411 = vunpack.c.l.b16 %v204
    %v1412 = vunpack.c.h.b16 %v204
    %v1413 = vunpack.c.l.b16 %v205
    %v1414 = vunpack.c.h.b16 %v205
    %v1415 = vunpack.c.l.b16 %v206
    %v1416 = vunpack.c.h.b16 %v206
    %v1417 = vunpack.c.l.b16 %v207
    %v1418 = vunpack.c.h.b16 %v207
    %v1419 = vunpack.c.l.b16 %v208
    %v1420 = vunpack.c.h.b16 %v208
    %v1421 = vunpack.c.l.b16 %v209
    %v1422 = vunpack.c.h.b16 %v209
    %v1423 = vunpack.c.l.b16 %v210
    %v1424 = vunpack.c.h.b16 %v210
    %v1425 = vunpack.c.l.b16 %v211
    %v1426 = vunpack.c.h.b16 %v211
    %v1427 = vunpack.c.l.b16 %v212
    %v1428 = vunpack.c.h.b16 %v212
    %v1429 = vunpack.c.l.b16 %v213
    %v1430 = vunpack.c.h.b16 %v213
    %v1431 = vunpack.c.l.b16 %v214
    %v1432 = vunpack.c.h.b16 %v214
    %v1433 = vunpack.c.l.b16 %v215
    %v1434 = vunpack.c.h.b16 %v215
    %v1435 = vunpack.c.l.b16 %v216
    %v1436 = vunpack.c.h.b16 %v216
    %v1437 = vunpack.c.l.b16 %v217
    %v1438 = vunpack.c.h.b16 %v217
    %v1439 = vunpack.c.l.b16 %v218
    %v1440 = vunpack.c.h.b16 %v218
    %v1441 = vunpack.c.l.b16 %v219
    %v1442 = vunpack.c.h.b16 %v219
    %v1443 = vunpack.c.l.b16 %v220
    %v1444 = vunpack.c.h.b16 %v220
    %v1445 = vunpack.c.l.b16 %v221
    %v1446 = vunpack.c.h.b16 %v221
    %v1447 = vunpack.c.l.b16 %v222
    %v1448 = vunpack.c.h.b16 %v222
    %v1449 = vunpack.c.l.b16 %v223
    %v1450 = vunpack.c.h.b16 %v223
    %v1451 = vunpack.c.l.b16 %v224
    %v1452 = vunpack.c.h.b16 %v224
    %v1453 = vunpack.c.l.b16 %v225
    %v1454 = vunpack.c.h.b16 %v225
    %v1455 = vunpack.c.l.b16 %v226
    %v1456 = vunpack.c.h.b16 %v226
    %v1457 = vunpack.c.l.b16 %v227
    %v1458 = vunpack.c.h.b16 %v227
    %v1459 = vunpack.c.l.b16 %v228
    %v1460 = vunpack.c.h.b16 %v228
    %v1461 = vunpack.c.l.b16 %v229
    %v1462 = vunpack.c.h.b16 %v229
    %v1463 = vunpack.c.l.b16 %v230
    %v1464 = vunpack.c.h.b16 %v230
    %v1465 = vunpack.c.l.b16 %v231
    %v1466 = vunpack.c.h.b16 %v231
    %v1467 = vunpack.c.l.b16 %v232
    %v1468 = vunpack.c.h.b16 %v232
    %v1469 = vunpack.c.l.b16 %v233
    %v1470 = vunpack.c.h.b16 %v233
    %v1471 = vunpack.c.l.b16 %v234
    %v1472 = vunpack.c.h.b16 %v234
    %v1473 = vunpack.c.l.b16 %v235
    %v1474 = vunpack.c.h.b16 %v235
    %v1475 = vunpack.c.l.b16 %v236
    %v1476 = vunpack.c.h.b16 %v236
    %v1477 = vunpack.c.l.b16 %v237
    %v1478 = vunpack.c.h.b16 %v237
    %v1479 = vunpack.c.l.b16 %v238
    %v1480 = vunpack.c.h.b16 %v238
    %v1481 = vunpack.c.l.b16 %v239
    %v1482 = vunpack.c.h.b16 %v239
    %v1483 = vunpack.c.l.b16 %v240
    %v1484 = vunpack.c.h.b16 %v240
    %v1485 = vunpack.c.l.b16 %v241
    %v1486 = vunpack.c.h.b16 %v241
    %v1487 = vunpack.c.l.b16 %v242
    %v1488 = vunpack.c.h.b16 %v242
    %v1489 = vunpack.c.l.b16 %v243
    %v1490 = vunpack.c.h.b16 %v243
    %v1491 = vunpack.c.l.b16 %v244
    %v1492 = vunpack.c.h.b16 %v244
    %v1493 = vunpack.c.l.b16 %v245
    %v1494 = vunpack.c.h.b16 %v245
    %v1495 = vunpack.c.l.b16 %v246
    %v1496 = vunpack.c.h.b16 %v246
    %v1497 = vunpack.c.l.b16 %v247
    %v1498 = vunpack.c.h.b16 %v247
    %v1499 = vunpack.c.l.b16 %v248
    %v1500 = vunpack.c.h.b16 %v248
    %v1501 = vunpack.c.l.b16 %v249
    %v1502 = vunpack.c.h.b16 %v249
    %v1503 = vunpack.c.l.b16 %v250
    %v1504 = vunpack.c.h.b16 %v250
    %v1505 = vunpack.c.l.b16 %v251
    %v1506 = vunpack.c.h.b16 %v251
    %v1507 = vunpack.c.l.b16 %v252
    %v1508 = vunpack.c.h.b16 %v252
    %v1509 = vunpack.c.l.b16 %v253
    %v1510 = vunpack.c.h.b16 %v253
    %v1511 = vunpack.c.l.b16 %v254
    %v1512 = vunpack.c.h.b16 %v254
    %v1513 = vunpack.c.l.b16 %v255
    %v1514 = vunpack.c.h.b16 %v255
    %v1515 = vunpack.c.l.b16 %v256
    %v1516 = vunpack.c.h.b16 %v256
    %v1517 = vunpack.c.l.b16 %v257
    %v1518 = vunpack.c.h.b16 %v257
    %v1519 = vunpack.c.l.b16 %v258
    %v1520 = vunpack.c.h.b16 %v258
    %v1521 = vunpack.c.l.b16 %v259
    %v1522 = vunpack.c.h.b16 %v259
    %v1523 = vunpack.c.l.b16 %v260
    %v1524 = vunpack.c.h.b16 %v260
    %v1525 = vunpack.c.l.b16 %v261
    %v1526 = vunpack.c.h.b16 %v261
    %v1527 = vunpack.c.l.b16 %v262
    %v1528 = vunpack.c.h.b16 %v262
    %v1529 = vunpack.c.l.b16 %v263
    %v1530 = vunpack.c.h.b16 %v263
    %v1531 = vunpack.c.l.b16 %v264
    %v1532 = vunpack.c.h.b16 %v264
    %v1533 = vunpack.c.l.b16 %v265
    %v1534 = vunpack.c.h.b16 %v265
    %v1535 = vunpack.c.l.b16 %v266
    %v1536 = vunpack.c.h.b16 %v266
    %v1537 = vunpack.c.l.b16 %v267
    %v1538 = vunpack.c.h.b16 %v267
    %v1539 = vunpack.c.l.b16 %v268
    %v1540 = vunpack.c.h.b16 %v268
    %v1541 = vunpack.c.l.b16 %v269
    %v1542 = vunpack.c.h.b16 %v269
    %v1543 = vunpack.c.l.b16 %v270
    %v1544 = vunpack.c.h.b16 %v270
    %v1545 = vunpack.c.l.b16 %v271
    %v1546 = vunpack.c.h.b16 %v271
    %v1547 = vunpack.c.l.b16 %v272
    %v1548 = vunpack.c.h.b16 %v272
    %v1549 = vunpack.c.l.b16 %v273
    %v1550 = vunpack.c.h.b16 %v273
    %v1551 = vunpack.c.l.b16 %v274
    %v1552 = vunpack.c.h.b16 %v274
    %v1553 = vunpack.c.l.b16 %v275
    %v1554 = vunpack.c.h.b16 %v275
    %v1555 = vunpack.c.l.b16 %v276
    %v1556 = vunpack.c.h.b16 %v276
    %v1557 = vunpack.c.l.b16 %v277
    %v1558 = vunpack.c.h.b16 %v277
    %v1559 = vunpack.c.l.b16 %v278
    %v1560 = vunpack.c.h.b16 %v278
    %v1561 = vunpack.c.l.b16 %v279
    %v1562 = vunpack.c.h.b16 %v279
    %v1563 = vunpack.c.l.b16 %v280
    %v1564 = vunpack.c.h.b16 %v280
    %v1565 = vunpack.c.l.b16 %v281
    %v1566 = vunpack.c.h.b16 %v281
    %v1567 = vunpack.c.l.b16 %v282
    %v1568 = vunpack.c.h.b16 %v282
    %v1569 = vunpack.c.l.b16 %v283
    %v1570 = vunpack.c.h.b16 %v283
    %v1571 = vunpack.c.l.b16 %v284
    %v1572 = vunpack.c.h.b16 %v284
    %v1573 = vunpack.c.l.b16 %v285
    %v1574 = vunpack.c.h.b16 %v285
    %v1575 = vunpack.c.l.b16 %v286
    %v1576 = vunpack.c.h.b16 %v286
    %v1577 = vunpack.c.l.b16 %v287
    %v1578 = vunpack.c.h.b16 %v287
    %v1579 = vunpack.c.l.b16 %v288
    %v1580 = vunpack.c.h.b16 %v288
    %v1581 = vunpack.c.l.b16 %v289
    %v1582 = vunpack.c.h.b16 %v289
    %v1583 = vunpack.c.l.b16 %v290
    %v1584 = vunpack.c.h.b16 %v290
    %v1585 = vunpack.c.l.b16 %v291
    %v1586 = vunpack.c.h.b16 %v291
    %v1587 = vunpack.c.l.b16 %v292
    %v1588 = vunpack.c.h.b16 %v292
    %v1589 = vunpack.c.l.b16 %v293
    %v1590 = vunpack.c.h.b16 %v293
    %v1591 = vunpack.c.l.b16 %v294
    %v1592 = vunpack.c.h.b16 %v294
    %v1593 = vunpack.c.l.b16 %v295
    %v1594 = vunpack.c.h.b16 %v295
    %v1595 = vunpack.c.l.b16 %v296
    %v1596 = vunpack.c.h.b16 %v296
    %v1597 = vunpack.c.l.b16 %v297
    %v1598 = vunpack.c.h.b16 %v297
    %v1599 = vunpack.c.l.b16 %v298
    %v1600 = vunpack.c.h.b16 %v298
    %v1601 = vunpack.c.l.b16 %v299
    %v1602 = vunpack.c.h.b16 %v299
    %v1603 = vunpack.c.l.b16 %v300
    %v1604 = vunpack.c.h.b16 %v300
    %v1605 = vunpack.c.l.b16 %v301
    %v1606 = vunpack.c.h.b16 %v301
    %v1607 = vunpack.c.l.b16 %v302
    %v1608 = vunpack.c.h.b16 %v302
    %v1609 = vunpack.c.l.b16 %v303
    %v1610 = vunpack.c.h.b16 %v303
    %v1611 = vunpack.c.l.b16 %v304
    %v1612 = vunpack.c.h.b16 %v304
    %v1613 = vunpack.c.l.b16 %v305
    %v1614 = vunpack.c.h.b16 %v305
    %v1615 = vunpack.c.l.b16 %v306
    %v1616 = vunpack.c.h.b16 %v306
    %v1617 = vunpack.c.l.b16 %v307
    %v1618 = vunpack.c.h.b16 %v307
    %v1619 = vunpack.c.l.b16 %v308
    %v1620 = vunpack.c.h.b16 %v308
    %v1621 = vunpack.c.l.b16 %v309
    %v1622 = vunpack.c.h.b16 %v309
    %v1623 = vunpack.c.l.b16 %v310
    %v1624 = vunpack.c.h.b16 %v310
    %v1625 = vunpack.c.l.b16 %v311
    %v1626 = vunpack.c.h.b16 %v311
    %v1627 = vunpack.c.l.b16 %v312
    %v1628 = vunpack.c.h.b16 %v312
    %v1629 = vunpack.c.l.b16 %v313
    %v1630 = vunpack.c.h.b16 %v313
    %v1631 = vunpack.c.l.b16 %v314
    %v1632 = vunpack.c.h.b16 %v314
    %v1633 = vunpack.c.l.b16 %v315
    %v1634 = vunpack.c.h.b16 %v315
    %v1635 = vunpack.c.l.b16 %v316
    %v1636 = vunpack.c.h.b16 %v316
    %v1637 = vunpack.c.l.b16 %v317
    %v1638 = vunpack.c.h.b16 %v317
    %v1639 = vunpack.c.l.b16 %v318
    %v1640 = vunpack.c.h.b16 %v318
    %v1641 = vunpack.c.l.b16 %v319
    %v1642 = vunpack.c.h.b16 %v319
    %v1643 = vunpack.c.l.b16 %v320
    %v1644 = vunpack.c.h.b16 %v320
    %v1645 = vunpack.c.l.b16 %v321
    %v1646 = vunpack.c.h.b16 %v321
    %v1647 = vunpack.c.l.b16 %v322
    %v1648 = vunpack.c.h.b16 %v322
    %v1649 = vunpack.c.l.b16 %v323
    %v1650 = vunpack.c.h.b16 %v323
    %v1651 = vunpack.c.l.b16 %v324
    %v1652 = vunpack.c.h.b16 %v324
    %v1653 = vunpack.c.l.b16 %v325
    %v1654 = vunpack.c.h.b16 %v325
    %v1655 = vunpack.c.l.b16 %v326
    %v1656 = vunpack.c.h.b16 %v326
    %v1657 = vunpack.c.l.b16 %v327
    %v1658 = vunpack.c.h.b16 %v327
    %v1659 = vunpack.c.l.b16 %v328
    %v1660 = vunpack.c.h.b16 %v328
    %v1661 = vunpack.c.l.b16 %v329
    %v1662 = vunpack.c.h.b16 %v329
    %v1663 = vunpack.c.l.b16 %v330
    %v1664 = vunpack.c.h.b16 %v330
    %v1665 = vunpack.c.l.b16 %v331
    %v1666 = vunpack.c.h.b16 %v331
    %v1667 = vunpack.c.l.b16 %v332
    %v1668 = vunpack.c.h.b16 %v332
    %v1669 = vunpack.c.l.b16 %v333
    %v1670 = vunpack.c.h.b16 %v333
    %v1671 = vunpack.c.l.b16 %v334
    %v1672 = vunpack.c.h.b16 %v334
    %v1673 = vunpack.c.l.b16 %v335
    %v1674 = vunpack.c.h.b16 %v335
    %v1675 = vunpack.c.l.b16 %v336
    %v1676 = vunpack.c.h.b16 %v336
    %v1677 = vunpack.c.l.b16 %v337
    %v1678 = vunpack.c.h.b16 %v337
    %v1679 = vunpack.c.l.b16 %v338
    %v1680 = vunpack.c.h.b16 %v338
    %v1681 = vunpack.c.l.b16 %v339
    %v1682 = vunpack.c.h.b16 %v339
    %v1683 = vunpack.c.l.b16 %v340
    %v1684 = vunpack.c.h.b16 %v340
    %v1685 = vunpack.c.l.b16 %v341
    %v1686 = vunpack.c.h.b16 %v341
    %v1687 = vunpack.c.l.b16 %v342
    %v1688 = vunpack.c.h.b16 %v342
    %v1689 = vunpack.c.l.b16 %v343
    %v1690 = vunpack.c.h.b16 %v343
    %v1691 = vunpack.c.l.b16 %v344
    %v1692 = vunpack.c.h.b16 %v344
    %v1693 = vunpack.c.l.b16 %v345
    %v1694 = vunpack.c.h.b16 %v345
    %v1695 = vunpack.c.l.b16 %v346
    %v1696 = vunpack.c.h.b16 %v346
    %v1697 = vunpack.c.l.b16 %v347
    %v1698 = vunpack.c.h.b16 %v347
    %v1699 = vunpack.c.l.b16 %v348
    %v1700 = vunpack.c.h.b16 %v348
    %v1701 = vunpack.c.l.b16 %v349
    %v1702 = vunpack.c.h.b16 %v349
    %v1703 = vunpack.c.l.b16 %v350
    %v1704 = vunpack.c.h.b16 %v350
    %v1705 = vunpack.c.l.b16 %v351
    %v1706 = vunpack.c.h.b16 %v351
    %v1707 = vunpack.c.l.b16 %v352
    %v1708 = vunpack.c.h.b16 %v352
    %v1709 = vunpack.c.l.b16 %v353
    %v1710 = vunpack.c.h.b16 %v353
    %v1711 = vunpack.c.l.b16 %v354
    %v1712 = vunpack.c.h.b16 %v354
    %v1713 = vunpack.c.l.b16 %v355
    %v1714 = vunpack.c.h.b16 %v355
    %v1715 = vunpack.c.l.b16 %v356
    %v1716 = vunpack.c.h.b16 %v356
    %v1717 = vunpack.c.l.b16 %v357
    %v1718 = vunpack.c.h.b16 %v357
    %v1719 = vunpack.c.l.b16 %v358
    %v1720 = vunpack.c.h.b16 %v358
    %v1721 = vunpack.c.l.b16 %v359
    %v1722 = vunpack.c.h.b16 %v359
    %v1723 = vunpack.c.l.b16 %v360
    %v1724 = vunpack.c.h.b16 %v360
    %v1725 = vunpack.c.l.b16 %v361
    %v1726 = vunpack.c.h.b16 %v361
    %v1727 = vunpack.c.l.b16 %v362
    %v1728 = vunpack.c.h.b16 %v362
    %v1729 = vunpack.c.l.b16 %v363
    %v1730 = vunpack.c.h.b16 %v363
    %v1731 = vunpack.c.l.b16 %v364
    %v1732 = vunpack.c.h.b16 %v364
    %v1733 = vunpack.c.l.b16 %v365
    %v1734 = vunpack.c.h.b16 %v365
    %v1735 = vunpack.c.l.b16 %v366
    %v1736 = vunpack.c.h.b16 %v366
    %v1737 = vunpack.c.l.b16 %v367
    %v1738 = vunpack.c.h.b16 %v367
    %v1739 = vunpack.c.l.b16 %v368
    %v1740 = vunpack.c.h.b16 %v368
    %v1741 = vunpack.c.l.b16 %v369
    %v1742 = vunpack.c.h.b16 %v369
    %v1743 = vunpack.c.l.b16 %v370
    %v1744 = vunpack.c.h.b16 %v370
    %v1745 = vunpack.c.l.b16 %v371
    %v1746 = vunpack.c.h.b16 %v371
    %v1747 = vunpack.c.l.b16 %v372
    %v1748 = vunpack.c.h.b16 %v372
    %v1749 = vunpack.c.l.b16 %v373
    %v1750 = vunpack.c.h.b16 %v373
    %v1751 = vunpack.c.l.b16 %v374
    %v1752 = vunpack.c.h.b16 %v374
    %v1753 = vunpack.c.l.b16 %v375
    %v1754 = vunpack.c.h.b16 %v375
    %v1755 = vunpack.c.l.b16 %v376
    %v1756 = vunpack.c.h.b16 %v376
    %v1757 = vunpack.c.l.b16 %v377
    %v1758 = vunpack.c.h.b16 %v377
    %v1759 = vunpack.c.l.b16 %v378
    %v1760 = vunpack.c.h.b16 %v378
    %v1761 = vunpack.c.l.b16 %v379
    %v1762 = vunpack.c.h.b16 %v379
    %v1763 = vunpack.c.l.b16 %v380
    %v1764 = vunpack.c.h.b16 %v380
    %v1765 = vunpack.c.l.b16 %v381
    %v1766 = vunpack.c.h.b16 %v381
    %v1767 = vunpack.c.l.b16 %v382
    %v1768 = vunpack.c.h.b16 %v382
    %v1769 = vunpack.c.l.b16 %v383
    %v1770 = vunpack.c.h.b16 %v383
    %v1771 = vunpack.c.l.b16 %v384
    %v1772 = vunpack.c.h.b16 %v384
    %v1773 = vunpack.c.l.b16 %v385
    %v1774 = vunpack.c.h.b16 %v385
    %v1775 = vunpack.c.l.b16 %v386
    %v1776 = vunpack.c.h.b16 %v386
    %v1777 = vunpack.c.l.b16 %v387
    %v1778 = vunpack.c.h.b16 %v387
    %v1779 = vunpack.c.l.b16 %v388
    %v1780 = vunpack.c.h.b16 %v388
    %v1781 = vunpack.c.l.b16 %v389
    %v1782 = vunpack.c.h.b16 %v389
    %v1783 = vunpack.c.l.b16 %v390
    %v1784 = vunpack.c.h.b16 %v390
    %v1785 = vunpack.c.l.b16 %v391
    %v1786 = vunpack.c.h.b16 %v391
    %v1787 = vunpack.c.l.b16 %v392
    %v1788 = vunpack.c.h.b16 %v392
    %v1789 = vunpack.c.l.b16 %v393
    %v1790 = vunpack.c.h.b16 %v393
    %v1791 = vunpack.c.l.b16 %v394
    %v1792 = vunpack.c.h.b16 %v394
    %v1793 = vunpack.c.l.b16 %v395
    %v1794 = vunpack.c.h.b16 %v395
    %v1795 = vunpack.c.l.b16 %v396
    %v1796 = vunpack.c.h.b16 %v396
    %v1797 = vunpack.c.l.b16 %v397
    %v1798 = vunpack.c.h.b16 %v397
    %v1799 = vunpack.c.l.b16 %v398
    %v1800 = vunpack.c.h.b16 %v398
    %v1801 = vunpack.c.l.b16 %v399
    %v1802 = vunpack.c.h.b16 %v399
    %v1803 = vunpack.c.l.b16 %v400
    %v1804 = vunpack.c.h.b16 %v400
    %v1805 = vunpack.c.l.b16 %v401
    %v1806 = vunpack.c.h.b16 %v401
    %v1807 = vunpack.c.l.b16 %v402
    %v1808 = vunpack.c.h.b16 %v402
    %v1809 = vunpack.c.l.b16 %v403
    %v1810 = vunpack.c.h.b16 %v403
    %v1811 = vunpack.c.l.b16 %v404
    %v1812 = vunpack.c.h.b16 %v404
    %v1813 = vunpack.c.l.b16 %v405
    %v1814 = vunpack.c.h.b16 %v405
    %v1815 = vunpack.c.l.b16 %v406
    %v1816 = vunpack.c.h.b16 %v406
    %v1817 = vunpack.c.l.b16 %v407
    %v1818 = vunpack.c.h.b16 %v407
    %v1819 = vunpack.c.l.b16 %v408
    %v1820 = vunpack.c.h.b16 %v408
    %v1821 = vunpack.c.l.b16 %v409
    %v1822 = vunpack.c.h.b16 %v409
    %v1823 = vunpack.c.l.b16 %v410
    %v1824 = vunpack.c.h.b16 %v410
    %v1825 = vunpack.c.l.b16 %v411
    %v1826 = vunpack.c.h.b16 %v411
    %v1827 = vunpack.c.l.b16 %v412
    %v1828 = vunpack.c.h.b16 %v412
    %v1829 = vunpack.c.l.b16 %v413
    %v1830 = vunpack.c.h.b16 %v413
    %v1831 = vunpack.c.l.b16 %v414
    %v1832 = vunpack.c.h.b16 %v414
    %v1833 = vunpack.c.l.b16 %v415
    %v1834 = vunpack.c.h.b16 %v415
    %v1835 = vunpack.c.l.b16 %v416
    %v1836 = vunpack.c.h.b16 %v416
    %v1837 = vunpack.c.l.b16 %v417
    %v1838 = vunpack.c.h.b16 %v417
    %v1839 = vunpack.c.l.b16 %v418
    %v1840 = vunpack.c.h.b16 %v418
    %v1841 = vunpack.c.l.b16 %v419
    %v1842 = vunpack.c.h.b16 %v419
    %v1843 = vunpack.c.l.b16 %v420
    %v1844 = vunpack.c.h.b16 %v420
    %v1845 = vunpack.c.l.b16 %v421
    %v1846 = vunpack.c.h.b16 %v421
    %v1847 = vunpack.c.l.b16 %v422
    %v1848 = vunpack.c.h.b16 %v422
    %v1849 = vunpack.c.l.b16 %v423
    %v1850 = vunpack.c.h.b16 %v423
    %v1851 = vunpack.c.l.b16 %v424
    %v1852 = vunpack.c.h.b16 %v424
    %v1853 = vunpack.c.l.b16 %v425
    %v1854 = vunpack.c.h.b16 %v425
    %v1855 = vunpack.c.l.b16 %v426
    %v1856 = vunpack.c.h.b16 %v426
    %v1857 = vunpack.c.l.b16 %v427
    %v1858 = vunpack.c.h.b16 %v427
    %v1859 = vunpack.c.l.b16 %v428
    %v1860 = vunpack.c.h.b16 %v428
    %v1861 = vunpack.c.l.b16 %v429
    %v1862 = vunpack.c.h.b16 %v429
    %v1863 = vunpack.c.l.b16 %v430
    %v1864 = vunpack.c.h.b16 %v430
    %v1865 = vunpack.c.l.b16 %v431
    %v1866 = vunpack.c.h.b16 %v431
    %v1867 = vunpack.c.l.b16 %v432
    %v1868 = vunpack.c.h.b16 %v432
    %v1869 = vunpack.c.l.b16 %v433
    %v1870 = vunpack.c.h.b16 %v433
    %v1871 = vunpack.c.l.b16 %v434
    %v1872 = vunpack.c.h.b16 %v434
    %v1873 = vunpack.c.l.b16 %v435
    %v1874 = vunpack.c.h.b16 %v435
    %v1875 = vunpack.c.l.b16 %v436
    %v1876 = vunpack.c.h.b16 %v436
    %v1877 = vunpack.c.l.b16 %v437
    %v1878 = vunpack.c.h.b16 %v437
    %v1879 = vunpack.c.l.b16 %v438
    %v1880 = vunpack.c.h.b16 %v438
    %v1881 = vunpack.c.l.b16 %v439
    %v1882 = vunpack.c.h.b16 %v439
    %v1883 = vunpack.c.l.b16 %v440
    %v1884 = vunpack.c.h.b16 %v440
    %v1885 = vunpack.c.l.b16 %v441
    %v1886 = vunpack.c.h.b16 %v441
    %v1887 = vunpack.c.l.b16 %v442
    %v1888 = vunpack.c.h.b16 %v442
    %v1889 = vunpack.c.l.b16 %v443
    %v1890 = vunpack.c.h.b16 %v443
    %v1891 = vunpack.c.l.b16 %v444
    %v1892 = vunpack.c.h.b16 %v444
    %v1893 = vunpack.c.l.b16 %v445
    %v1894 = vunpack.c.h.b16 %v445
    %v1895 = vunpack.c.l.b16 %v446
    %v1896 = vunpack.c.h.b16 %v446
    %v1897 = vunpack.c.l.b16 %v447
    %v1898 = vunpack.c.h.b16 %v447
    %v1899 = vunpack.c.l.b16 %v448
    %v1900 = vunpack.c.h.b16 %v448
    %v1901 = vunpack.c.l.b16 %v449
    %v1902 = vunpack.c.h.b16 %v449
    %v1903 = vunpack.c.l.b16 %v450
    %v1904 = vunpack.c.h.b16 %v450
    %v1905 = vunpack.c.l.b16 %v451
    %v1906 = vunpack.c.h.b16 %v451
    %v1907 = vunpack.c.l.b16 %v452
    %v1908 = vunpack.c.h.b16 %v452
    %v1909 = vunpack.c.l.b16 %v453
    %v1910 = vunpack.c.h.b16 %v453
    %v1911 = vunpack.c.l.b16 %v454
    %v1912 = vunpack.c.h.b16 %v454
    %v1913 = vunpack.c.l.b16 %v455
    %v1914 = vunpack.c.h.b16 %v455
    %v1915 = vunpack.c.l.b16 %v456
    %v1916 = vunpack.c.h.b16 %v456
    %v1917 = vunpack.c.l.b16 %v457
    %v1918 = vunpack.c.h.b16 %v457
    %v1919 = vunpack.c.l.b16 %v458
    %v1920 = vunpack.c.h.b16 %v458
    %v1921 = vunpack.c.l.b16 %v459
    %v1922 = vunpack.c.h.b16 %v459
    %v1923 = vunpack.c.l.b16 %v460
    %v1924 = vunpack.c.h.b16 %v460
    %v1925 = vunpack.c.l.b16 %v461
    %v1926 = vunpack.c.h.b16 %v461
    %v1927 = vunpack.c.l.b16 %v462
    %v1928 = vunpack.c.h.b16 %v462
    %v1929 = vunpack.c.l.b16 %v463
    %v1930 = vunpack.c.h.b16 %v463
    %v1931 = vunpack.c.l.b16 %v464
    %v1932 = vunpack.c.h.b16 %v464
    %v1933 = vunpack.c.l.b16 %v465
    %v1934 = vunpack.c.h.b16 %v465
    %v1935 = vunpack.c.l.b16 %v466
    %v1936 = vunpack.c.h.b16 %v466
    %v1937 = vunpack.c.l.b16 %v467
    %v1938 = vunpack.c.h.b16 %v467
    %v1939 = vunpack.c.l.b16 %v468
    %v1940 = vunpack.c.h.b16 %v468
    %v1941 = vunpack.c.l.b16 %v469
    %v1942 = vunpack.c.h.b16 %v469
    %v1943 = vunpack.c.l.b16 %v470
    %v1944 = vunpack.c.h.b16 %v470
    %v1945 = vunpack.c.l.b16 %v471
    %v1946 = vunpack.c.h.b16 %v471
    %v1947 = vunpack.c.l.b16 %v472
    %v1948 = vunpack.c.h.b16 %v472
    %v1949 = vunpack.c.l.b16 %v473
    %v1950 = vunpack.c.h.b16 %v473
    %v1951 = vunpack.c.l.b16 %v474
    %v1952 = vunpack.c.h.b16 %v474
    %v1953 = vunpack.c.l.b16 %v475
    %v1954 = vunpack.c.h.b16 %v475
    %v1955 = vunpack.c.l.b16 %v476
    %v1956 = vunpack.c.h.b16 %v476
    %v1957 = vunpack.c.l.b16 %v477
    %v1958 = vunpack.c.h.b16 %v477
    %v1959 = vunpack.c.l.b16 %v478
    %v1960 = vunpack.c.h.b16 %v478
    %v1961 = vunpack.c.l.b16 %v479
    %v1962 = vunpack.c.h.b16 %v479
    %v1963 = vunpack.c.l.b16 %v480
    %v1964 = vunpack.c.h.b16 %v480
    %v1965 = vunpack.c.l.b16 %v481
    %v1966 = vunpack.c.h.b16 %v481
    %v1967 = vunpack.c.l.b16 %v482
    %v1968 = vunpack.c.h.b16 %v482
    %v1969 = vunpack.c.l.b16 %v483
    %v1970 = vunpack.c.h.b16 %v483
    %v1971 = vunpack.c.l.b16 %v484
    %v1972 = vunpack.c.h.b16 %v484
    %v1973 = vunpack.c.l.b16 %v485
    %v1974 = vunpack.c.h.b16 %v485
    %v1975 = vunpack.c.l.b16 %v486
    %v1976 = vunpack.c.h.b16 %v486
    %v1977 = vunpack.c.l.b16 %v487
    %v1978 = vunpack.c.h.b16 %v487
    %v1979 = vunpack.c.l.b16 %v488
    %v1980 = vunpack.c.h.b16 %v488
    %v1981 = vunpack.c.l.b16 %v489
    %v1982 = vunpack.c.h.b16 %v489
    %v1983 = vunpack.c.l.b16 %v490
    %v1984 = vunpack.c.h.b16 %v490
    %v1985 = vunpack.c.l.b16 %v491
    %v1986 = vunpack.c.h.b16 %v491
    %v1987 = vunpack.c.l.b16 %v492
    %v1988 = vunpack.c.h.b16 %v492
    %v1989 = vunpack.c.l.b16 %v493
    %v1990 = vunpack.c.h.b16 %v493
    %v1991 = vunpack.c.l.b16 %v494
    %v1992 = vunpack.c.h.b16 %v494
    %v1993 = vunpack.c.l.b16 %v495
    %v1994 = vunpack.c.h.b16 %v495
    %v1995 = vunpack.c.l.b16 %v496
    %v1996 = vunpack.c.h.b16 %v496
    %v1997 = vunpack.c.l.b16 %v497
    %v1998 = vunpack.c.h.b16 %v497
    %v1999 = vunpack.c.l.b16 %v498
    %v2000 = vunpack.c.h.b16 %v498
    %v2001 = vunpack.c.l.b16 %v499
    %v2002 = vunpack.c.h.b16 %v499
    %v2003 = vunpack.c.l.b16 %v500
    %v2004 = vunpack.c.h.b16 %v500
    %v2005 = vunpack.c.l.b16 %v501
    %v2006 = vunpack.c.h.b16 %v501
    %v2007 = vunpack.c.l.b16 %v502
    %v2008 = vunpack.c.h.b16 %v502
    %v2009 = vunpack.c.l.b16 %v503
    %v2010 = vunpack.c.h.b16 %v503
    %v2011 = vunpack.c.l.b16 %v504
    %v2012 = vunpack.c.h.b16 %v504
    %v2013 = vunpack.c.l.b16 %v505
    %v2014 = vunpack.c.h.b16 %v505
    %v2015 = vunpack.c.l.b16 %v506
    %v2016 = vunpack.c.h.b16 %v506
    %v2017 = vunpack.c.l.b16 %v507
    %v2018 = vunpack.c.h.b16 %v507
    %v2019 = vunpack.c.l.b16 %v508
    %v2020 = vunpack.c.h.b16 %v508
    %v2021 = vunpack.c.l.b16 %v509
    %v2022 = vunpack.c.h.b16 %v509
    %v2023 = vunpack.c.l.b16 %v510
    %v2024 = vunpack.c.h.b16 %v510
    %v2025 = vunpack.c.l.b16 %v511
    %v2026 = vunpack.c.h.b16 %v511
    %v2027 = vunpack.c.l.b16 %v512
    %v2028 = vunpack.c.h.b16 %v512
    %v2029 = vunpack.c.l.b16 %v513
    %v2030 = vunpack.c.h.b16 %v513
    %v2031 = vunpack.c.l.b16 %v514
    %v2032 = vunpack.c.h.b16 %v514
    %v2033 = vunpack.c.l.b16 %v515
    %v2034 = vunpack.c.h.b16 %v515
    %v2035 = vunpack.c.l.b16 %v516
    %v2036 = vunpack.c.h.b16 %v516
    %v2037 = vunpack.c.l.b16 %v517
    %v2038 = vunpack.c.h.b16 %v517
    %v2039 = vunpack.c.l.b16 %v518
    %v2040 = vunpack.c.h.b16 %v518
    %v2041 = vunpack.c.l.b16 %v519
    %v2042 = vunpack.c.h.b16 %v519
    %v2043 = vunpack.c.l.b16 %v520
    %v2044 = vunpack.c.h.b16 %v520
    %v2045 = vunpack.c.l.b16 %v521
    %v2046 = vunpack.c.h.b16 %v521
    %v2047 = vunpack.c.l.b16 %v522
    %v2048 = vunpack.c.h.b16 %v522
    %v2049 = vunpack.c.l.b16 %v523
    %v2050 = vunpack.c.h.b16 %v523
    %v2051 = vunpack.c.l.b16 %v524
    %v2052 = vunpack.c.h.b16 %v524
    %v2053 = vunpack.c.l.b16 %v525
    %v2054 = vunpack.c.h.b16 %v525
    %v2055 = vunpack.c.l.b16 %v526
    %v2056 = vunpack.c.h.b16 %v526
    %v2057 = vunpack.c.l.b16 %v527
    %v2058 = vunpack.c.h.b16 %v527
    %v2059 = vunpack.c.l.b16 %v528
    %v2060 = vunpack.c.h.b16 %v528
    %v2061 = vunpack.c.l.b16 %v529
    %v2062 = vunpack.c.h.b16 %v529
    %v2063 = vunpack.c.l.b16 %v530
    %v2064 = vunpack.c.h.b16 %v530
    %v2065 = vunpack.c.l.b16 %v531
    %v2066 = vunpack.c.h.b16 %v531
    %v2067 = vunpack.c.l.b16 %v532
    %v2068 = vunpack.c.h.b16 %v532
    %v2069 = vunpack.c.l.b16 %v533
    %v2070 = vunpack.c.h.b16 %v533
    %v2071 = vunpack.c.l.b16 %v534
    %v2072 = vunpack.c.h.b16 %v534
    %v2073 = vunpack.c.l.b16 %v535
    %v2074 = vunpack.c.h.b16 %v535
    %v2075 = vunpack.c.l.b16 %v536
    %v2076 = vunpack.c.h.b16 %v536
    %v2077 = vunpack.c.l.b16 %v537
    %v2078 = vunpack.c.h.b16 %v537
    %v2079 = vunpack.c.l.b16 %v538
    %v2080 = vunpack.c.h.b16 %v538
    %v2081 = vunpack.c.l.b16 %v539
    %v2082 = vunpack.c.h.b16 %v539
    %v2083 = vunpack.c.l.b16 %v540
    %v2084 = vunpack.c.h.b16 %v540
    %v2085 = vunpack.c.l.b16 %v541
    %v2086 = vunpack.c.h.b16 %v541
    %v2087 = vunpack.c.l.b16 %v542
    %v2088 = vunpack.c.h.b16 %v542
    %v2089 = vunpack.c.l.b16 %v543
    %v2090 = vunpack.c.h.b16 %v543
    %v2091 = vunpack.c.l.b16 %v544
    %v2092 = vunpack.c.h.b16 %v544
    %v2093 = vunpack.c.l.b16 %v545
    %v2094 = vunpack.c.h.b16 %v545
    %v2095 = vunpack.c.l.b16 %v546
    %v2096 = vunpack.c.h.b16 %v546
    %v2097 = vunpack.c.l.b16 %v547
    %v2098 = vunpack.c.h.b16 %v547
    %v2099 = vunpack.c.l.b16 %v548
    %v2100 = vunpack.c.h.b16 %v548
    %v2101 = vunpack.c.l.b16 %v549
    %v2102 = vunpack.c.h.b16 %v549
    %v2103 = vunpack.c.l.b16 %v550
    %v2104 = vunpack.c.h.b16 %v550
    %v2105 = vunpack.c.l.b16 %v551
    %v2106 = vunpack.c.h.b16 %v551
    %v2107 = vunpack.c.l.b16 %v552
    %v2108 = vunpack.c.h.b16 %v552
    %v2109 = vunpack.c.l.b16 %v553
    %v2110 = vunpack.c.h.b16 %v553
    %v2111 = vunpack.c.l.b16 %v554
    %v2112 = vunpack.c.h.b16 %v554
    %v2113 = vunpack.c.l.b16 %v555
    %v2114 = vunpack.c.h.b16 %v555
    %v2115 = vunpack.c.l.b16 %v556
    %v2116 = vunpack.c.h.b16 %v556
    %v2117 = vunpack.c.l.b16 %v557
    %v2118 = vunpack.c.h.b16 %v557
    %v2119 = vunpack.c.l.b16 %v558
    %v2120 = vunpack.c.h.b16 %v558
    %v2121 = vunpack.c.l.b16 %v559
    %v2122 = vunpack.c.h.b16 %v559
    %v2123 = vunpack.c.l.b16 %v560
    %v2124 = vunpack.c.h.b16 %v560
    %v2125 = vunpack.c.l.b16 %v561
    %v2126 = vunpack.c.h.b16 %v561
    %v2127 = vunpack.c.l.b16 %v562
    %v2128 = vunpack.c.h.b16 %v562
    %v2129 = vunpack.c.l.b16 %v563
    %v2130 = vunpack.c.h.b16 %v563
    %v2131 = vunpack.c.l.b16 %v564
    %v2132 = vunpack.c.h.b16 %v564
    %v2133 = vunpack.c.l.b16 %v565
    %v2134 = vunpack.c.h.b16 %v565
    %v2135 = vunpack.c.l.b16 %v566
    %v2136 = vunpack.c.h.b16 %v566
    %v2137 = vunpack.c.l.b16 %v567
    %v2138 = vunpack.c.h.b16 %v567
    %v2139 = vunpack.c.l.b16 %v568
    %v2140 = vunpack.c.h.b16 %v568
    %v2141 = vunpack.c.l.b16 %v569
    %v2142 = vunpack.c.h.b16 %v569
    %v2143 = vunpack.c.l.b16 %v570
    %v2144 = vunpack.c.h.b16 %v570
    %v2145 = vunpack.c.l.b16 %v571
    %v2146 = vunpack.c.h.b16 %v571
    %v2147 = vunpack.c.l.b16 %v572
    %v2148 = vunpack.c.h.b16 %v572
    %v2149 = vunpack.c.l.b16 %v573
    %v2150 = vunpack.c.h.b16 %v573
    %v2151 = vunpack.c.l.b16 %v574
    %v2152 = vunpack.c.h.b16 %v574
    %v2153 = vunpack.c.l.b16 %v575
    %v2154 = vunpack.c.h.b16 %v575
    %v2155 = vunpack.c.l.b16 %v576
    %v2156 = vunpack.c.h.b16 %v576
    %v2157 = vunpack.c.l.b16 %v577
    %v2158 = vunpack.c.h.b16 %v577
    %v2159 = vunpack.c.l.b16 %v578
    %v2160 = vunpack.c.h.b16 %v578
    %v2161 = vunpack.c.l.b16 %v579
    %v2162 = vunpack.c.h.b16 %v579
    %v2163 = vunpack.c.l.b16 %v580
    %v2164 = vunpack.c.h.b16 %v580
    %v2165 = vunpack.c.l.b16 %v581
    %v2166 = vunpack.c.h.b16 %v581
    %v2167 = vunpack.c.l.b16 %v582
    %v2168 = vunpack.c.h.b16 %v582
    %v2169 = vunpack.c.l.b16 %v583
    %v2170 = vunpack.c.h.b16 %v583
    %v2171 = vunpack.c.l.b16 %v584
    %v2172 = vunpack.c.h.b16 %v584
    %v2173 = vunpack.c.l.b16 %v585
    %v2174 = vunpack.c.h.b16 %v585
    %v2175 = vunpack.c.l.b16 %v586
    %v2176 = vunpack.c.h.b16 %v586
    %v2177 = vunpack.c.l.b16 %v587
    %v2178 = vunpack.c.h.b16 %v587
    %v2179 = vunpack.c.l.b16 %v588
    %v2180 = vunpack.c.h.b16 %v588
    %v2181 = vunpack.c.l.b16 %v589
    %v2182 = vunpack.c.h.b16 %v589
    %v2183 = vunpack.c.l.b16 %v590
    %v2184 = vunpack.c.h.b16 %v590
    %v2185 = vunpack.c.l.b16 %v591
    %v2186 = vunpack.c.h.b16 %v591
    %v2187 = vunpack.c.l.b16 %v592
    %v2188 = vunpack.c.h.b16 %v592
    %v2189 = vunpack.c.l.b16 %v593
    %v2190 = vunpack.c.h.b16 %v593
    %v2191 = vunpack.c.l.b16 %v594
    %v2192 = vunpack.c.h.b16 %v594
    %v2193 = vunpack.c.l.b16 %v595
    %v2194 = vunpack.c.h.b16 %v595
    %v2195 = vunpack.c.l.b16 %v596
    %v2196 = vunpack.c.h.b16 %v596
    %v2197 = vunpack.c.l.b16 %v597
    %v2198 = vunpack.c.h.b16 %v597
    %v2199 = vunpack.c.l.b16 %v598
    %v2200 = vunpack.c.h.b16 %v598
    %v2201 = vunpack.c.l.b16 %v599
    %v2202 = vunpack.c.h.b16 %v599
    %v2203 = vunpack.c.l.b16 %v600
    %v2204 = vunpack.c.h.b16 %v600
    %v2205 = vunpack.c.l.b16 %v601
    %v2206 = vunpack.c.h.b16 %v601
    %v2207 = vunpack.c.l.b16 %v602
    %v2208 = vunpack.c.h.b16 %v602
    %v2209 = vunpack.c.l.b16 %v603
    %v2210 = vunpack.c.h.b16 %v603
    %v2211 = vunpack.c.l.b16 %v604
    %v2212 = vunpack.c.h.b16 %v604
    %v2213 = vunpack.c.l.b16 %v605
    %v2214 = vunpack.c.h.b16 %v605
    %v2215 = vunpack.c.l.b16 %v606
    %v2216 = vunpack.c.h.b16 %v606
    %v2217 = vunpack.c.l.b16 %v607
    %v2218 = vunpack.c.h.b16 %v607
    %v2219 = vunpack.c.l.b16 %v608
    %v2220 = vunpack.c.h.b16 %v608
    %v2221 = vunpack.c.l.b16 %v609
    %v2222 = vunpack.c.h.b16 %v609
    %v2223 = vunpack.c.l.b16 %v610
    %v2224 = vunpack.c.h.b16 %v610
    %v2225 = vunpack.c.l.b16 %v611
    %v2226 = vunpack.c.h.b16 %v611
    %v2227 = vunpack.c.l.b16 %v612
    %v2228 = vunpack.c.h.b16 %v612
    %v2229 = vunpack.c.l.b16 %v613
    %v2230 = vunpack.c.h.b16 %v613
    %v2231 = vunpack.c.l.b16 %v614
    %v2232 = vunpack.c.h.b16 %v614
    %v2233 = vunpack.c.l.b16 %v615
    %v2234 = vunpack.c.h.b16 %v615
    %v2235 = vunpack.c.l.b16 %v616
    %v2236 = vunpack.c.h.b16 %v616
    %v2237 = vpack.c.b16 %v1229, %v1213
    %v2238 = vpack.c.b16 %v1230, %v1214
    %v2239 = vpack.c.b16 %v1231, %v1215
    %v2240 = vpack.c.b16 %v1232, %v1216
    %v2241 = vpack.c.b16 %v1233, %v1217
    %v2242 = vpack.c.b16 %v1234, %v1218
    %v2243 = vpack.c.b16 %v1235, %v1219
    %v2244 = vpack.c.b16 %v1236, %v1220
    %v2245 = vpack.c.b16 %v1237, %v1221
    %v2246 = vpack.c.b16 %v1238, %v1222
    %v2247 = vpack.c.b16 %v1239, %v1223
    %v2248 = vpack.c.b16 %v1240, %v1224
    %v2249 = vpack.c.b16 %v1241, %v1225
    %v2250 = vpack.c.b16 %v1242, %v1226
    %v2251 = vpack.c.b16 %v1243, %v1227
    %v2252 = vpack.c.b16 %v1244, %v1228
    %v2253 = vpack.c.b16 %v1261, %v1245
    %v2254 = vpack.c.b16 %v1262, %v1246
    %v2255 = vpack.c.b16 %v1263, %v1247
    %v2256 = vpack.c.b16 %v1264, %v1248
    %v2257 = vpack.c.b16 %v1265, %v1249
    %v2258 = vpack.c.b16 %v1266, %v1250
    %v2259 = vpack.c.b16 %v1267, %v1251
    %v2260 = vpack.c.b16 %v1268, %v1252
    %v2261 = vpack.c.b16 %v1269, %v1253
    %v2262 = vpack.c.b16 %v1270, %v1254
    %v2263 = vpack.c.b16 %v1271, %v1255
    %v2264 = vpack.c.b16 %v1272, %v1256
    %v2265 = vpack.c.b16 %v1273, %v1257
    %v2266 = vpack.c.b16 %v1274, %v1258
    %v2267 = vpack.c.b16 %v1275, %v1259
    %v2268 = vpack.c.b16 %v1276, %v1260
    %v2269 = vpack.c.b16 %v1293, %v1277
    %v2270 = vpack.c.b16 %v1294, %v1278
    %v2271 = vpack.c.b16 %v1295, %v1279
    %v2272 = vpack.c.b16 %v1296, %v1280
    %v2273 = vpack.c.b16 %v1297, %v1281
    %v2274 = vpack.c.b16 %v1298, %v1282
    %v2275 = vpack.c.b16 %v1299, %v1283
    %v2276 = vpack.c.b16 %v1300, %v1284
    %v2277 = vpack.c.b16 %v1301, %v1285
    %v2278 = vpack.c.b16 %v1302, %v1286
    %v2279 = vpack.c.b16 %v1303, %v1287
    %v2280 = vpack.c.b16 %v1304, %v1288
    %v2281 = vpack.c.b16 %v1305, %v1289
    %v2282 = vpack.c.b16 %v1306, %v1290
    %v2283 = vpack.c.b16 %v1307, %v1291
    %v2284 = vpack.c.b16 %v1308, %v1292
    %v2285 = vpack.c.b16 %v1325, %v1309
    %v2286 = vpack.c.b16 %v1326, %v1310
    %v2287 = vpack.c.b16 %v1327, %v1311
    %v2288 = vpack.c.b16 %v1328, %v1312
    %v2289 = vpack.c.b16 %v1329, %v1313
    %v2290 = vpack.c.b16 %v1330, %v1314
    %v2291 = vpack.c.b16 %v1331, %v1315
    %v2292 = vpack.c.b16 %v1332, %v1316
    %v2293 = vpack.c.b16 %v1333, %v1317
    %v2294 = vpack.c.b16 %v1334, %v1318
    %v2295 = vpack.c.b16 %v1335, %v1319
    %v2296 = vpack.c.b16 %v1336, %v1320
    %v2297 = vpack.c.b16 %v1337, %v1321
    %v2298 = vpack.c.b16 %v1338, %v1322
    %v2299 = vpack.c.b16 %v1339, %v1323
    %v2300 = vpack.c.b16 %v1340, %v1324
    %v2301 = vpack.c.b16 %v1357, %v1341
    %v2302 = vpack.c.b16 %v1358, %v1342
    %v2303 = vpack.c.b16 %v1359, %v1343
    %v2304 = vpack.c.b16 %v1360, %v1344
    %v2305 = vpack.c.b16 %v1361, %v1345
    %v2306 = vpack.c.b16 %v1362, %v1346
    %v2307 = vpack.c.b16 %v1363, %v1347
    %v2308 = vpack.c.b16 %v1364, %v1348
    %v2309 = vpack.c.b16 %v1365, %v1349
    %v2310 = vpack.c.b16 %v1366, %v1350
    %v2311 = vpack.c.b16 %v1367, %v1351
    %v2312 = vpack.c.b16 %v1368, %v1352
    %v2313 = vpack.c.b16 %v1369, %v1353
    %v2314 = vpack.c.b16 %v1370, %v1354
    %v2315 = vpack.c.b16 %v1371, %v1355
    %v2316 = vpack.c.b16 %v1372, %v1356
    %v2317 = vpack.c.b16 %v1389, %v1373
    %v2318 = vpack.c.b16 %v1390, %v1374
    %v2319 = vpack.c.b16 %v1391, %v1375
    %v2320 = vpack.c.b16 %v1392, %v1376
    %v2321 = vpack.c.b16 %v1393, %v1377
    %v2322 = vpack.c.b16 %v1394, %v1378
    %v2323 = vpack.c.b16 %v1395, %v1379
    %v2324 = vpack.c.b16 %v1396, %v1380
    %v2325 = vpack.c.b16 %v1397, %v1381
    %v2326 = vpack.c.b16 %v1398, %v1382
    %v2327 = vpack.c.b16 %v1399, %v1383
    %v2328 = vpack.c.b16 %v1400, %v1384
    %v2329 = vpack.c.b16 %v1401, %v1385
    %v2330 = vpack.c.b16 %v1402, %v1386
    %v2331 = vpack.c.b16 %v1403, %v1387
    %v2332 = vpack.c.b16 %v1404, %v1388
    %v2333 = vpack.c.b16 %v1421, %v1405
    %v2334 = vpack.c.b16 %v1422, %v1406
    %v2335 = vpack.c.b16 %v1423, %v1407
    %v2336 = vpack.c.b16 %v1424, %v1408
    %v2337 = vpack.c.b16 %v1425, %v1409
    %v2338 = vpack.c.b16 %v1426, %v1410
    %v2339 = vpack.c.b16 %v1427, %v1411
    %v2340 = vpack.c.b16 %v1428, %v1412
    %v2341 = vpack.c.b16 %v1429, %v1413
    %v2342 = vpack.c.b16 %v1430, %v1414
    %v2343 = vpack.c.b16 %v1431, %v1415
    %v2344 = vpack.c.b16 %v1432, %v1416
    %v2345 = vpack.c.b16 %v1433, %v1417
    %v2346 = vpack.c.b16 %v1434, %v1418
    %v2347 = vpack.c.b16 %v1435, %v1419
    %v2348 = vpack.c.b16 %v1436, %v1420
    %v2349 = vpack.c.b16 %v1453, %v1437
    %v2350 = vpack.c.b16 %v1454, %v1438
    %v2351 = vpack.c.b16 %v1455, %v1439
    %v2352 = vpack.c.b16 %v1456, %v1440
    %v2353 = vpack.c.b16 %v1457, %v1441
    %v2354 = vpack.c.b16 %v1458, %v1442
    %v2355 = vpack.c.b16 %v1459, %v1443
    %v2356 = vpack.c.b16 %v1460, %v1444
    %v2357 = vpack.c.b16 %v1461, %v1445
    %v2358 = vpack.c.b16 %v1462, %v1446
    %v2359 = vpack.c.b16 %v1463, %v1447
    %v2360 = vpack.c.b16 %v1464, %v1448
    %v2361 = vpack.c.b16 %v1465, %v1449
    %v2362 = vpack.c.b16 %v1466, %v1450
    %v2363 = vpack.c.b16 %v1467, %v1451
    %v2364 = vpack.c.b16 %v1468, %v1452
    %v2365 = vpack.c.b16 %v1485, %v1469
    %v2366 = vpack.c.b16 %v1486, %v1470
    %v2367 = vpack.c.b16 %v1487, %v1471
    %v2368 = vpack.c.b16 %v1488, %v1472
    %v2369 = vpack.c.b16 %v1489, %v1473
    %v2370 = vpack.c.b16 %v1490, %v1474
    %v2371 = vpack.c.b16 %v1491, %v1475
    %v2372 = vpack.c.b16 %v1492, %v1476
    %v2373 = vpack.c.b16 %v1493, %v1477
    %v2374 = vpack.c.b16 %v1494, %v1478
    %v2375 = vpack.c.b16 %v1495, %v1479
    %v2376 = vpack.c.b16 %v1496, %v1480
    %v2377 = vpack.c.b16 %v1497, %v1481
    %v2378 = vpack.c.b16 %v1498, %v1482
    %v2379 = vpack.c.b16 %v1499, %v1483
    %v2380 = vpack.c.b16 %v1500, %v1484
    %v2381 = vpack.c.b16 %v1517, %v1501
    %v2382 = vpack.c.b16 %v1518, %v1502
    %v2383 = vpack.c.b16 %v1519, %v1503
    %v2384 = vpack.c.b16 %v1520, %v1504
    %v2385 = vpack.c.b16 %v1521, %v1505
    %v2386 = vpack.c.b16 %v1522, %v1506
    %v2387 = vpack.c.b16 %v1523, %v1507
    %v2388 = vpack.c.b16 %v1524, %v1508
    %v2389 = vpack.c.b16 %v1525, %v1509
    %v2390 = vpack.c.b16 %v1526, %v1510
    %v2391 = vpack.c.b16 %v1527, %v1511
    %v2392 = vpack.c.b16 %v1528, %v1512
    %v2393 = vpack.c.b16 %v1529, %v1513
    %v2394 = vpack.c.b16 %v1530, %v1514
    %v2395 = vpack.c.b16 %v1531, %v1515
    %v2396 = vpack.c.b16 %v1532, %v1516
    %v2397 = vpack.c.b16 %v1549, %v1533
    %v2398 = vpack.c.b16 %v1550, %v1534
    %v2399 = vpack.c.b16 %v1551, %v1535
    %v2400 = vpack.c.b16 %v1552, %v1536
    %v2401 = vpack.c.b16 %v1553, %v1537
    %v2402 = vpack.c.b16 %v1554, %v1538
    %v2403 = vpack.c.b16 %v1555, %v1539
    %v2404 = vpack.c.b16 %v1556, %v1540
    %v2405 = vpack.c.b16 %v1557, %v1541
    %v2406 = vpack.c.b16 %v1558, %v1542
    %v2407 = vpack.c.b16 %v1559, %v1543
    %v2408 = vpack.c.b16 %v1560, %v1544
    %v2409 = vpack.c.b16 %v1561, %v1545
    %v2410 = vpack.c.b16 %v1562, %v1546
    %v2411 = vpack.c.b16 %v1563, %v1547
    %v2412 = vpack.c.b16 %v1564, %v1548
    %v2413 = vpack.c.b16 %v1581, %v1565
    %v2414 = vpack.c.b16 %v1582, %v1566
    %v2415 = vpack.c.b16 %v1583, %v1567
    %v2416 = vpack.c.b16 %v1584, %v1568
    %v2417 = vpack.c.b16 %v1585, %v1569
    %v2418 = vpack.c.b16 %v1586, %v1570
    %v2419 = vpack.c.b16 %v1587, %v1571
    %v2420 = vpack.c.b16 %v1588, %v1572
    %v2421 = vpack.c.b16 %v1589, %v1573
    %v2422 = vpack.c.b16 %v1590, %v1574
    %v2423 = vpack.c.b16 %v1591, %v1575
    %v2424 = vpack.c.b16 %v1592, %v1576
    %v2425 = vpack.c.b16 %v1593, %v1577
    %v2426 = vpack.c.b16 %v1594, %v1578
    %v2427 = vpack.c.b16 %v1595, %v1579
    %v2428 = vpack.c.b16 %v1596, %v1580
    %v2429 = vpack.c.b16 %v1613, %v1597
    %v2430 = vpack.c.b16 %v1614, %v1598
    %v2431 = vpack.c.b16 %v1615, %v1599
    %v2432 = vpack.c.b16 %v1616, %v1600
    %v2433 = vpack.c.b16 %v1617, %v1601
    %v2434 = vpack.c.b16 %v1618, %v1602
    %v2435 = vpack.c.b16 %v1619, %v1603
    %v2436 = vpack.c.b16 %v1620, %v1604
    %v2437 = vpack.c.b16 %v1621, %v1605
    %v2438 = vpack.c.b16 %v1622, %v1606
    %v2439 = vpack.c.b16 %v1623, %v1607
    %v2440 = vpack.c.b16 %v1624, %v1608
    %v2441 = vpack.c.b16 %v1625, %v1609
    %v2442 = vpack.c.b16 %v1626, %v1610
    %v2443 = vpack.c.b16 %v1627, %v1611
    %v2444 = vpack.c.b16 %v1628, %v1612
    %v2445 = vpack.c.b16 %v1645, %v1629
    %v2446 = vpack.c.b16 %v1646, %v1630
    %v2447 = vpack.c.b16 %v1647, %v1631
    %v2448 = vpack.c.b16 %v1648, %v1632
    %v2449 = vpack.c.b16 %v1649, %v1633
    %v2450 = vpack.c.b16 %v1650, %v1634
    %v2451 = vpack.c.b16 %v1651, %v1635
    %v2452 = vpack.c.b16 %v1652, %v1636
    %v2453 = vpack.c.b16 %v1653, %v1637
    %v2454 = vpack.c.b16 %v1654, %v1638
    %v2455 = vpack.c.b16 %v1655, %v1639
    %v2456 = vpack.c.b16 %v1656, %v1640
    %v2457 = vpack.c.b16 %v1657, %v1641
    %v2458 = vpack.c.b16 %v1658, %v1642
    %v2459 = vpack.c.b16 %v1659, %v1643
    %v2460 = vpack.c.b16 %v1660, %v1644
    %v2461 = vpack.c.b16 %v1677, %v1661
    %v2462 = vpack.c.b16 %v1678, %v1662
    %v2463 = vpack.c.b16 %v1679, %v1663
    %v2464 = vpack.c.b16 %v1680, %v1664
    %v2465 = vpack.c.b16 %v1681, %v1665
    %v2466 = vpack.c.b16 %v1682, %v1666
    %v2467 = vpack.c.b16 %v1683, %v1667
    %v2468 = vpack.c.b16 %v1684, %v1668
    %v2469 = vpack.c.b16 %v1685, %v1669
    %v2470 = vpack.c.b16 %v1686, %v1670
    %v2471 = vpack.c.b16 %v1687, %v1671
    %v2472 = vpack.c.b16 %v1688, %v1672
    %v2473 = vpack.c.b16 %v1689, %v1673
    %v2474 = vpack.c.b16 %v1690, %v1674
    %v2475 = vpack.c.b16 %v1691, %v1675
    %v2476 = vpack.c.b16 %v1692, %v1676
    %v2477 = vpack.c.b16 %v1709, %v1693
    %v2478 = vpack.c.b16 %v1710, %v1694
    %v2479 = vpack.c.b16 %v1711, %v1695
    %v2480 = vpack.c.b16 %v1712, %v1696
    %v2481 = vpack.c.b16 %v1713, %v1697
    %v2482 = vpack.c.b16 %v1714, %v1698
    %v2483 = vpack.c.b16 %v1715, %v1699
    %v2484 = vpack.c.b16 %v1716, %v1700
    %v2485 = vpack.c.b16 %v1717, %v1701
    %v2486 = vpack.c.b16 %v1718, %v1702
    %v2487 = vpack.c.b16 %v1719, %v1703
    %v2488 = vpack.c.b16 %v1720, %v1704
    %v2489 = vpack.c.b16 %v1721, %v1705
    %v2490 = vpack.c.b16 %v1722, %v1706
    %v2491 = vpack.c.b16 %v1723, %v1707
    %v2492 = vpack.c.b16 %v1724, %v1708
    %v2493 = vpack.c.b16 %v1741, %v1725
    %v2494 = vpack.c.b16 %v1742, %v1726
    %v2495 = vpack.c.b16 %v1743, %v1727
    %v2496 = vpack.c.b16 %v1744, %v1728
    %v2497 = vpack.c.b16 %v1745, %v1729
    %v2498 = vpack.c.b16 %v1746, %v1730
    %v2499 = vpack.c.b16 %v1747, %v1731
    %v2500 = vpack.c.b16 %v1748, %v1732
    %v2501 = vpack.c.b16 %v1749, %v1733
    %v2502 = vpack.c.b16 %v1750, %v1734
    %v2503 = vpack.c.b16 %v1751, %v1735
    %v2504 = vpack.c.b16 %v1752, %v1736
    %v2505 = vpack.c.b16 %v1753, %v1737
    %v2506 = vpack.c.b16 %v1754, %v1738
    %v2507 = vpack.c.b16 %v1755, %v1739
    %v2508 = vpack.c.b16 %v1756, %v1740
    %v2509 = vpack.c.b16 %v1773, %v1757
    %v2510 = vpack.c.b16 %v1774, %v1758
    %v2511 = vpack.c.b16 %v1775, %v1759
    %v2512 = vpack.c.b16 %v1776, %v1760
    %v2513 = vpack.c.b16 %v1777, %v1761
    %v2514 = vpack.c.b16 %v1778, %v1762
    %v2515 = vpack.c.b16 %v1779, %v1763
    %v2516 = vpack.c.b16 %v1780, %v1764
    %v2517 = vpack.c.b16 %v1781, %v1765
    %v2518 = vpack.c.b16 %v1782, %v1766
    %v2519 = vpack.c.b16 %v1783, %v1767
    %v2520 = vpack.c.b16 %v1784, %v1768
    %v2521 = vpack.c.b16 %v1785, %v1769
    %v2522 = vpack.c.b16 %v1786, %v1770
    %v2523 = vpack.c.b16 %v1787, %v1771
    %v2524 = vpack.c.b16 %v1788, %v1772
    %v2525 = vpack.c.b16 %v1805, %v1789
    %v2526 = vpack.c.b16 %v1806, %v1790
    %v2527 = vpack.c.b16 %v1807, %v1791
    %v2528 = vpack.c.b16 %v1808, %v1792
    %v2529 = vpack.c.b16 %v1809, %v1793
    %v2530 = vpack.c.b16 %v1810, %v1794
    %v2531 = vpack.c.b16 %v1811, %v1795
    %v2532 = vpack.c.b16 %v1812, %v1796
    %v2533 = vpack.c.b16 %v1813, %v1797
    %v2534 = vpack.c.b16 %v1814, %v1798
    %v2535 = vpack.c.b16 %v1815, %v1799
    %v2536 = vpack.c.b16 %v1816, %v1800
    %v2537 = vpack.c.b16 %v1817, %v1801
    %v2538 = vpack.c.b16 %v1818, %v1802
    %v2539 = vpack.c.b16 %v1819, %v1803
    %v2540 = vpack.c.b16 %v1820, %v1804
    %v2541 = vpack.c.b16 %v1837, %v1821
    %v2542 = vpack.c.b16 %v1838, %v1822
    %v2543 = vpack.c.b16 %v1839, %v1823
    %v2544 = vpack.c.b16 %v1840, %v1824
    %v2545 = vpack.c.b16 %v1841, %v1825
    %v2546 = vpack.c.b16 %v1842, %v1826
    %v2547 = vpack.c.b16 %v1843, %v1827
    %v2548 = vpack.c.b16 %v1844, %v1828
    %v2549 = vpack.c.b16 %v1845, %v1829
    %v2550 = vpack.c.b16 %v1846, %v1830
    %v2551 = vpack.c.b16 %v1847, %v1831
    %v2552 = vpack.c.b16 %v1848, %v1832
    %v2553 = vpack.c.b16 %v1849, %v1833
    %v2554 = vpack.c.b16 %v1850, %v1834
    %v2555 = vpack.c.b16 %v1851, %v1835
    %v2556 = vpack.c.b16 %v1852, %v1836
    %v2557 = vpack.c.b16 %v1869, %v1853
    %v2558 = vpack.c.b16 %v1870, %v1854
    %v2559 = vpack.c.b16 %v1871, %v1855
    %v2560 = vpack.c.b16 %v1872, %v1856
    %v2561 = vpack.c.b16 %v1873, %v1857
    %v2562 = vpack.c.b16 %v1874, %v1858
    %v2563 = vpack.c.b16 %v1875, %v1859
    %v2564 = vpack.c.b16 %v1876, %v1860
    %v2565 = vpack.c.b16 %v1877, %v1861
    %v2566 = vpack.c.b16 %v1878, %v1862
    %v2567 = vpack.c.b16 %v1879, %v1863
    %v2568 = vpack.c.b16 %v1880, %v1864
    %v2569 = vpack.c.b16 %v1881, %v1865
    %v2570 = vpack.c.b16 %v1882, %v1866
    %v2571 = vpack.c.b16 %v1883, %v1867
    %v2572 = vpack.c.b16 %v1884, %v1868
    %v2573 = vpack.c.b16 %v1901, %v1885
    %v2574 = vpack.c.b16 %v1902, %v1886
    %v2575 = vpack.c.b16 %v1903, %v1887
    %v2576 = vpack.c.b16 %v1904, %v1888
    %v2577 = vpack.c.b16 %v1905, %v1889
    %v2578 = vpack.c.b16 %v1906, %v1890
    %v2579 = vpack.c.b16 %v1907, %v1891
    %v2580 = vpack.c.b16 %v1908, %v1892
    %v2581 = vpack.c.b16 %v1909, %v1893
    %v2582 = vpack.c.b16 %v1910, %v1894
    %v2583 = vpack.c.b16 %v1911, %v1895
    %v2584 = vpack.c.b16 %v1912, %v1896
    %v2585 = vpack.c.b16 %v1913, %v1897
    %v2586 = vpack.c.b16 %v1914, %v1898
    %v2587 = vpack.c.b16 %v1915, %v1899
    %v2588 = vpack.c.b16 %v1916, %v1900
    %v2589 = vpack.c.b16 %v1933, %v1917
    %v2590 = vpack.c.b16 %v1934, %v1918
    %v2591 = vpack.c.b16 %v1935, %v1919
    %v2592 = vpack.c.b16 %v1936, %v1920
    %v2593 = vpack.c.b16 %v1937, %v1921
    %v2594 = vpack.c.b16 %v1938, %v1922
    %v2595 = vpack.c.b16 %v1939, %v1923
    %v2596 = vpack.c.b16 %v1940, %v1924
    %v2597 = vpack.c.b16 %v1941, %v1925
    %v2598 = vpack.c.b16 %v1942, %v1926
    %v2599 = vpack.c.b16 %v1943, %v1927
    %v2600 = vpack.c.b16 %v1944, %v1928
    %v2601 = vpack.c.b16 %v1945, %v1929
    %v2602 = vpack.c.b16 %v1946, %v1930
    %v2603 = vpack.c.b16 %v1947, %v1931
    %v2604 = vpack.c.b16 %v1948, %v1932
    %v2605 = vpack.c.b16 %v1965, %v1949
    %v2606 = vpack.c.b16 %v1966, %v1950
    %v2607 = vpack.c.b16 %v1967, %v1951
    %v2608 = vpack.c.b16 %v1968, %v1952
    %v2609 = vpack.c.b16 %v1969, %v1953
    %v2610 = vpack.c.b16 %v1970, %v1954
    %v2611 = vpack.c.b16 %v1971, %v1955
    %v2612 = vpack.c.b16 %v1972, %v1956
    %v2613 = vpack.c.b16 %v1973, %v1957
    %v2614 = vpack.c.b16 %v1974, %v1958
    %v2615 = vpack.c.b16 %v1975, %v1959
    %v2616 = vpack.c.b16 %v1976, %v1960
    %v2617 = vpack.c.b16 %v1977, %v1961
    %v2618 = vpack.c.b16 %v1978, %v1962
    %v2619 = vpack.c.b16 %v1979, %v1963
    %v2620 = vpack.c.b16 %v1980, %v1964
    %v2621 = vpack.c.b16 %v1997, %v1981
    %v2622 = vpack.c.b16 %v1998, %v1982
    %v2623 = vpack.c.b16 %v1999, %v1983
    %v2624 = vpack.c.b16 %v2000, %v1984
    %v2625 = vpack.c.b16 %v2001, %v1985
    %v2626 = vpack.c.b16 %v2002, %v1986
    %v2627 = vpack.c.b16 %v2003, %v1987
    %v2628 = vpack.c.b16 %v2004, %v1988
    %v2629 = vpack.c.b16 %v2005, %v1989
    %v2630 = vpack.c.b16 %v2006, %v1990
    %v2631 = vpack.c.b16 %v2007, %v1991
    %v2632 = vpack.c.b16 %v2008, %v1992
    %v2633 = vpack.c.b16 %v2009, %v1993
    %v2634 = vpack.c.b16 %v2010, %v1994
    %v2635 = vpack.c.b16 %v2011, %v1995
    %v2636 = vpack.c.b16 %v2012, %v1996
    %v2637 = vpack.c.b16 %v2029, %v2013
    %v2638 = vpack.c.b16 %v2030, %v2014
    %v2639 = vpack.c.b16 %v2031, %v2015
    %v2640 = vpack.c.b16 %v2032, %v2016
    %v2641 = vpack.c.b16 %v2033, %v2017
    %v2642 = vpack.c.b16 %v2034, %v2018
    %v2643 = vpack.c.b16 %v2035, %v2019
    %v2644 = vpack.c.b16 %v2036, %v2020
    %v2645 = vpack.c.b16 %v2037, %v2021
    %v2646 = vpack.c.b16 %v2038, %v2022
    %v2647 = vpack.c.b16 %v2039, %v2023
    %v2648 = vpack.c.b16 %v2040, %v2024
    %v2649 = vpack.c.b16 %v2041, %v2025
    %v2650 = vpack.c.b16 %v2042, %v2026
    %v2651 = vpack.c.b16 %v2043, %v2027
    %v2652 = vpack.c.b16 %v2044, %v2028
    %v2653 = vpack.c.b16 %v2061, %v2045
    %v2654 = vpack.c.b16 %v2062, %v2046
    %v2655 = vpack.c.b16 %v2063, %v2047
    %v2656 = vpack.c.b16 %v2064, %v2048
    %v2657 = vpack.c.b16 %v2065, %v2049
    %v2658 = vpack.c.b16 %v2066, %v2050
    %v2659 = vpack.c.b16 %v2067, %v2051
    %v2660 = vpack.c.b16 %v2068, %v2052
    %v2661 = vpack.c.b16 %v2069, %v2053
    %v2662 = vpack.c.b16 %v2070, %v2054
    %v2663 = vpack.c.b16 %v2071, %v2055
    %v2664 = vpack.c.b16 %v2072, %v2056
    %v2665 = vpack.c.b16 %v2073, %v2057
    %v2666 = vpack.c.b16 %v2074, %v2058
    %v2667 = vpack.c.b16 %v2075, %v2059
    %v2668 = vpack.c.b16 %v2076, %v2060
    %v2669 = vpack.c.b16 %v2093, %v2077
    %v2670 = vpack.c.b16 %v2094, %v2078
    %v2671 = vpack.c.b16 %v2095, %v2079
    %v2672 = vpack.c.b16 %v2096, %v2080
    %v2673 = vpack.c.b16 %v2097, %v2081
    %v2674 = vpack.c.b16 %v2098, %v2082
    %v2675 = vpack.c.b16 %v2099, %v2083
    %v2676 = vpack.c.b16 %v2100, %v2084
    %v2677 = vpack.c.b16 %v2101, %v2085
    %v2678 = vpack.c.b16 %v2102, %v2086
    %v2679 = vpack.c.b16 %v2103, %v2087
    %v2680 = vpack.c.b16 %v2104, %v2088
    %v2681 = vpack.c.b16 %v2105, %v2089
    %v2682 = vpack.c.b16 %v2106, %v2090
    %v2683 = vpack.c.b16 %v2107, %v2091
    %v2684 = vpack.c.b16 %v2108, %v2092
    %v2685 = vpack.c.b16 %v2125, %v2109
    %v2686 = vpack.c.b16 %v2126, %v2110
    %v2687 = vpack.c.b16 %v2127, %v2111
    %v2688 = vpack.c.b16 %v2128, %v2112
    %v2689 = vpack.c.b16 %v2129, %v2113
    %v2690 = vpack.c.b16 %v2130, %v2114
    %v2691 = vpack.c.b16 %v2131, %v2115
    %v2692 = vpack.c.b16 %v2132, %v2116
    %v2693 = vpack.c.b16 %v2133, %v2117
    %v2694 = vpack.c.b16 %v2134, %v2118
    %v2695 = vpack.c.b16 %v2135, %v2119
    %v2696 = vpack.c.b16 %v2136, %v2120
    %v2697 = vpack.c.b16 %v2137, %v2121
    %v2698 = vpack.c.b16 %v2138, %v2122
    %v2699 = vpack.c.b16 %v2139, %v2123
    %v2700 = vpack.c.b16 %v2140, %v2124
    %v2701 = vpack.c.b16 %v2157, %v2141
    %v2702 = vpack.c.b16 %v2158, %v2142
    %v2703 = vpack.c.b16 %v2159, %v2143
    %v2704 = vpack.c.b16 %v2160, %v2144
    %v2705 = vpack.c.b16 %v2161, %v2145
    %v2706 = vpack.c.b16 %v2162, %v2146
    %v2707 = vpack.c.b16 %v2163, %v2147
    %v2708 = vpack.c.b16 %v2164, %v2148
    %v2709 = vpack.c.b16 %v2165, %v2149
    %v2710 = vpack.c.b16 %v2166, %v2150
    %v2711 = vpack.c.b16 %v2167, %v2151
    %v2712 = vpack.c.b16 %v2168, %v2152
    %v2713 = vpack.c.b16 %v2169, %v2153
    %v2714 = vpack.c.b16 %v2170, %v2154
    %v2715 = vpack.c.b16 %v2171, %v2155
    %v2716 = vpack.c.b16 %v2172, %v2156
    %v2717 = vpack.c.b16 %v2189, %v2173
    %v2718 = vpack.c.b16 %v2190, %v2174
    %v2719 = vpack.c.b16 %v2191, %v2175
    %v2720 = vpack.c.b16 %v2192, %v2176
    %v2721 = vpack.c.b16 %v2193, %v2177
    %v2722 = vpack.c.b16 %v2194, %v2178
    %v2723 = vpack.c.b16 %v2195, %v2179
    %v2724 = vpack.c.b16 %v2196, %v2180
    %v2725 = vpack.c.b16 %v2197, %v2181
    %v2726 = vpack.c.b16 %v2198, %v2182
    %v2727 = vpack.c.b16 %v2199, %v2183
    %v2728 = vpack.c.b16 %v2200, %v2184
    %v2729 = vpack.c.b16 %v2201, %v2185
    %v2730 = vpack.c.b16 %v2202, %v2186
    %v2731 = vpack.c.b16 %v2203, %v2187
    %v2732 = vpack.c.b16 %v2204, %v2188
    %v2733 = vpack.c.b16 %v2221, %v2205
    %v2734 = vpack.c.b16 %v2222, %v2206
    %v2735 = vpack.c.b16 %v2223, %v2207
    %v2736 = vpack.c.b16 %v2224, %v2208
    %v2737 = vpack.c.b16 %v2225, %v2209
    %v2738 = vpack.c.b16 %v2226, %v2210
    %v2739 = vpack.c.b16 %v2227, %v2211
    %v2740 = vpack.c.b16 %v2228, %v2212
    %v2741 = vpack.c.b16 %v2229, %v2213
    %v2742 = vpack.c.b16 %v2230, %v2214
    %v2743 = vpack.c.b16 %v2231, %v2215
    %v2744 = vpack.c.b16 %v2232, %v2216
    %v2745 = vpack.c.b16 %v2233, %v2217
    %v2746 = vpack.c.b16 %v2234, %v2218
    %v2747 = vpack.c.b16 %v2235, %v2219
    %v2748 = vpack.c.b16 %v2236, %v2220
    %3261 = vmatprep.subr.bf16.mxu0 %v2350
    %3262 = vmatpush1.bf16.msra.mxu0 %v2349
    %3263 = vmatprep.subr.bf16.mxu0 %v2334
    %3264 = vmatpush1.bf16.msra.mxu0 %v2333
    %3265 = vmatprep.subr.bf16.mxu0 %v2318
    %3266 = vmatpush1.bf16.msra.mxu0 %v2317
    %3267 = vmatprep.subr.bf16.mxu0 %v2302
    %3268 = vmatpush1.bf16.msra.mxu0 %v2301
    %3269 = vmatprep.subr.bf16.mxu0 %v2286
    %3270 = vmatpush1.bf16.msra.mxu0 %v2285
    %3271 = vmatprep.subr.bf16.mxu0 %v2270
    %3272 = vmatpush1.bf16.msra.mxu0 %v2269
    %3273 = vmatprep.subr.bf16.mxu0 %v2254
    %3274 = vmatpush1.bf16.msra.mxu0 %v2253
    %3275 = vmatprep.subr.bf16.mxu0 %v2238
    %3276 = vmatpush1.bf16.msra.mxu0 %v2237
    %3277 = vmatprep.subr.bf16.mxu0 %v2478
    %3278 = vmatpush2.bf16.msra.mxu0 %v2477
    %3279 = vmatprep.subr.bf16.mxu0 %v2462
    %3280 = vmatpush2.bf16.msra.mxu0 %v2461
    %3281 = vmatprep.subr.bf16.mxu0 %v2446
    %3282 = vmatpush2.bf16.msra.mxu0 %v2445
    %3283 = vmatprep.subr.bf16.mxu0 %v2430
    %3284 = vmatpush2.bf16.msra.mxu0 %v2429
    %3285 = vmatprep.subr.bf16.mxu0 %v2414
    %3286 = vmatpush2.bf16.msra.mxu0 %v2413
    %3287 = vmatprep.subr.bf16.mxu0 %v2398
    %3288 = vmatpush2.bf16.msra.mxu0 %v2397
    %3289 = vmatprep.subr.bf16.mxu0 %v2382
    %3290 = vmatpush2.bf16.msra.mxu0 %v2381
    %3291 = vmatprep.subr.bf16.mxu0 %v2366
    %3292 = vmatpush2.bf16.msra.mxu0 %v2365
    %3293 = vmatprep.mubr.bf16.mxu0 %v98
    %3294 = vmatmul.mubr.bf16.gmra.mxu0 %v97
    %v3295 = vpop.f32.mrf.mxu0
    %v3296 = vadd.f32 %v624, %v3295
    %v3297 = vpop.f32.mrf.mxu0
    %v3298 = vadd.f32 %v628, %v3297
    %v3299 = vpop.f32.mrf.mxu0
    %v3300 = vadd.f32 %v624, %v3299
    %v3301 = vpop.f32.mrf.mxu0
    %v3302 = vadd.f32 %v628, %v3301
    %3303 = vmatprep.mubr.bf16.mxu0 %v102
    %3304 = vmatmul.mubr.bf16.gmra.mxu0 %v101
    %v3305 = vpop.f32.mrf.mxu0
    %v3306 = vadd.f32 %v624, %v3305
    %v3307 = vpop.f32.mrf.mxu0
    %v3308 = vadd.f32 %v628, %v3307
    %v3309 = vpop.f32.mrf.mxu0
    %v3310 = vpop.f32.mrf.mxu0
    %3311 = vdwg.mxu0
    %3312 = vmatprep.subr.bf16.mxu0 %v2606
    %3313 = vmatpush1.bf16.msra.mxu0 %v2605
    %3314 = vmatprep.subr.bf16.mxu0 %v2590
    %3315 = vmatpush1.bf16.msra.mxu0 %v2589
    %3316 = vmatprep.subr.bf16.mxu0 %v2574
    %3317 = vmatpush1.bf16.msra.mxu0 %v2573
    %3318 = vmatprep.subr.bf16.mxu0 %v2558
    %3319 = vmatpush1.bf16.msra.mxu0 %v2557
    %3320 = vmatprep.subr.bf16.mxu0 %v2542
    %3321 = vmatpush1.bf16.msra.mxu0 %v2541
    %3322 = vmatprep.subr.bf16.mxu0 %v2526
    %3323 = vmatpush1.bf16.msra.mxu0 %v2525
    %3324 = vmatprep.subr.bf16.mxu0 %v2510
    %3325 = vmatpush1.bf16.msra.mxu0 %v2509
    %3326 = vmatprep.subr.bf16.mxu0 %v2494
    %3327 = vmatpush1.bf16.msra.mxu0 %v2493
    %3328 = vmatprep.subr.bf16.mxu0 %v2734
    %3329 = vmatpush2.bf16.msra.mxu0 %v2733
    %3330 = vmatprep.subr.bf16.mxu0 %v2718
    %3331 = vmatpush2.bf16.msra.mxu0 %v2717
    %3332 = vmatprep.subr.bf16.mxu0 %v2702
    %3333 = vmatpush2.bf16.msra.mxu0 %v2701
    %3334 = vmatprep.subr.bf16.mxu0 %v2686
    %3335 = vmatpush2.bf16.msra.mxu0 %v2685
    %3336 = vmatprep.subr.bf16.mxu0 %v2670
    %3337 = vmatpush2.bf16.msra.mxu0 %v2669
    %3338 = vmatprep.subr.bf16.mxu0 %v2654
    %3339 = vmatpush2.bf16.msra.mxu0 %v2653
    %3340 = vmatprep.subr.bf16.mxu0 %v2638
    %3341 = vmatpush2.bf16.msra.mxu0 %v2637
    %3342 = vmatprep.subr.bf16.mxu0 %v2622
    %3343 = vmatpush2.bf16.msra.mxu0 %v2621
    %3344 = vmatprep.mubr.bf16.mxu0 %v100
    %3345 = vmatmul.mubr.bf16.gmra.mxu0 %v99
    %v3346 = vpop.f32.mrf.mxu0
    %v3347 = vadd.f32 %v3296, %v3346
    %v3348 = vpop.f32.mrf.mxu0
    %v3349 = vadd.f32 %v3298, %v3348
    %v3350 = vpop.f32.mrf.mxu0
    %v3351 = vadd.f32 %v3300, %v3350
    %v3352 = vpop.f32.mrf.mxu0
    %v3353 = vadd.f32 %v3302, %v3352
    %3354 = vmatprep.mubr.bf16.mxu0 %v104
    %3355 = vmatmul.mubr.bf16.gmra.mxu0 %v103
    %v3356 = vpop.f32.mrf.mxu0
    %v3357 = vadd.f32 %v3306, %v3356
    %v3358 = vpop.f32.mrf.mxu0
    %v3359 = vadd.f32 %v3308, %v3358
    %v3360 = vpop.f32.mrf.mxu0
    %v3361 = vpop.f32.mrf.mxu0
    %3362 = vdwg.mxu0
    %3363 = vmatprep.subr.bf16.mxu0 %v2352
    %3364 = vmatpush1.bf16.msra.mxu0 %v2351
    %3365 = vmatprep.subr.bf16.mxu0 %v2336
    %3366 = vmatpush1.bf16.msra.mxu0 %v2335
    %3367 = vmatprep.subr.bf16.mxu0 %v2320
    %3368 = vmatpush1.bf16.msra.mxu0 %v2319
    %3369 = vmatprep.subr.bf16.mxu0 %v2304
    %3370 = vmatpush1.bf16.msra.mxu0 %v2303
    %3371 = vmatprep.subr.bf16.mxu0 %v2288
    %3372 = vmatpush1.bf16.msra.mxu0 %v2287
    %3373 = vmatprep.subr.bf16.mxu0 %v2272
    %3374 = vmatpush1.bf16.msra.mxu0 %v2271
    %3375 = vmatprep.subr.bf16.mxu0 %v2256
    %3376 = vmatpush1.bf16.msra.mxu0 %v2255
    %3377 = vmatprep.subr.bf16.mxu0 %v2240
    %3378 = vmatpush1.bf16.msra.mxu0 %v2239
    %3379 = vmatprep.subr.bf16.mxu0 %v2480
    %3380 = vmatpush2.bf16.msra.mxu0 %v2479
    %3381 = vmatprep.subr.bf16.mxu0 %v2464
    %3382 = vmatpush2.bf16.msra.mxu0 %v2463
    %3383 = vmatprep.subr.bf16.mxu0 %v2448
    %3384 = vmatpush2.bf16.msra.mxu0 %v2447
    %3385 = vmatprep.subr.bf16.mxu0 %v2432
    %3386 = vmatpush2.bf16.msra.mxu0 %v2431
    %3387 = vmatprep.subr.bf16.mxu0 %v2416
    %3388 = vmatpush2.bf16.msra.mxu0 %v2415
    %3389 = vmatprep.subr.bf16.mxu0 %v2400
    %3390 = vmatpush2.bf16.msra.mxu0 %v2399
    %3391 = vmatprep.subr.bf16.mxu0 %v2384
    %3392 = vmatpush2.bf16.msra.mxu0 %v2383
    %3393 = vmatprep.subr.bf16.mxu0 %v2368
    %3394 = vmatpush2.bf16.msra.mxu0 %v2367
    %3395 = vmatprep.mubr.bf16.mxu0 %v98
    %3396 = vmatmul.mubr.bf16.gmra.mxu0 %v97
    %v3397 = vpop.f32.mrf.mxu0
    %v3398 = vadd.f32 %v632, %v3397
    %v3399 = vpop.f32.mrf.mxu0
    %v3400 = vadd.f32 %v636, %v3399
    %v3401 = vpop.f32.mrf.mxu0
    %v3402 = vadd.f32 %v632, %v3401
    %v3403 = vpop.f32.mrf.mxu0
    %v3404 = vadd.f32 %v636, %v3403
    %3405 = vmatprep.mubr.bf16.mxu0 %v102
    %3406 = vmatmul.mubr.bf16.gmra.mxu0 %v101
    %v3407 = vpop.f32.mrf.mxu0
    %v3408 = vadd.f32 %v632, %v3407
    %v3409 = vpop.f32.mrf.mxu0
    %v3410 = vadd.f32 %v636, %v3409
    %v3411 = vpop.f32.mrf.mxu0
    %v3412 = vpop.f32.mrf.mxu0
    %3413 = vdwg.mxu0
    %3414 = vmatprep.subr.bf16.mxu0 %v2608
    %3415 = vmatpush1.bf16.msra.mxu0 %v2607
    %3416 = vmatprep.subr.bf16.mxu0 %v2592
    %3417 = vmatpush1.bf16.msra.mxu0 %v2591
    %3418 = vmatprep.subr.bf16.mxu0 %v2576
    %3419 = vmatpush1.bf16.msra.mxu0 %v2575
    %3420 = vmatprep.subr.bf16.mxu0 %v2560
    %3421 = vmatpush1.bf16.msra.mxu0 %v2559
    %3422 = vmatprep.subr.bf16.mxu0 %v2544
    %3423 = vmatpush1.bf16.msra.mxu0 %v2543
    %3424 = vmatprep.subr.bf16.mxu0 %v2528
    %3425 = vmatpush1.bf16.msra.mxu0 %v2527
    %3426 = vmatprep.subr.bf16.mxu0 %v2512
    %3427 = vmatpush1.bf16.msra.mxu0 %v2511
    %3428 = vmatprep.subr.bf16.mxu0 %v2496
    %3429 = vmatpush1.bf16.msra.mxu0 %v2495
    %3430 = vmatprep.subr.bf16.mxu0 %v2736
    %3431 = vmatpush2.bf16.msra.mxu0 %v2735
    %3432 = vmatprep.subr.bf16.mxu0 %v2720
    %3433 = vmatpush2.bf16.msra.mxu0 %v2719
    %3434 = vmatprep.subr.bf16.mxu0 %v2704
    %3435 = vmatpush2.bf16.msra.mxu0 %v2703
    %3436 = vmatprep.subr.bf16.mxu0 %v2688
    %3437 = vmatpush2.bf16.msra.mxu0 %v2687
    %3438 = vmatprep.subr.bf16.mxu0 %v2672
    %3439 = vmatpush2.bf16.msra.mxu0 %v2671
    %3440 = vmatprep.subr.bf16.mxu0 %v2656
    %3441 = vmatpush2.bf16.msra.mxu0 %v2655
    %3442 = vmatprep.subr.bf16.mxu0 %v2640
    %3443 = vmatpush2.bf16.msra.mxu0 %v2639
    %3444 = vmatprep.subr.bf16.mxu0 %v2624
    %3445 = vmatpush2.bf16.msra.mxu0 %v2623
    %3446 = vmatprep.mubr.bf16.mxu0 %v100
    %3447 = vmatmul.mubr.bf16.gmra.mxu0 %v99
    %v3448 = vpop.f32.mrf.mxu0
    %v3449 = vadd.f32 %v3398, %v3448
    %v3450 = vpop.f32.mrf.mxu0
    %v3451 = vadd.f32 %v3400, %v3450
    %v3452 = vpop.f32.mrf.mxu0
    %v3453 = vadd.f32 %v3402, %v3452
    %v3454 = vpop.f32.mrf.mxu0
    %v3455 = vadd.f32 %v3404, %v3454
    %3456 = vmatprep.mubr.bf16.mxu0 %v104
    %3457 = vmatmul.mubr.bf16.gmra.mxu0 %v103
    %v3458 = vpop.f32.mrf.mxu0
    %v3459 = vadd.f32 %v3408, %v3458
    %v3460 = vpop.f32.mrf.mxu0
    %v3461 = vadd.f32 %v3410, %v3460
    %v3462 = vpop.f32.mrf.mxu0
    %v3463 = vpop.f32.mrf.mxu0
    %3464 = vdwg.mxu0
    %3465 = vmatprep.subr.bf16.mxu0 %v2354
    %3466 = vmatpush1.bf16.msra.mxu0 %v2353
    %3467 = vmatprep.subr.bf16.mxu0 %v2338
    %3468 = vmatpush1.bf16.msra.mxu0 %v2337
    %3469 = vmatprep.subr.bf16.mxu0 %v2322
    %3470 = vmatpush1.bf16.msra.mxu0 %v2321
    %3471 = vmatprep.subr.bf16.mxu0 %v2306
    %3472 = vmatpush1.bf16.msra.mxu0 %v2305
    %3473 = vmatprep.subr.bf16.mxu0 %v2290
    %3474 = vmatpush1.bf16.msra.mxu0 %v2289
    %3475 = vmatprep.subr.bf16.mxu0 %v2274
    %3476 = vmatpush1.bf16.msra.mxu0 %v2273
    %3477 = vmatprep.subr.bf16.mxu0 %v2258
    %3478 = vmatpush1.bf16.msra.mxu0 %v2257
    %3479 = vmatprep.subr.bf16.mxu0 %v2242
    %3480 = vmatpush1.bf16.msra.mxu0 %v2241
    %3481 = vmatprep.subr.bf16.mxu0 %v2482
    %3482 = vmatpush2.bf16.msra.mxu0 %v2481
    %3483 = vmatprep.subr.bf16.mxu0 %v2466
    %3484 = vmatpush2.bf16.msra.mxu0 %v2465
    %3485 = vmatprep.subr.bf16.mxu0 %v2450
    %3486 = vmatpush2.bf16.msra.mxu0 %v2449
    %3487 = vmatprep.subr.bf16.mxu0 %v2434
    %3488 = vmatpush2.bf16.msra.mxu0 %v2433
    %3489 = vmatprep.subr.bf16.mxu0 %v2418
    %3490 = vmatpush2.bf16.msra.mxu0 %v2417
    %3491 = vmatprep.subr.bf16.mxu0 %v2402
    %3492 = vmatpush2.bf16.msra.mxu0 %v2401
    %3493 = vmatprep.subr.bf16.mxu0 %v2386
    %3494 = vmatpush2.bf16.msra.mxu0 %v2385
    %3495 = vmatprep.subr.bf16.mxu0 %v2370
    %3496 = vmatpush2.bf16.msra.mxu0 %v2369
    %3497 = vmatprep.mubr.bf16.mxu0 %v98
    %3498 = vmatmul.mubr.bf16.gmra.mxu0 %v97
    %v3499 = vpop.f32.mrf.mxu0
    %v3500 = vadd.f32 %v640, %v3499
    %v3501 = vpop.f32.mrf.mxu0
    %v3502 = vadd.f32 %v644, %v3501
    %v3503 = vpop.f32.mrf.mxu0
    %v3504 = vadd.f32 %v640, %v3503
    %v3505 = vpop.f32.mrf.mxu0
    %v3506 = vadd.f32 %v644, %v3505
    %3507 = vmatprep.mubr.bf16.mxu0 %v102
    %3508 = vmatmul.mubr.bf16.gmra.mxu0 %v101
    %v3509 = vpop.f32.mrf.mxu0
    %v3510 = vadd.f32 %v640, %v3509
    %v3511 = vpop.f32.mrf.mxu0
    %v3512 = vadd.f32 %v644, %v3511
    %v3513 = vpop.f32.mrf.mxu0
    %v3514 = vpop.f32.mrf.mxu0
    %3515 = vdwg.mxu0
    %3516 = vmatprep.subr.bf16.mxu0 %v2610
    %3517 = vmatpush1.bf16.msra.mxu0 %v2609
    %3518 = vmatprep.subr.bf16.mxu0 %v2594
    %3519 = vmatpush1.bf16.msra.mxu0 %v2593
    %3520 = vmatprep.subr.bf16.mxu0 %v2578
    %3521 = vmatpush1.bf16.msra.mxu0 %v2577
    %3522 = vmatprep.subr.bf16.mxu0 %v2562
    %3523 = vmatpush1.bf16.msra.mxu0 %v2561
    %3524 = vmatprep.subr.bf16.mxu0 %v2546
    %3525 = vmatpush1.bf16.msra.mxu0 %v2545
    %3526 = vmatprep.subr.bf16.mxu0 %v2530
    %3527 = vmatpush1.bf16.msra.mxu0 %v2529
    %3528 = vmatprep.subr.bf16.mxu0 %v2514
    %3529 = vmatpush1.bf16.msra.mxu0 %v2513
    %3530 = vmatprep.subr.bf16.mxu0 %v2498
    %3531 = vmatpush1.bf16.msra.mxu0 %v2497
    %3532 = vmatprep.subr.bf16.mxu0 %v2738
    %3533 = vmatpush2.bf16.msra.mxu0 %v2737
    %3534 = vmatprep.subr.bf16.mxu0 %v2722
    %3535 = vmatpush2.bf16.msra.mxu0 %v2721
    %3536 = vmatprep.subr.bf16.mxu0 %v2706
    %3537 = vmatpush2.bf16.msra.mxu0 %v2705
    %3538 = vmatprep.subr.bf16.mxu0 %v2690
    %3539 = vmatpush2.bf16.msra.mxu0 %v2689
    %3540 = vmatprep.subr.bf16.mxu0 %v2674
    %3541 = vmatpush2.bf16.msra.mxu0 %v2673
    %3542 = vmatprep.subr.bf16.mxu0 %v2658
    %3543 = vmatpush2.bf16.msra.mxu0 %v2657
    %3544 = vmatprep.subr.bf16.mxu0 %v2642
    %3545 = vmatpush2.bf16.msra.mxu0 %v2641
    %3546 = vmatprep.subr.bf16.mxu0 %v2626
    %3547 = vmatpush2.bf16.msra.mxu0 %v2625
    %3548 = vmatprep.mubr.bf16.mxu0 %v100
    %3549 = vmatmul.mubr.bf16.gmra.mxu0 %v99
    %v3550 = vpop.f32.mrf.mxu0
    %v3551 = vadd.f32 %v3500, %v3550
    %v3552 = vpop.f32.mrf.mxu0
    %v3553 = vadd.f32 %v3502, %v3552
    %v3554 = vpop.f32.mrf.mxu0
    %v3555 = vadd.f32 %v3504, %v3554
    %v3556 = vpop.f32.mrf.mxu0
    %v3557 = vadd.f32 %v3506, %v3556
    %3558 = vmatprep.mubr.bf16.mxu0 %v104
    %3559 = vmatmul.mubr.bf16.gmra.mxu0 %v103
    %v3560 = vpop.f32.mrf.mxu0
    %v3561 = vadd.f32 %v3510, %v3560
    %v3562 = vpop.f32.mrf.mxu0
    %v3563 = vadd.f32 %v3512, %v3562
    %v3564 = vpop.f32.mrf.mxu0
    %v3565 = vpop.f32.mrf.mxu0
    %3566 = vdwg.mxu0
    %3567 = vmatprep.subr.bf16.mxu0 %v2356
    %3568 = vmatpush1.bf16.msra.mxu0 %v2355
    %3569 = vmatprep.subr.bf16.mxu0 %v2340
    %3570 = vmatpush1.bf16.msra.mxu0 %v2339
    %3571 = vmatprep.subr.bf16.mxu0 %v2324
    %3572 = vmatpush1.bf16.msra.mxu0 %v2323
    %3573 = vmatprep.subr.bf16.mxu0 %v2308
    %3574 = vmatpush1.bf16.msra.mxu0 %v2307
    %3575 = vmatprep.subr.bf16.mxu0 %v2292
    %3576 = vmatpush1.bf16.msra.mxu0 %v2291
    %3577 = vmatprep.subr.bf16.mxu0 %v2276
    %3578 = vmatpush1.bf16.msra.mxu0 %v2275
    %3579 = vmatprep.subr.bf16.mxu0 %v2260
    %3580 = vmatpush1.bf16.msra.mxu0 %v2259
    %3581 = vmatprep.subr.bf16.mxu0 %v2244
    %3582 = vmatpush1.bf16.msra.mxu0 %v2243
    %3583 = vmatprep.subr.bf16.mxu0 %v2484
    %3584 = vmatpush2.bf16.msra.mxu0 %v2483
    %3585 = vmatprep.subr.bf16.mxu0 %v2468
    %3586 = vmatpush2.bf16.msra.mxu0 %v2467
    %3587 = vmatprep.subr.bf16.mxu0 %v2452
    %3588 = vmatpush2.bf16.msra.mxu0 %v2451
    %3589 = vmatprep.subr.bf16.mxu0 %v2436
    %3590 = vmatpush2.bf16.msra.mxu0 %v2435
    %3591 = vmatprep.subr.bf16.mxu0 %v2420
    %3592 = vmatpush2.bf16.msra.mxu0 %v2419
    %3593 = vmatprep.subr.bf16.mxu0 %v2404
    %3594 = vmatpush2.bf16.msra.mxu0 %v2403
    %3595 = vmatprep.subr.bf16.mxu0 %v2388
    %3596 = vmatpush2.bf16.msra.mxu0 %v2387
    %3597 = vmatprep.subr.bf16.mxu0 %v2372
    %3598 = vmatpush2.bf16.msra.mxu0 %v2371
    %3599 = vmatprep.mubr.bf16.mxu0 %v98
    %3600 = vmatmul.mubr.bf16.gmra.mxu0 %v97
    %v3601 = vpop.f32.mrf.mxu0
    %v3602 = vadd.f32 %v648, %v3601
    %v3603 = vpop.f32.mrf.mxu0
    %v3604 = vadd.f32 %v652, %v3603
    %v3605 = vpop.f32.mrf.mxu0
    %v3606 = vadd.f32 %v648, %v3605
    %v3607 = vpop.f32.mrf.mxu0
    %v3608 = vadd.f32 %v652, %v3607
    %3609 = vmatprep.mubr.bf16.mxu0 %v102
    %3610 = vmatmul.mubr.bf16.gmra.mxu0 %v101
    %v3611 = vpop.f32.mrf.mxu0
    %v3612 = vadd.f32 %v648, %v3611
    %v3613 = vpop.f32.mrf.mxu0
    %v3614 = vadd.f32 %v652, %v3613
    %v3615 = vpop.f32.mrf.mxu0
    %v3616 = vpop.f32.mrf.mxu0
    %3617 = vdwg.mxu0
    %3618 = vmatprep.subr.bf16.mxu0 %v2612
    %3619 = vmatpush1.bf16.msra.mxu0 %v2611
    %3620 = vmatprep.subr.bf16.mxu0 %v2596
    %3621 = vmatpush1.bf16.msra.mxu0 %v2595
    %3622 = vmatprep.subr.bf16.mxu0 %v2580
    %3623 = vmatpush1.bf16.msra.mxu0 %v2579
    %3624 = vmatprep.subr.bf16.mxu0 %v2564
    %3625 = vmatpush1.bf16.msra.mxu0 %v2563
    %3626 = vmatprep.subr.bf16.mxu0 %v2548
    %3627 = vmatpush1.bf16.msra.mxu0 %v2547
    %3628 = vmatprep.subr.bf16.mxu0 %v2532
    %3629 = vmatpush1.bf16.msra.mxu0 %v2531
    %3630 = vmatprep.subr.bf16.mxu0 %v2516
    %3631 = vmatpush1.bf16.msra.mxu0 %v2515
    %3632 = vmatprep.subr.bf16.mxu0 %v2500
    %3633 = vmatpush1.bf16.msra.mxu0 %v2499
    %3634 = vmatprep.subr.bf16.mxu0 %v2740
    %3635 = vmatpush2.bf16.msra.mxu0 %v2739
    %3636 = vmatprep.subr.bf16.mxu0 %v2724
    %3637 = vmatpush2.bf16.msra.mxu0 %v2723
    %3638 = vmatprep.subr.bf16.mxu0 %v2708
    %3639 = vmatpush2.bf16.msra.mxu0 %v2707
    %3640 = vmatprep.subr.bf16.mxu0 %v2692
    %3641 = vmatpush2.bf16.msra.mxu0 %v2691
    %3642 = vmatprep.subr.bf16.mxu0 %v2676
    %3643 = vmatpush2.bf16.msra.mxu0 %v2675
    %3644 = vmatprep.subr.bf16.mxu0 %v2660
    %3645 = vmatpush2.bf16.msra.mxu0 %v2659
    %3646 = vmatprep.subr.bf16.mxu0 %v2644
    %3647 = vmatpush2.bf16.msra.mxu0 %v2643
    %3648 = vmatprep.subr.bf16.mxu0 %v2628
    %3649 = vmatpush2.bf16.msra.mxu0 %v2627
    %3650 = vmatprep.mubr.bf16.mxu0 %v100
    %3651 = vmatmul.mubr.bf16.gmra.mxu0 %v99
    %v3652 = vpop.f32.mrf.mxu0
    %v3653 = vadd.f32 %v3602, %v3652
    %v3654 = vpop.f32.mrf.mxu0
    %v3655 = vadd.f32 %v3604, %v3654
    %v3656 = vpop.f32.mrf.mxu0
    %v3657 = vadd.f32 %v3606, %v3656
    %v3658 = vpop.f32.mrf.mxu0
    %v3659 = vadd.f32 %v3608, %v3658
    %3660 = vmatprep.mubr.bf16.mxu0 %v104
    %3661 = vmatmul.mubr.bf16.gmra.mxu0 %v103
    %v3662 = vpop.f32.mrf.mxu0
    %v3663 = vadd.f32 %v3612, %v3662
    %v3664 = vpop.f32.mrf.mxu0
    %v3665 = vadd.f32 %v3614, %v3664
    %v3666 = vpop.f32.mrf.mxu0
    %v3667 = vpop.f32.mrf.mxu0
    %3668 = vdwg.mxu0
    %3669 = vmatprep.subr.bf16.mxu0 %v2358
    %3670 = vmatpush1.bf16.msra.mxu0 %v2357
    %3671 = vmatprep.subr.bf16.mxu0 %v2342
    %3672 = vmatpush1.bf16.msra.mxu0 %v2341
    %3673 = vmatprep.subr.bf16.mxu0 %v2326
    %3674 = vmatpush1.bf16.msra.mxu0 %v2325
    %3675 = vmatprep.subr.bf16.mxu0 %v2310
    %3676 = vmatpush1.bf16.msra.mxu0 %v2309
    %3677 = vmatprep.subr.bf16.mxu0 %v2294
    %3678 = vmatpush1.bf16.msra.mxu0 %v2293
    %3679 = vmatprep.subr.bf16.mxu0 %v2278
    %3680 = vmatpush1.bf16.msra.mxu0 %v2277
    %3681 = vmatprep.subr.bf16.mxu0 %v2262
    %3682 = vmatpush1.bf16.msra.mxu0 %v2261
    %3683 = vmatprep.subr.bf16.mxu0 %v2246
    %3684 = vmatpush1.bf16.msra.mxu0 %v2245
    %3685 = vmatprep.subr.bf16.mxu0 %v2486
    %3686 = vmatpush2.bf16.msra.mxu0 %v2485
    %3687 = vmatprep.subr.bf16.mxu0 %v2470
    %3688 = vmatpush2.bf16.msra.mxu0 %v2469
    %3689 = vmatprep.subr.bf16.mxu0 %v2454
    %3690 = vmatpush2.bf16.msra.mxu0 %v2453
    %3691 = vmatprep.subr.bf16.mxu0 %v2438
    %3692 = vmatpush2.bf16.msra.mxu0 %v2437
    %3693 = vmatprep.subr.bf16.mxu0 %v2422
    %3694 = vmatpush2.bf16.msra.mxu0 %v2421
    %3695 = vmatprep.subr.bf16.mxu0 %v2406
    %3696 = vmatpush2.bf16.msra.mxu0 %v2405
    %3697 = vmatprep.subr.bf16.mxu0 %v2390
    %3698 = vmatpush2.bf16.msra.mxu0 %v2389
    %3699 = vmatprep.subr.bf16.mxu0 %v2374
    %3700 = vmatpush2.bf16.msra.mxu0 %v2373
    %3701 = vmatprep.mubr.bf16.mxu0 %v98
    %3702 = vmatmul.mubr.bf16.gmra.mxu0 %v97
    %v3703 = vpop.f32.mrf.mxu0
    %v3704 = vadd.f32 %v656, %v3703
    %v3705 = vpop.f32.mrf.mxu0
    %v3706 = vadd.f32 %v660, %v3705
    %v3707 = vpop.f32.mrf.mxu0
    %v3708 = vadd.f32 %v656, %v3707
    %v3709 = vpop.f32.mrf.mxu0
    %v3710 = vadd.f32 %v660, %v3709
    %3711 = vmatprep.mubr.bf16.mxu0 %v102
    %3712 = vmatmul.mubr.bf16.gmra.mxu0 %v101
    %v3713 = vpop.f32.mrf.mxu0
    %v3714 = vadd.f32 %v656, %v3713
    %v3715 = vpop.f32.mrf.mxu0
    %v3716 = vadd.f32 %v660, %v3715
    %v3717 = vpop.f32.mrf.mxu0
    %v3718 = vpop.f32.mrf.mxu0
    %3719 = vdwg.mxu0
    %3720 = vmatprep.subr.bf16.mxu0 %v2614
    %3721 = vmatpush1.bf16.msra.mxu0 %v2613
    %3722 = vmatprep.subr.bf16.mxu0 %v2598
    %3723 = vmatpush1.bf16.msra.mxu0 %v2597
    %3724 = vmatprep.subr.bf16.mxu0 %v2582
    %3725 = vmatpush1.bf16.msra.mxu0 %v2581
    %3726 = vmatprep.subr.bf16.mxu0 %v2566
    %3727 = vmatpush1.bf16.msra.mxu0 %v2565
    %3728 = vmatprep.subr.bf16.mxu0 %v2550
    %3729 = vmatpush1.bf16.msra.mxu0 %v2549
    %3730 = vmatprep.subr.bf16.mxu0 %v2534
    %3731 = vmatpush1.bf16.msra.mxu0 %v2533
    %3732 = vmatprep.subr.bf16.mxu0 %v2518
    %3733 = vmatpush1.bf16.msra.mxu0 %v2517
    %3734 = vmatprep.subr.bf16.mxu0 %v2502
    %3735 = vmatpush1.bf16.msra.mxu0 %v2501
    %3736 = vmatprep.subr.bf16.mxu0 %v2742
    %3737 = vmatpush2.bf16.msra.mxu0 %v2741
    %3738 = vmatprep.subr.bf16.mxu0 %v2726
    %3739 = vmatpush2.bf16.msra.mxu0 %v2725
    %3740 = vmatprep.subr.bf16.mxu0 %v2710
    %3741 = vmatpush2.bf16.msra.mxu0 %v2709
    %3742 = vmatprep.subr.bf16.mxu0 %v2694
    %3743 = vmatpush2.bf16.msra.mxu0 %v2693
    %3744 = vmatprep.subr.bf16.mxu0 %v2678
    %3745 = vmatpush2.bf16.msra.mxu0 %v2677
    %3746 = vmatprep.subr.bf16.mxu0 %v2662
    %3747 = vmatpush2.bf16.msra.mxu0 %v2661
    %3748 = vmatprep.subr.bf16.mxu0 %v2646
    %3749 = vmatpush2.bf16.msra.mxu0 %v2645
    %3750 = vmatprep.subr.bf16.mxu0 %v2630
    %3751 = vmatpush2.bf16.msra.mxu0 %v2629
    %3752 = vmatprep.mubr.bf16.mxu0 %v100
    %3753 = vmatmul.mubr.bf16.gmra.mxu0 %v99
    %v3754 = vpop.f32.mrf.mxu0
    %v3755 = vadd.f32 %v3704, %v3754
    %v3756 = vpop.f32.mrf.mxu0
    %v3757 = vadd.f32 %v3706, %v3756
    %v3758 = vpop.f32.mrf.mxu0
    %v3759 = vadd.f32 %v3708, %v3758
    %v3760 = vpop.f32.mrf.mxu0
    %v3761 = vadd.f32 %v3710, %v3760
    %3762 = vmatprep.mubr.bf16.mxu0 %v104
    %3763 = vmatmul.mubr.bf16.gmra.mxu0 %v103
    %v3764 = vpop.f32.mrf.mxu0
    %v3765 = vadd.f32 %v3714, %v3764
    %v3766 = vpop.f32.mrf.mxu0
    %v3767 = vadd.f32 %v3716, %v3766
    %v3768 = vpop.f32.mrf.mxu0
    %v3769 = vpop.f32.mrf.mxu0
    %3770 = vdwg.mxu0
    %3771 = vmatprep.subr.bf16.mxu0 %v2360
    %3772 = vmatpush1.bf16.msra.mxu0 %v2359
    %3773 = vmatprep.subr.bf16.mxu0 %v2344
    %3774 = vmatpush1.bf16.msra.mxu0 %v2343
    %3775 = vmatprep.subr.bf16.mxu0 %v2328
    %3776 = vmatpush1.bf16.msra.mxu0 %v2327
    %3777 = vmatprep.subr.bf16.mxu0 %v2312
    %3778 = vmatpush1.bf16.msra.mxu0 %v2311
    %3779 = vmatprep.subr.bf16.mxu0 %v2296
    %3780 = vmatpush1.bf16.msra.mxu0 %v2295
    %3781 = vmatprep.subr.bf16.mxu0 %v2280
    %3782 = vmatpush1.bf16.msra.mxu0 %v2279
    %3783 = vmatprep.subr.bf16.mxu0 %v2264
    %3784 = vmatpush1.bf16.msra.mxu0 %v2263
    %3785 = vmatprep.subr.bf16.mxu0 %v2248
    %3786 = vmatpush1.bf16.msra.mxu0 %v2247
    %3787 = vmatprep.subr.bf16.mxu0 %v2488
    %3788 = vmatpush2.bf16.msra.mxu0 %v2487
    %3789 = vmatprep.subr.bf16.mxu0 %v2472
    %3790 = vmatpush2.bf16.msra.mxu0 %v2471
    %3791 = vmatprep.subr.bf16.mxu0 %v2456
    %3792 = vmatpush2.bf16.msra.mxu0 %v2455
    %3793 = vmatprep.subr.bf16.mxu0 %v2440
    %3794 = vmatpush2.bf16.msra.mxu0 %v2439
    %3795 = vmatprep.subr.bf16.mxu0 %v2424
    %3796 = vmatpush2.bf16.msra.mxu0 %v2423
    %3797 = vmatprep.subr.bf16.mxu0 %v2408
    %3798 = vmatpush2.bf16.msra.mxu0 %v2407
    %3799 = vmatprep.subr.bf16.mxu0 %v2392
    %3800 = vmatpush2.bf16.msra.mxu0 %v2391
    %3801 = vmatprep.subr.bf16.mxu0 %v2376
    %3802 = vmatpush2.bf16.msra.mxu0 %v2375
    %3803 = vmatprep.mubr.bf16.mxu0 %v98
    %3804 = vmatmul.mubr.bf16.gmra.mxu0 %v97
    %v3805 = vpop.f32.mrf.mxu0
    %v3806 = vadd.f32 %v664, %v3805
    %v3807 = vpop.f32.mrf.mxu0
    %v3808 = vadd.f32 %v668, %v3807
    %v3809 = vpop.f32.mrf.mxu0
    %v3810 = vadd.f32 %v664, %v3809
    %v3811 = vpop.f32.mrf.mxu0
    %v3812 = vadd.f32 %v668, %v3811
    %3813 = vmatprep.mubr.bf16.mxu0 %v102
    %3814 = vmatmul.mubr.bf16.gmra.mxu0 %v101
    %v3815 = vpop.f32.mrf.mxu0
    %v3816 = vadd.f32 %v664, %v3815
    %v3817 = vpop.f32.mrf.mxu0
    %v3818 = vadd.f32 %v668, %v3817
    %v3819 = vpop.f32.mrf.mxu0
    %v3820 = vpop.f32.mrf.mxu0
    %3821 = vdwg.mxu0
    %3822 = vmatprep.subr.bf16.mxu0 %v2616
    %3823 = vmatpush1.bf16.msra.mxu0 %v2615
    %3824 = vmatprep.subr.bf16.mxu0 %v2600
    %3825 = vmatpush1.bf16.msra.mxu0 %v2599
    %3826 = vmatprep.subr.bf16.mxu0 %v2584
    %3827 = vmatpush1.bf16.msra.mxu0 %v2583
    %3828 = vmatprep.subr.bf16.mxu0 %v2568
    %3829 = vmatpush1.bf16.msra.mxu0 %v2567
    %3830 = vmatprep.subr.bf16.mxu0 %v2552
    %3831 = vmatpush1.bf16.msra.mxu0 %v2551
    %3832 = vmatprep.subr.bf16.mxu0 %v2536
    %3833 = vmatpush1.bf16.msra.mxu0 %v2535
    %3834 = vmatprep.subr.bf16.mxu0 %v2520
    %3835 = vmatpush1.bf16.msra.mxu0 %v2519
    %3836 = vmatprep.subr.bf16.mxu0 %v2504
    %3837 = vmatpush1.bf16.msra.mxu0 %v2503
    %3838 = vmatprep.subr.bf16.mxu0 %v2744
    %3839 = vmatpush2.bf16.msra.mxu0 %v2743
    %3840 = vmatprep.subr.bf16.mxu0 %v2728
    %3841 = vmatpush2.bf16.msra.mxu0 %v2727
    %3842 = vmatprep.subr.bf16.mxu0 %v2712
    %3843 = vmatpush2.bf16.msra.mxu0 %v2711
    %3844 = vmatprep.subr.bf16.mxu0 %v2696
    %3845 = vmatpush2.bf16.msra.mxu0 %v2695
    %3846 = vmatprep.subr.bf16.mxu0 %v2680
    %3847 = vmatpush2.bf16.msra.mxu0 %v2679
    %3848 = vmatprep.subr.bf16.mxu0 %v2664
    %3849 = vmatpush2.bf16.msra.mxu0 %v2663
    %3850 = vmatprep.subr.bf16.mxu0 %v2648
    %3851 = vmatpush2.bf16.msra.mxu0 %v2647
    %3852 = vmatprep.subr.bf16.mxu0 %v2632
    %3853 = vmatpush2.bf16.msra.mxu0 %v2631
    %3854 = vmatprep.mubr.bf16.mxu0 %v100
    %3855 = vmatmul.mubr.bf16.gmra.mxu0 %v99
    %v3856 = vpop.f32.mrf.mxu0
    %v3857 = vadd.f32 %v3806, %v3856
    %v3858 = vpop.f32.mrf.mxu0
    %v3859 = vadd.f32 %v3808, %v3858
    %v3860 = vpop.f32.mrf.mxu0
    %v3861 = vadd.f32 %v3810, %v3860
    %v3862 = vpop.f32.mrf.mxu0
    %v3863 = vadd.f32 %v3812, %v3862
    %3864 = vmatprep.mubr.bf16.mxu0 %v104
    %3865 = vmatmul.mubr.bf16.gmra.mxu0 %v103
    %v3866 = vpop.f32.mrf.mxu0
    %v3867 = vadd.f32 %v3816, %v3866
    %v3868 = vpop.f32.mrf.mxu0
    %v3869 = vadd.f32 %v3818, %v3868
    %v3870 = vpop.f32.mrf.mxu0
    %v3871 = vpop.f32.mrf.mxu0
    %3872 = vdwg.mxu0
    %3873 = vmatprep.subr.bf16.mxu0 %v2362
    %3874 = vmatpush1.bf16.msra.mxu0 %v2361
    %3875 = vmatprep.subr.bf16.mxu0 %v2346
    %3876 = vmatpush1.bf16.msra.mxu0 %v2345
    %3877 = vmatprep.subr.bf16.mxu0 %v2330
    %3878 = vmatpush1.bf16.msra.mxu0 %v2329
    %3879 = vmatprep.subr.bf16.mxu0 %v2314
    %3880 = vmatpush1.bf16.msra.mxu0 %v2313
    %3881 = vmatprep.subr.bf16.mxu0 %v2298
    %3882 = vmatpush1.bf16.msra.mxu0 %v2297
    %3883 = vmatprep.subr.bf16.mxu0 %v2282
    %3884 = vmatpush1.bf16.msra.mxu0 %v2281
    %3885 = vmatprep.subr.bf16.mxu0 %v2266
    %3886 = vmatpush1.bf16.msra.mxu0 %v2265
    %3887 = vmatprep.subr.bf16.mxu0 %v2250
    %3888 = vmatpush1.bf16.msra.mxu0 %v2249
    %3889 = vmatprep.subr.bf16.mxu0 %v2490
    %3890 = vmatpush2.bf16.msra.mxu0 %v2489
    %3891 = vmatprep.subr.bf16.mxu0 %v2474
    %3892 = vmatpush2.bf16.msra.mxu0 %v2473
    %3893 = vmatprep.subr.bf16.mxu0 %v2458
    %3894 = vmatpush2.bf16.msra.mxu0 %v2457
    %3895 = vmatprep.subr.bf16.mxu0 %v2442
    %3896 = vmatpush2.bf16.msra.mxu0 %v2441
    %3897 = vmatprep.subr.bf16.mxu0 %v2426
    %3898 = vmatpush2.bf16.msra.mxu0 %v2425
    %3899 = vmatprep.subr.bf16.mxu0 %v2410
    %3900 = vmatpush2.bf16.msra.mxu0 %v2409
    %3901 = vmatprep.subr.bf16.mxu0 %v2394
    %3902 = vmatpush2.bf16.msra.mxu0 %v2393
    %3903 = vmatprep.subr.bf16.mxu0 %v2378
    %3904 = vmatpush2.bf16.msra.mxu0 %v2377
    %3905 = vmatprep.mubr.bf16.mxu0 %v98
    %3906 = vmatmul.mubr.bf16.gmra.mxu0 %v97
    %v3907 = vpop.f32.mrf.mxu0
    %v3908 = vadd.f32 %v672, %v3907
    %v3909 = vpop.f32.mrf.mxu0
    %v3910 = vadd.f32 %v676, %v3909
    %v3911 = vpop.f32.mrf.mxu0
    %v3912 = vadd.f32 %v672, %v3911
    %v3913 = vpop.f32.mrf.mxu0
    %v3914 = vadd.f32 %v676, %v3913
    %3915 = vmatprep.mubr.bf16.mxu0 %v102
    %3916 = vmatmul.mubr.bf16.gmra.mxu0 %v101
    %v3917 = vpop.f32.mrf.mxu0
    %v3918 = vadd.f32 %v672, %v3917
    %v3919 = vpop.f32.mrf.mxu0
    %v3920 = vadd.f32 %v676, %v3919
    %v3921 = vpop.f32.mrf.mxu0
    %v3922 = vpop.f32.mrf.mxu0
    %3923 = vdwg.mxu0
    %3924 = vmatprep.subr.bf16.mxu0 %v2618
    %3925 = vmatpush1.bf16.msra.mxu0 %v2617
    %3926 = vmatprep.subr.bf16.mxu0 %v2602
    %3927 = vmatpush1.bf16.msra.mxu0 %v2601
    %3928 = vmatprep.subr.bf16.mxu0 %v2586
    %3929 = vmatpush1.bf16.msra.mxu0 %v2585
    %3930 = vmatprep.subr.bf16.mxu0 %v2570
    %3931 = vmatpush1.bf16.msra.mxu0 %v2569
    %3932 = vmatprep.subr.bf16.mxu0 %v2554
    %3933 = vmatpush1.bf16.msra.mxu0 %v2553
    %3934 = vmatprep.subr.bf16.mxu0 %v2538
    %3935 = vmatpush1.bf16.msra.mxu0 %v2537
    %3936 = vmatprep.subr.bf16.mxu0 %v2522
    %3937 = vmatpush1.bf16.msra.mxu0 %v2521
    %3938 = vmatprep.subr.bf16.mxu0 %v2506
    %3939 = vmatpush1.bf16.msra.mxu0 %v2505
    %3940 = vmatprep.subr.bf16.mxu0 %v2746
    %3941 = vmatpush2.bf16.msra.mxu0 %v2745
    %3942 = vmatprep.subr.bf16.mxu0 %v2730
    %3943 = vmatpush2.bf16.msra.mxu0 %v2729
    %3944 = vmatprep.subr.bf16.mxu0 %v2714
    %3945 = vmatpush2.bf16.msra.mxu0 %v2713
    %3946 = vmatprep.subr.bf16.mxu0 %v2698
    %3947 = vmatpush2.bf16.msra.mxu0 %v2697
    %3948 = vmatprep.subr.bf16.mxu0 %v2682
    %3949 = vmatpush2.bf16.msra.mxu0 %v2681
    %3950 = vmatprep.subr.bf16.mxu0 %v2666
    %3951 = vmatpush2.bf16.msra.mxu0 %v2665
    %3952 = vmatprep.subr.bf16.mxu0 %v2650
    %3953 = vmatpush2.bf16.msra.mxu0 %v2649
    %3954 = vmatprep.subr.bf16.mxu0 %v2634
    %3955 = vmatpush2.bf16.msra.mxu0 %v2633
    %3956 = vmatprep.mubr.bf16.mxu0 %v100
    %3957 = vmatmul.mubr.bf16.gmra.mxu0 %v99
    %v3958 = vpop.f32.mrf.mxu0
    %v3959 = vadd.f32 %v3908, %v3958
    %v3960 = vpop.f32.mrf.mxu0
    %v3961 = vadd.f32 %v3910, %v3960
    %v3962 = vpop.f32.mrf.mxu0
    %v3963 = vadd.f32 %v3912, %v3962
    %v3964 = vpop.f32.mrf.mxu0
    %v3965 = vadd.f32 %v3914, %v3964
    %3966 = vmatprep.mubr.bf16.mxu0 %v104
    %3967 = vmatmul.mubr.bf16.gmra.mxu0 %v103
    %v3968 = vpop.f32.mrf.mxu0
    %v3969 = vadd.f32 %v3918, %v3968
    %v3970 = vpop.f32.mrf.mxu0
    %v3971 = vadd.f32 %v3920, %v3970
    %v3972 = vpop.f32.mrf.mxu0
    %v3973 = vpop.f32.mrf.mxu0
    %3974 = vdwg.mxu0
    %3975 = vmatprep.subr.bf16.mxu0 %v2364
    %3976 = vmatpush1.bf16.msra.mxu0 %v2363
    %3977 = vmatprep.subr.bf16.mxu0 %v2348
    %3978 = vmatpush1.bf16.msra.mxu0 %v2347
    %3979 = vmatprep.subr.bf16.mxu0 %v2332
    %3980 = vmatpush1.bf16.msra.mxu0 %v2331
    %3981 = vmatprep.subr.bf16.mxu0 %v2316
    %3982 = vmatpush1.bf16.msra.mxu0 %v2315
    %3983 = vmatprep.subr.bf16.mxu0 %v2300
    %3984 = vmatpush1.bf16.msra.mxu0 %v2299
    %3985 = vmatprep.subr.bf16.mxu0 %v2284
    %3986 = vmatpush1.bf16.msra.mxu0 %v2283
    %3987 = vmatprep.subr.bf16.mxu0 %v2268
    %3988 = vmatpush1.bf16.msra.mxu0 %v2267
    %3989 = vmatprep.subr.bf16.mxu0 %v2252
    %3990 = vmatpush1.bf16.msra.mxu0 %v2251
    %3991 = vmatprep.subr.bf16.mxu0 %v2492
    %3992 = vmatpush2.bf16.msra.mxu0 %v2491
    %3993 = vmatprep.subr.bf16.mxu0 %v2476
    %3994 = vmatpush2.bf16.msra.mxu0 %v2475
    %3995 = vmatprep.subr.bf16.mxu0 %v2460
    %3996 = vmatpush2.bf16.msra.mxu0 %v2459
    %3997 = vmatprep.subr.bf16.mxu0 %v2444
    %3998 = vmatpush2.bf16.msra.mxu0 %v2443
    %3999 = vmatprep.subr.bf16.mxu0 %v2428
    %4000 = vmatpush2.bf16.msra.mxu0 %v2427
    %4001 = vmatprep.subr.bf16.mxu0 %v2412
    %4002 = vmatpush2.bf16.msra.mxu0 %v2411
    %4003 = vmatprep.subr.bf16.mxu0 %v2396
    %4004 = vmatpush2.bf16.msra.mxu0 %v2395
    %4005 = vmatprep.subr.bf16.mxu0 %v2380
    %4006 = vmatpush2.bf16.msra.mxu0 %v2379
    %4007 = vmatprep.mubr.bf16.mxu0 %v98
    %4008 = vmatmul.mubr.bf16.gmra.mxu0 %v97
    %v4009 = vpop.f32.mrf.mxu0
    %v4010 = vadd.f32 %v680, %v4009
    %v4011 = vpop.f32.mrf.mxu0
    %v4012 = vadd.f32 %v684, %v4011
    %v4013 = vpop.f32.mrf.mxu0
    %v4014 = vadd.f32 %v680, %v4013
    %v4015 = vpop.f32.mrf.mxu0
    %v4016 = vadd.f32 %v684, %v4015
    %4017 = vmatprep.mubr.bf16.mxu0 %v102
    %4018 = vmatmul.mubr.bf16.gmra.mxu0 %v101
    %v4019 = vpop.f32.mrf.mxu0
    %v4020 = vadd.f32 %v680, %v4019
    %v4021 = vpop.f32.mrf.mxu0
    %v4022 = vadd.f32 %v684, %v4021
    %v4023 = vpop.f32.mrf.mxu0
    %v4024 = vpop.f32.mrf.mxu0
    %4025 = vdwg.mxu0
    %4026 = vmatprep.subr.bf16.mxu0 %v2620
    %4027 = vmatpush1.bf16.msra.mxu0 %v2619
    %4028 = vmatprep.subr.bf16.mxu0 %v2604
    %4029 = vmatpush1.bf16.msra.mxu0 %v2603
    %4030 = vmatprep.subr.bf16.mxu0 %v2588
    %4031 = vmatpush1.bf16.msra.mxu0 %v2587
    %4032 = vmatprep.subr.bf16.mxu0 %v2572
    %4033 = vmatpush1.bf16.msra.mxu0 %v2571
    %4034 = vmatprep.subr.bf16.mxu0 %v2556
    %4035 = vmatpush1.bf16.msra.mxu0 %v2555
    %4036 = vmatprep.subr.bf16.mxu0 %v2540
    %4037 = vmatpush1.bf16.msra.mxu0 %v2539
    %4038 = vmatprep.subr.bf16.mxu0 %v2524
    %4039 = vmatpush1.bf16.msra.mxu0 %v2523
    %4040 = vmatprep.subr.bf16.mxu0 %v2508
    %4041 = vmatpush1.bf16.msra.mxu0 %v2507
    %4042 = vmatprep.subr.bf16.mxu0 %v2748
    %4043 = vmatpush2.bf16.msra.mxu0 %v2747
    %4044 = vmatprep.subr.bf16.mxu0 %v2732
    %4045 = vmatpush2.bf16.msra.mxu0 %v2731
    %4046 = vmatprep.subr.bf16.mxu0 %v2716
    %4047 = vmatpush2.bf16.msra.mxu0 %v2715
    %4048 = vmatprep.subr.bf16.mxu0 %v2700
    %4049 = vmatpush2.bf16.msra.mxu0 %v2699
    %4050 = vmatprep.subr.bf16.mxu0 %v2684
    %4051 = vmatpush2.bf16.msra.mxu0 %v2683
    %4052 = vmatprep.subr.bf16.mxu0 %v2668
    %4053 = vmatpush2.bf16.msra.mxu0 %v2667
    %4054 = vmatprep.subr.bf16.mxu0 %v2652
    %4055 = vmatpush2.bf16.msra.mxu0 %v2651
    %4056 = vmatprep.subr.bf16.mxu0 %v2636
    %4057 = vmatpush2.bf16.msra.mxu0 %v2635
    %4058 = vmatprep.mubr.bf16.mxu0 %v100
    %4059 = vmatmul.mubr.bf16.gmra.mxu0 %v99
    %v4060 = vpop.f32.mrf.mxu0
    %v4061 = vadd.f32 %v4010, %v4060
    %v4062 = vpop.f32.mrf.mxu0
    %v4063 = vadd.f32 %v4012, %v4062
    %v4064 = vpop.f32.mrf.mxu0
    %v4065 = vadd.f32 %v4014, %v4064
    %v4066 = vpop.f32.mrf.mxu0
    %v4067 = vadd.f32 %v4016, %v4066
    %4068 = vmatprep.mubr.bf16.mxu0 %v104
    %4069 = vmatmul.mubr.bf16.gmra.mxu0 %v103
    %v4070 = vpop.f32.mrf.mxu0
    %v4071 = vadd.f32 %v4020, %v4070
    %v4072 = vpop.f32.mrf.mxu0
    %v4073 = vadd.f32 %v4022, %v4072
    %v4074 = vpop.f32.mrf.mxu0
    %v4075 = vpop.f32.mrf.mxu0
    %4076 = vdwg.mxu0
    %v4077 = vmax.f32 %v3347, 0.0
    %v4078 = vmax.f32 %v3349, 0.0
    %v4079 = vmax.f32 %v3449, 0.0
    %v4080 = vmax.f32 %v3451, 0.0
    %v4081 = vmax.f32 %v3551, 0.0
    %v4082 = vmax.f32 %v3553, 0.0
    %v4083 = vmax.f32 %v3653, 0.0
    %v4084 = vmax.f32 %v3655, 0.0
    %v4085 = vmax.f32 %v3755, 0.0
    %v4086 = vmax.f32 %v3757, 0.0
    %v4087 = vmax.f32 %v3857, 0.0
    %v4088 = vmax.f32 %v3859, 0.0
    %v4089 = vmax.f32 %v3959, 0.0
    %v4090 = vmax.f32 %v3961, 0.0
    %v4091 = vmax.f32 %v4061, 0.0
    %v4092 = vmax.f32 %v4063, 0.0
    %v4093 = vmax.f32 %v3351, 0.0
    %v4094 = vmax.f32 %v3353, 0.0
    %v4095 = vmax.f32 %v3453, 0.0
    %v4096 = vmax.f32 %v3455, 0.0
    %v4097 = vmax.f32 %v3555, 0.0
    %v4098 = vmax.f32 %v3557, 0.0
    %v4099 = vmax.f32 %v3657, 0.0
    %v4100 = vmax.f32 %v3659, 0.0
    %v4101 = vmax.f32 %v3759, 0.0
    %v4102 = vmax.f32 %v3761, 0.0
    %v4103 = vmax.f32 %v3861, 0.0
    %v4104 = vmax.f32 %v3863, 0.0
    %v4105 = vmax.f32 %v3963, 0.0
    %v4106 = vmax.f32 %v3965, 0.0
    %v4107 = vmax.f32 %v4065, 0.0
    %v4108 = vmax.f32 %v4067, 0.0
    %v4109 = vmax.f32 %v3357, 0.0
    %v4110 = vmax.f32 %v3359, 0.0
    %v4111 = vmax.f32 %v3459, 0.0
    %v4112 = vmax.f32 %v3461, 0.0
    %v4113 = vmax.f32 %v3561, 0.0
    %v4114 = vmax.f32 %v3563, 0.0
    %v4115 = vmax.f32 %v3663, 0.0
    %v4116 = vmax.f32 %v3665, 0.0
    %v4117 = vmax.f32 %v3765, 0.0
    %v4118 = vmax.f32 %v3767, 0.0
    %v4119 = vmax.f32 %v3867, 0.0
    %v4120 = vmax.f32 %v3869, 0.0
    %v4121 = vmax.f32 %v3969, 0.0
    %v4122 = vmax.f32 %v3971, 0.0
    %v4123 = vmax.f32 %v4071, 0.0
    %v4124 = vmax.f32 %v4073, 0.0
    %v4125 = vpack.c.bf16 %v4093, %v4077
    %v4126 = vpack.c.bf16 %v4094, %v4078
    %v4127 = vpack.c.bf16 %v4095, %v4079
    %v4128 = vpack.c.bf16 %v4096, %v4080
    %v4129 = vpack.c.bf16 %v4097, %v4081
    %v4130 = vpack.c.bf16 %v4098, %v4082
    %v4131 = vpack.c.bf16 %v4099, %v4083
    %v4132 = vpack.c.bf16 %v4100, %v4084
    %v4133 = vpack.c.bf16 %v4101, %v4085
    %v4134 = vpack.c.bf16 %v4102, %v4086
    %v4135 = vpack.c.bf16 %v4103, %v4087
    %v4136 = vpack.c.bf16 %v4104, %v4088
    %v4137 = vpack.c.bf16 %v4105, %v4089
    %v4138 = vpack.c.bf16 %v4106, %v4090
    %v4139 = vpack.c.bf16 %v4107, %v4091
    %v4140 = vpack.c.bf16 %v4108, %v4092
    %v4141 = vpack.c.bf16 %v4109, %v4109
    %v4142 = vpack.c.bf16 %v4110, %v4110
    %v4143 = vpack.c.bf16 %v4111, %v4111
    %v4144 = vpack.c.bf16 %v4112, %v4112
    %v4145 = vpack.c.bf16 %v4113, %v4113
    %v4146 = vpack.c.bf16 %v4114, %v4114
    %v4147 = vpack.c.bf16 %v4115, %v4115
    %v4148 = vpack.c.bf16 %v4116, %v4116
    %v4149 = vpack.c.bf16 %v4117, %v4117
    %v4150 = vpack.c.bf16 %v4118, %v4118
    %v4151 = vpack.c.bf16 %v4119, %v4119
    %v4152 = vpack.c.bf16 %v4120, %v4120
    %v4153 = vpack.c.bf16 %v4121, %v4121
    %v4154 = vpack.c.bf16 %v4122, %v4122
    %v4155 = vpack.c.bf16 %v4123, %v4123
    %v4156 = vpack.c.bf16 %v4124, %v4124
    %v4157 = vld [vmem:[#allocation8] sm:$0xff]
    %v4158 = vld [vmem:[#allocation8 + $0x8] sm:$0xff]
    %v4159 = vld [vmem:[#allocation8 + $0x10] sm:$0xff]
    %v4160 = vld [vmem:[#allocation8 + $0x18] sm:$0xff]
    %v4161 = vld [vmem:[#allocation8 + $0x20] sm:$0xff]
    %v4162 = vld [vmem:[#allocation8 + $0x28] sm:$0xff]
    %v4163 = vld [vmem:[#allocation8 + $0x30] sm:$0xff]
    %v4164 = vld [vmem:[#allocation8 + $0x38] sm:$0xff]
    %v4165 = vld [vmem:[#allocation8 + $0x40] sm:$0xff]
    %v4166 = vld [vmem:[#allocation8 + $0x48] sm:$0xff]
    %v4167 = vld [vmem:[#allocation8 + $0x50] sm:$0xff]
    %v4168 = vld [vmem:[#allocation8 + $0x58] sm:$0xff]
    %v4169 = vld [vmem:[#allocation8 + $0x60] sm:$0xff]
    %v4170 = vld [vmem:[#allocation8 + $0x68] sm:$0xff]
    %v4171 = vld [vmem:[#allocation8 + $0x70] sm:$0xff]
    %v4172 = vld [vmem:[#allocation8 + $0x78] sm:$0xff]
    %v4173 = vld [vmem:[#allocation8 + $0x80] sm:$0xff]
    %v4174 = vld [vmem:[#allocation8 + $0x88] sm:$0xff]
    %v4175 = vld [vmem:[#allocation8 + $0x90] sm:$0xff]
    %v4176 = vld [vmem:[#allocation8 + $0x98] sm:$0xff]
    %v4177 = vld [vmem:[#allocation8 + $0xa0] sm:$0xff]
    %v4178 = vld [vmem:[#allocation8 + $0xa8] sm:$0xff]
    %v4179 = vld [vmem:[#allocation8 + $0xb0] sm:$0xff]
    %v4180 = vld [vmem:[#allocation8 + $0xb8] sm:$0xff]
    %v4181 = vld [vmem:[#allocation8 + $0xc0] sm:$0xff]
    %v4182 = vld [vmem:[#allocation8 + $0xc8] sm:$0xff]
    %v4183 = vld [vmem:[#allocation8 + $0xd0] sm:$0xff]
    %v4184 = vld [vmem:[#allocation8 + $0xd8] sm:$0xff]
    %v4185 = vld [vmem:[#allocation8 + $0xe0] sm:$0xff]
    %v4186 = vld [vmem:[#allocation8 + $0xe8] sm:$0xff]
    %v4187 = vld [vmem:[#allocation8 + $0xf0] sm:$0xff]
    %v4188 = vld [vmem:[#allocation8 + $0xf8] sm:$0xff]
    %v4189 = vld [vmem:[#allocation8 + $0x100] sm:$0xff]
    %v4190 = vld [vmem:[#allocation8 + $0x108] sm:$0xff]
    %v4191 = vld [vmem:[#allocation8 + $0x110] sm:$0xff]
    %v4192 = vld [vmem:[#allocation8 + $0x118] sm:$0xff]
    %v4193 = vld [vmem:[#allocation8 + $0x120] sm:$0xff]
    %v4194 = vld [vmem:[#allocation8 + $0x128] sm:$0xff]
    %v4195 = vld [vmem:[#allocation8 + $0x130] sm:$0xff]
    %v4196 = vld [vmem:[#allocation8 + $0x138] sm:$0xff]
    %v4197 = vld [vmem:[#allocation8 + $0x140] sm:$0xff]
    %v4198 = vld [vmem:[#allocation8 + $0x148] sm:$0xff]
    %v4199 = vld [vmem:[#allocation8 + $0x150] sm:$0xff]
    %v4200 = vld [vmem:[#allocation8 + $0x158] sm:$0xff]
    %v4201 = vld [vmem:[#allocation8 + $0x160] sm:$0xff]
    %v4202 = vld [vmem:[#allocation8 + $0x168] sm:$0xff]
    %v4203 = vld [vmem:[#allocation8 + $0x170] sm:$0xff]
    %v4204 = vld [vmem:[#allocation8 + $0x178] sm:$0xff]
    %v4205 = vld [vmem:[#allocation8 + $0x180] sm:$0xff]
    %v4206 = vld [vmem:[#allocation8 + $0x188] sm:$0xff]
    %v4207 = vld [vmem:[#allocation8 + $0x190] sm:$0xff]
    %v4208 = vld [vmem:[#allocation8 + $0x198] sm:$0xff]
    %v4209 = vld [vmem:[#allocation8 + $0x1a0] sm:$0xff]
    %v4210 = vld [vmem:[#allocation8 + $0x1a8] sm:$0xff]
    %v4211 = vld [vmem:[#allocation8 + $0x1b0] sm:$0xff]
    %v4212 = vld [vmem:[#allocation8 + $0x1b8] sm:$0xff]
    %v4213 = vld [vmem:[#allocation8 + $0x1c0] sm:$0xff]
    %v4214 = vld [vmem:[#allocation8 + $0x1c8] sm:$0xff]
    %v4215 = vld [vmem:[#allocation8 + $0x1d0] sm:$0xff]
    %v4216 = vld [vmem:[#allocation8 + $0x1d8] sm:$0xff]
    %v4217 = vld [vmem:[#allocation8 + $0x1e0] sm:$0xff]
    %v4218 = vld [vmem:[#allocation8 + $0x1e8] sm:$0xff]
    %v4219 = vld [vmem:[#allocation8 + $0x1f0] sm:$0xff]
    %v4220 = vld [vmem:[#allocation8 + $0x1f8] sm:$0xff]
    %v4221 = vld [vmem:[#allocation8 + $0x200] sm:$0xff]
    %v4222 = vld [vmem:[#allocation8 + $0x208] sm:$0xff]
    %v4223 = vld [vmem:[#allocation8 + $0x210] sm:$0xff]
    %v4224 = vld [vmem:[#allocation8 + $0x218] sm:$0xff]
    %v4225 = vld [vmem:[#allocation8 + $0x220] sm:$0xff]
    %v4226 = vld [vmem:[#allocation8 + $0x228] sm:$0xff]
    %v4227 = vld [vmem:[#allocation8 + $0x230] sm:$0xff]
    %v4228 = vld [vmem:[#allocation8 + $0x238] sm:$0xff]
    %v4229 = vld [vmem:[#allocation8 + $0x240] sm:$0xff]
    %v4230 = vld [vmem:[#allocation8 + $0x248] sm:$0xff]
    %v4231 = vld [vmem:[#allocation8 + $0x250] sm:$0xff]
    %v4232 = vld [vmem:[#allocation8 + $0x258] sm:$0xff]
    %v4233 = vld [vmem:[#allocation8 + $0x260] sm:$0xff]
    %v4234 = vld [vmem:[#allocation8 + $0x268] sm:$0xff]
    %v4235 = vld [vmem:[#allocation8 + $0x270] sm:$0xff]
    %v4236 = vld [vmem:[#allocation8 + $0x278] sm:$0xff]
    %v4237 = vld [vmem:[#allocation8 + $0x280] sm:$0xff]
    %v4238 = vld [vmem:[#allocation8 + $0x288] sm:$0xff]
    %v4239 = vld [vmem:[#allocation8 + $0x290] sm:$0xff]
    %v4240 = vld [vmem:[#allocation8 + $0x298] sm:$0xff]
    %v4241 = vld [vmem:[#allocation8 + $0x2a0] sm:$0xff]
    %v4242 = vld [vmem:[#allocation8 + $0x2a8] sm:$0xff]
    %v4243 = vld [vmem:[#allocation8 + $0x2b0] sm:$0xff]
    %v4244 = vld [vmem:[#allocation8 + $0x2b8] sm:$0xff]
    %v4245 = vld [vmem:[#allocation8 + $0x2c0] sm:$0xff]
    %v4246 = vld [vmem:[#allocation8 + $0x2c8] sm:$0xff]
    %v4247 = vld [vmem:[#allocation8 + $0x2d0] sm:$0xff]
    %v4248 = vld [vmem:[#allocation8 + $0x2d8] sm:$0xff]
    %v4249 = vld [vmem:[#allocation8 + $0x2e0] sm:$0xff]
    %v4250 = vld [vmem:[#allocation8 + $0x2e8] sm:$0xff]
    %v4251 = vld [vmem:[#allocation8 + $0x2f0] sm:$0xff]
    %v4252 = vld [vmem:[#allocation8 + $0x2f8] sm:$0xff]
    %v4253 = vld [vmem:[#allocation8 + $0x300] sm:$0xff]
    %v4254 = vld [vmem:[#allocation8 + $0x308] sm:$0xff]
    %v4255 = vld [vmem:[#allocation8 + $0x310] sm:$0xff]
    %v4256 = vld [vmem:[#allocation8 + $0x318] sm:$0xff]
    %v4257 = vld [vmem:[#allocation8 + $0x320] sm:$0xff]
    %v4258 = vld [vmem:[#allocation8 + $0x328] sm:$0xff]
    %v4259 = vld [vmem:[#allocation8 + $0x330] sm:$0xff]
    %v4260 = vld [vmem:[#allocation8 + $0x338] sm:$0xff]
    %v4261 = vld [vmem:[#allocation8 + $0x340] sm:$0xff]
    %v4262 = vld [vmem:[#allocation8 + $0x348] sm:$0xff]
    %v4263 = vld [vmem:[#allocation8 + $0x350] sm:$0xff]
    %v4264 = vld [vmem:[#allocation8 + $0x358] sm:$0xff]
    %v4265 = vld [vmem:[#allocation8 + $0x360] sm:$0xff]
    %v4266 = vld [vmem:[#allocation8 + $0x368] sm:$0xff]
    %v4267 = vld [vmem:[#allocation8 + $0x370] sm:$0xff]
    %v4268 = vld [vmem:[#allocation8 + $0x378] sm:$0xff]
    %v4269 = vld [vmem:[#allocation8 + $0x380] sm:$0xff]
    %v4270 = vld [vmem:[#allocation8 + $0x388] sm:$0xff]
    %v4271 = vld [vmem:[#allocation8 + $0x390] sm:$0xff]
    %v4272 = vld [vmem:[#allocation8 + $0x398] sm:$0xff]
    %v4273 = vld [vmem:[#allocation8 + $0x3a0] sm:$0xff]
    %v4274 = vld [vmem:[#allocation8 + $0x3a8] sm:$0xff]
    %v4275 = vld [vmem:[#allocation8 + $0x3b0] sm:$0xff]
    %v4276 = vld [vmem:[#allocation8 + $0x3b8] sm:$0xff]
    %v4277 = vld [vmem:[#allocation8 + $0x3c0] sm:$0xff]
    %v4278 = vld [vmem:[#allocation8 + $0x3c8] sm:$0xff]
    %v4279 = vld [vmem:[#allocation8 + $0x3d0] sm:$0xff]
    %v4280 = vld [vmem:[#allocation8 + $0x3d8] sm:$0xff]
    %v4281 = vld [vmem:[#allocation8 + $0x3e0] sm:$0xff]
    %v4282 = vld [vmem:[#allocation8 + $0x3e8] sm:$0xff]
    %v4283 = vld [vmem:[#allocation8 + $0x3f0] sm:$0xff]
    %v4284 = vld [vmem:[#allocation8 + $0x3f8] sm:$0xff]
    %v4285 = vld [vmem:[#allocation8 + $0x400] sm:$0xff]
    %v4286 = vld [vmem:[#allocation8 + $0x408] sm:$0xff]
    %v4287 = vld [vmem:[#allocation8 + $0x410] sm:$0xff]
    %v4288 = vld [vmem:[#allocation8 + $0x418] sm:$0xff]
    %v4289 = vld [vmem:[#allocation8 + $0x420] sm:$0xff]
    %v4290 = vld [vmem:[#allocation8 + $0x428] sm:$0xff]
    %v4291 = vld [vmem:[#allocation8 + $0x430] sm:$0xff]
    %v4292 = vld [vmem:[#allocation8 + $0x438] sm:$0xff]
    %v4293 = vld [vmem:[#allocation8 + $0x440] sm:$0xff]
    %v4294 = vld [vmem:[#allocation8 + $0x448] sm:$0xff]
    %v4295 = vld [vmem:[#allocation8 + $0x450] sm:$0xff]
    %v4296 = vld [vmem:[#allocation8 + $0x458] sm:$0xff]
    %v4297 = vld [vmem:[#allocation8 + $0x460] sm:$0xff]
    %v4298 = vld [vmem:[#allocation8 + $0x468] sm:$0xff]
    %v4299 = vld [vmem:[#allocation8 + $0x470] sm:$0xff]
    %v4300 = vld [vmem:[#allocation8 + $0x478] sm:$0xff]
    %v4301 = vld [vmem:[#allocation8 + $0x480] sm:$0xff]
    %v4302 = vld [vmem:[#allocation8 + $0x488] sm:$0xff]
    %v4303 = vld [vmem:[#allocation8 + $0x490] sm:$0xff]
    %v4304 = vld [vmem:[#allocation8 + $0x498] sm:$0xff]
    %v4305 = vld [vmem:[#allocation8 + $0x4a0] sm:$0xff]
    %v4306 = vld [vmem:[#allocation8 + $0x4a8] sm:$0xff]
    %v4307 = vld [vmem:[#allocation8 + $0x4b0] sm:$0xff]
    %v4308 = vld [vmem:[#allocation8 + $0x4b8] sm:$0xff]
    %v4309 = vld [vmem:[#allocation8 + $0x4c0] sm:$0xff]
    %v4310 = vld [vmem:[#allocation8 + $0x4c8] sm:$0xff]
    %v4311 = vld [vmem:[#allocation8 + $0x4d0] sm:$0xff]
    %v4312 = vld [vmem:[#allocation8 + $0x4d8] sm:$0xff]
    %v4313 = vld [vmem:[#allocation8 + $0x4e0] sm:$0xff]
    %v4314 = vld [vmem:[#allocation8 + $0x4e8] sm:$0xff]
    %v4315 = vld [vmem:[#allocation8 + $0x4f0] sm:$0xff]
    %v4316 = vld [vmem:[#allocation8 + $0x4f8] sm:$0xff]
    %v4317 = vld [vmem:[#allocation8 + $0x500] sm:$0xff]
    %v4318 = vld [vmem:[#allocation8 + $0x508] sm:$0xff]
    %v4319 = vld [vmem:[#allocation8 + $0x510] sm:$0xff]
    %v4320 = vld [vmem:[#allocation8 + $0x518] sm:$0xff]
    %v4321 = vld [vmem:[#allocation8 + $0x520] sm:$0xff]
    %v4322 = vld [vmem:[#allocation8 + $0x528] sm:$0xff]
    %v4323 = vld [vmem:[#allocation8 + $0x530] sm:$0xff]
    %v4324 = vld [vmem:[#allocation8 + $0x538] sm:$0xff]
    %v4325 = vld [vmem:[#allocation8 + $0x540] sm:$0xff]
    %v4326 = vld [vmem:[#allocation8 + $0x548] sm:$0xff]
    %v4327 = vld [vmem:[#allocation8 + $0x550] sm:$0xff]
    %v4328 = vld [vmem:[#allocation8 + $0x558] sm:$0xff]
    %v4329 = vld [vmem:[#allocation8 + $0x560] sm:$0xff]
    %v4330 = vld [vmem:[#allocation8 + $0x568] sm:$0xff]
    %v4331 = vld [vmem:[#allocation8 + $0x570] sm:$0xff]
    %v4332 = vld [vmem:[#allocation8 + $0x578] sm:$0xff]
    %v4333 = vld [vmem:[#allocation8 + $0x580] sm:$0xff]
    %v4334 = vld [vmem:[#allocation8 + $0x588] sm:$0xff]
    %v4335 = vld [vmem:[#allocation8 + $0x590] sm:$0xff]
    %v4336 = vld [vmem:[#allocation8 + $0x598] sm:$0xff]
    %v4337 = vld [vmem:[#allocation8 + $0x5a0] sm:$0xff]
    %v4338 = vld [vmem:[#allocation8 + $0x5a8] sm:$0xff]
    %v4339 = vld [vmem:[#allocation8 + $0x5b0] sm:$0xff]
    %v4340 = vld [vmem:[#allocation8 + $0x5b8] sm:$0xff]
    %v4341 = vld [vmem:[#allocation8 + $0x5c0] sm:$0xff]
    %v4342 = vld [vmem:[#allocation8 + $0x5c8] sm:$0xff]
    %v4343 = vld [vmem:[#allocation8 + $0x5d0] sm:$0xff]
    %v4344 = vld [vmem:[#allocation8 + $0x5d8] sm:$0xff]
    %v4345 = vld [vmem:[#allocation8 + $0x5e0] sm:$0xff]
    %v4346 = vld [vmem:[#allocation8 + $0x5e8] sm:$0xff]
    %v4347 = vld [vmem:[#allocation8 + $0x5f0] sm:$0xff]
    %v4348 = vld [vmem:[#allocation8 + $0x5f8] sm:$0xff]
    %v4349 = vld [vmem:[#allocation8 + $0x600] sm:$0xff]
    %v4350 = vld [vmem:[#allocation8 + $0x608] sm:$0xff]
    %v4351 = vld [vmem:[#allocation8 + $0x610] sm:$0xff]
    %v4352 = vld [vmem:[#allocation8 + $0x618] sm:$0xff]
    %v4353 = vld [vmem:[#allocation8 + $0x620] sm:$0xff]
    %v4354 = vld [vmem:[#allocation8 + $0x628] sm:$0xff]
    %v4355 = vld [vmem:[#allocation8 + $0x630] sm:$0xff]
    %v4356 = vld [vmem:[#allocation8 + $0x638] sm:$0xff]
    %v4357 = vld [vmem:[#allocation8 + $0x640] sm:$0xff]
    %v4358 = vld [vmem:[#allocation8 + $0x648] sm:$0xff]
    %v4359 = vld [vmem:[#allocation8 + $0x650] sm:$0xff]
    %v4360 = vld [vmem:[#allocation8 + $0x658] sm:$0xff]
    %v4361 = vld [vmem:[#allocation8 + $0x660] sm:$0xff]
    %v4362 = vld [vmem:[#allocation8 + $0x668] sm:$0xff]
    %v4363 = vld [vmem:[#allocation8 + $0x670] sm:$0xff]
    %v4364 = vld [vmem:[#allocation8 + $0x678] sm:$0xff]
    %v4365 = vld [vmem:[#allocation8 + $0x680] sm:$0xff]
    %v4366 = vld [vmem:[#allocation8 + $0x688] sm:$0xff]
    %v4367 = vld [vmem:[#allocation8 + $0x690] sm:$0xff]
    %v4368 = vld [vmem:[#allocation8 + $0x698] sm:$0xff]
    %v4369 = vld [vmem:[#allocation8 + $0x6a0] sm:$0xff]
    %v4370 = vld [vmem:[#allocation8 + $0x6a8] sm:$0xff]
    %v4371 = vld [vmem:[#allocation8 + $0x6b0] sm:$0xff]
    %v4372 = vld [vmem:[#allocation8 + $0x6b8] sm:$0xff]
    %v4373 = vld [vmem:[#allocation8 + $0x6c0] sm:$0xff]
    %v4374 = vld [vmem:[#allocation8 + $0x6c8] sm:$0xff]
    %v4375 = vld [vmem:[#allocation8 + $0x6d0] sm:$0xff]
    %v4376 = vld [vmem:[#allocation8 + $0x6d8] sm:$0xff]
    %v4377 = vld [vmem:[#allocation8 + $0x6e0] sm:$0xff]
    %v4378 = vld [vmem:[#allocation8 + $0x6e8] sm:$0xff]
    %v4379 = vld [vmem:[#allocation8 + $0x6f0] sm:$0xff]
    %v4380 = vld [vmem:[#allocation8 + $0x6f8] sm:$0xff]
    %v4381 = vld [vmem:[#allocation8 + $0x700] sm:$0xff]
    %v4382 = vld [vmem:[#allocation8 + $0x708] sm:$0xff]
    %v4383 = vld [vmem:[#allocation8 + $0x710] sm:$0xff]
    %v4384 = vld [vmem:[#allocation8 + $0x718] sm:$0xff]
    %v4385 = vld [vmem:[#allocation8 + $0x720] sm:$0xff]
    %v4386 = vld [vmem:[#allocation8 + $0x728] sm:$0xff]
    %v4387 = vld [vmem:[#allocation8 + $0x730] sm:$0xff]
    %v4388 = vld [vmem:[#allocation8 + $0x738] sm:$0xff]
    %v4389 = vld [vmem:[#allocation8 + $0x740] sm:$0xff]
    %v4390 = vld [vmem:[#allocation8 + $0x748] sm:$0xff]
    %v4391 = vld [vmem:[#allocation8 + $0x750] sm:$0xff]
    %v4392 = vld [vmem:[#allocation8 + $0x758] sm:$0xff]
    %v4393 = vld [vmem:[#allocation8 + $0x760] sm:$0xff]
    %v4394 = vld [vmem:[#allocation8 + $0x768] sm:$0xff]
    %v4395 = vld [vmem:[#allocation8 + $0x770] sm:$0xff]
    %v4396 = vld [vmem:[#allocation8 + $0x778] sm:$0xff]
    %v4397 = vld [vmem:[#allocation8 + $0x780] sm:$0xff]
    %v4398 = vld [vmem:[#allocation8 + $0x788] sm:$0xff]
    %v4399 = vld [vmem:[#allocation8 + $0x790] sm:$0xff]
    %v4400 = vld [vmem:[#allocation8 + $0x798] sm:$0xff]
    %v4401 = vld [vmem:[#allocation8 + $0x7a0] sm:$0xff]
    %v4402 = vld [vmem:[#allocation8 + $0x7a8] sm:$0xff]
    %v4403 = vld [vmem:[#allocation8 + $0x7b0] sm:$0xff]
    %v4404 = vld [vmem:[#allocation8 + $0x7b8] sm:$0xff]
    %v4405 = vld [vmem:[#allocation8 + $0x7c0] sm:$0xff]
    %v4406 = vld [vmem:[#allocation8 + $0x7c8] sm:$0xff]
    %v4407 = vld [vmem:[#allocation8 + $0x7d0] sm:$0xff]
    %v4408 = vld [vmem:[#allocation8 + $0x7d8] sm:$0xff]
    %v4409 = vld [vmem:[#allocation8 + $0x7e0] sm:$0xff]
    %v4410 = vld [vmem:[#allocation8 + $0x7e8] sm:$0xff]
    %v4411 = vld [vmem:[#allocation8 + $0x7f0] sm:$0xff]
    %v4412 = vld [vmem:[#allocation8 + $0x7f8] sm:$0xff]
    %v4413 = vld [vmem:[#allocation8 + $0x800] sm:$0xff]
    %v4414 = vld [vmem:[#allocation8 + $0x808] sm:$0xff]
    %v4415 = vld [vmem:[#allocation8 + $0x810] sm:$0xff]
    %v4416 = vld [vmem:[#allocation8 + $0x818] sm:$0xff]
    %v4417 = vld [vmem:[#allocation8 + $0x820] sm:$0xff]
    %v4418 = vld [vmem:[#allocation8 + $0x828] sm:$0xff]
    %v4419 = vld [vmem:[#allocation8 + $0x830] sm:$0xff]
    %v4420 = vld [vmem:[#allocation8 + $0x838] sm:$0xff]
    %v4421 = vld [vmem:[#allocation8 + $0x840] sm:$0xff]
    %v4422 = vld [vmem:[#allocation8 + $0x848] sm:$0xff]
    %v4423 = vld [vmem:[#allocation8 + $0x850] sm:$0xff]
    %v4424 = vld [vmem:[#allocation8 + $0x858] sm:$0xff]
    %v4425 = vld [vmem:[#allocation8 + $0x860] sm:$0xff]
    %v4426 = vld [vmem:[#allocation8 + $0x868] sm:$0xff]
    %v4427 = vld [vmem:[#allocation8 + $0x870] sm:$0xff]
    %v4428 = vld [vmem:[#allocation8 + $0x878] sm:$0xff]
    %v4429 = vld [vmem:[#allocation8 + $0x880] sm:$0xff]
    %v4430 = vld [vmem:[#allocation8 + $0x888] sm:$0xff]
    %v4431 = vld [vmem:[#allocation8 + $0x890] sm:$0xff]
    %v4432 = vld [vmem:[#allocation8 + $0x898] sm:$0xff]
    %v4433 = vld [vmem:[#allocation8 + $0x8a0] sm:$0xff]
    %v4434 = vld [vmem:[#allocation8 + $0x8a8] sm:$0xff]
    %v4435 = vld [vmem:[#allocation8 + $0x8b0] sm:$0xff]
    %v4436 = vld [vmem:[#allocation8 + $0x8b8] sm:$0xff]
    %v4437 = vld [vmem:[#allocation8 + $0x8c0] sm:$0xff]
    %v4438 = vld [vmem:[#allocation8 + $0x8c8] sm:$0xff]
    %v4439 = vld [vmem:[#allocation8 + $0x8d0] sm:$0xff]
    %v4440 = vld [vmem:[#allocation8 + $0x8d8] sm:$0xff]
    %v4441 = vld [vmem:[#allocation8 + $0x8e0] sm:$0xff]
    %v4442 = vld [vmem:[#allocation8 + $0x8e8] sm:$0xff]
    %v4443 = vld [vmem:[#allocation8 + $0x8f0] sm:$0xff]
    %v4444 = vld [vmem:[#allocation8 + $0x8f8] sm:$0xff]
    %v4445 = vld [vmem:[#allocation8 + $0x900] sm:$0xff]
    %v4446 = vld [vmem:[#allocation8 + $0x908] sm:$0xff]
    %v4447 = vld [vmem:[#allocation8 + $0x910] sm:$0xff]
    %v4448 = vld [vmem:[#allocation8 + $0x918] sm:$0xff]
    %v4449 = vld [vmem:[#allocation8 + $0x920] sm:$0xff]
    %v4450 = vld [vmem:[#allocation8 + $0x928] sm:$0xff]
    %v4451 = vld [vmem:[#allocation8 + $0x930] sm:$0xff]
    %v4452 = vld [vmem:[#allocation8 + $0x938] sm:$0xff]
    %v4453 = vld [vmem:[#allocation8 + $0x940] sm:$0xff]
    %v4454 = vld [vmem:[#allocation8 + $0x948] sm:$0xff]
    %v4455 = vld [vmem:[#allocation8 + $0x950] sm:$0xff]
    %v4456 = vld [vmem:[#allocation8 + $0x958] sm:$0xff]
    %v4457 = vld [vmem:[#allocation8 + $0x960] sm:$0xff]
    %v4458 = vld [vmem:[#allocation8 + $0x968] sm:$0xff]
    %v4459 = vld [vmem:[#allocation8 + $0x970] sm:$0xff]
    %v4460 = vld [vmem:[#allocation8 + $0x978] sm:$0xff]
    %v4461 = vld [vmem:[#allocation8 + $0x980] sm:$0xff]
    %v4462 = vld [vmem:[#allocation8 + $0x988] sm:$0xff]
    %v4463 = vld [vmem:[#allocation8 + $0x990] sm:$0xff]
    %v4464 = vld [vmem:[#allocation8 + $0x998] sm:$0xff]
    %v4465 = vld [vmem:[#allocation8 + $0x9a0] sm:$0xff]
    %v4466 = vld [vmem:[#allocation8 + $0x9a8] sm:$0xff]
    %v4467 = vld [vmem:[#allocation8 + $0x9b0] sm:$0xff]
    %v4468 = vld [vmem:[#allocation8 + $0x9b8] sm:$0xff]
    %v4469 = vld [vmem:[#allocation8 + $0x9c0] sm:$0xff]
    %v4470 = vld [vmem:[#allocation8 + $0x9c8] sm:$0xff]
    %v4471 = vld [vmem:[#allocation8 + $0x9d0] sm:$0xff]
    %v4472 = vld [vmem:[#allocation8 + $0x9d8] sm:$0xff]
    %v4473 = vld [vmem:[#allocation8 + $0x9e0] sm:$0xff]
    %v4474 = vld [vmem:[#allocation8 + $0x9e8] sm:$0xff]
    %v4475 = vld [vmem:[#allocation8 + $0x9f0] sm:$0xff]
    %v4476 = vld [vmem:[#allocation8 + $0x9f8] sm:$0xff]
    %v4477 = vld [vmem:[#allocation8 + $0xa00] sm:$0xff]
    %v4478 = vld [vmem:[#allocation8 + $0xa08] sm:$0xff]
    %v4479 = vld [vmem:[#allocation8 + $0xa10] sm:$0xff]
    %v4480 = vld [vmem:[#allocation8 + $0xa18] sm:$0xff]
    %v4481 = vld [vmem:[#allocation8 + $0xa20] sm:$0xff]
    %v4482 = vld [vmem:[#allocation8 + $0xa28] sm:$0xff]
    %v4483 = vld [vmem:[#allocation8 + $0xa30] sm:$0xff]
    %v4484 = vld [vmem:[#allocation8 + $0xa38] sm:$0xff]
    %v4485 = vld [vmem:[#allocation8 + $0xa40] sm:$0xff]
    %v4486 = vld [vmem:[#allocation8 + $0xa48] sm:$0xff]
    %v4487 = vld [vmem:[#allocation8 + $0xa50] sm:$0xff]
    %v4488 = vld [vmem:[#allocation8 + $0xa58] sm:$0xff]
    %v4489 = vld [vmem:[#allocation8 + $0xa60] sm:$0xff]
    %v4490 = vld [vmem:[#allocation8 + $0xa68] sm:$0xff]
    %v4491 = vld [vmem:[#allocation8 + $0xa70] sm:$0xff]
    %v4492 = vld [vmem:[#allocation8 + $0xa78] sm:$0xff]
    %v4493 = vld [vmem:[#allocation8 + $0xa80] sm:$0xff]
    %v4494 = vld [vmem:[#allocation8 + $0xa88] sm:$0xff]
    %v4495 = vld [vmem:[#allocation8 + $0xa90] sm:$0xff]
    %v4496 = vld [vmem:[#allocation8 + $0xa98] sm:$0xff]
    %v4497 = vld [vmem:[#allocation8 + $0xaa0] sm:$0xff]
    %v4498 = vld [vmem:[#allocation8 + $0xaa8] sm:$0xff]
    %v4499 = vld [vmem:[#allocation8 + $0xab0] sm:$0xff]
    %v4500 = vld [vmem:[#allocation8 + $0xab8] sm:$0xff]
    %v4501 = vld [vmem:[#allocation8 + $0xac0] sm:$0xff]
    %v4502 = vld [vmem:[#allocation8 + $0xac8] sm:$0xff]
    %v4503 = vld [vmem:[#allocation8 + $0xad0] sm:$0xff]
    %v4504 = vld [vmem:[#allocation8 + $0xad8] sm:$0xff]
    %v4505 = vld [vmem:[#allocation8 + $0xae0] sm:$0xff]
    %v4506 = vld [vmem:[#allocation8 + $0xae8] sm:$0xff]
    %v4507 = vld [vmem:[#allocation8 + $0xaf0] sm:$0xff]
    %v4508 = vld [vmem:[#allocation8 + $0xaf8] sm:$0xff]
    %v4509 = vld [vmem:[#allocation8 + $0xb00] sm:$0xff]
    %v4510 = vld [vmem:[#allocation8 + $0xb08] sm:$0xff]
    %v4511 = vld [vmem:[#allocation8 + $0xb10] sm:$0xff]
    %v4512 = vld [vmem:[#allocation8 + $0xb18] sm:$0xff]
    %v4513 = vld [vmem:[#allocation8 + $0xb20] sm:$0xff]
    %v4514 = vld [vmem:[#allocation8 + $0xb28] sm:$0xff]
    %v4515 = vld [vmem:[#allocation8 + $0xb30] sm:$0xff]
    %v4516 = vld [vmem:[#allocation8 + $0xb38] sm:$0xff]
    %v4517 = vld [vmem:[#allocation8 + $0xb40] sm:$0xff]
    %v4518 = vld [vmem:[#allocation8 + $0xb48] sm:$0xff]
    %v4519 = vld [vmem:[#allocation8 + $0xb50] sm:$0xff]
    %v4520 = vld [vmem:[#allocation8 + $0xb58] sm:$0xff]
    %v4521 = vld [vmem:[#allocation8 + $0xb60] sm:$0xff]
    %v4522 = vld [vmem:[#allocation8 + $0xb68] sm:$0xff]
    %v4523 = vld [vmem:[#allocation8 + $0xb70] sm:$0xff]
    %v4524 = vld [vmem:[#allocation8 + $0xb78] sm:$0xff]
    %v4525 = vld [vmem:[#allocation8 + $0xb80] sm:$0xff]
    %v4526 = vld [vmem:[#allocation8 + $0xb88] sm:$0xff]
    %v4527 = vld [vmem:[#allocation8 + $0xb90] sm:$0xff]
    %v4528 = vld [vmem:[#allocation8 + $0xb98] sm:$0xff]
    %v4529 = vld [vmem:[#allocation8 + $0xba0] sm:$0xff]
    %v4530 = vld [vmem:[#allocation8 + $0xba8] sm:$0xff]
    %v4531 = vld [vmem:[#allocation8 + $0xbb0] sm:$0xff]
    %v4532 = vld [vmem:[#allocation8 + $0xbb8] sm:$0xff]
    %v4533 = vld [vmem:[#allocation8 + $0xbc0] sm:$0xff]
    %v4534 = vld [vmem:[#allocation8 + $0xbc8] sm:$0xff]
    %v4535 = vld [vmem:[#allocation8 + $0xbd0] sm:$0xff]
    %v4536 = vld [vmem:[#allocation8 + $0xbd8] sm:$0xff]
    %v4537 = vld [vmem:[#allocation8 + $0xbe0] sm:$0xff]
    %v4538 = vld [vmem:[#allocation8 + $0xbe8] sm:$0xff]
    %v4539 = vld [vmem:[#allocation8 + $0xbf0] sm:$0xff]
    %v4540 = vld [vmem:[#allocation8 + $0xbf8] sm:$0xff]
    %v4541 = vld [vmem:[#allocation8 + $0xc00] sm:$0xff]
    %v4542 = vld [vmem:[#allocation8 + $0xc08] sm:$0xff]
    %v4543 = vld [vmem:[#allocation8 + $0xc10] sm:$0xff]
    %v4544 = vld [vmem:[#allocation8 + $0xc18] sm:$0xff]
    %v4545 = vld [vmem:[#allocation8 + $0xc20] sm:$0xff]
    %v4546 = vld [vmem:[#allocation8 + $0xc28] sm:$0xff]
    %v4547 = vld [vmem:[#allocation8 + $0xc30] sm:$0xff]
    %v4548 = vld [vmem:[#allocation8 + $0xc38] sm:$0xff]
    %v4549 = vld [vmem:[#allocation8 + $0xc40] sm:$0xff]
    %v4550 = vld [vmem:[#allocation8 + $0xc48] sm:$0xff]
    %v4551 = vld [vmem:[#allocation8 + $0xc50] sm:$0xff]
    %v4552 = vld [vmem:[#allocation8 + $0xc58] sm:$0xff]
    %v4553 = vld [vmem:[#allocation8 + $0xc60] sm:$0xff]
    %v4554 = vld [vmem:[#allocation8 + $0xc68] sm:$0xff]
    %v4555 = vld [vmem:[#allocation8 + $0xc70] sm:$0xff]
    %v4556 = vld [vmem:[#allocation8 + $0xc78] sm:$0xff]
    %v4557 = vld [vmem:[#allocation8 + $0xc80] sm:$0xff]
    %v4558 = vld [vmem:[#allocation8 + $0xc88] sm:$0xff]
    %v4559 = vld [vmem:[#allocation8 + $0xc90] sm:$0xff]
    %v4560 = vld [vmem:[#allocation8 + $0xc98] sm:$0xff]
    %v4561 = vld [vmem:[#allocation8 + $0xca0] sm:$0xff]
    %v4562 = vld [vmem:[#allocation8 + $0xca8] sm:$0xff]
    %v4563 = vld [vmem:[#allocation8 + $0xcb0] sm:$0xff]
    %v4564 = vld [vmem:[#allocation8 + $0xcb8] sm:$0xff]
    %v4565 = vld [vmem:[#allocation8 + $0xcc0] sm:$0xff]
    %v4566 = vld [vmem:[#allocation8 + $0xcc8] sm:$0xff]
    %v4567 = vld [vmem:[#allocation8 + $0xcd0] sm:$0xff]
    %v4568 = vld [vmem:[#allocation8 + $0xcd8] sm:$0xff]
    %v4569 = vld [vmem:[#allocation8 + $0xce0] sm:$0xff]
    %v4570 = vld [vmem:[#allocation8 + $0xce8] sm:$0xff]
    %v4571 = vld [vmem:[#allocation8 + $0xcf0] sm:$0xff]
    %v4572 = vld [vmem:[#allocation8 + $0xcf8] sm:$0xff]
    %v4573 = vld [vmem:[#allocation8 + $0xd00] sm:$0xff]
    %v4574 = vld [vmem:[#allocation8 + $0xd08] sm:$0xff]
    %v4575 = vld [vmem:[#allocation8 + $0xd10] sm:$0xff]
    %v4576 = vld [vmem:[#allocation8 + $0xd18] sm:$0xff]
    %v4577 = vld [vmem:[#allocation8 + $0xd20] sm:$0xff]
    %v4578 = vld [vmem:[#allocation8 + $0xd28] sm:$0xff]
    %v4579 = vld [vmem:[#allocation8 + $0xd30] sm:$0xff]
    %v4580 = vld [vmem:[#allocation8 + $0xd38] sm:$0xff]
    %v4581 = vld [vmem:[#allocation8 + $0xd40] sm:$0xff]
    %v4582 = vld [vmem:[#allocation8 + $0xd48] sm:$0xff]
    %v4583 = vld [vmem:[#allocation8 + $0xd50] sm:$0xff]
    %v4584 = vld [vmem:[#allocation8 + $0xd58] sm:$0xff]
    %v4585 = vld [vmem:[#allocation8 + $0xd60] sm:$0xff]
    %v4586 = vld [vmem:[#allocation8 + $0xd68] sm:$0xff]
    %v4587 = vld [vmem:[#allocation8 + $0xd70] sm:$0xff]
    %v4588 = vld [vmem:[#allocation8 + $0xd78] sm:$0xff]
    %v4589 = vld [vmem:[#allocation8 + $0xd80] sm:$0xff]
    %v4590 = vld [vmem:[#allocation8 + $0xd88] sm:$0xff]
    %v4591 = vld [vmem:[#allocation8 + $0xd90] sm:$0xff]
    %v4592 = vld [vmem:[#allocation8 + $0xd98] sm:$0xff]
    %v4593 = vld [vmem:[#allocation8 + $0xda0] sm:$0xff]
    %v4594 = vld [vmem:[#allocation8 + $0xda8] sm:$0xff]
    %v4595 = vld [vmem:[#allocation8 + $0xdb0] sm:$0xff]
    %v4596 = vld [vmem:[#allocation8 + $0xdb8] sm:$0xff]
    %v4597 = vld [vmem:[#allocation8 + $0xdc0] sm:$0xff]
    %v4598 = vld [vmem:[#allocation8 + $0xdc8] sm:$0xff]
    %v4599 = vld [vmem:[#allocation8 + $0xdd0] sm:$0xff]
    %v4600 = vld [vmem:[#allocation8 + $0xdd8] sm:$0xff]
    %v4601 = vld [vmem:[#allocation8 + $0xde0] sm:$0xff]
    %v4602 = vld [vmem:[#allocation8 + $0xde8] sm:$0xff]
    %v4603 = vld [vmem:[#allocation8 + $0xdf0] sm:$0xff]
    %v4604 = vld [vmem:[#allocation8 + $0xdf8] sm:$0xff]
    %v4605 = vld [vmem:[#allocation8 + $0xe00] sm:$0xff]
    %v4606 = vld [vmem:[#allocation8 + $0xe08] sm:$0xff]
    %v4607 = vld [vmem:[#allocation8 + $0xe10] sm:$0xff]
    %v4608 = vld [vmem:[#allocation8 + $0xe18] sm:$0xff]
    %v4609 = vld [vmem:[#allocation8 + $0xe20] sm:$0xff]
    %v4610 = vld [vmem:[#allocation8 + $0xe28] sm:$0xff]
    %v4611 = vld [vmem:[#allocation8 + $0xe30] sm:$0xff]
    %v4612 = vld [vmem:[#allocation8 + $0xe38] sm:$0xff]
    %v4613 = vld [vmem:[#allocation8 + $0xe40] sm:$0xff]
    %v4614 = vld [vmem:[#allocation8 + $0xe48] sm:$0xff]
    %v4615 = vld [vmem:[#allocation8 + $0xe50] sm:$0xff]
    %v4616 = vld [vmem:[#allocation8 + $0xe58] sm:$0xff]
    %v4617 = vld [vmem:[#allocation8 + $0xe60] sm:$0xff]
    %v4618 = vld [vmem:[#allocation8 + $0xe68] sm:$0xff]
    %v4619 = vld [vmem:[#allocation8 + $0xe70] sm:$0xff]
    %v4620 = vld [vmem:[#allocation8 + $0xe78] sm:$0xff]
    %v4621 = vld [vmem:[#allocation8 + $0xe80] sm:$0xff]
    %v4622 = vld [vmem:[#allocation8 + $0xe88] sm:$0xff]
    %v4623 = vld [vmem:[#allocation8 + $0xe90] sm:$0xff]
    %v4624 = vld [vmem:[#allocation8 + $0xe98] sm:$0xff]
    %v4625 = vld [vmem:[#allocation8 + $0xea0] sm:$0xff]
    %v4626 = vld [vmem:[#allocation8 + $0xea8] sm:$0xff]
    %v4627 = vld [vmem:[#allocation8 + $0xeb0] sm:$0xff]
    %v4628 = vld [vmem:[#allocation8 + $0xeb8] sm:$0xff]
    %v4629 = vld [vmem:[#allocation8 + $0xec0] sm:$0xff]
    %v4630 = vld [vmem:[#allocation8 + $0xec8] sm:$0xff]
    %v4631 = vld [vmem:[#allocation8 + $0xed0] sm:$0xff]
    %v4632 = vld [vmem:[#allocation8 + $0xed8] sm:$0xff]
    %v4633 = vld [vmem:[#allocation8 + $0xee0] sm:$0xff]
    %v4634 = vld [vmem:[#allocation8 + $0xee8] sm:$0xff]
    %v4635 = vld [vmem:[#allocation8 + $0xef0] sm:$0xff]
    %v4636 = vld [vmem:[#allocation8 + $0xef8] sm:$0xff]
    %v4637 = vld [vmem:[#allocation8 + $0xf00] sm:$0xff]
    %v4638 = vld [vmem:[#allocation8 + $0xf08] sm:$0xff]
    %v4639 = vld [vmem:[#allocation8 + $0xf10] sm:$0xff]
    %v4640 = vld [vmem:[#allocation8 + $0xf18] sm:$0xff]
    %v4641 = vld [vmem:[#allocation8 + $0xf20] sm:$0xff]
    %v4642 = vld [vmem:[#allocation8 + $0xf28] sm:$0xff]
    %v4643 = vld [vmem:[#allocation8 + $0xf30] sm:$0xff]
    %v4644 = vld [vmem:[#allocation8 + $0xf38] sm:$0xff]
    %v4645 = vld [vmem:[#allocation8 + $0xf40] sm:$0xff]
    %v4646 = vld [vmem:[#allocation8 + $0xf48] sm:$0xff]
    %v4647 = vld [vmem:[#allocation8 + $0xf50] sm:$0xff]
    %v4648 = vld [vmem:[#allocation8 + $0xf58] sm:$0xff]
    %v4649 = vld [vmem:[#allocation8 + $0xf60] sm:$0xff]
    %v4650 = vld [vmem:[#allocation8 + $0xf68] sm:$0xff]
    %v4651 = vld [vmem:[#allocation8 + $0xf70] sm:$0xff]
    %v4652 = vld [vmem:[#allocation8 + $0xf78] sm:$0xff]
    %v4653 = vld [vmem:[#allocation8 + $0xf80] sm:$0xff]
    %v4654 = vld [vmem:[#allocation8 + $0xf88] sm:$0xff]
    %v4655 = vld [vmem:[#allocation8 + $0xf90] sm:$0xff]
    %v4656 = vld [vmem:[#allocation8 + $0xf98] sm:$0xff]
    %v4657 = vld [vmem:[#allocation8 + $0xfa0] sm:$0xff]
    %v4658 = vld [vmem:[#allocation8 + $0xfa8] sm:$0xff]
    %v4659 = vld [vmem:[#allocation8 + $0xfb0] sm:$0xff]
    %v4660 = vld [vmem:[#allocation8 + $0xfb8] sm:$0xff]
    %v4661 = vld [vmem:[#allocation8 + $0xfc0] sm:$0xff]
    %v4662 = vld [vmem:[#allocation8 + $0xfc8] sm:$0xff]
    %v4663 = vld [vmem:[#allocation8 + $0xfd0] sm:$0xff]
    %v4664 = vld [vmem:[#allocation8 + $0xfd8] sm:$0xff]
    %v4665 = vld [vmem:[#allocation8 + $0xfe0] sm:$0xff]
    %v4666 = vld [vmem:[#allocation8 + $0xfe8] sm:$0xff]
    %v4667 = vld [vmem:[#allocation8 + $0xff0] sm:$0xff]
    %v4668 = vld [vmem:[#allocation8 + $0xff8] sm:$0xff]
    %v4669 = vld [vmem:[#allocation10] sm:$0xf]
    %v4671 = vlaneseq
    %v4672 = vshrl.u32 %v4671, 7
    %v4673 = vsub.s32 0, %v4672
    %v4674 = vrot.slane %v4669, %v4673
    %v4675 = vlaneseq
    %v4676 = vshrl.u32 %v4675, 7
    %v4677 = vsub.s32 1, %v4676
    %v4678 = vrot.slane %v4669, %v4677
    %v4679 = vlaneseq
    %v4680 = vshrl.u32 %v4679, 7
    %v4681 = vsub.s32 2, %v4680
    %v4682 = vrot.slane %v4669, %v4681
    %v4683 = vlaneseq
    %v4684 = vshrl.u32 %v4683, 7
    %v4685 = vsub.s32 3, %v4684
    %v4686 = vrot.slane %v4669, %v4685
    %v5203 = vunpack.c.l.b16 %v4157
    %v5204 = vunpack.c.h.b16 %v4157
    %v5205 = vunpack.c.l.b16 %v4158
    %v5206 = vunpack.c.h.b16 %v4158
    %v5207 = vunpack.c.l.b16 %v4159
    %v5208 = vunpack.c.h.b16 %v4159
    %v5209 = vunpack.c.l.b16 %v4160
    %v5210 = vunpack.c.h.b16 %v4160
    %v5211 = vunpack.c.l.b16 %v4161
    %v5212 = vunpack.c.h.b16 %v4161
    %v5213 = vunpack.c.l.b16 %v4162
    %v5214 = vunpack.c.h.b16 %v4162
    %v5215 = vunpack.c.l.b16 %v4163
    %v5216 = vunpack.c.h.b16 %v4163
    %v5217 = vunpack.c.l.b16 %v4164
    %v5218 = vunpack.c.h.b16 %v4164
    %v5219 = vunpack.c.l.b16 %v4165
    %v5220 = vunpack.c.h.b16 %v4165
    %v5221 = vunpack.c.l.b16 %v4166
    %v5222 = vunpack.c.h.b16 %v4166
    %v5223 = vunpack.c.l.b16 %v4167
    %v5224 = vunpack.c.h.b16 %v4167
    %v5225 = vunpack.c.l.b16 %v4168
    %v5226 = vunpack.c.h.b16 %v4168
    %v5227 = vunpack.c.l.b16 %v4169
    %v5228 = vunpack.c.h.b16 %v4169
    %v5229 = vunpack.c.l.b16 %v4170
    %v5230 = vunpack.c.h.b16 %v4170
    %v5231 = vunpack.c.l.b16 %v4171
    %v5232 = vunpack.c.h.b16 %v4171
    %v5233 = vunpack.c.l.b16 %v4172
    %v5234 = vunpack.c.h.b16 %v4172
    %v5235 = vunpack.c.l.b16 %v4173
    %v5236 = vunpack.c.h.b16 %v4173
    %v5237 = vunpack.c.l.b16 %v4174
    %v5238 = vunpack.c.h.b16 %v4174
    %v5239 = vunpack.c.l.b16 %v4175
    %v5240 = vunpack.c.h.b16 %v4175
    %v5241 = vunpack.c.l.b16 %v4176
    %v5242 = vunpack.c.h.b16 %v4176
    %v5243 = vunpack.c.l.b16 %v4177
    %v5244 = vunpack.c.h.b16 %v4177
    %v5245 = vunpack.c.l.b16 %v4178
    %v5246 = vunpack.c.h.b16 %v4178
    %v5247 = vunpack.c.l.b16 %v4179
    %v5248 = vunpack.c.h.b16 %v4179
    %v5249 = vunpack.c.l.b16 %v4180
    %v5250 = vunpack.c.h.b16 %v4180
    %v5251 = vunpack.c.l.b16 %v4181
    %v5252 = vunpack.c.h.b16 %v4181
    %v5253 = vunpack.c.l.b16 %v4182
    %v5254 = vunpack.c.h.b16 %v4182
    %v5255 = vunpack.c.l.b16 %v4183
    %v5256 = vunpack.c.h.b16 %v4183
    %v5257 = vunpack.c.l.b16 %v4184
    %v5258 = vunpack.c.h.b16 %v4184
    %v5259 = vunpack.c.l.b16 %v4185
    %v5260 = vunpack.c.h.b16 %v4185
    %v5261 = vunpack.c.l.b16 %v4186
    %v5262 = vunpack.c.h.b16 %v4186
    %v5263 = vunpack.c.l.b16 %v4187
    %v5264 = vunpack.c.h.b16 %v4187
    %v5265 = vunpack.c.l.b16 %v4188
    %v5266 = vunpack.c.h.b16 %v4188
    %v5267 = vunpack.c.l.b16 %v4189
    %v5268 = vunpack.c.h.b16 %v4189
    %v5269 = vunpack.c.l.b16 %v4190
    %v5270 = vunpack.c.h.b16 %v4190
    %v5271 = vunpack.c.l.b16 %v4191
    %v5272 = vunpack.c.h.b16 %v4191
    %v5273 = vunpack.c.l.b16 %v4192
    %v5274 = vunpack.c.h.b16 %v4192
    %v5275 = vunpack.c.l.b16 %v4193
    %v5276 = vunpack.c.h.b16 %v4193
    %v5277 = vunpack.c.l.b16 %v4194
    %v5278 = vunpack.c.h.b16 %v4194
    %v5279 = vunpack.c.l.b16 %v4195
    %v5280 = vunpack.c.h.b16 %v4195
    %v5281 = vunpack.c.l.b16 %v4196
    %v5282 = vunpack.c.h.b16 %v4196
    %v5283 = vunpack.c.l.b16 %v4197
    %v5284 = vunpack.c.h.b16 %v4197
    %v5285 = vunpack.c.l.b16 %v4198
    %v5286 = vunpack.c.h.b16 %v4198
    %v5287 = vunpack.c.l.b16 %v4199
    %v5288 = vunpack.c.h.b16 %v4199
    %v5289 = vunpack.c.l.b16 %v4200
    %v5290 = vunpack.c.h.b16 %v4200
    %v5291 = vunpack.c.l.b16 %v4201
    %v5292 = vunpack.c.h.b16 %v4201
    %v5293 = vunpack.c.l.b16 %v4202
    %v5294 = vunpack.c.h.b16 %v4202
    %v5295 = vunpack.c.l.b16 %v4203
    %v5296 = vunpack.c.h.b16 %v4203
    %v5297 = vunpack.c.l.b16 %v4204
    %v5298 = vunpack.c.h.b16 %v4204
    %v5299 = vunpack.c.l.b16 %v4205
    %v5300 = vunpack.c.h.b16 %v4205
    %v5301 = vunpack.c.l.b16 %v4206
    %v5302 = vunpack.c.h.b16 %v4206
    %v5303 = vunpack.c.l.b16 %v4207
    %v5304 = vunpack.c.h.b16 %v4207
    %v5305 = vunpack.c.l.b16 %v4208
    %v5306 = vunpack.c.h.b16 %v4208
    %v5307 = vunpack.c.l.b16 %v4209
    %v5308 = vunpack.c.h.b16 %v4209
    %v5309 = vunpack.c.l.b16 %v4210
    %v5310 = vunpack.c.h.b16 %v4210
    %v5311 = vunpack.c.l.b16 %v4211
    %v5312 = vunpack.c.h.b16 %v4211
    %v5313 = vunpack.c.l.b16 %v4212
    %v5314 = vunpack.c.h.b16 %v4212
    %v5315 = vunpack.c.l.b16 %v4213
    %v5316 = vunpack.c.h.b16 %v4213
    %v5317 = vunpack.c.l.b16 %v4214
    %v5318 = vunpack.c.h.b16 %v4214
    %v5319 = vunpack.c.l.b16 %v4215
    %v5320 = vunpack.c.h.b16 %v4215
    %v5321 = vunpack.c.l.b16 %v4216
    %v5322 = vunpack.c.h.b16 %v4216
    %v5323 = vunpack.c.l.b16 %v4217
    %v5324 = vunpack.c.h.b16 %v4217
    %v5325 = vunpack.c.l.b16 %v4218
    %v5326 = vunpack.c.h.b16 %v4218
    %v5327 = vunpack.c.l.b16 %v4219
    %v5328 = vunpack.c.h.b16 %v4219
    %v5329 = vunpack.c.l.b16 %v4220
    %v5330 = vunpack.c.h.b16 %v4220
    %v5331 = vunpack.c.l.b16 %v4221
    %v5332 = vunpack.c.h.b16 %v4221
    %v5333 = vunpack.c.l.b16 %v4222
    %v5334 = vunpack.c.h.b16 %v4222
    %v5335 = vunpack.c.l.b16 %v4223
    %v5336 = vunpack.c.h.b16 %v4223
    %v5337 = vunpack.c.l.b16 %v4224
    %v5338 = vunpack.c.h.b16 %v4224
    %v5339 = vunpack.c.l.b16 %v4225
    %v5340 = vunpack.c.h.b16 %v4225
    %v5341 = vunpack.c.l.b16 %v4226
    %v5342 = vunpack.c.h.b16 %v4226
    %v5343 = vunpack.c.l.b16 %v4227
    %v5344 = vunpack.c.h.b16 %v4227
    %v5345 = vunpack.c.l.b16 %v4228
    %v5346 = vunpack.c.h.b16 %v4228
    %v5347 = vunpack.c.l.b16 %v4229
    %v5348 = vunpack.c.h.b16 %v4229
    %v5349 = vunpack.c.l.b16 %v4230
    %v5350 = vunpack.c.h.b16 %v4230
    %v5351 = vunpack.c.l.b16 %v4231
    %v5352 = vunpack.c.h.b16 %v4231
    %v5353 = vunpack.c.l.b16 %v4232
    %v5354 = vunpack.c.h.b16 %v4232
    %v5355 = vunpack.c.l.b16 %v4233
    %v5356 = vunpack.c.h.b16 %v4233
    %v5357 = vunpack.c.l.b16 %v4234
    %v5358 = vunpack.c.h.b16 %v4234
    %v5359 = vunpack.c.l.b16 %v4235
    %v5360 = vunpack.c.h.b16 %v4235
    %v5361 = vunpack.c.l.b16 %v4236
    %v5362 = vunpack.c.h.b16 %v4236
    %v5363 = vunpack.c.l.b16 %v4237
    %v5364 = vunpack.c.h.b16 %v4237
    %v5365 = vunpack.c.l.b16 %v4238
    %v5366 = vunpack.c.h.b16 %v4238
    %v5367 = vunpack.c.l.b16 %v4239
    %v5368 = vunpack.c.h.b16 %v4239
    %v5369 = vunpack.c.l.b16 %v4240
    %v5370 = vunpack.c.h.b16 %v4240
    %v5371 = vunpack.c.l.b16 %v4241
    %v5372 = vunpack.c.h.b16 %v4241
    %v5373 = vunpack.c.l.b16 %v4242
    %v5374 = vunpack.c.h.b16 %v4242
    %v5375 = vunpack.c.l.b16 %v4243
    %v5376 = vunpack.c.h.b16 %v4243
    %v5377 = vunpack.c.l.b16 %v4244
    %v5378 = vunpack.c.h.b16 %v4244
    %v5379 = vunpack.c.l.b16 %v4245
    %v5380 = vunpack.c.h.b16 %v4245
    %v5381 = vunpack.c.l.b16 %v4246
    %v5382 = vunpack.c.h.b16 %v4246
    %v5383 = vunpack.c.l.b16 %v4247
    %v5384 = vunpack.c.h.b16 %v4247
    %v5385 = vunpack.c.l.b16 %v4248
    %v5386 = vunpack.c.h.b16 %v4248
    %v5387 = vunpack.c.l.b16 %v4249
    %v5388 = vunpack.c.h.b16 %v4249
    %v5389 = vunpack.c.l.b16 %v4250
    %v5390 = vunpack.c.h.b16 %v4250
    %v5391 = vunpack.c.l.b16 %v4251
    %v5392 = vunpack.c.h.b16 %v4251
    %v5393 = vunpack.c.l.b16 %v4252
    %v5394 = vunpack.c.h.b16 %v4252
    %v5395 = vunpack.c.l.b16 %v4253
    %v5396 = vunpack.c.h.b16 %v4253
    %v5397 = vunpack.c.l.b16 %v4254
    %v5398 = vunpack.c.h.b16 %v4254
    %v5399 = vunpack.c.l.b16 %v4255
    %v5400 = vunpack.c.h.b16 %v4255
    %v5401 = vunpack.c.l.b16 %v4256
    %v5402 = vunpack.c.h.b16 %v4256
    %v5403 = vunpack.c.l.b16 %v4257
    %v5404 = vunpack.c.h.b16 %v4257
    %v5405 = vunpack.c.l.b16 %v4258
    %v5406 = vunpack.c.h.b16 %v4258
    %v5407 = vunpack.c.l.b16 %v4259
    %v5408 = vunpack.c.h.b16 %v4259
    %v5409 = vunpack.c.l.b16 %v4260
    %v5410 = vunpack.c.h.b16 %v4260
    %v5411 = vunpack.c.l.b16 %v4261
    %v5412 = vunpack.c.h.b16 %v4261
    %v5413 = vunpack.c.l.b16 %v4262
    %v5414 = vunpack.c.h.b16 %v4262
    %v5415 = vunpack.c.l.b16 %v4263
    %v5416 = vunpack.c.h.b16 %v4263
    %v5417 = vunpack.c.l.b16 %v4264
    %v5418 = vunpack.c.h.b16 %v4264
    %v5419 = vunpack.c.l.b16 %v4265
    %v5420 = vunpack.c.h.b16 %v4265
    %v5421 = vunpack.c.l.b16 %v4266
    %v5422 = vunpack.c.h.b16 %v4266
    %v5423 = vunpack.c.l.b16 %v4267
    %v5424 = vunpack.c.h.b16 %v4267
    %v5425 = vunpack.c.l.b16 %v4268
    %v5426 = vunpack.c.h.b16 %v4268
    %v5427 = vunpack.c.l.b16 %v4269
    %v5428 = vunpack.c.h.b16 %v4269
    %v5429 = vunpack.c.l.b16 %v4270
    %v5430 = vunpack.c.h.b16 %v4270
    %v5431 = vunpack.c.l.b16 %v4271
    %v5432 = vunpack.c.h.b16 %v4271
    %v5433 = vunpack.c.l.b16 %v4272
    %v5434 = vunpack.c.h.b16 %v4272
    %v5435 = vunpack.c.l.b16 %v4273
    %v5436 = vunpack.c.h.b16 %v4273
    %v5437 = vunpack.c.l.b16 %v4274
    %v5438 = vunpack.c.h.b16 %v4274
    %v5439 = vunpack.c.l.b16 %v4275
    %v5440 = vunpack.c.h.b16 %v4275
    %v5441 = vunpack.c.l.b16 %v4276
    %v5442 = vunpack.c.h.b16 %v4276
    %v5443 = vunpack.c.l.b16 %v4277
    %v5444 = vunpack.c.h.b16 %v4277
    %v5445 = vunpack.c.l.b16 %v4278
    %v5446 = vunpack.c.h.b16 %v4278
    %v5447 = vunpack.c.l.b16 %v4279
    %v5448 = vunpack.c.h.b16 %v4279
    %v5449 = vunpack.c.l.b16 %v4280
    %v5450 = vunpack.c.h.b16 %v4280
    %v5451 = vunpack.c.l.b16 %v4281
    %v5452 = vunpack.c.h.b16 %v4281
    %v5453 = vunpack.c.l.b16 %v4282
    %v5454 = vunpack.c.h.b16 %v4282
    %v5455 = vunpack.c.l.b16 %v4283
    %v5456 = vunpack.c.h.b16 %v4283
    %v5457 = vunpack.c.l.b16 %v4284
    %v5458 = vunpack.c.h.b16 %v4284
    %v5459 = vunpack.c.l.b16 %v4285
    %v5460 = vunpack.c.h.b16 %v4285
    %v5461 = vunpack.c.l.b16 %v4286
    %v5462 = vunpack.c.h.b16 %v4286
    %v5463 = vunpack.c.l.b16 %v4287
    %v5464 = vunpack.c.h.b16 %v4287
    %v5465 = vunpack.c.l.b16 %v4288
    %v5466 = vunpack.c.h.b16 %v4288
    %v5467 = vunpack.c.l.b16 %v4289
    %v5468 = vunpack.c.h.b16 %v4289
    %v5469 = vunpack.c.l.b16 %v4290
    %v5470 = vunpack.c.h.b16 %v4290
    %v5471 = vunpack.c.l.b16 %v4291
    %v5472 = vunpack.c.h.b16 %v4291
    %v5473 = vunpack.c.l.b16 %v4292
    %v5474 = vunpack.c.h.b16 %v4292
    %v5475 = vunpack.c.l.b16 %v4293
    %v5476 = vunpack.c.h.b16 %v4293
    %v5477 = vunpack.c.l.b16 %v4294
    %v5478 = vunpack.c.h.b16 %v4294
    %v5479 = vunpack.c.l.b16 %v4295
    %v5480 = vunpack.c.h.b16 %v4295
    %v5481 = vunpack.c.l.b16 %v4296
    %v5482 = vunpack.c.h.b16 %v4296
    %v5483 = vunpack.c.l.b16 %v4297
    %v5484 = vunpack.c.h.b16 %v4297
    %v5485 = vunpack.c.l.b16 %v4298
    %v5486 = vunpack.c.h.b16 %v4298
    %v5487 = vunpack.c.l.b16 %v4299
    %v5488 = vunpack.c.h.b16 %v4299
    %v5489 = vunpack.c.l.b16 %v4300
    %v5490 = vunpack.c.h.b16 %v4300
    %v5491 = vunpack.c.l.b16 %v4301
    %v5492 = vunpack.c.h.b16 %v4301
    %v5493 = vunpack.c.l.b16 %v4302
    %v5494 = vunpack.c.h.b16 %v4302
    %v5495 = vunpack.c.l.b16 %v4303
    %v5496 = vunpack.c.h.b16 %v4303
    %v5497 = vunpack.c.l.b16 %v4304
    %v5498 = vunpack.c.h.b16 %v4304
    %v5499 = vunpack.c.l.b16 %v4305
    %v5500 = vunpack.c.h.b16 %v4305
    %v5501 = vunpack.c.l.b16 %v4306
    %v5502 = vunpack.c.h.b16 %v4306
    %v5503 = vunpack.c.l.b16 %v4307
    %v5504 = vunpack.c.h.b16 %v4307
    %v5505 = vunpack.c.l.b16 %v4308
    %v5506 = vunpack.c.h.b16 %v4308
    %v5507 = vunpack.c.l.b16 %v4309
    %v5508 = vunpack.c.h.b16 %v4309
    %v5509 = vunpack.c.l.b16 %v4310
    %v5510 = vunpack.c.h.b16 %v4310
    %v5511 = vunpack.c.l.b16 %v4311
    %v5512 = vunpack.c.h.b16 %v4311
    %v5513 = vunpack.c.l.b16 %v4312
    %v5514 = vunpack.c.h.b16 %v4312
    %v5515 = vunpack.c.l.b16 %v4313
    %v5516 = vunpack.c.h.b16 %v4313
    %v5517 = vunpack.c.l.b16 %v4314
    %v5518 = vunpack.c.h.b16 %v4314
    %v5519 = vunpack.c.l.b16 %v4315
    %v5520 = vunpack.c.h.b16 %v4315
    %v5521 = vunpack.c.l.b16 %v4316
    %v5522 = vunpack.c.h.b16 %v4316
    %v5523 = vunpack.c.l.b16 %v4317
    %v5524 = vunpack.c.h.b16 %v4317
    %v5525 = vunpack.c.l.b16 %v4318
    %v5526 = vunpack.c.h.b16 %v4318
    %v5527 = vunpack.c.l.b16 %v4319
    %v5528 = vunpack.c.h.b16 %v4319
    %v5529 = vunpack.c.l.b16 %v4320
    %v5530 = vunpack.c.h.b16 %v4320
    %v5531 = vunpack.c.l.b16 %v4321
    %v5532 = vunpack.c.h.b16 %v4321
    %v5533 = vunpack.c.l.b16 %v4322
    %v5534 = vunpack.c.h.b16 %v4322
    %v5535 = vunpack.c.l.b16 %v4323
    %v5536 = vunpack.c.h.b16 %v4323
    %v5537 = vunpack.c.l.b16 %v4324
    %v5538 = vunpack.c.h.b16 %v4324
    %v5539 = vunpack.c.l.b16 %v4325
    %v5540 = vunpack.c.h.b16 %v4325
    %v5541 = vunpack.c.l.b16 %v4326
    %v5542 = vunpack.c.h.b16 %v4326
    %v5543 = vunpack.c.l.b16 %v4327
    %v5544 = vunpack.c.h.b16 %v4327
    %v5545 = vunpack.c.l.b16 %v4328
    %v5546 = vunpack.c.h.b16 %v4328
    %v5547 = vunpack.c.l.b16 %v4329
    %v5548 = vunpack.c.h.b16 %v4329
    %v5549 = vunpack.c.l.b16 %v4330
    %v5550 = vunpack.c.h.b16 %v4330
    %v5551 = vunpack.c.l.b16 %v4331
    %v5552 = vunpack.c.h.b16 %v4331
    %v5553 = vunpack.c.l.b16 %v4332
    %v5554 = vunpack.c.h.b16 %v4332
    %v5555 = vunpack.c.l.b16 %v4333
    %v5556 = vunpack.c.h.b16 %v4333
    %v5557 = vunpack.c.l.b16 %v4334
    %v5558 = vunpack.c.h.b16 %v4334
    %v5559 = vunpack.c.l.b16 %v4335
    %v5560 = vunpack.c.h.b16 %v4335
    %v5561 = vunpack.c.l.b16 %v4336
    %v5562 = vunpack.c.h.b16 %v4336
    %v5563 = vunpack.c.l.b16 %v4337
    %v5564 = vunpack.c.h.b16 %v4337
    %v5565 = vunpack.c.l.b16 %v4338
    %v5566 = vunpack.c.h.b16 %v4338
    %v5567 = vunpack.c.l.b16 %v4339
    %v5568 = vunpack.c.h.b16 %v4339
    %v5569 = vunpack.c.l.b16 %v4340
    %v5570 = vunpack.c.h.b16 %v4340
    %v5571 = vunpack.c.l.b16 %v4341
    %v5572 = vunpack.c.h.b16 %v4341
    %v5573 = vunpack.c.l.b16 %v4342
    %v5574 = vunpack.c.h.b16 %v4342
    %v5575 = vunpack.c.l.b16 %v4343
    %v5576 = vunpack.c.h.b16 %v4343
    %v5577 = vunpack.c.l.b16 %v4344
    %v5578 = vunpack.c.h.b16 %v4344
    %v5579 = vunpack.c.l.b16 %v4345
    %v5580 = vunpack.c.h.b16 %v4345
    %v5581 = vunpack.c.l.b16 %v4346
    %v5582 = vunpack.c.h.b16 %v4346
    %v5583 = vunpack.c.l.b16 %v4347
    %v5584 = vunpack.c.h.b16 %v4347
    %v5585 = vunpack.c.l.b16 %v4348
    %v5586 = vunpack.c.h.b16 %v4348
    %v5587 = vunpack.c.l.b16 %v4349
    %v5588 = vunpack.c.h.b16 %v4349
    %v5589 = vunpack.c.l.b16 %v4350
    %v5590 = vunpack.c.h.b16 %v4350
    %v5591 = vunpack.c.l.b16 %v4351
    %v5592 = vunpack.c.h.b16 %v4351
    %v5593 = vunpack.c.l.b16 %v4352
    %v5594 = vunpack.c.h.b16 %v4352
    %v5595 = vunpack.c.l.b16 %v4353
    %v5596 = vunpack.c.h.b16 %v4353
    %v5597 = vunpack.c.l.b16 %v4354
    %v5598 = vunpack.c.h.b16 %v4354
    %v5599 = vunpack.c.l.b16 %v4355
    %v5600 = vunpack.c.h.b16 %v4355
    %v5601 = vunpack.c.l.b16 %v4356
    %v5602 = vunpack.c.h.b16 %v4356
    %v5603 = vunpack.c.l.b16 %v4357
    %v5604 = vunpack.c.h.b16 %v4357
    %v5605 = vunpack.c.l.b16 %v4358
    %v5606 = vunpack.c.h.b16 %v4358
    %v5607 = vunpack.c.l.b16 %v4359
    %v5608 = vunpack.c.h.b16 %v4359
    %v5609 = vunpack.c.l.b16 %v4360
    %v5610 = vunpack.c.h.b16 %v4360
    %v5611 = vunpack.c.l.b16 %v4361
    %v5612 = vunpack.c.h.b16 %v4361
    %v5613 = vunpack.c.l.b16 %v4362
    %v5614 = vunpack.c.h.b16 %v4362
    %v5615 = vunpack.c.l.b16 %v4363
    %v5616 = vunpack.c.h.b16 %v4363
    %v5617 = vunpack.c.l.b16 %v4364
    %v5618 = vunpack.c.h.b16 %v4364
    %v5619 = vunpack.c.l.b16 %v4365
    %v5620 = vunpack.c.h.b16 %v4365
    %v5621 = vunpack.c.l.b16 %v4366
    %v5622 = vunpack.c.h.b16 %v4366
    %v5623 = vunpack.c.l.b16 %v4367
    %v5624 = vunpack.c.h.b16 %v4367
    %v5625 = vunpack.c.l.b16 %v4368
    %v5626 = vunpack.c.h.b16 %v4368
    %v5627 = vunpack.c.l.b16 %v4369
    %v5628 = vunpack.c.h.b16 %v4369
    %v5629 = vunpack.c.l.b16 %v4370
    %v5630 = vunpack.c.h.b16 %v4370
    %v5631 = vunpack.c.l.b16 %v4371
    %v5632 = vunpack.c.h.b16 %v4371
    %v5633 = vunpack.c.l.b16 %v4372
    %v5634 = vunpack.c.h.b16 %v4372
    %v5635 = vunpack.c.l.b16 %v4373
    %v5636 = vunpack.c.h.b16 %v4373
    %v5637 = vunpack.c.l.b16 %v4374
    %v5638 = vunpack.c.h.b16 %v4374
    %v5639 = vunpack.c.l.b16 %v4375
    %v5640 = vunpack.c.h.b16 %v4375
    %v5641 = vunpack.c.l.b16 %v4376
    %v5642 = vunpack.c.h.b16 %v4376
    %v5643 = vunpack.c.l.b16 %v4377
    %v5644 = vunpack.c.h.b16 %v4377
    %v5645 = vunpack.c.l.b16 %v4378
    %v5646 = vunpack.c.h.b16 %v4378
    %v5647 = vunpack.c.l.b16 %v4379
    %v5648 = vunpack.c.h.b16 %v4379
    %v5649 = vunpack.c.l.b16 %v4380
    %v5650 = vunpack.c.h.b16 %v4380
    %v5651 = vunpack.c.l.b16 %v4381
    %v5652 = vunpack.c.h.b16 %v4381
    %v5653 = vunpack.c.l.b16 %v4382
    %v5654 = vunpack.c.h.b16 %v4382
    %v5655 = vunpack.c.l.b16 %v4383
    %v5656 = vunpack.c.h.b16 %v4383
    %v5657 = vunpack.c.l.b16 %v4384
    %v5658 = vunpack.c.h.b16 %v4384
    %v5659 = vunpack.c.l.b16 %v4385
    %v5660 = vunpack.c.h.b16 %v4385
    %v5661 = vunpack.c.l.b16 %v4386
    %v5662 = vunpack.c.h.b16 %v4386
    %v5663 = vunpack.c.l.b16 %v4387
    %v5664 = vunpack.c.h.b16 %v4387
    %v5665 = vunpack.c.l.b16 %v4388
    %v5666 = vunpack.c.h.b16 %v4388
    %v5667 = vunpack.c.l.b16 %v4389
    %v5668 = vunpack.c.h.b16 %v4389
    %v5669 = vunpack.c.l.b16 %v4390
    %v5670 = vunpack.c.h.b16 %v4390
    %v5671 = vunpack.c.l.b16 %v4391
    %v5672 = vunpack.c.h.b16 %v4391
    %v5673 = vunpack.c.l.b16 %v4392
    %v5674 = vunpack.c.h.b16 %v4392
    %v5675 = vunpack.c.l.b16 %v4393
    %v5676 = vunpack.c.h.b16 %v4393
    %v5677 = vunpack.c.l.b16 %v4394
    %v5678 = vunpack.c.h.b16 %v4394
    %v5679 = vunpack.c.l.b16 %v4395
    %v5680 = vunpack.c.h.b16 %v4395
    %v5681 = vunpack.c.l.b16 %v4396
    %v5682 = vunpack.c.h.b16 %v4396
    %v5683 = vunpack.c.l.b16 %v4397
    %v5684 = vunpack.c.h.b16 %v4397
    %v5685 = vunpack.c.l.b16 %v4398
    %v5686 = vunpack.c.h.b16 %v4398
    %v5687 = vunpack.c.l.b16 %v4399
    %v5688 = vunpack.c.h.b16 %v4399
    %v5689 = vunpack.c.l.b16 %v4400
    %v5690 = vunpack.c.h.b16 %v4400
    %v5691 = vunpack.c.l.b16 %v4401
    %v5692 = vunpack.c.h.b16 %v4401
    %v5693 = vunpack.c.l.b16 %v4402
    %v5694 = vunpack.c.h.b16 %v4402
    %v5695 = vunpack.c.l.b16 %v4403
    %v5696 = vunpack.c.h.b16 %v4403
    %v5697 = vunpack.c.l.b16 %v4404
    %v5698 = vunpack.c.h.b16 %v4404
    %v5699 = vunpack.c.l.b16 %v4405
    %v5700 = vunpack.c.h.b16 %v4405
    %v5701 = vunpack.c.l.b16 %v4406
    %v5702 = vunpack.c.h.b16 %v4406
    %v5703 = vunpack.c.l.b16 %v4407
    %v5704 = vunpack.c.h.b16 %v4407
    %v5705 = vunpack.c.l.b16 %v4408
    %v5706 = vunpack.c.h.b16 %v4408
    %v5707 = vunpack.c.l.b16 %v4409
    %v5708 = vunpack.c.h.b16 %v4409
    %v5709 = vunpack.c.l.b16 %v4410
    %v5710 = vunpack.c.h.b16 %v4410
    %v5711 = vunpack.c.l.b16 %v4411
    %v5712 = vunpack.c.h.b16 %v4411
    %v5713 = vunpack.c.l.b16 %v4412
    %v5714 = vunpack.c.h.b16 %v4412
    %v5715 = vunpack.c.l.b16 %v4413
    %v5716 = vunpack.c.h.b16 %v4413
    %v5717 = vunpack.c.l.b16 %v4414
    %v5718 = vunpack.c.h.b16 %v4414
    %v5719 = vunpack.c.l.b16 %v4415
    %v5720 = vunpack.c.h.b16 %v4415
    %v5721 = vunpack.c.l.b16 %v4416
    %v5722 = vunpack.c.h.b16 %v4416
    %v5723 = vunpack.c.l.b16 %v4417
    %v5724 = vunpack.c.h.b16 %v4417
    %v5725 = vunpack.c.l.b16 %v4418
    %v5726 = vunpack.c.h.b16 %v4418
    %v5727 = vunpack.c.l.b16 %v4419
    %v5728 = vunpack.c.h.b16 %v4419
    %v5729 = vunpack.c.l.b16 %v4420
    %v5730 = vunpack.c.h.b16 %v4420
    %v5731 = vunpack.c.l.b16 %v4421
    %v5732 = vunpack.c.h.b16 %v4421
    %v5733 = vunpack.c.l.b16 %v4422
    %v5734 = vunpack.c.h.b16 %v4422
    %v5735 = vunpack.c.l.b16 %v4423
    %v5736 = vunpack.c.h.b16 %v4423
    %v5737 = vunpack.c.l.b16 %v4424
    %v5738 = vunpack.c.h.b16 %v4424
    %v5739 = vunpack.c.l.b16 %v4425
    %v5740 = vunpack.c.h.b16 %v4425
    %v5741 = vunpack.c.l.b16 %v4426
    %v5742 = vunpack.c.h.b16 %v4426
    %v5743 = vunpack.c.l.b16 %v4427
    %v5744 = vunpack.c.h.b16 %v4427
    %v5745 = vunpack.c.l.b16 %v4428
    %v5746 = vunpack.c.h.b16 %v4428
    %v5747 = vunpack.c.l.b16 %v4429
    %v5748 = vunpack.c.h.b16 %v4429
    %v5749 = vunpack.c.l.b16 %v4430
    %v5750 = vunpack.c.h.b16 %v4430
    %v5751 = vunpack.c.l.b16 %v4431
    %v5752 = vunpack.c.h.b16 %v4431
    %v5753 = vunpack.c.l.b16 %v4432
    %v5754 = vunpack.c.h.b16 %v4432
    %v5755 = vunpack.c.l.b16 %v4433
    %v5756 = vunpack.c.h.b16 %v4433
    %v5757 = vunpack.c.l.b16 %v4434
    %v5758 = vunpack.c.h.b16 %v4434
    %v5759 = vunpack.c.l.b16 %v4435
    %v5760 = vunpack.c.h.b16 %v4435
    %v5761 = vunpack.c.l.b16 %v4436
    %v5762 = vunpack.c.h.b16 %v4436
    %v5763 = vunpack.c.l.b16 %v4437
    %v5764 = vunpack.c.h.b16 %v4437
    %v5765 = vunpack.c.l.b16 %v4438
    %v5766 = vunpack.c.h.b16 %v4438
    %v5767 = vunpack.c.l.b16 %v4439
    %v5768 = vunpack.c.h.b16 %v4439
    %v5769 = vunpack.c.l.b16 %v4440
    %v5770 = vunpack.c.h.b16 %v4440
    %v5771 = vunpack.c.l.b16 %v4441
    %v5772 = vunpack.c.h.b16 %v4441
    %v5773 = vunpack.c.l.b16 %v4442
    %v5774 = vunpack.c.h.b16 %v4442
    %v5775 = vunpack.c.l.b16 %v4443
    %v5776 = vunpack.c.h.b16 %v4443
    %v5777 = vunpack.c.l.b16 %v4444
    %v5778 = vunpack.c.h.b16 %v4444
    %v5779 = vunpack.c.l.b16 %v4445
    %v5780 = vunpack.c.h.b16 %v4445
    %v5781 = vunpack.c.l.b16 %v4446
    %v5782 = vunpack.c.h.b16 %v4446
    %v5783 = vunpack.c.l.b16 %v4447
    %v5784 = vunpack.c.h.b16 %v4447
    %v5785 = vunpack.c.l.b16 %v4448
    %v5786 = vunpack.c.h.b16 %v4448
    %v5787 = vunpack.c.l.b16 %v4449
    %v5788 = vunpack.c.h.b16 %v4449
    %v5789 = vunpack.c.l.b16 %v4450
    %v5790 = vunpack.c.h.b16 %v4450
    %v5791 = vunpack.c.l.b16 %v4451
    %v5792 = vunpack.c.h.b16 %v4451
    %v5793 = vunpack.c.l.b16 %v4452
    %v5794 = vunpack.c.h.b16 %v4452
    %v5795 = vunpack.c.l.b16 %v4453
    %v5796 = vunpack.c.h.b16 %v4453
    %v5797 = vunpack.c.l.b16 %v4454
    %v5798 = vunpack.c.h.b16 %v4454
    %v5799 = vunpack.c.l.b16 %v4455
    %v5800 = vunpack.c.h.b16 %v4455
    %v5801 = vunpack.c.l.b16 %v4456
    %v5802 = vunpack.c.h.b16 %v4456
    %v5803 = vunpack.c.l.b16 %v4457
    %v5804 = vunpack.c.h.b16 %v4457
    %v5805 = vunpack.c.l.b16 %v4458
    %v5806 = vunpack.c.h.b16 %v4458
    %v5807 = vunpack.c.l.b16 %v4459
    %v5808 = vunpack.c.h.b16 %v4459
    %v5809 = vunpack.c.l.b16 %v4460
    %v5810 = vunpack.c.h.b16 %v4460
    %v5811 = vunpack.c.l.b16 %v4461
    %v5812 = vunpack.c.h.b16 %v4461
    %v5813 = vunpack.c.l.b16 %v4462
    %v5814 = vunpack.c.h.b16 %v4462
    %v5815 = vunpack.c.l.b16 %v4463
    %v5816 = vunpack.c.h.b16 %v4463
    %v5817 = vunpack.c.l.b16 %v4464
    %v5818 = vunpack.c.h.b16 %v4464
    %v5819 = vunpack.c.l.b16 %v4465
    %v5820 = vunpack.c.h.b16 %v4465
    %v5821 = vunpack.c.l.b16 %v4466
    %v5822 = vunpack.c.h.b16 %v4466
    %v5823 = vunpack.c.l.b16 %v4467
    %v5824 = vunpack.c.h.b16 %v4467
    %v5825 = vunpack.c.l.b16 %v4468
    %v5826 = vunpack.c.h.b16 %v4468
    %v5827 = vunpack.c.l.b16 %v4469
    %v5828 = vunpack.c.h.b16 %v4469
    %v5829 = vunpack.c.l.b16 %v4470
    %v5830 = vunpack.c.h.b16 %v4470
    %v5831 = vunpack.c.l.b16 %v4471
    %v5832 = vunpack.c.h.b16 %v4471
    %v5833 = vunpack.c.l.b16 %v4472
    %v5834 = vunpack.c.h.b16 %v4472
    %v5835 = vunpack.c.l.b16 %v4473
    %v5836 = vunpack.c.h.b16 %v4473
    %v5837 = vunpack.c.l.b16 %v4474
    %v5838 = vunpack.c.h.b16 %v4474
    %v5839 = vunpack.c.l.b16 %v4475
    %v5840 = vunpack.c.h.b16 %v4475
    %v5841 = vunpack.c.l.b16 %v4476
    %v5842 = vunpack.c.h.b16 %v4476
    %v5843 = vunpack.c.l.b16 %v4477
    %v5844 = vunpack.c.h.b16 %v4477
    %v5845 = vunpack.c.l.b16 %v4478
    %v5846 = vunpack.c.h.b16 %v4478
    %v5847 = vunpack.c.l.b16 %v4479
    %v5848 = vunpack.c.h.b16 %v4479
    %v5849 = vunpack.c.l.b16 %v4480
    %v5850 = vunpack.c.h.b16 %v4480
    %v5851 = vunpack.c.l.b16 %v4481
    %v5852 = vunpack.c.h.b16 %v4481
    %v5853 = vunpack.c.l.b16 %v4482
    %v5854 = vunpack.c.h.b16 %v4482
    %v5855 = vunpack.c.l.b16 %v4483
    %v5856 = vunpack.c.h.b16 %v4483
    %v5857 = vunpack.c.l.b16 %v4484
    %v5858 = vunpack.c.h.b16 %v4484
    %v5859 = vunpack.c.l.b16 %v4485
    %v5860 = vunpack.c.h.b16 %v4485
    %v5861 = vunpack.c.l.b16 %v4486
    %v5862 = vunpack.c.h.b16 %v4486
    %v5863 = vunpack.c.l.b16 %v4487
    %v5864 = vunpack.c.h.b16 %v4487
    %v5865 = vunpack.c.l.b16 %v4488
    %v5866 = vunpack.c.h.b16 %v4488
    %v5867 = vunpack.c.l.b16 %v4489
    %v5868 = vunpack.c.h.b16 %v4489
    %v5869 = vunpack.c.l.b16 %v4490
    %v5870 = vunpack.c.h.b16 %v4490
    %v5871 = vunpack.c.l.b16 %v4491
    %v5872 = vunpack.c.h.b16 %v4491
    %v5873 = vunpack.c.l.b16 %v4492
    %v5874 = vunpack.c.h.b16 %v4492
    %v5875 = vunpack.c.l.b16 %v4493
    %v5876 = vunpack.c.h.b16 %v4493
    %v5877 = vunpack.c.l.b16 %v4494
    %v5878 = vunpack.c.h.b16 %v4494
    %v5879 = vunpack.c.l.b16 %v4495
    %v5880 = vunpack.c.h.b16 %v4495
    %v5881 = vunpack.c.l.b16 %v4496
    %v5882 = vunpack.c.h.b16 %v4496
    %v5883 = vunpack.c.l.b16 %v4497
    %v5884 = vunpack.c.h.b16 %v4497
    %v5885 = vunpack.c.l.b16 %v4498
    %v5886 = vunpack.c.h.b16 %v4498
    %v5887 = vunpack.c.l.b16 %v4499
    %v5888 = vunpack.c.h.b16 %v4499
    %v5889 = vunpack.c.l.b16 %v4500
    %v5890 = vunpack.c.h.b16 %v4500
    %v5891 = vunpack.c.l.b16 %v4501
    %v5892 = vunpack.c.h.b16 %v4501
    %v5893 = vunpack.c.l.b16 %v4502
    %v5894 = vunpack.c.h.b16 %v4502
    %v5895 = vunpack.c.l.b16 %v4503
    %v5896 = vunpack.c.h.b16 %v4503
    %v5897 = vunpack.c.l.b16 %v4504
    %v5898 = vunpack.c.h.b16 %v4504
    %v5899 = vunpack.c.l.b16 %v4505
    %v5900 = vunpack.c.h.b16 %v4505
    %v5901 = vunpack.c.l.b16 %v4506
    %v5902 = vunpack.c.h.b16 %v4506
    %v5903 = vunpack.c.l.b16 %v4507
    %v5904 = vunpack.c.h.b16 %v4507
    %v5905 = vunpack.c.l.b16 %v4508
    %v5906 = vunpack.c.h.b16 %v4508
    %v5907 = vunpack.c.l.b16 %v4509
    %v5908 = vunpack.c.h.b16 %v4509
    %v5909 = vunpack.c.l.b16 %v4510
    %v5910 = vunpack.c.h.b16 %v4510
    %v5911 = vunpack.c.l.b16 %v4511
    %v5912 = vunpack.c.h.b16 %v4511
    %v5913 = vunpack.c.l.b16 %v4512
    %v5914 = vunpack.c.h.b16 %v4512
    %v5915 = vunpack.c.l.b16 %v4513
    %v5916 = vunpack.c.h.b16 %v4513
    %v5917 = vunpack.c.l.b16 %v4514
    %v5918 = vunpack.c.h.b16 %v4514
    %v5919 = vunpack.c.l.b16 %v4515
    %v5920 = vunpack.c.h.b16 %v4515
    %v5921 = vunpack.c.l.b16 %v4516
    %v5922 = vunpack.c.h.b16 %v4516
    %v5923 = vunpack.c.l.b16 %v4517
    %v5924 = vunpack.c.h.b16 %v4517
    %v5925 = vunpack.c.l.b16 %v4518
    %v5926 = vunpack.c.h.b16 %v4518
    %v5927 = vunpack.c.l.b16 %v4519
    %v5928 = vunpack.c.h.b16 %v4519
    %v5929 = vunpack.c.l.b16 %v4520
    %v5930 = vunpack.c.h.b16 %v4520
    %v5931 = vunpack.c.l.b16 %v4521
    %v5932 = vunpack.c.h.b16 %v4521
    %v5933 = vunpack.c.l.b16 %v4522
    %v5934 = vunpack.c.h.b16 %v4522
    %v5935 = vunpack.c.l.b16 %v4523
    %v5936 = vunpack.c.h.b16 %v4523
    %v5937 = vunpack.c.l.b16 %v4524
    %v5938 = vunpack.c.h.b16 %v4524
    %v5939 = vunpack.c.l.b16 %v4525
    %v5940 = vunpack.c.h.b16 %v4525
    %v5941 = vunpack.c.l.b16 %v4526
    %v5942 = vunpack.c.h.b16 %v4526
    %v5943 = vunpack.c.l.b16 %v4527
    %v5944 = vunpack.c.h.b16 %v4527
    %v5945 = vunpack.c.l.b16 %v4528
    %v5946 = vunpack.c.h.b16 %v4528
    %v5947 = vunpack.c.l.b16 %v4529
    %v5948 = vunpack.c.h.b16 %v4529
    %v5949 = vunpack.c.l.b16 %v4530
    %v5950 = vunpack.c.h.b16 %v4530
    %v5951 = vunpack.c.l.b16 %v4531
    %v5952 = vunpack.c.h.b16 %v4531
    %v5953 = vunpack.c.l.b16 %v4532
    %v5954 = vunpack.c.h.b16 %v4532
    %v5955 = vunpack.c.l.b16 %v4533
    %v5956 = vunpack.c.h.b16 %v4533
    %v5957 = vunpack.c.l.b16 %v4534
    %v5958 = vunpack.c.h.b16 %v4534
    %v5959 = vunpack.c.l.b16 %v4535
    %v5960 = vunpack.c.h.b16 %v4535
    %v5961 = vunpack.c.l.b16 %v4536
    %v5962 = vunpack.c.h.b16 %v4536
    %v5963 = vunpack.c.l.b16 %v4537
    %v5964 = vunpack.c.h.b16 %v4537
    %v5965 = vunpack.c.l.b16 %v4538
    %v5966 = vunpack.c.h.b16 %v4538
    %v5967 = vunpack.c.l.b16 %v4539
    %v5968 = vunpack.c.h.b16 %v4539
    %v5969 = vunpack.c.l.b16 %v4540
    %v5970 = vunpack.c.h.b16 %v4540
    %v5971 = vunpack.c.l.b16 %v4541
    %v5972 = vunpack.c.h.b16 %v4541
    %v5973 = vunpack.c.l.b16 %v4542
    %v5974 = vunpack.c.h.b16 %v4542
    %v5975 = vunpack.c.l.b16 %v4543
    %v5976 = vunpack.c.h.b16 %v4543
    %v5977 = vunpack.c.l.b16 %v4544
    %v5978 = vunpack.c.h.b16 %v4544
    %v5979 = vunpack.c.l.b16 %v4545
    %v5980 = vunpack.c.h.b16 %v4545
    %v5981 = vunpack.c.l.b16 %v4546
    %v5982 = vunpack.c.h.b16 %v4546
    %v5983 = vunpack.c.l.b16 %v4547
    %v5984 = vunpack.c.h.b16 %v4547
    %v5985 = vunpack.c.l.b16 %v4548
    %v5986 = vunpack.c.h.b16 %v4548
    %v5987 = vunpack.c.l.b16 %v4549
    %v5988 = vunpack.c.h.b16 %v4549
    %v5989 = vunpack.c.l.b16 %v4550
    %v5990 = vunpack.c.h.b16 %v4550
    %v5991 = vunpack.c.l.b16 %v4551
    %v5992 = vunpack.c.h.b16 %v4551
    %v5993 = vunpack.c.l.b16 %v4552
    %v5994 = vunpack.c.h.b16 %v4552
    %v5995 = vunpack.c.l.b16 %v4553
    %v5996 = vunpack.c.h.b16 %v4553
    %v5997 = vunpack.c.l.b16 %v4554
    %v5998 = vunpack.c.h.b16 %v4554
    %v5999 = vunpack.c.l.b16 %v4555
    %v6000 = vunpack.c.h.b16 %v4555
    %v6001 = vunpack.c.l.b16 %v4556
    %v6002 = vunpack.c.h.b16 %v4556
    %v6003 = vunpack.c.l.b16 %v4557
    %v6004 = vunpack.c.h.b16 %v4557
    %v6005 = vunpack.c.l.b16 %v4558
    %v6006 = vunpack.c.h.b16 %v4558
    %v6007 = vunpack.c.l.b16 %v4559
    %v6008 = vunpack.c.h.b16 %v4559
    %v6009 = vunpack.c.l.b16 %v4560
    %v6010 = vunpack.c.h.b16 %v4560
    %v6011 = vunpack.c.l.b16 %v4561
    %v6012 = vunpack.c.h.b16 %v4561
    %v6013 = vunpack.c.l.b16 %v4562
    %v6014 = vunpack.c.h.b16 %v4562
    %v6015 = vunpack.c.l.b16 %v4563
    %v6016 = vunpack.c.h.b16 %v4563
    %v6017 = vunpack.c.l.b16 %v4564
    %v6018 = vunpack.c.h.b16 %v4564
    %v6019 = vunpack.c.l.b16 %v4565
    %v6020 = vunpack.c.h.b16 %v4565
    %v6021 = vunpack.c.l.b16 %v4566
    %v6022 = vunpack.c.h.b16 %v4566
    %v6023 = vunpack.c.l.b16 %v4567
    %v6024 = vunpack.c.h.b16 %v4567
    %v6025 = vunpack.c.l.b16 %v4568
    %v6026 = vunpack.c.h.b16 %v4568
    %v6027 = vunpack.c.l.b16 %v4569
    %v6028 = vunpack.c.h.b16 %v4569
    %v6029 = vunpack.c.l.b16 %v4570
    %v6030 = vunpack.c.h.b16 %v4570
    %v6031 = vunpack.c.l.b16 %v4571
    %v6032 = vunpack.c.h.b16 %v4571
    %v6033 = vunpack.c.l.b16 %v4572
    %v6034 = vunpack.c.h.b16 %v4572
    %v6035 = vunpack.c.l.b16 %v4573
    %v6036 = vunpack.c.h.b16 %v4573
    %v6037 = vunpack.c.l.b16 %v4574
    %v6038 = vunpack.c.h.b16 %v4574
    %v6039 = vunpack.c.l.b16 %v4575
    %v6040 = vunpack.c.h.b16 %v4575
    %v6041 = vunpack.c.l.b16 %v4576
    %v6042 = vunpack.c.h.b16 %v4576
    %v6043 = vunpack.c.l.b16 %v4577
    %v6044 = vunpack.c.h.b16 %v4577
    %v6045 = vunpack.c.l.b16 %v4578
    %v6046 = vunpack.c.h.b16 %v4578
    %v6047 = vunpack.c.l.b16 %v4579
    %v6048 = vunpack.c.h.b16 %v4579
    %v6049 = vunpack.c.l.b16 %v4580
    %v6050 = vunpack.c.h.b16 %v4580
    %v6051 = vunpack.c.l.b16 %v4581
    %v6052 = vunpack.c.h.b16 %v4581
    %v6053 = vunpack.c.l.b16 %v4582
    %v6054 = vunpack.c.h.b16 %v4582
    %v6055 = vunpack.c.l.b16 %v4583
    %v6056 = vunpack.c.h.b16 %v4583
    %v6057 = vunpack.c.l.b16 %v4584
    %v6058 = vunpack.c.h.b16 %v4584
    %v6059 = vunpack.c.l.b16 %v4585
    %v6060 = vunpack.c.h.b16 %v4585
    %v6061 = vunpack.c.l.b16 %v4586
    %v6062 = vunpack.c.h.b16 %v4586
    %v6063 = vunpack.c.l.b16 %v4587
    %v6064 = vunpack.c.h.b16 %v4587
    %v6065 = vunpack.c.l.b16 %v4588
    %v6066 = vunpack.c.h.b16 %v4588
    %v6067 = vunpack.c.l.b16 %v4589
    %v6068 = vunpack.c.h.b16 %v4589
    %v6069 = vunpack.c.l.b16 %v4590
    %v6070 = vunpack.c.h.b16 %v4590
    %v6071 = vunpack.c.l.b16 %v4591
    %v6072 = vunpack.c.h.b16 %v4591
    %v6073 = vunpack.c.l.b16 %v4592
    %v6074 = vunpack.c.h.b16 %v4592
    %v6075 = vunpack.c.l.b16 %v4593
    %v6076 = vunpack.c.h.b16 %v4593
    %v6077 = vunpack.c.l.b16 %v4594
    %v6078 = vunpack.c.h.b16 %v4594
    %v6079 = vunpack.c.l.b16 %v4595
    %v6080 = vunpack.c.h.b16 %v4595
    %v6081 = vunpack.c.l.b16 %v4596
    %v6082 = vunpack.c.h.b16 %v4596
    %v6083 = vunpack.c.l.b16 %v4597
    %v6084 = vunpack.c.h.b16 %v4597
    %v6085 = vunpack.c.l.b16 %v4598
    %v6086 = vunpack.c.h.b16 %v4598
    %v6087 = vunpack.c.l.b16 %v4599
    %v6088 = vunpack.c.h.b16 %v4599
    %v6089 = vunpack.c.l.b16 %v4600
    %v6090 = vunpack.c.h.b16 %v4600
    %v6091 = vunpack.c.l.b16 %v4601
    %v6092 = vunpack.c.h.b16 %v4601
    %v6093 = vunpack.c.l.b16 %v4602
    %v6094 = vunpack.c.h.b16 %v4602
    %v6095 = vunpack.c.l.b16 %v4603
    %v6096 = vunpack.c.h.b16 %v4603
    %v6097 = vunpack.c.l.b16 %v4604
    %v6098 = vunpack.c.h.b16 %v4604
    %v6099 = vunpack.c.l.b16 %v4605
    %v6100 = vunpack.c.h.b16 %v4605
    %v6101 = vunpack.c.l.b16 %v4606
    %v6102 = vunpack.c.h.b16 %v4606
    %v6103 = vunpack.c.l.b16 %v4607
    %v6104 = vunpack.c.h.b16 %v4607
    %v6105 = vunpack.c.l.b16 %v4608
    %v6106 = vunpack.c.h.b16 %v4608
    %v6107 = vunpack.c.l.b16 %v4609
    %v6108 = vunpack.c.h.b16 %v4609
    %v6109 = vunpack.c.l.b16 %v4610
    %v6110 = vunpack.c.h.b16 %v4610
    %v6111 = vunpack.c.l.b16 %v4611
    %v6112 = vunpack.c.h.b16 %v4611
    %v6113 = vunpack.c.l.b16 %v4612
    %v6114 = vunpack.c.h.b16 %v4612
    %v6115 = vunpack.c.l.b16 %v4613
    %v6116 = vunpack.c.h.b16 %v4613
    %v6117 = vunpack.c.l.b16 %v4614
    %v6118 = vunpack.c.h.b16 %v4614
    %v6119 = vunpack.c.l.b16 %v4615
    %v6120 = vunpack.c.h.b16 %v4615
    %v6121 = vunpack.c.l.b16 %v4616
    %v6122 = vunpack.c.h.b16 %v4616
    %v6123 = vunpack.c.l.b16 %v4617
    %v6124 = vunpack.c.h.b16 %v4617
    %v6125 = vunpack.c.l.b16 %v4618
    %v6126 = vunpack.c.h.b16 %v4618
    %v6127 = vunpack.c.l.b16 %v4619
    %v6128 = vunpack.c.h.b16 %v4619
    %v6129 = vunpack.c.l.b16 %v4620
    %v6130 = vunpack.c.h.b16 %v4620
    %v6131 = vunpack.c.l.b16 %v4621
    %v6132 = vunpack.c.h.b16 %v4621
    %v6133 = vunpack.c.l.b16 %v4622
    %v6134 = vunpack.c.h.b16 %v4622
    %v6135 = vunpack.c.l.b16 %v4623
    %v6136 = vunpack.c.h.b16 %v4623
    %v6137 = vunpack.c.l.b16 %v4624
    %v6138 = vunpack.c.h.b16 %v4624
    %v6139 = vunpack.c.l.b16 %v4625
    %v6140 = vunpack.c.h.b16 %v4625
    %v6141 = vunpack.c.l.b16 %v4626
    %v6142 = vunpack.c.h.b16 %v4626
    %v6143 = vunpack.c.l.b16 %v4627
    %v6144 = vunpack.c.h.b16 %v4627
    %v6145 = vunpack.c.l.b16 %v4628
    %v6146 = vunpack.c.h.b16 %v4628
    %v6147 = vunpack.c.l.b16 %v4629
    %v6148 = vunpack.c.h.b16 %v4629
    %v6149 = vunpack.c.l.b16 %v4630
    %v6150 = vunpack.c.h.b16 %v4630
    %v6151 = vunpack.c.l.b16 %v4631
    %v6152 = vunpack.c.h.b16 %v4631
    %v6153 = vunpack.c.l.b16 %v4632
    %v6154 = vunpack.c.h.b16 %v4632
    %v6155 = vunpack.c.l.b16 %v4633
    %v6156 = vunpack.c.h.b16 %v4633
    %v6157 = vunpack.c.l.b16 %v4634
    %v6158 = vunpack.c.h.b16 %v4634
    %v6159 = vunpack.c.l.b16 %v4635
    %v6160 = vunpack.c.h.b16 %v4635
    %v6161 = vunpack.c.l.b16 %v4636
    %v6162 = vunpack.c.h.b16 %v4636
    %v6163 = vunpack.c.l.b16 %v4637
    %v6164 = vunpack.c.h.b16 %v4637
    %v6165 = vunpack.c.l.b16 %v4638
    %v6166 = vunpack.c.h.b16 %v4638
    %v6167 = vunpack.c.l.b16 %v4639
    %v6168 = vunpack.c.h.b16 %v4639
    %v6169 = vunpack.c.l.b16 %v4640
    %v6170 = vunpack.c.h.b16 %v4640
    %v6171 = vunpack.c.l.b16 %v4641
    %v6172 = vunpack.c.h.b16 %v4641
    %v6173 = vunpack.c.l.b16 %v4642
    %v6174 = vunpack.c.h.b16 %v4642
    %v6175 = vunpack.c.l.b16 %v4643
    %v6176 = vunpack.c.h.b16 %v4643
    %v6177 = vunpack.c.l.b16 %v4644
    %v6178 = vunpack.c.h.b16 %v4644
    %v6179 = vunpack.c.l.b16 %v4645
    %v6180 = vunpack.c.h.b16 %v4645
    %v6181 = vunpack.c.l.b16 %v4646
    %v6182 = vunpack.c.h.b16 %v4646
    %v6183 = vunpack.c.l.b16 %v4647
    %v6184 = vunpack.c.h.b16 %v4647
    %v6185 = vunpack.c.l.b16 %v4648
    %v6186 = vunpack.c.h.b16 %v4648
    %v6187 = vunpack.c.l.b16 %v4649
    %v6188 = vunpack.c.h.b16 %v4649
    %v6189 = vunpack.c.l.b16 %v4650
    %v6190 = vunpack.c.h.b16 %v4650
    %v6191 = vunpack.c.l.b16 %v4651
    %v6192 = vunpack.c.h.b16 %v4651
    %v6193 = vunpack.c.l.b16 %v4652
    %v6194 = vunpack.c.h.b16 %v4652
    %v6195 = vunpack.c.l.b16 %v4653
    %v6196 = vunpack.c.h.b16 %v4653
    %v6197 = vunpack.c.l.b16 %v4654
    %v6198 = vunpack.c.h.b16 %v4654
    %v6199 = vunpack.c.l.b16 %v4655
    %v6200 = vunpack.c.h.b16 %v4655
    %v6201 = vunpack.c.l.b16 %v4656
    %v6202 = vunpack.c.h.b16 %v4656
    %v6203 = vunpack.c.l.b16 %v4657
    %v6204 = vunpack.c.h.b16 %v4657
    %v6205 = vunpack.c.l.b16 %v4658
    %v6206 = vunpack.c.h.b16 %v4658
    %v6207 = vunpack.c.l.b16 %v4659
    %v6208 = vunpack.c.h.b16 %v4659
    %v6209 = vunpack.c.l.b16 %v4660
    %v6210 = vunpack.c.h.b16 %v4660
    %v6211 = vunpack.c.l.b16 %v4661
    %v6212 = vunpack.c.h.b16 %v4661
    %v6213 = vunpack.c.l.b16 %v4662
    %v6214 = vunpack.c.h.b16 %v4662
    %v6215 = vunpack.c.l.b16 %v4663
    %v6216 = vunpack.c.h.b16 %v4663
    %v6217 = vunpack.c.l.b16 %v4664
    %v6218 = vunpack.c.h.b16 %v4664
    %v6219 = vunpack.c.l.b16 %v4665
    %v6220 = vunpack.c.h.b16 %v4665
    %v6221 = vunpack.c.l.b16 %v4666
    %v6222 = vunpack.c.h.b16 %v4666
    %v6223 = vunpack.c.l.b16 %v4667
    %v6224 = vunpack.c.h.b16 %v4667
    %v6225 = vunpack.c.l.b16 %v4668
    %v6226 = vunpack.c.h.b16 %v4668
    %v6227 = vpack.c.b16 %v5207, %v5203
    %v6228 = vpack.c.b16 %v5208, %v5204
    %v6229 = vpack.c.b16 %v5209, %v5205
    %v6230 = vpack.c.b16 %v5210, %v5206
    %v6231 = vpack.c.b16 %v5215, %v5211
    %v6232 = vpack.c.b16 %v5216, %v5212
    %v6233 = vpack.c.b16 %v5217, %v5213
    %v6234 = vpack.c.b16 %v5218, %v5214
    %v6235 = vpack.c.b16 %v5223, %v5219
    %v6236 = vpack.c.b16 %v5224, %v5220
    %v6237 = vpack.c.b16 %v5225, %v5221
    %v6238 = vpack.c.b16 %v5226, %v5222
    %v6239 = vpack.c.b16 %v5231, %v5227
    %v6240 = vpack.c.b16 %v5232, %v5228
    %v6241 = vpack.c.b16 %v5233, %v5229
    %v6242 = vpack.c.b16 %v5234, %v5230
    %v6243 = vpack.c.b16 %v5239, %v5235
    %v6244 = vpack.c.b16 %v5240, %v5236
    %v6245 = vpack.c.b16 %v5241, %v5237
    %v6246 = vpack.c.b16 %v5242, %v5238
    %v6247 = vpack.c.b16 %v5247, %v5243
    %v6248 = vpack.c.b16 %v5248, %v5244
    %v6249 = vpack.c.b16 %v5249, %v5245
    %v6250 = vpack.c.b16 %v5250, %v5246
    %v6251 = vpack.c.b16 %v5255, %v5251
    %v6252 = vpack.c.b16 %v5256, %v5252
    %v6253 = vpack.c.b16 %v5257, %v5253
    %v6254 = vpack.c.b16 %v5258, %v5254
    %v6255 = vpack.c.b16 %v5263, %v5259
    %v6256 = vpack.c.b16 %v5264, %v5260
    %v6257 = vpack.c.b16 %v5265, %v5261
    %v6258 = vpack.c.b16 %v5266, %v5262
    %v6259 = vpack.c.b16 %v5271, %v5267
    %v6260 = vpack.c.b16 %v5272, %v5268
    %v6261 = vpack.c.b16 %v5273, %v5269
    %v6262 = vpack.c.b16 %v5274, %v5270
    %v6263 = vpack.c.b16 %v5279, %v5275
    %v6264 = vpack.c.b16 %v5280, %v5276
    %v6265 = vpack.c.b16 %v5281, %v5277
    %v6266 = vpack.c.b16 %v5282, %v5278
    %v6267 = vpack.c.b16 %v5287, %v5283
    %v6268 = vpack.c.b16 %v5288, %v5284
    %v6269 = vpack.c.b16 %v5289, %v5285
    %v6270 = vpack.c.b16 %v5290, %v5286
    %v6271 = vpack.c.b16 %v5295, %v5291
    %v6272 = vpack.c.b16 %v5296, %v5292
    %v6273 = vpack.c.b16 %v5297, %v5293
    %v6274 = vpack.c.b16 %v5298, %v5294
    %v6275 = vpack.c.b16 %v5303, %v5299
    %v6276 = vpack.c.b16 %v5304, %v5300
    %v6277 = vpack.c.b16 %v5305, %v5301
    %v6278 = vpack.c.b16 %v5306, %v5302
    %v6279 = vpack.c.b16 %v5311, %v5307
    %v6280 = vpack.c.b16 %v5312, %v5308
    %v6281 = vpack.c.b16 %v5313, %v5309
    %v6282 = vpack.c.b16 %v5314, %v5310
    %v6283 = vpack.c.b16 %v5319, %v5315
    %v6284 = vpack.c.b16 %v5320, %v5316
    %v6285 = vpack.c.b16 %v5321, %v5317
    %v6286 = vpack.c.b16 %v5322, %v5318
    %v6287 = vpack.c.b16 %v5327, %v5323
    %v6288 = vpack.c.b16 %v5328, %v5324
    %v6289 = vpack.c.b16 %v5329, %v5325
    %v6290 = vpack.c.b16 %v5330, %v5326
    %v6291 = vpack.c.b16 %v5335, %v5331
    %v6292 = vpack.c.b16 %v5336, %v5332
    %v6293 = vpack.c.b16 %v5337, %v5333
    %v6294 = vpack.c.b16 %v5338, %v5334
    %v6295 = vpack.c.b16 %v5343, %v5339
    %v6296 = vpack.c.b16 %v5344, %v5340
    %v6297 = vpack.c.b16 %v5345, %v5341
    %v6298 = vpack.c.b16 %v5346, %v5342
    %v6299 = vpack.c.b16 %v5351, %v5347
    %v6300 = vpack.c.b16 %v5352, %v5348
    %v6301 = vpack.c.b16 %v5353, %v5349
    %v6302 = vpack.c.b16 %v5354, %v5350
    %v6303 = vpack.c.b16 %v5359, %v5355
    %v6304 = vpack.c.b16 %v5360, %v5356
    %v6305 = vpack.c.b16 %v5361, %v5357
    %v6306 = vpack.c.b16 %v5362, %v5358
    %v6307 = vpack.c.b16 %v5367, %v5363
    %v6308 = vpack.c.b16 %v5368, %v5364
    %v6309 = vpack.c.b16 %v5369, %v5365
    %v6310 = vpack.c.b16 %v5370, %v5366
    %v6311 = vpack.c.b16 %v5375, %v5371
    %v6312 = vpack.c.b16 %v5376, %v5372
    %v6313 = vpack.c.b16 %v5377, %v5373
    %v6314 = vpack.c.b16 %v5378, %v5374
    %v6315 = vpack.c.b16 %v5383, %v5379
    %v6316 = vpack.c.b16 %v5384, %v5380
    %v6317 = vpack.c.b16 %v5385, %v5381
    %v6318 = vpack.c.b16 %v5386, %v5382
    %v6319 = vpack.c.b16 %v5391, %v5387
    %v6320 = vpack.c.b16 %v5392, %v5388
    %v6321 = vpack.c.b16 %v5393, %v5389
    %v6322 = vpack.c.b16 %v5394, %v5390
    %v6323 = vpack.c.b16 %v5399, %v5395
    %v6324 = vpack.c.b16 %v5400, %v5396
    %v6325 = vpack.c.b16 %v5401, %v5397
    %v6326 = vpack.c.b16 %v5402, %v5398
    %v6327 = vpack.c.b16 %v5407, %v5403
    %v6328 = vpack.c.b16 %v5408, %v5404
    %v6329 = vpack.c.b16 %v5409, %v5405
    %v6330 = vpack.c.b16 %v5410, %v5406
    %v6331 = vpack.c.b16 %v5415, %v5411
    %v6332 = vpack.c.b16 %v5416, %v5412
    %v6333 = vpack.c.b16 %v5417, %v5413
    %v6334 = vpack.c.b16 %v5418, %v5414
    %v6335 = vpack.c.b16 %v5423, %v5419
    %v6336 = vpack.c.b16 %v5424, %v5420
    %v6337 = vpack.c.b16 %v5425, %v5421
    %v6338 = vpack.c.b16 %v5426, %v5422
    %v6339 = vpack.c.b16 %v5431, %v5427
    %v6340 = vpack.c.b16 %v5432, %v5428
    %v6341 = vpack.c.b16 %v5433, %v5429
    %v6342 = vpack.c.b16 %v5434, %v5430
    %v6343 = vpack.c.b16 %v5439, %v5435
    %v6344 = vpack.c.b16 %v5440, %v5436
    %v6345 = vpack.c.b16 %v5441, %v5437
    %v6346 = vpack.c.b16 %v5442, %v5438
    %v6347 = vpack.c.b16 %v5447, %v5443
    %v6348 = vpack.c.b16 %v5448, %v5444
    %v6349 = vpack.c.b16 %v5449, %v5445
    %v6350 = vpack.c.b16 %v5450, %v5446
    %v6351 = vpack.c.b16 %v5455, %v5451
    %v6352 = vpack.c.b16 %v5456, %v5452
    %v6353 = vpack.c.b16 %v5457, %v5453
    %v6354 = vpack.c.b16 %v5458, %v5454
    %v6355 = vpack.c.b16 %v5463, %v5459
    %v6356 = vpack.c.b16 %v5464, %v5460
    %v6357 = vpack.c.b16 %v5465, %v5461
    %v6358 = vpack.c.b16 %v5466, %v5462
    %v6359 = vpack.c.b16 %v5471, %v5467
    %v6360 = vpack.c.b16 %v5472, %v5468
    %v6361 = vpack.c.b16 %v5473, %v5469
    %v6362 = vpack.c.b16 %v5474, %v5470
    %v6363 = vpack.c.b16 %v5479, %v5475
    %v6364 = vpack.c.b16 %v5480, %v5476
    %v6365 = vpack.c.b16 %v5481, %v5477
    %v6366 = vpack.c.b16 %v5482, %v5478
    %v6367 = vpack.c.b16 %v5487, %v5483
    %v6368 = vpack.c.b16 %v5488, %v5484
    %v6369 = vpack.c.b16 %v5489, %v5485
    %v6370 = vpack.c.b16 %v5490, %v5486
    %v6371 = vpack.c.b16 %v5495, %v5491
    %v6372 = vpack.c.b16 %v5496, %v5492
    %v6373 = vpack.c.b16 %v5497, %v5493
    %v6374 = vpack.c.b16 %v5498, %v5494
    %v6375 = vpack.c.b16 %v5503, %v5499
    %v6376 = vpack.c.b16 %v5504, %v5500
    %v6377 = vpack.c.b16 %v5505, %v5501
    %v6378 = vpack.c.b16 %v5506, %v5502
    %v6379 = vpack.c.b16 %v5511, %v5507
    %v6380 = vpack.c.b16 %v5512, %v5508
    %v6381 = vpack.c.b16 %v5513, %v5509
    %v6382 = vpack.c.b16 %v5514, %v5510
    %v6383 = vpack.c.b16 %v5519, %v5515
    %v6384 = vpack.c.b16 %v5520, %v5516
    %v6385 = vpack.c.b16 %v5521, %v5517
    %v6386 = vpack.c.b16 %v5522, %v5518
    %v6387 = vpack.c.b16 %v5527, %v5523
    %v6388 = vpack.c.b16 %v5528, %v5524
    %v6389 = vpack.c.b16 %v5529, %v5525
    %v6390 = vpack.c.b16 %v5530, %v5526
    %v6391 = vpack.c.b16 %v5535, %v5531
    %v6392 = vpack.c.b16 %v5536, %v5532
    %v6393 = vpack.c.b16 %v5537, %v5533
    %v6394 = vpack.c.b16 %v5538, %v5534
    %v6395 = vpack.c.b16 %v5543, %v5539
    %v6396 = vpack.c.b16 %v5544, %v5540
    %v6397 = vpack.c.b16 %v5545, %v5541
    %v6398 = vpack.c.b16 %v5546, %v5542
    %v6399 = vpack.c.b16 %v5551, %v5547
    %v6400 = vpack.c.b16 %v5552, %v5548
    %v6401 = vpack.c.b16 %v5553, %v5549
    %v6402 = vpack.c.b16 %v5554, %v5550
    %v6403 = vpack.c.b16 %v5559, %v5555
    %v6404 = vpack.c.b16 %v5560, %v5556
    %v6405 = vpack.c.b16 %v5561, %v5557
    %v6406 = vpack.c.b16 %v5562, %v5558
    %v6407 = vpack.c.b16 %v5567, %v5563
    %v6408 = vpack.c.b16 %v5568, %v5564
    %v6409 = vpack.c.b16 %v5569, %v5565
    %v6410 = vpack.c.b16 %v5570, %v5566
    %v6411 = vpack.c.b16 %v5575, %v5571
    %v6412 = vpack.c.b16 %v5576, %v5572
    %v6413 = vpack.c.b16 %v5577, %v5573
    %v6414 = vpack.c.b16 %v5578, %v5574
    %v6415 = vpack.c.b16 %v5583, %v5579
    %v6416 = vpack.c.b16 %v5584, %v5580
    %v6417 = vpack.c.b16 %v5585, %v5581
    %v6418 = vpack.c.b16 %v5586, %v5582
    %v6419 = vpack.c.b16 %v5591, %v5587
    %v6420 = vpack.c.b16 %v5592, %v5588
    %v6421 = vpack.c.b16 %v5593, %v5589
    %v6422 = vpack.c.b16 %v5594, %v5590
    %v6423 = vpack.c.b16 %v5599, %v5595
    %v6424 = vpack.c.b16 %v5600, %v5596
    %v6425 = vpack.c.b16 %v5601, %v5597
    %v6426 = vpack.c.b16 %v5602, %v5598
    %v6427 = vpack.c.b16 %v5607, %v5603
    %v6428 = vpack.c.b16 %v5608, %v5604
    %v6429 = vpack.c.b16 %v5609, %v5605
    %v6430 = vpack.c.b16 %v5610, %v5606
    %v6431 = vpack.c.b16 %v5615, %v5611
    %v6432 = vpack.c.b16 %v5616, %v5612
    %v6433 = vpack.c.b16 %v5617, %v5613
    %v6434 = vpack.c.b16 %v5618, %v5614
    %v6435 = vpack.c.b16 %v5623, %v5619
    %v6436 = vpack.c.b16 %v5624, %v5620
    %v6437 = vpack.c.b16 %v5625, %v5621
    %v6438 = vpack.c.b16 %v5626, %v5622
    %v6439 = vpack.c.b16 %v5631, %v5627
    %v6440 = vpack.c.b16 %v5632, %v5628
    %v6441 = vpack.c.b16 %v5633, %v5629
    %v6442 = vpack.c.b16 %v5634, %v5630
    %v6443 = vpack.c.b16 %v5639, %v5635
    %v6444 = vpack.c.b16 %v5640, %v5636
    %v6445 = vpack.c.b16 %v5641, %v5637
    %v6446 = vpack.c.b16 %v5642, %v5638
    %v6447 = vpack.c.b16 %v5647, %v5643
    %v6448 = vpack.c.b16 %v5648, %v5644
    %v6449 = vpack.c.b16 %v5649, %v5645
    %v6450 = vpack.c.b16 %v5650, %v5646
    %v6451 = vpack.c.b16 %v5655, %v5651
    %v6452 = vpack.c.b16 %v5656, %v5652
    %v6453 = vpack.c.b16 %v5657, %v5653
    %v6454 = vpack.c.b16 %v5658, %v5654
    %v6455 = vpack.c.b16 %v5663, %v5659
    %v6456 = vpack.c.b16 %v5664, %v5660
    %v6457 = vpack.c.b16 %v5665, %v5661
    %v6458 = vpack.c.b16 %v5666, %v5662
    %v6459 = vpack.c.b16 %v5671, %v5667
    %v6460 = vpack.c.b16 %v5672, %v5668
    %v6461 = vpack.c.b16 %v5673, %v5669
    %v6462 = vpack.c.b16 %v5674, %v5670
    %v6463 = vpack.c.b16 %v5679, %v5675
    %v6464 = vpack.c.b16 %v5680, %v5676
    %v6465 = vpack.c.b16 %v5681, %v5677
    %v6466 = vpack.c.b16 %v5682, %v5678
    %v6467 = vpack.c.b16 %v5687, %v5683
    %v6468 = vpack.c.b16 %v5688, %v5684
    %v6469 = vpack.c.b16 %v5689, %v5685
    %v6470 = vpack.c.b16 %v5690, %v5686
    %v6471 = vpack.c.b16 %v5695, %v5691
    %v6472 = vpack.c.b16 %v5696, %v5692
    %v6473 = vpack.c.b16 %v5697, %v5693
    %v6474 = vpack.c.b16 %v5698, %v5694
    %v6475 = vpack.c.b16 %v5703, %v5699
    %v6476 = vpack.c.b16 %v5704, %v5700
    %v6477 = vpack.c.b16 %v5705, %v5701
    %v6478 = vpack.c.b16 %v5706, %v5702
    %v6479 = vpack.c.b16 %v5711, %v5707
    %v6480 = vpack.c.b16 %v5712, %v5708
    %v6481 = vpack.c.b16 %v5713, %v5709
    %v6482 = vpack.c.b16 %v5714, %v5710
    %v6483 = vpack.c.b16 %v5719, %v5715
    %v6484 = vpack.c.b16 %v5720, %v5716
    %v6485 = vpack.c.b16 %v5721, %v5717
    %v6486 = vpack.c.b16 %v5722, %v5718
    %v6487 = vpack.c.b16 %v5727, %v5723
    %v6488 = vpack.c.b16 %v5728, %v5724
    %v6489 = vpack.c.b16 %v5729, %v5725
    %v6490 = vpack.c.b16 %v5730, %v5726
    %v6491 = vpack.c.b16 %v5735, %v5731
    %v6492 = vpack.c.b16 %v5736, %v5732
    %v6493 = vpack.c.b16 %v5737, %v5733
    %v6494 = vpack.c.b16 %v5738, %v5734
    %v6495 = vpack.c.b16 %v5743, %v5739
    %v6496 = vpack.c.b16 %v5744, %v5740
    %v6497 = vpack.c.b16 %v5745, %v5741
    %v6498 = vpack.c.b16 %v5746, %v5742
    %v6499 = vpack.c.b16 %v5751, %v5747
    %v6500 = vpack.c.b16 %v5752, %v5748
    %v6501 = vpack.c.b16 %v5753, %v5749
    %v6502 = vpack.c.b16 %v5754, %v5750
    %v6503 = vpack.c.b16 %v5759, %v5755
    %v6504 = vpack.c.b16 %v5760, %v5756
    %v6505 = vpack.c.b16 %v5761, %v5757
    %v6506 = vpack.c.b16 %v5762, %v5758
    %v6507 = vpack.c.b16 %v5767, %v5763
    %v6508 = vpack.c.b16 %v5768, %v5764
    %v6509 = vpack.c.b16 %v5769, %v5765
    %v6510 = vpack.c.b16 %v5770, %v5766
    %v6511 = vpack.c.b16 %v5775, %v5771
    %v6512 = vpack.c.b16 %v5776, %v5772
    %v6513 = vpack.c.b16 %v5777, %v5773
    %v6514 = vpack.c.b16 %v5778, %v5774
    %v6515 = vpack.c.b16 %v5783, %v5779
    %v6516 = vpack.c.b16 %v5784, %v5780
    %v6517 = vpack.c.b16 %v5785, %v5781
    %v6518 = vpack.c.b16 %v5786, %v5782
    %v6519 = vpack.c.b16 %v5791, %v5787
    %v6520 = vpack.c.b16 %v5792, %v5788
    %v6521 = vpack.c.b16 %v5793, %v5789
    %v6522 = vpack.c.b16 %v5794, %v5790
    %v6523 = vpack.c.b16 %v5799, %v5795
    %v6524 = vpack.c.b16 %v5800, %v5796
    %v6525 = vpack.c.b16 %v5801, %v5797
    %v6526 = vpack.c.b16 %v5802, %v5798
    %v6527 = vpack.c.b16 %v5807, %v5803
    %v6528 = vpack.c.b16 %v5808, %v5804
    %v6529 = vpack.c.b16 %v5809, %v5805
    %v6530 = vpack.c.b16 %v5810, %v5806
    %v6531 = vpack.c.b16 %v5815, %v5811
    %v6532 = vpack.c.b16 %v5816, %v5812
    %v6533 = vpack.c.b16 %v5817, %v5813
    %v6534 = vpack.c.b16 %v5818, %v5814
    %v6535 = vpack.c.b16 %v5823, %v5819
    %v6536 = vpack.c.b16 %v5824, %v5820
    %v6537 = vpack.c.b16 %v5825, %v5821
    %v6538 = vpack.c.b16 %v5826, %v5822
    %v6539 = vpack.c.b16 %v5831, %v5827
    %v6540 = vpack.c.b16 %v5832, %v5828
    %v6541 = vpack.c.b16 %v5833, %v5829
    %v6542 = vpack.c.b16 %v5834, %v5830
    %v6543 = vpack.c.b16 %v5839, %v5835
    %v6544 = vpack.c.b16 %v5840, %v5836
    %v6545 = vpack.c.b16 %v5841, %v5837
    %v6546 = vpack.c.b16 %v5842, %v5838
    %v6547 = vpack.c.b16 %v5847, %v5843
    %v6548 = vpack.c.b16 %v5848, %v5844
    %v6549 = vpack.c.b16 %v5849, %v5845
    %v6550 = vpack.c.b16 %v5850, %v5846
    %v6551 = vpack.c.b16 %v5855, %v5851
    %v6552 = vpack.c.b16 %v5856, %v5852
    %v6553 = vpack.c.b16 %v5857, %v5853
    %v6554 = vpack.c.b16 %v5858, %v5854
    %v6555 = vpack.c.b16 %v5863, %v5859
    %v6556 = vpack.c.b16 %v5864, %v5860
    %v6557 = vpack.c.b16 %v5865, %v5861
    %v6558 = vpack.c.b16 %v5866, %v5862
    %v6559 = vpack.c.b16 %v5871, %v5867
    %v6560 = vpack.c.b16 %v5872, %v5868
    %v6561 = vpack.c.b16 %v5873, %v5869
    %v6562 = vpack.c.b16 %v5874, %v5870
    %v6563 = vpack.c.b16 %v5879, %v5875
    %v6564 = vpack.c.b16 %v5880, %v5876
    %v6565 = vpack.c.b16 %v5881, %v5877
    %v6566 = vpack.c.b16 %v5882, %v5878
    %v6567 = vpack.c.b16 %v5887, %v5883
    %v6568 = vpack.c.b16 %v5888, %v5884
    %v6569 = vpack.c.b16 %v5889, %v5885
    %v6570 = vpack.c.b16 %v5890, %v5886
    %v6571 = vpack.c.b16 %v5895, %v5891
    %v6572 = vpack.c.b16 %v5896, %v5892
    %v6573 = vpack.c.b16 %v5897, %v5893
    %v6574 = vpack.c.b16 %v5898, %v5894
    %v6575 = vpack.c.b16 %v5903, %v5899
    %v6576 = vpack.c.b16 %v5904, %v5900
    %v6577 = vpack.c.b16 %v5905, %v5901
    %v6578 = vpack.c.b16 %v5906, %v5902
    %v6579 = vpack.c.b16 %v5911, %v5907
    %v6580 = vpack.c.b16 %v5912, %v5908
    %v6581 = vpack.c.b16 %v5913, %v5909
    %v6582 = vpack.c.b16 %v5914, %v5910
    %v6583 = vpack.c.b16 %v5919, %v5915
    %v6584 = vpack.c.b16 %v5920, %v5916
    %v6585 = vpack.c.b16 %v5921, %v5917
    %v6586 = vpack.c.b16 %v5922, %v5918
    %v6587 = vpack.c.b16 %v5927, %v5923
    %v6588 = vpack.c.b16 %v5928, %v5924
    %v6589 = vpack.c.b16 %v5929, %v5925
    %v6590 = vpack.c.b16 %v5930, %v5926
    %v6591 = vpack.c.b16 %v5935, %v5931
    %v6592 = vpack.c.b16 %v5936, %v5932
    %v6593 = vpack.c.b16 %v5937, %v5933
    %v6594 = vpack.c.b16 %v5938, %v5934
    %v6595 = vpack.c.b16 %v5943, %v5939
    %v6596 = vpack.c.b16 %v5944, %v5940
    %v6597 = vpack.c.b16 %v5945, %v5941
    %v6598 = vpack.c.b16 %v5946, %v5942
    %v6599 = vpack.c.b16 %v5951, %v5947
    %v6600 = vpack.c.b16 %v5952, %v5948
    %v6601 = vpack.c.b16 %v5953, %v5949
    %v6602 = vpack.c.b16 %v5954, %v5950
    %v6603 = vpack.c.b16 %v5959, %v5955
    %v6604 = vpack.c.b16 %v5960, %v5956
    %v6605 = vpack.c.b16 %v5961, %v5957
    %v6606 = vpack.c.b16 %v5962, %v5958
    %v6607 = vpack.c.b16 %v5967, %v5963
    %v6608 = vpack.c.b16 %v5968, %v5964
    %v6609 = vpack.c.b16 %v5969, %v5965
    %v6610 = vpack.c.b16 %v5970, %v5966
    %v6611 = vpack.c.b16 %v5975, %v5971
    %v6612 = vpack.c.b16 %v5976, %v5972
    %v6613 = vpack.c.b16 %v5977, %v5973
    %v6614 = vpack.c.b16 %v5978, %v5974
    %v6615 = vpack.c.b16 %v5983, %v5979
    %v6616 = vpack.c.b16 %v5984, %v5980
    %v6617 = vpack.c.b16 %v5985, %v5981
    %v6618 = vpack.c.b16 %v5986, %v5982
    %v6619 = vpack.c.b16 %v5991, %v5987
    %v6620 = vpack.c.b16 %v5992, %v5988
    %v6621 = vpack.c.b16 %v5993, %v5989
    %v6622 = vpack.c.b16 %v5994, %v5990
    %v6623 = vpack.c.b16 %v5999, %v5995
    %v6624 = vpack.c.b16 %v6000, %v5996
    %v6625 = vpack.c.b16 %v6001, %v5997
    %v6626 = vpack.c.b16 %v6002, %v5998
    %v6627 = vpack.c.b16 %v6007, %v6003
    %v6628 = vpack.c.b16 %v6008, %v6004
    %v6629 = vpack.c.b16 %v6009, %v6005
    %v6630 = vpack.c.b16 %v6010, %v6006
    %v6631 = vpack.c.b16 %v6015, %v6011
    %v6632 = vpack.c.b16 %v6016, %v6012
    %v6633 = vpack.c.b16 %v6017, %v6013
    %v6634 = vpack.c.b16 %v6018, %v6014
    %v6635 = vpack.c.b16 %v6023, %v6019
    %v6636 = vpack.c.b16 %v6024, %v6020
    %v6637 = vpack.c.b16 %v6025, %v6021
    %v6638 = vpack.c.b16 %v6026, %v6022
    %v6639 = vpack.c.b16 %v6031, %v6027
    %v6640 = vpack.c.b16 %v6032, %v6028
    %v6641 = vpack.c.b16 %v6033, %v6029
    %v6642 = vpack.c.b16 %v6034, %v6030
    %v6643 = vpack.c.b16 %v6039, %v6035
    %v6644 = vpack.c.b16 %v6040, %v6036
    %v6645 = vpack.c.b16 %v6041, %v6037
    %v6646 = vpack.c.b16 %v6042, %v6038
    %v6647 = vpack.c.b16 %v6047, %v6043
    %v6648 = vpack.c.b16 %v6048, %v6044
    %v6649 = vpack.c.b16 %v6049, %v6045
    %v6650 = vpack.c.b16 %v6050, %v6046
    %v6651 = vpack.c.b16 %v6055, %v6051
    %v6652 = vpack.c.b16 %v6056, %v6052
    %v6653 = vpack.c.b16 %v6057, %v6053
    %v6654 = vpack.c.b16 %v6058, %v6054
    %v6655 = vpack.c.b16 %v6063, %v6059
    %v6656 = vpack.c.b16 %v6064, %v6060
    %v6657 = vpack.c.b16 %v6065, %v6061
    %v6658 = vpack.c.b16 %v6066, %v6062
    %v6659 = vpack.c.b16 %v6071, %v6067
    %v6660 = vpack.c.b16 %v6072, %v6068
    %v6661 = vpack.c.b16 %v6073, %v6069
    %v6662 = vpack.c.b16 %v6074, %v6070
    %v6663 = vpack.c.b16 %v6079, %v6075
    %v6664 = vpack.c.b16 %v6080, %v6076
    %v6665 = vpack.c.b16 %v6081, %v6077
    %v6666 = vpack.c.b16 %v6082, %v6078
    %v6667 = vpack.c.b16 %v6087, %v6083
    %v6668 = vpack.c.b16 %v6088, %v6084
    %v6669 = vpack.c.b16 %v6089, %v6085
    %v6670 = vpack.c.b16 %v6090, %v6086
    %v6671 = vpack.c.b16 %v6095, %v6091
    %v6672 = vpack.c.b16 %v6096, %v6092
    %v6673 = vpack.c.b16 %v6097, %v6093
    %v6674 = vpack.c.b16 %v6098, %v6094
    %v6675 = vpack.c.b16 %v6103, %v6099
    %v6676 = vpack.c.b16 %v6104, %v6100
    %v6677 = vpack.c.b16 %v6105, %v6101
    %v6678 = vpack.c.b16 %v6106, %v6102
    %v6679 = vpack.c.b16 %v6111, %v6107
    %v6680 = vpack.c.b16 %v6112, %v6108
    %v6681 = vpack.c.b16 %v6113, %v6109
    %v6682 = vpack.c.b16 %v6114, %v6110
    %v6683 = vpack.c.b16 %v6119, %v6115
    %v6684 = vpack.c.b16 %v6120, %v6116
    %v6685 = vpack.c.b16 %v6121, %v6117
    %v6686 = vpack.c.b16 %v6122, %v6118
    %v6687 = vpack.c.b16 %v6127, %v6123
    %v6688 = vpack.c.b16 %v6128, %v6124
    %v6689 = vpack.c.b16 %v6129, %v6125
    %v6690 = vpack.c.b16 %v6130, %v6126
    %v6691 = vpack.c.b16 %v6135, %v6131
    %v6692 = vpack.c.b16 %v6136, %v6132
    %v6693 = vpack.c.b16 %v6137, %v6133
    %v6694 = vpack.c.b16 %v6138, %v6134
    %v6695 = vpack.c.b16 %v6143, %v6139
    %v6696 = vpack.c.b16 %v6144, %v6140
    %v6697 = vpack.c.b16 %v6145, %v6141
    %v6698 = vpack.c.b16 %v6146, %v6142
    %v6699 = vpack.c.b16 %v6151, %v6147
    %v6700 = vpack.c.b16 %v6152, %v6148
    %v6701 = vpack.c.b16 %v6153, %v6149
    %v6702 = vpack.c.b16 %v6154, %v6150
    %v6703 = vpack.c.b16 %v6159, %v6155
    %v6704 = vpack.c.b16 %v6160, %v6156
    %v6705 = vpack.c.b16 %v6161, %v6157
    %v6706 = vpack.c.b16 %v6162, %v6158
    %v6707 = vpack.c.b16 %v6167, %v6163
    %v6708 = vpack.c.b16 %v6168, %v6164
    %v6709 = vpack.c.b16 %v6169, %v6165
    %v6710 = vpack.c.b16 %v6170, %v6166
    %v6711 = vpack.c.b16 %v6175, %v6171
    %v6712 = vpack.c.b16 %v6176, %v6172
    %v6713 = vpack.c.b16 %v6177, %v6173
    %v6714 = vpack.c.b16 %v6178, %v6174
    %v6715 = vpack.c.b16 %v6183, %v6179
    %v6716 = vpack.c.b16 %v6184, %v6180
    %v6717 = vpack.c.b16 %v6185, %v6181
    %v6718 = vpack.c.b16 %v6186, %v6182
    %v6719 = vpack.c.b16 %v6191, %v6187
    %v6720 = vpack.c.b16 %v6192, %v6188
    %v6721 = vpack.c.b16 %v6193, %v6189
    %v6722 = vpack.c.b16 %v6194, %v6190
    %v6723 = vpack.c.b16 %v6199, %v6195
    %v6724 = vpack.c.b16 %v6200, %v6196
    %v6725 = vpack.c.b16 %v6201, %v6197
    %v6726 = vpack.c.b16 %v6202, %v6198
    %v6727 = vpack.c.b16 %v6207, %v6203
    %v6728 = vpack.c.b16 %v6208, %v6204
    %v6729 = vpack.c.b16 %v6209, %v6205
    %v6730 = vpack.c.b16 %v6210, %v6206
    %v6731 = vpack.c.b16 %v6215, %v6211
    %v6732 = vpack.c.b16 %v6216, %v6212
    %v6733 = vpack.c.b16 %v6217, %v6213
    %v6734 = vpack.c.b16 %v6218, %v6214
    %v6735 = vpack.c.b16 %v6223, %v6219
    %v6736 = vpack.c.b16 %v6224, %v6220
    %v6737 = vpack.c.b16 %v6225, %v6221
    %v6738 = vpack.c.b16 %v6226, %v6222
    %7251 = vmatprep.subr.bf16.mxu0 %v6256
    %7252 = vmatpush1.bf16.msra.mxu0 %v6255
    %7253 = vmatprep.subr.bf16.mxu0 %v6252
    %7254 = vmatpush1.bf16.msra.mxu0 %v6251
    %7255 = vmatprep.subr.bf16.mxu0 %v6248
    %7256 = vmatpush1.bf16.msra.mxu0 %v6247
    %7257 = vmatprep.subr.bf16.mxu0 %v6244
    %7258 = vmatpush1.bf16.msra.mxu0 %v6243
    %7259 = vmatprep.subr.bf16.mxu0 %v6240
    %7260 = vmatpush1.bf16.msra.mxu0 %v6239
    %7261 = vmatprep.subr.bf16.mxu0 %v6236
    %7262 = vmatpush1.bf16.msra.mxu0 %v6235
    %7263 = vmatprep.subr.bf16.mxu0 %v6232
    %7264 = vmatpush1.bf16.msra.mxu0 %v6231
    %7265 = vmatprep.subr.bf16.mxu0 %v6228
    %7266 = vmatpush1.bf16.msra.mxu0 %v6227
    %7267 = vmatprep.subr.bf16.mxu0 %v6288
    %7268 = vmatpush2.bf16.msra.mxu0 %v6287
    %7269 = vmatprep.subr.bf16.mxu0 %v6284
    %7270 = vmatpush2.bf16.msra.mxu0 %v6283
    %7271 = vmatprep.subr.bf16.mxu0 %v6280
    %7272 = vmatpush2.bf16.msra.mxu0 %v6279
    %7273 = vmatprep.subr.bf16.mxu0 %v6276
    %7274 = vmatpush2.bf16.msra.mxu0 %v6275
    %7275 = vmatprep.subr.bf16.mxu0 %v6272
    %7276 = vmatpush2.bf16.msra.mxu0 %v6271
    %7277 = vmatprep.subr.bf16.mxu0 %v6268
    %7278 = vmatpush2.bf16.msra.mxu0 %v6267
    %7279 = vmatprep.subr.bf16.mxu0 %v6264
    %7280 = vmatpush2.bf16.msra.mxu0 %v6263
    %7281 = vmatprep.subr.bf16.mxu0 %v6260
    %7282 = vmatpush2.bf16.msra.mxu0 %v6259
    %7283 = vmatprep.mubr.bf16.mxu0 %v4126
    %7284 = vmatmul.mubr.bf16.gmra.mxu0 %v4125
    %v7285 = vpop.f32.mrf.mxu0
    %v7286 = vadd.f32 %v4674, %v7285
    %v7287 = vpop.f32.mrf.mxu0
    %v7288 = vadd.f32 %v4678, %v7287
    %v7289 = vpop.f32.mrf.mxu0
    %v7290 = vadd.f32 %v4674, %v7289
    %v7291 = vpop.f32.mrf.mxu0
    %v7292 = vadd.f32 %v4678, %v7291
    %7293 = vmatprep.mubr.bf16.mxu0 %v4142
    %7294 = vmatmul.mubr.bf16.gmra.mxu0 %v4141
    %v7295 = vpop.f32.mrf.mxu0
    %v7296 = vadd.f32 %v4674, %v7295
    %v7297 = vpop.f32.mrf.mxu0
    %v7298 = vadd.f32 %v4678, %v7297
    %v7299 = vpop.f32.mrf.mxu0
    %v7300 = vpop.f32.mrf.mxu0
    %7301 = vdwg.mxu0
    %7302 = vmatprep.subr.bf16.mxu0 %v6320
    %7303 = vmatpush1.bf16.msra.mxu0 %v6319
    %7304 = vmatprep.subr.bf16.mxu0 %v6316
    %7305 = vmatpush1.bf16.msra.mxu0 %v6315
    %7306 = vmatprep.subr.bf16.mxu0 %v6312
    %7307 = vmatpush1.bf16.msra.mxu0 %v6311
    %7308 = vmatprep.subr.bf16.mxu0 %v6308
    %7309 = vmatpush1.bf16.msra.mxu0 %v6307
    %7310 = vmatprep.subr.bf16.mxu0 %v6304
    %7311 = vmatpush1.bf16.msra.mxu0 %v6303
    %7312 = vmatprep.subr.bf16.mxu0 %v6300
    %7313 = vmatpush1.bf16.msra.mxu0 %v6299
    %7314 = vmatprep.subr.bf16.mxu0 %v6296
    %7315 = vmatpush1.bf16.msra.mxu0 %v6295
    %7316 = vmatprep.subr.bf16.mxu0 %v6292
    %7317 = vmatpush1.bf16.msra.mxu0 %v6291
    %7318 = vmatprep.subr.bf16.mxu0 %v6352
    %7319 = vmatpush2.bf16.msra.mxu0 %v6351
    %7320 = vmatprep.subr.bf16.mxu0 %v6348
    %7321 = vmatpush2.bf16.msra.mxu0 %v6347
    %7322 = vmatprep.subr.bf16.mxu0 %v6344
    %7323 = vmatpush2.bf16.msra.mxu0 %v6343
    %7324 = vmatprep.subr.bf16.mxu0 %v6340
    %7325 = vmatpush2.bf16.msra.mxu0 %v6339
    %7326 = vmatprep.subr.bf16.mxu0 %v6336
    %7327 = vmatpush2.bf16.msra.mxu0 %v6335
    %7328 = vmatprep.subr.bf16.mxu0 %v6332
    %7329 = vmatpush2.bf16.msra.mxu0 %v6331
    %7330 = vmatprep.subr.bf16.mxu0 %v6328
    %7331 = vmatpush2.bf16.msra.mxu0 %v6327
    %7332 = vmatprep.subr.bf16.mxu0 %v6324
    %7333 = vmatpush2.bf16.msra.mxu0 %v6323
    %7334 = vmatprep.mubr.bf16.mxu0 %v4128
    %7335 = vmatmul.mubr.bf16.gmra.mxu0 %v4127
    %v7336 = vpop.f32.mrf.mxu0
    %v7337 = vadd.f32 %v7286, %v7336
    %v7338 = vpop.f32.mrf.mxu0
    %v7339 = vadd.f32 %v7288, %v7338
    %v7340 = vpop.f32.mrf.mxu0
    %v7341 = vadd.f32 %v7290, %v7340
    %v7342 = vpop.f32.mrf.mxu0
    %v7343 = vadd.f32 %v7292, %v7342
    %7344 = vmatprep.mubr.bf16.mxu0 %v4144
    %7345 = vmatmul.mubr.bf16.gmra.mxu0 %v4143
    %v7346 = vpop.f32.mrf.mxu0
    %v7347 = vadd.f32 %v7296, %v7346
    %v7348 = vpop.f32.mrf.mxu0
    %v7349 = vadd.f32 %v7298, %v7348
    %v7350 = vpop.f32.mrf.mxu0
    %v7351 = vpop.f32.mrf.mxu0
    %7352 = vdwg.mxu0
    %7353 = vmatprep.subr.bf16.mxu0 %v6384
    %7354 = vmatpush1.bf16.msra.mxu0 %v6383
    %7355 = vmatprep.subr.bf16.mxu0 %v6380
    %7356 = vmatpush1.bf16.msra.mxu0 %v6379
    %7357 = vmatprep.subr.bf16.mxu0 %v6376
    %7358 = vmatpush1.bf16.msra.mxu0 %v6375
    %7359 = vmatprep.subr.bf16.mxu0 %v6372
    %7360 = vmatpush1.bf16.msra.mxu0 %v6371
    %7361 = vmatprep.subr.bf16.mxu0 %v6368
    %7362 = vmatpush1.bf16.msra.mxu0 %v6367
    %7363 = vmatprep.subr.bf16.mxu0 %v6364
    %7364 = vmatpush1.bf16.msra.mxu0 %v6363
    %7365 = vmatprep.subr.bf16.mxu0 %v6360
    %7366 = vmatpush1.bf16.msra.mxu0 %v6359
    %7367 = vmatprep.subr.bf16.mxu0 %v6356
    %7368 = vmatpush1.bf16.msra.mxu0 %v6355
    %7369 = vmatprep.subr.bf16.mxu0 %v6416
    %7370 = vmatpush2.bf16.msra.mxu0 %v6415
    %7371 = vmatprep.subr.bf16.mxu0 %v6412
    %7372 = vmatpush2.bf16.msra.mxu0 %v6411
    %7373 = vmatprep.subr.bf16.mxu0 %v6408
    %7374 = vmatpush2.bf16.msra.mxu0 %v6407
    %7375 = vmatprep.subr.bf16.mxu0 %v6404
    %7376 = vmatpush2.bf16.msra.mxu0 %v6403
    %7377 = vmatprep.subr.bf16.mxu0 %v6400
    %7378 = vmatpush2.bf16.msra.mxu0 %v6399
    %7379 = vmatprep.subr.bf16.mxu0 %v6396
    %7380 = vmatpush2.bf16.msra.mxu0 %v6395
    %7381 = vmatprep.subr.bf16.mxu0 %v6392
    %7382 = vmatpush2.bf16.msra.mxu0 %v6391
    %7383 = vmatprep.subr.bf16.mxu0 %v6388
    %7384 = vmatpush2.bf16.msra.mxu0 %v6387
    %7385 = vmatprep.mubr.bf16.mxu0 %v4130
    %7386 = vmatmul.mubr.bf16.gmra.mxu0 %v4129
    %v7387 = vpop.f32.mrf.mxu0
    %v7388 = vadd.f32 %v7337, %v7387
    %v7389 = vpop.f32.mrf.mxu0
    %v7390 = vadd.f32 %v7339, %v7389
    %v7391 = vpop.f32.mrf.mxu0
    %v7392 = vadd.f32 %v7341, %v7391
    %v7393 = vpop.f32.mrf.mxu0
    %v7394 = vadd.f32 %v7343, %v7393
    %7395 = vmatprep.mubr.bf16.mxu0 %v4146
    %7396 = vmatmul.mubr.bf16.gmra.mxu0 %v4145
    %v7397 = vpop.f32.mrf.mxu0
    %v7398 = vadd.f32 %v7347, %v7397
    %v7399 = vpop.f32.mrf.mxu0
    %v7400 = vadd.f32 %v7349, %v7399
    %v7401 = vpop.f32.mrf.mxu0
    %v7402 = vpop.f32.mrf.mxu0
    %7403 = vdwg.mxu0
    %7404 = vmatprep.subr.bf16.mxu0 %v6448
    %7405 = vmatpush1.bf16.msra.mxu0 %v6447
    %7406 = vmatprep.subr.bf16.mxu0 %v6444
    %7407 = vmatpush1.bf16.msra.mxu0 %v6443
    %7408 = vmatprep.subr.bf16.mxu0 %v6440
    %7409 = vmatpush1.bf16.msra.mxu0 %v6439
    %7410 = vmatprep.subr.bf16.mxu0 %v6436
    %7411 = vmatpush1.bf16.msra.mxu0 %v6435
    %7412 = vmatprep.subr.bf16.mxu0 %v6432
    %7413 = vmatpush1.bf16.msra.mxu0 %v6431
    %7414 = vmatprep.subr.bf16.mxu0 %v6428
    %7415 = vmatpush1.bf16.msra.mxu0 %v6427
    %7416 = vmatprep.subr.bf16.mxu0 %v6424
    %7417 = vmatpush1.bf16.msra.mxu0 %v6423
    %7418 = vmatprep.subr.bf16.mxu0 %v6420
    %7419 = vmatpush1.bf16.msra.mxu0 %v6419
    %7420 = vmatprep.subr.bf16.mxu0 %v6480
    %7421 = vmatpush2.bf16.msra.mxu0 %v6479
    %7422 = vmatprep.subr.bf16.mxu0 %v6476
    %7423 = vmatpush2.bf16.msra.mxu0 %v6475
    %7424 = vmatprep.subr.bf16.mxu0 %v6472
    %7425 = vmatpush2.bf16.msra.mxu0 %v6471
    %7426 = vmatprep.subr.bf16.mxu0 %v6468
    %7427 = vmatpush2.bf16.msra.mxu0 %v6467
    %7428 = vmatprep.subr.bf16.mxu0 %v6464
    %7429 = vmatpush2.bf16.msra.mxu0 %v6463
    %7430 = vmatprep.subr.bf16.mxu0 %v6460
    %7431 = vmatpush2.bf16.msra.mxu0 %v6459
    %7432 = vmatprep.subr.bf16.mxu0 %v6456
    %7433 = vmatpush2.bf16.msra.mxu0 %v6455
    %7434 = vmatprep.subr.bf16.mxu0 %v6452
    %7435 = vmatpush2.bf16.msra.mxu0 %v6451
    %7436 = vmatprep.mubr.bf16.mxu0 %v4132
    %7437 = vmatmul.mubr.bf16.gmra.mxu0 %v4131
    %v7438 = vpop.f32.mrf.mxu0
    %v7439 = vadd.f32 %v7388, %v7438
    %v7440 = vpop.f32.mrf.mxu0
    %v7441 = vadd.f32 %v7390, %v7440
    %v7442 = vpop.f32.mrf.mxu0
    %v7443 = vadd.f32 %v7392, %v7442
    %v7444 = vpop.f32.mrf.mxu0
    %v7445 = vadd.f32 %v7394, %v7444
    %7446 = vmatprep.mubr.bf16.mxu0 %v4148
    %7447 = vmatmul.mubr.bf16.gmra.mxu0 %v4147
    %v7448 = vpop.f32.mrf.mxu0
    %v7449 = vadd.f32 %v7398, %v7448
    %v7450 = vpop.f32.mrf.mxu0
    %v7451 = vadd.f32 %v7400, %v7450
    %v7452 = vpop.f32.mrf.mxu0
    %v7453 = vpop.f32.mrf.mxu0
    %7454 = vdwg.mxu0
    %7455 = vmatprep.subr.bf16.mxu0 %v6512
    %7456 = vmatpush1.bf16.msra.mxu0 %v6511
    %7457 = vmatprep.subr.bf16.mxu0 %v6508
    %7458 = vmatpush1.bf16.msra.mxu0 %v6507
    %7459 = vmatprep.subr.bf16.mxu0 %v6504
    %7460 = vmatpush1.bf16.msra.mxu0 %v6503
    %7461 = vmatprep.subr.bf16.mxu0 %v6500
    %7462 = vmatpush1.bf16.msra.mxu0 %v6499
    %7463 = vmatprep.subr.bf16.mxu0 %v6496
    %7464 = vmatpush1.bf16.msra.mxu0 %v6495
    %7465 = vmatprep.subr.bf16.mxu0 %v6492
    %7466 = vmatpush1.bf16.msra.mxu0 %v6491
    %7467 = vmatprep.subr.bf16.mxu0 %v6488
    %7468 = vmatpush1.bf16.msra.mxu0 %v6487
    %7469 = vmatprep.subr.bf16.mxu0 %v6484
    %7470 = vmatpush1.bf16.msra.mxu0 %v6483
    %7471 = vmatprep.subr.bf16.mxu0 %v6544
    %7472 = vmatpush2.bf16.msra.mxu0 %v6543
    %7473 = vmatprep.subr.bf16.mxu0 %v6540
    %7474 = vmatpush2.bf16.msra.mxu0 %v6539
    %7475 = vmatprep.subr.bf16.mxu0 %v6536
    %7476 = vmatpush2.bf16.msra.mxu0 %v6535
    %7477 = vmatprep.subr.bf16.mxu0 %v6532
    %7478 = vmatpush2.bf16.msra.mxu0 %v6531
    %7479 = vmatprep.subr.bf16.mxu0 %v6528
    %7480 = vmatpush2.bf16.msra.mxu0 %v6527
    %7481 = vmatprep.subr.bf16.mxu0 %v6524
    %7482 = vmatpush2.bf16.msra.mxu0 %v6523
    %7483 = vmatprep.subr.bf16.mxu0 %v6520
    %7484 = vmatpush2.bf16.msra.mxu0 %v6519
    %7485 = vmatprep.subr.bf16.mxu0 %v6516
    %7486 = vmatpush2.bf16.msra.mxu0 %v6515
    %7487 = vmatprep.mubr.bf16.mxu0 %v4134
    %7488 = vmatmul.mubr.bf16.gmra.mxu0 %v4133
    %v7489 = vpop.f32.mrf.mxu0
    %v7490 = vadd.f32 %v7439, %v7489
    %v7491 = vpop.f32.mrf.mxu0
    %v7492 = vadd.f32 %v7441, %v7491
    %v7493 = vpop.f32.mrf.mxu0
    %v7494 = vadd.f32 %v7443, %v7493
    %v7495 = vpop.f32.mrf.mxu0
    %v7496 = vadd.f32 %v7445, %v7495
    %7497 = vmatprep.mubr.bf16.mxu0 %v4150
    %7498 = vmatmul.mubr.bf16.gmra.mxu0 %v4149
    %v7499 = vpop.f32.mrf.mxu0
    %v7500 = vadd.f32 %v7449, %v7499
    %v7501 = vpop.f32.mrf.mxu0
    %v7502 = vadd.f32 %v7451, %v7501
    %v7503 = vpop.f32.mrf.mxu0
    %v7504 = vpop.f32.mrf.mxu0
    %7505 = vdwg.mxu0
    %7506 = vmatprep.subr.bf16.mxu0 %v6576
    %7507 = vmatpush1.bf16.msra.mxu0 %v6575
    %7508 = vmatprep.subr.bf16.mxu0 %v6572
    %7509 = vmatpush1.bf16.msra.mxu0 %v6571
    %7510 = vmatprep.subr.bf16.mxu0 %v6568
    %7511 = vmatpush1.bf16.msra.mxu0 %v6567
    %7512 = vmatprep.subr.bf16.mxu0 %v6564
    %7513 = vmatpush1.bf16.msra.mxu0 %v6563
    %7514 = vmatprep.subr.bf16.mxu0 %v6560
    %7515 = vmatpush1.bf16.msra.mxu0 %v6559
    %7516 = vmatprep.subr.bf16.mxu0 %v6556
    %7517 = vmatpush1.bf16.msra.mxu0 %v6555
    %7518 = vmatprep.subr.bf16.mxu0 %v6552
    %7519 = vmatpush1.bf16.msra.mxu0 %v6551
    %7520 = vmatprep.subr.bf16.mxu0 %v6548
    %7521 = vmatpush1.bf16.msra.mxu0 %v6547
    %7522 = vmatprep.subr.bf16.mxu0 %v6608
    %7523 = vmatpush2.bf16.msra.mxu0 %v6607
    %7524 = vmatprep.subr.bf16.mxu0 %v6604
    %7525 = vmatpush2.bf16.msra.mxu0 %v6603
    %7526 = vmatprep.subr.bf16.mxu0 %v6600
    %7527 = vmatpush2.bf16.msra.mxu0 %v6599
    %7528 = vmatprep.subr.bf16.mxu0 %v6596
    %7529 = vmatpush2.bf16.msra.mxu0 %v6595
    %7530 = vmatprep.subr.bf16.mxu0 %v6592
    %7531 = vmatpush2.bf16.msra.mxu0 %v6591
    %7532 = vmatprep.subr.bf16.mxu0 %v6588
    %7533 = vmatpush2.bf16.msra.mxu0 %v6587
    %7534 = vmatprep.subr.bf16.mxu0 %v6584
    %7535 = vmatpush2.bf16.msra.mxu0 %v6583
    %7536 = vmatprep.subr.bf16.mxu0 %v6580
    %7537 = vmatpush2.bf16.msra.mxu0 %v6579
    %7538 = vmatprep.mubr.bf16.mxu0 %v4136
    %7539 = vmatmul.mubr.bf16.gmra.mxu0 %v4135
    %v7540 = vpop.f32.mrf.mxu0
    %v7541 = vadd.f32 %v7490, %v7540
    %v7542 = vpop.f32.mrf.mxu0
    %v7543 = vadd.f32 %v7492, %v7542
    %v7544 = vpop.f32.mrf.mxu0
    %v7545 = vadd.f32 %v7494, %v7544
    %v7546 = vpop.f32.mrf.mxu0
    %v7547 = vadd.f32 %v7496, %v7546
    %7548 = vmatprep.mubr.bf16.mxu0 %v4152
    %7549 = vmatmul.mubr.bf16.gmra.mxu0 %v4151
    %v7550 = vpop.f32.mrf.mxu0
    %v7551 = vadd.f32 %v7500, %v7550
    %v7552 = vpop.f32.mrf.mxu0
    %v7553 = vadd.f32 %v7502, %v7552
    %v7554 = vpop.f32.mrf.mxu0
    %v7555 = vpop.f32.mrf.mxu0
    %7556 = vdwg.mxu0
    %7557 = vmatprep.subr.bf16.mxu0 %v6640
    %7558 = vmatpush1.bf16.msra.mxu0 %v6639
    %7559 = vmatprep.subr.bf16.mxu0 %v6636
    %7560 = vmatpush1.bf16.msra.mxu0 %v6635
    %7561 = vmatprep.subr.bf16.mxu0 %v6632
    %7562 = vmatpush1.bf16.msra.mxu0 %v6631
    %7563 = vmatprep.subr.bf16.mxu0 %v6628
    %7564 = vmatpush1.bf16.msra.mxu0 %v6627
    %7565 = vmatprep.subr.bf16.mxu0 %v6624
    %7566 = vmatpush1.bf16.msra.mxu0 %v6623
    %7567 = vmatprep.subr.bf16.mxu0 %v6620
    %7568 = vmatpush1.bf16.msra.mxu0 %v6619
    %7569 = vmatprep.subr.bf16.mxu0 %v6616
    %7570 = vmatpush1.bf16.msra.mxu0 %v6615
    %7571 = vmatprep.subr.bf16.mxu0 %v6612
    %7572 = vmatpush1.bf16.msra.mxu0 %v6611
    %7573 = vmatprep.subr.bf16.mxu0 %v6672
    %7574 = vmatpush2.bf16.msra.mxu0 %v6671
    %7575 = vmatprep.subr.bf16.mxu0 %v6668
    %7576 = vmatpush2.bf16.msra.mxu0 %v6667
    %7577 = vmatprep.subr.bf16.mxu0 %v6664
    %7578 = vmatpush2.bf16.msra.mxu0 %v6663
    %7579 = vmatprep.subr.bf16.mxu0 %v6660
    %7580 = vmatpush2.bf16.msra.mxu0 %v6659
    %7581 = vmatprep.subr.bf16.mxu0 %v6656
    %7582 = vmatpush2.bf16.msra.mxu0 %v6655
    %7583 = vmatprep.subr.bf16.mxu0 %v6652
    %7584 = vmatpush2.bf16.msra.mxu0 %v6651
    %7585 = vmatprep.subr.bf16.mxu0 %v6648
    %7586 = vmatpush2.bf16.msra.mxu0 %v6647
    %7587 = vmatprep.subr.bf16.mxu0 %v6644
    %7588 = vmatpush2.bf16.msra.mxu0 %v6643
    %7589 = vmatprep.mubr.bf16.mxu0 %v4138
    %7590 = vmatmul.mubr.bf16.gmra.mxu0 %v4137
    %v7591 = vpop.f32.mrf.mxu0
    %v7592 = vadd.f32 %v7541, %v7591
    %v7593 = vpop.f32.mrf.mxu0
    %v7594 = vadd.f32 %v7543, %v7593
    %v7595 = vpop.f32.mrf.mxu0
    %v7596 = vadd.f32 %v7545, %v7595
    %v7597 = vpop.f32.mrf.mxu0
    %v7598 = vadd.f32 %v7547, %v7597
    %7599 = vmatprep.mubr.bf16.mxu0 %v4154
    %7600 = vmatmul.mubr.bf16.gmra.mxu0 %v4153
    %v7601 = vpop.f32.mrf.mxu0
    %v7602 = vadd.f32 %v7551, %v7601
    %v7603 = vpop.f32.mrf.mxu0
    %v7604 = vadd.f32 %v7553, %v7603
    %v7605 = vpop.f32.mrf.mxu0
    %v7606 = vpop.f32.mrf.mxu0
    %7607 = vdwg.mxu0
    %7608 = vmatprep.subr.bf16.mxu0 %v6704
    %7609 = vmatpush1.bf16.msra.mxu0 %v6703
    %7610 = vmatprep.subr.bf16.mxu0 %v6700
    %7611 = vmatpush1.bf16.msra.mxu0 %v6699
    %7612 = vmatprep.subr.bf16.mxu0 %v6696
    %7613 = vmatpush1.bf16.msra.mxu0 %v6695
    %7614 = vmatprep.subr.bf16.mxu0 %v6692
    %7615 = vmatpush1.bf16.msra.mxu0 %v6691
    %7616 = vmatprep.subr.bf16.mxu0 %v6688
    %7617 = vmatpush1.bf16.msra.mxu0 %v6687
    %7618 = vmatprep.subr.bf16.mxu0 %v6684
    %7619 = vmatpush1.bf16.msra.mxu0 %v6683
    %7620 = vmatprep.subr.bf16.mxu0 %v6680
    %7621 = vmatpush1.bf16.msra.mxu0 %v6679
    %7622 = vmatprep.subr.bf16.mxu0 %v6676
    %7623 = vmatpush1.bf16.msra.mxu0 %v6675
    %7624 = vmatprep.subr.bf16.mxu0 %v6736
    %7625 = vmatpush2.bf16.msra.mxu0 %v6735
    %7626 = vmatprep.subr.bf16.mxu0 %v6732
    %7627 = vmatpush2.bf16.msra.mxu0 %v6731
    %7628 = vmatprep.subr.bf16.mxu0 %v6728
    %7629 = vmatpush2.bf16.msra.mxu0 %v6727
    %7630 = vmatprep.subr.bf16.mxu0 %v6724
    %7631 = vmatpush2.bf16.msra.mxu0 %v6723
    %7632 = vmatprep.subr.bf16.mxu0 %v6720
    %7633 = vmatpush2.bf16.msra.mxu0 %v6719
    %7634 = vmatprep.subr.bf16.mxu0 %v6716
    %7635 = vmatpush2.bf16.msra.mxu0 %v6715
    %7636 = vmatprep.subr.bf16.mxu0 %v6712
    %7637 = vmatpush2.bf16.msra.mxu0 %v6711
    %7638 = vmatprep.subr.bf16.mxu0 %v6708
    %7639 = vmatpush2.bf16.msra.mxu0 %v6707
    %7640 = vmatprep.mubr.bf16.mxu0 %v4140
    %7641 = vmatmul.mubr.bf16.gmra.mxu0 %v4139
    %v7642 = vpop.f32.mrf.mxu0
    %v7643 = vadd.f32 %v7592, %v7642
    %v7644 = vpop.f32.mrf.mxu0
    %v7645 = vadd.f32 %v7594, %v7644
    %v7646 = vpop.f32.mrf.mxu0
    %v7647 = vadd.f32 %v7596, %v7646
    %v7648 = vpop.f32.mrf.mxu0
    %v7649 = vadd.f32 %v7598, %v7648
    %7650 = vmatprep.mubr.bf16.mxu0 %v4156
    %7651 = vmatmul.mubr.bf16.gmra.mxu0 %v4155
    %v7652 = vpop.f32.mrf.mxu0
    %v7653 = vadd.f32 %v7602, %v7652
    %v7654 = vpop.f32.mrf.mxu0
    %v7655 = vadd.f32 %v7604, %v7654
    %v7656 = vpop.f32.mrf.mxu0
    %v7657 = vpop.f32.mrf.mxu0
    %7658 = vdwg.mxu0
    %7659 = vmatprep.subr.bf16.mxu0 %v6258
    %7660 = vmatpush1.bf16.msra.mxu0 %v6257
    %7661 = vmatprep.subr.bf16.mxu0 %v6254
    %7662 = vmatpush1.bf16.msra.mxu0 %v6253
    %7663 = vmatprep.subr.bf16.mxu0 %v6250
    %7664 = vmatpush1.bf16.msra.mxu0 %v6249
    %7665 = vmatprep.subr.bf16.mxu0 %v6246
    %7666 = vmatpush1.bf16.msra.mxu0 %v6245
    %7667 = vmatprep.subr.bf16.mxu0 %v6242
    %7668 = vmatpush1.bf16.msra.mxu0 %v6241
    %7669 = vmatprep.subr.bf16.mxu0 %v6238
    %7670 = vmatpush1.bf16.msra.mxu0 %v6237
    %7671 = vmatprep.subr.bf16.mxu0 %v6234
    %7672 = vmatpush1.bf16.msra.mxu0 %v6233
    %7673 = vmatprep.subr.bf16.mxu0 %v6230
    %7674 = vmatpush1.bf16.msra.mxu0 %v6229
    %7675 = vmatprep.subr.bf16.mxu0 %v6290
    %7676 = vmatpush2.bf16.msra.mxu0 %v6289
    %7677 = vmatprep.subr.bf16.mxu0 %v6286
    %7678 = vmatpush2.bf16.msra.mxu0 %v6285
    %7679 = vmatprep.subr.bf16.mxu0 %v6282
    %7680 = vmatpush2.bf16.msra.mxu0 %v6281
    %7681 = vmatprep.subr.bf16.mxu0 %v6278
    %7682 = vmatpush2.bf16.msra.mxu0 %v6277
    %7683 = vmatprep.subr.bf16.mxu0 %v6274
    %7684 = vmatpush2.bf16.msra.mxu0 %v6273
    %7685 = vmatprep.subr.bf16.mxu0 %v6270
    %7686 = vmatpush2.bf16.msra.mxu0 %v6269
    %7687 = vmatprep.subr.bf16.mxu0 %v6266
    %7688 = vmatpush2.bf16.msra.mxu0 %v6265
    %7689 = vmatprep.subr.bf16.mxu0 %v6262
    %7690 = vmatpush2.bf16.msra.mxu0 %v6261
    %7691 = vmatprep.mubr.bf16.mxu0 %v4126
    %7692 = vmatmul.mubr.bf16.gmra.mxu0 %v4125
    %v7693 = vpop.f32.mrf.mxu0
    %v7694 = vadd.f32 %v4682, %v7693
    %v7695 = vpop.f32.mrf.mxu0
    %v7696 = vadd.f32 %v4686, %v7695
    %v7697 = vpop.f32.mrf.mxu0
    %v7698 = vadd.f32 %v4682, %v7697
    %v7699 = vpop.f32.mrf.mxu0
    %v7700 = vadd.f32 %v4686, %v7699
    %7701 = vmatprep.mubr.bf16.mxu0 %v4142
    %7702 = vmatmul.mubr.bf16.gmra.mxu0 %v4141
    %v7703 = vpop.f32.mrf.mxu0
    %v7704 = vadd.f32 %v4682, %v7703
    %v7705 = vpop.f32.mrf.mxu0
    %v7706 = vadd.f32 %v4686, %v7705
    %v7707 = vpop.f32.mrf.mxu0
    %v7708 = vpop.f32.mrf.mxu0
    %7709 = vdwg.mxu0
    %7710 = vmatprep.subr.bf16.mxu0 %v6322
    %7711 = vmatpush1.bf16.msra.mxu0 %v6321
    %7712 = vmatprep.subr.bf16.mxu0 %v6318
    %7713 = vmatpush1.bf16.msra.mxu0 %v6317
    %7714 = vmatprep.subr.bf16.mxu0 %v6314
    %7715 = vmatpush1.bf16.msra.mxu0 %v6313
    %7716 = vmatprep.subr.bf16.mxu0 %v6310
    %7717 = vmatpush1.bf16.msra.mxu0 %v6309
    %7718 = vmatprep.subr.bf16.mxu0 %v6306
    %7719 = vmatpush1.bf16.msra.mxu0 %v6305
    %7720 = vmatprep.subr.bf16.mxu0 %v6302
    %7721 = vmatpush1.bf16.msra.mxu0 %v6301
    %7722 = vmatprep.subr.bf16.mxu0 %v6298
    %7723 = vmatpush1.bf16.msra.mxu0 %v6297
    %7724 = vmatprep.subr.bf16.mxu0 %v6294
    %7725 = vmatpush1.bf16.msra.mxu0 %v6293
    %7726 = vmatprep.subr.bf16.mxu0 %v6354
    %7727 = vmatpush2.bf16.msra.mxu0 %v6353
    %7728 = vmatprep.subr.bf16.mxu0 %v6350
    %7729 = vmatpush2.bf16.msra.mxu0 %v6349
    %7730 = vmatprep.subr.bf16.mxu0 %v6346
    %7731 = vmatpush2.bf16.msra.mxu0 %v6345
    %7732 = vmatprep.subr.bf16.mxu0 %v6342
    %7733 = vmatpush2.bf16.msra.mxu0 %v6341
    %7734 = vmatprep.subr.bf16.mxu0 %v6338
    %7735 = vmatpush2.bf16.msra.mxu0 %v6337
    %7736 = vmatprep.subr.bf16.mxu0 %v6334
    %7737 = vmatpush2.bf16.msra.mxu0 %v6333
    %7738 = vmatprep.subr.bf16.mxu0 %v6330
    %7739 = vmatpush2.bf16.msra.mxu0 %v6329
    %7740 = vmatprep.subr.bf16.mxu0 %v6326
    %7741 = vmatpush2.bf16.msra.mxu0 %v6325
    %7742 = vmatprep.mubr.bf16.mxu0 %v4128
    %7743 = vmatmul.mubr.bf16.gmra.mxu0 %v4127
    %v7744 = vpop.f32.mrf.mxu0
    %v7745 = vadd.f32 %v7694, %v7744
    %v7746 = vpop.f32.mrf.mxu0
    %v7747 = vadd.f32 %v7696, %v7746
    %v7748 = vpop.f32.mrf.mxu0
    %v7749 = vadd.f32 %v7698, %v7748
    %v7750 = vpop.f32.mrf.mxu0
    %v7751 = vadd.f32 %v7700, %v7750
    %7752 = vmatprep.mubr.bf16.mxu0 %v4144
    %7753 = vmatmul.mubr.bf16.gmra.mxu0 %v4143
    %v7754 = vpop.f32.mrf.mxu0
    %v7755 = vadd.f32 %v7704, %v7754
    %v7756 = vpop.f32.mrf.mxu0
    %v7757 = vadd.f32 %v7706, %v7756
    %v7758 = vpop.f32.mrf.mxu0
    %v7759 = vpop.f32.mrf.mxu0
    %7760 = vdwg.mxu0
    %7761 = vmatprep.subr.bf16.mxu0 %v6386
    %7762 = vmatpush1.bf16.msra.mxu0 %v6385
    %7763 = vmatprep.subr.bf16.mxu0 %v6382
    %7764 = vmatpush1.bf16.msra.mxu0 %v6381
    %7765 = vmatprep.subr.bf16.mxu0 %v6378
    %7766 = vmatpush1.bf16.msra.mxu0 %v6377
    %7767 = vmatprep.subr.bf16.mxu0 %v6374
    %7768 = vmatpush1.bf16.msra.mxu0 %v6373
    %7769 = vmatprep.subr.bf16.mxu0 %v6370
    %7770 = vmatpush1.bf16.msra.mxu0 %v6369
    %7771 = vmatprep.subr.bf16.mxu0 %v6366
    %7772 = vmatpush1.bf16.msra.mxu0 %v6365
    %7773 = vmatprep.subr.bf16.mxu0 %v6362
    %7774 = vmatpush1.bf16.msra.mxu0 %v6361
    %7775 = vmatprep.subr.bf16.mxu0 %v6358
    %7776 = vmatpush1.bf16.msra.mxu0 %v6357
    %7777 = vmatprep.subr.bf16.mxu0 %v6418
    %7778 = vmatpush2.bf16.msra.mxu0 %v6417
    %7779 = vmatprep.subr.bf16.mxu0 %v6414
    %7780 = vmatpush2.bf16.msra.mxu0 %v6413
    %7781 = vmatprep.subr.bf16.mxu0 %v6410
    %7782 = vmatpush2.bf16.msra.mxu0 %v6409
    %7783 = vmatprep.subr.bf16.mxu0 %v6406
    %7784 = vmatpush2.bf16.msra.mxu0 %v6405
    %7785 = vmatprep.subr.bf16.mxu0 %v6402
    %7786 = vmatpush2.bf16.msra.mxu0 %v6401
    %7787 = vmatprep.subr.bf16.mxu0 %v6398
    %7788 = vmatpush2.bf16.msra.mxu0 %v6397
    %7789 = vmatprep.subr.bf16.mxu0 %v6394
    %7790 = vmatpush2.bf16.msra.mxu0 %v6393
    %7791 = vmatprep.subr.bf16.mxu0 %v6390
    %7792 = vmatpush2.bf16.msra.mxu0 %v6389
    %7793 = vmatprep.mubr.bf16.mxu0 %v4130
    %7794 = vmatmul.mubr.bf16.gmra.mxu0 %v4129
    %v7795 = vpop.f32.mrf.mxu0
    %v7796 = vadd.f32 %v7745, %v7795
    %v7797 = vpop.f32.mrf.mxu0
    %v7798 = vadd.f32 %v7747, %v7797
    %v7799 = vpop.f32.mrf.mxu0
    %v7800 = vadd.f32 %v7749, %v7799
    %v7801 = vpop.f32.mrf.mxu0
    %v7802 = vadd.f32 %v7751, %v7801
    %7803 = vmatprep.mubr.bf16.mxu0 %v4146
    %7804 = vmatmul.mubr.bf16.gmra.mxu0 %v4145
    %v7805 = vpop.f32.mrf.mxu0
    %v7806 = vadd.f32 %v7755, %v7805
    %v7807 = vpop.f32.mrf.mxu0
    %v7808 = vadd.f32 %v7757, %v7807
    %v7809 = vpop.f32.mrf.mxu0
    %v7810 = vpop.f32.mrf.mxu0
    %7811 = vdwg.mxu0
    %7812 = vmatprep.subr.bf16.mxu0 %v6450
    %7813 = vmatpush1.bf16.msra.mxu0 %v6449
    %7814 = vmatprep.subr.bf16.mxu0 %v6446
    %7815 = vmatpush1.bf16.msra.mxu0 %v6445
    %7816 = vmatprep.subr.bf16.mxu0 %v6442
    %7817 = vmatpush1.bf16.msra.mxu0 %v6441
    %7818 = vmatprep.subr.bf16.mxu0 %v6438
    %7819 = vmatpush1.bf16.msra.mxu0 %v6437
    %7820 = vmatprep.subr.bf16.mxu0 %v6434
    %7821 = vmatpush1.bf16.msra.mxu0 %v6433
    %7822 = vmatprep.subr.bf16.mxu0 %v6430
    %7823 = vmatpush1.bf16.msra.mxu0 %v6429
    %7824 = vmatprep.subr.bf16.mxu0 %v6426
    %7825 = vmatpush1.bf16.msra.mxu0 %v6425
    %7826 = vmatprep.subr.bf16.mxu0 %v6422
    %7827 = vmatpush1.bf16.msra.mxu0 %v6421
    %7828 = vmatprep.subr.bf16.mxu0 %v6482
    %7829 = vmatpush2.bf16.msra.mxu0 %v6481
    %7830 = vmatprep.subr.bf16.mxu0 %v6478
    %7831 = vmatpush2.bf16.msra.mxu0 %v6477
    %7832 = vmatprep.subr.bf16.mxu0 %v6474
    %7833 = vmatpush2.bf16.msra.mxu0 %v6473
    %7834 = vmatprep.subr.bf16.mxu0 %v6470
    %7835 = vmatpush2.bf16.msra.mxu0 %v6469
    %7836 = vmatprep.subr.bf16.mxu0 %v6466
    %7837 = vmatpush2.bf16.msra.mxu0 %v6465
    %7838 = vmatprep.subr.bf16.mxu0 %v6462
    %7839 = vmatpush2.bf16.msra.mxu0 %v6461
    %7840 = vmatprep.subr.bf16.mxu0 %v6458
    %7841 = vmatpush2.bf16.msra.mxu0 %v6457
    %7842 = vmatprep.subr.bf16.mxu0 %v6454
    %7843 = vmatpush2.bf16.msra.mxu0 %v6453
    %7844 = vmatprep.mubr.bf16.mxu0 %v4132
    %7845 = vmatmul.mubr.bf16.gmra.mxu0 %v4131
    %v7846 = vpop.f32.mrf.mxu0
    %v7847 = vadd.f32 %v7796, %v7846
    %v7848 = vpop.f32.mrf.mxu0
    %v7849 = vadd.f32 %v7798, %v7848
    %v7850 = vpop.f32.mrf.mxu0
    %v7851 = vadd.f32 %v7800, %v7850
    %v7852 = vpop.f32.mrf.mxu0
    %v7853 = vadd.f32 %v7802, %v7852
    %7854 = vmatprep.mubr.bf16.mxu0 %v4148
    %7855 = vmatmul.mubr.bf16.gmra.mxu0 %v4147
    %v7856 = vpop.f32.mrf.mxu0
    %v7857 = vadd.f32 %v7806, %v7856
    %v7858 = vpop.f32.mrf.mxu0
    %v7859 = vadd.f32 %v7808, %v7858
    %v7860 = vpop.f32.mrf.mxu0
    %v7861 = vpop.f32.mrf.mxu0
    %7862 = vdwg.mxu0
    %7863 = vmatprep.subr.bf16.mxu0 %v6514
    %7864 = vmatpush1.bf16.msra.mxu0 %v6513
    %7865 = vmatprep.subr.bf16.mxu0 %v6510
    %7866 = vmatpush1.bf16.msra.mxu0 %v6509
    %7867 = vmatprep.subr.bf16.mxu0 %v6506
    %7868 = vmatpush1.bf16.msra.mxu0 %v6505
    %7869 = vmatprep.subr.bf16.mxu0 %v6502
    %7870 = vmatpush1.bf16.msra.mxu0 %v6501
    %7871 = vmatprep.subr.bf16.mxu0 %v6498
    %7872 = vmatpush1.bf16.msra.mxu0 %v6497
    %7873 = vmatprep.subr.bf16.mxu0 %v6494
    %7874 = vmatpush1.bf16.msra.mxu0 %v6493
    %7875 = vmatprep.subr.bf16.mxu0 %v6490
    %7876 = vmatpush1.bf16.msra.mxu0 %v6489
    %7877 = vmatprep.subr.bf16.mxu0 %v6486
    %7878 = vmatpush1.bf16.msra.mxu0 %v6485
    %7879 = vmatprep.subr.bf16.mxu0 %v6546
    %7880 = vmatpush2.bf16.msra.mxu0 %v6545
    %7881 = vmatprep.subr.bf16.mxu0 %v6542
    %7882 = vmatpush2.bf16.msra.mxu0 %v6541
    %7883 = vmatprep.subr.bf16.mxu0 %v6538
    %7884 = vmatpush2.bf16.msra.mxu0 %v6537
    %7885 = vmatprep.subr.bf16.mxu0 %v6534
    %7886 = vmatpush2.bf16.msra.mxu0 %v6533
    %7887 = vmatprep.subr.bf16.mxu0 %v6530
    %7888 = vmatpush2.bf16.msra.mxu0 %v6529
    %7889 = vmatprep.subr.bf16.mxu0 %v6526
    %7890 = vmatpush2.bf16.msra.mxu0 %v6525
    %7891 = vmatprep.subr.bf16.mxu0 %v6522
    %7892 = vmatpush2.bf16.msra.mxu0 %v6521
    %7893 = vmatprep.subr.bf16.mxu0 %v6518
    %7894 = vmatpush2.bf16.msra.mxu0 %v6517
    %7895 = vmatprep.mubr.bf16.mxu0 %v4134
    %7896 = vmatmul.mubr.bf16.gmra.mxu0 %v4133
    %v7897 = vpop.f32.mrf.mxu0
    %v7898 = vadd.f32 %v7847, %v7897
    %v7899 = vpop.f32.mrf.mxu0
    %v7900 = vadd.f32 %v7849, %v7899
    %v7901 = vpop.f32.mrf.mxu0
    %v7902 = vadd.f32 %v7851, %v7901
    %v7903 = vpop.f32.mrf.mxu0
    %v7904 = vadd.f32 %v7853, %v7903
    %7905 = vmatprep.mubr.bf16.mxu0 %v4150
    %7906 = vmatmul.mubr.bf16.gmra.mxu0 %v4149
    %v7907 = vpop.f32.mrf.mxu0
    %v7908 = vadd.f32 %v7857, %v7907
    %v7909 = vpop.f32.mrf.mxu0
    %v7910 = vadd.f32 %v7859, %v7909
    %v7911 = vpop.f32.mrf.mxu0
    %v7912 = vpop.f32.mrf.mxu0
    %7913 = vdwg.mxu0
    %7914 = vmatprep.subr.bf16.mxu0 %v6578
    %7915 = vmatpush1.bf16.msra.mxu0 %v6577
    %7916 = vmatprep.subr.bf16.mxu0 %v6574
    %7917 = vmatpush1.bf16.msra.mxu0 %v6573
    %7918 = vmatprep.subr.bf16.mxu0 %v6570
    %7919 = vmatpush1.bf16.msra.mxu0 %v6569
    %7920 = vmatprep.subr.bf16.mxu0 %v6566
    %7921 = vmatpush1.bf16.msra.mxu0 %v6565
    %7922 = vmatprep.subr.bf16.mxu0 %v6562
    %7923 = vmatpush1.bf16.msra.mxu0 %v6561
    %7924 = vmatprep.subr.bf16.mxu0 %v6558
    %7925 = vmatpush1.bf16.msra.mxu0 %v6557
    %7926 = vmatprep.subr.bf16.mxu0 %v6554
    %7927 = vmatpush1.bf16.msra.mxu0 %v6553
    %7928 = vmatprep.subr.bf16.mxu0 %v6550
    %7929 = vmatpush1.bf16.msra.mxu0 %v6549
    %7930 = vmatprep.subr.bf16.mxu0 %v6610
    %7931 = vmatpush2.bf16.msra.mxu0 %v6609
    %7932 = vmatprep.subr.bf16.mxu0 %v6606
    %7933 = vmatpush2.bf16.msra.mxu0 %v6605
    %7934 = vmatprep.subr.bf16.mxu0 %v6602
    %7935 = vmatpush2.bf16.msra.mxu0 %v6601
    %7936 = vmatprep.subr.bf16.mxu0 %v6598
    %7937 = vmatpush2.bf16.msra.mxu0 %v6597
    %7938 = vmatprep.subr.bf16.mxu0 %v6594
    %7939 = vmatpush2.bf16.msra.mxu0 %v6593
    %7940 = vmatprep.subr.bf16.mxu0 %v6590
    %7941 = vmatpush2.bf16.msra.mxu0 %v6589
    %7942 = vmatprep.subr.bf16.mxu0 %v6586
    %7943 = vmatpush2.bf16.msra.mxu0 %v6585
    %7944 = vmatprep.subr.bf16.mxu0 %v6582
    %7945 = vmatpush2.bf16.msra.mxu0 %v6581
    %7946 = vmatprep.mubr.bf16.mxu0 %v4136
    %7947 = vmatmul.mubr.bf16.gmra.mxu0 %v4135
    %v7948 = vpop.f32.mrf.mxu0
    %v7949 = vadd.f32 %v7898, %v7948
    %v7950 = vpop.f32.mrf.mxu0
    %v7951 = vadd.f32 %v7900, %v7950
    %v7952 = vpop.f32.mrf.mxu0
    %v7953 = vadd.f32 %v7902, %v7952
    %v7954 = vpop.f32.mrf.mxu0
    %v7955 = vadd.f32 %v7904, %v7954
    %7956 = vmatprep.mubr.bf16.mxu0 %v4152
    %7957 = vmatmul.mubr.bf16.gmra.mxu0 %v4151
    %v7958 = vpop.f32.mrf.mxu0
    %v7959 = vadd.f32 %v7908, %v7958
    %v7960 = vpop.f32.mrf.mxu0
    %v7961 = vadd.f32 %v7910, %v7960
    %v7962 = vpop.f32.mrf.mxu0
    %v7963 = vpop.f32.mrf.mxu0
    %7964 = vdwg.mxu0
    %7965 = vmatprep.subr.bf16.mxu0 %v6642
    %7966 = vmatpush1.bf16.msra.mxu0 %v6641
    %7967 = vmatprep.subr.bf16.mxu0 %v6638
    %7968 = vmatpush1.bf16.msra.mxu0 %v6637
    %7969 = vmatprep.subr.bf16.mxu0 %v6634
    %7970 = vmatpush1.bf16.msra.mxu0 %v6633
    %7971 = vmatprep.subr.bf16.mxu0 %v6630
    %7972 = vmatpush1.bf16.msra.mxu0 %v6629
    %7973 = vmatprep.subr.bf16.mxu0 %v6626
    %7974 = vmatpush1.bf16.msra.mxu0 %v6625
    %7975 = vmatprep.subr.bf16.mxu0 %v6622
    %7976 = vmatpush1.bf16.msra.mxu0 %v6621
    %7977 = vmatprep.subr.bf16.mxu0 %v6618
    %7978 = vmatpush1.bf16.msra.mxu0 %v6617
    %7979 = vmatprep.subr.bf16.mxu0 %v6614
    %7980 = vmatpush1.bf16.msra.mxu0 %v6613
    %7981 = vmatprep.subr.bf16.mxu0 %v6674
    %7982 = vmatpush2.bf16.msra.mxu0 %v6673
    %7983 = vmatprep.subr.bf16.mxu0 %v6670
    %7984 = vmatpush2.bf16.msra.mxu0 %v6669
    %7985 = vmatprep.subr.bf16.mxu0 %v6666
    %7986 = vmatpush2.bf16.msra.mxu0 %v6665
    %7987 = vmatprep.subr.bf16.mxu0 %v6662
    %7988 = vmatpush2.bf16.msra.mxu0 %v6661
    %7989 = vmatprep.subr.bf16.mxu0 %v6658
    %7990 = vmatpush2.bf16.msra.mxu0 %v6657
    %7991 = vmatprep.subr.bf16.mxu0 %v6654
    %7992 = vmatpush2.bf16.msra.mxu0 %v6653
    %7993 = vmatprep.subr.bf16.mxu0 %v6650
    %7994 = vmatpush2.bf16.msra.mxu0 %v6649
    %7995 = vmatprep.subr.bf16.mxu0 %v6646
    %7996 = vmatpush2.bf16.msra.mxu0 %v6645
    %7997 = vmatprep.mubr.bf16.mxu0 %v4138
    %7998 = vmatmul.mubr.bf16.gmra.mxu0 %v4137
    %v7999 = vpop.f32.mrf.mxu0
    %v8000 = vadd.f32 %v7949, %v7999
    %v8001 = vpop.f32.mrf.mxu0
    %v8002 = vadd.f32 %v7951, %v8001
    %v8003 = vpop.f32.mrf.mxu0
    %v8004 = vadd.f32 %v7953, %v8003
    %v8005 = vpop.f32.mrf.mxu0
    %v8006 = vadd.f32 %v7955, %v8005
    %8007 = vmatprep.mubr.bf16.mxu0 %v4154
    %8008 = vmatmul.mubr.bf16.gmra.mxu0 %v4153
    %v8009 = vpop.f32.mrf.mxu0
    %v8010 = vadd.f32 %v7959, %v8009
    %v8011 = vpop.f32.mrf.mxu0
    %v8012 = vadd.f32 %v7961, %v8011
    %v8013 = vpop.f32.mrf.mxu0
    %v8014 = vpop.f32.mrf.mxu0
    %8015 = vdwg.mxu0
    %8016 = vmatprep.subr.bf16.mxu0 %v6706
    %8017 = vmatpush1.bf16.msra.mxu0 %v6705
    %8018 = vmatprep.subr.bf16.mxu0 %v6702
    %8019 = vmatpush1.bf16.msra.mxu0 %v6701
    %8020 = vmatprep.subr.bf16.mxu0 %v6698
    %8021 = vmatpush1.bf16.msra.mxu0 %v6697
    %8022 = vmatprep.subr.bf16.mxu0 %v6694
    %8023 = vmatpush1.bf16.msra.mxu0 %v6693
    %8024 = vmatprep.subr.bf16.mxu0 %v6690
    %8025 = vmatpush1.bf16.msra.mxu0 %v6689
    %8026 = vmatprep.subr.bf16.mxu0 %v6686
    %8027 = vmatpush1.bf16.msra.mxu0 %v6685
    %8028 = vmatprep.subr.bf16.mxu0 %v6682
    %8029 = vmatpush1.bf16.msra.mxu0 %v6681
    %8030 = vmatprep.subr.bf16.mxu0 %v6678
    %8031 = vmatpush1.bf16.msra.mxu0 %v6677
    %8032 = vmatprep.subr.bf16.mxu0 %v6738
    %8033 = vmatpush2.bf16.msra.mxu0 %v6737
    %8034 = vmatprep.subr.bf16.mxu0 %v6734
    %8035 = vmatpush2.bf16.msra.mxu0 %v6733
    %8036 = vmatprep.subr.bf16.mxu0 %v6730
    %8037 = vmatpush2.bf16.msra.mxu0 %v6729
    %8038 = vmatprep.subr.bf16.mxu0 %v6726
    %8039 = vmatpush2.bf16.msra.mxu0 %v6725
    %8040 = vmatprep.subr.bf16.mxu0 %v6722
    %8041 = vmatpush2.bf16.msra.mxu0 %v6721
    %8042 = vmatprep.subr.bf16.mxu0 %v6718
    %8043 = vmatpush2.bf16.msra.mxu0 %v6717
    %8044 = vmatprep.subr.bf16.mxu0 %v6714
    %8045 = vmatpush2.bf16.msra.mxu0 %v6713
    %8046 = vmatprep.subr.bf16.mxu0 %v6710
    %8047 = vmatpush2.bf16.msra.mxu0 %v6709
    %8048 = vmatprep.mubr.bf16.mxu0 %v4140
    %8049 = vmatmul.mubr.bf16.gmra.mxu0 %v4139
    %v8050 = vpop.f32.mrf.mxu0
    %v8051 = vadd.f32 %v8000, %v8050
    %v8052 = vpop.f32.mrf.mxu0
    %v8053 = vadd.f32 %v8002, %v8052
    %v8054 = vpop.f32.mrf.mxu0
    %v8055 = vadd.f32 %v8004, %v8054
    %v8056 = vpop.f32.mrf.mxu0
    %v8057 = vadd.f32 %v8006, %v8056
    %8058 = vmatprep.mubr.bf16.mxu0 %v4156
    %8059 = vmatmul.mubr.bf16.gmra.mxu0 %v4155
    %v8060 = vpop.f32.mrf.mxu0
    %v8061 = vadd.f32 %v8010, %v8060
    %v8062 = vpop.f32.mrf.mxu0
    %v8063 = vadd.f32 %v8012, %v8062
    %v8064 = vpop.f32.mrf.mxu0
    %v8065 = vpop.f32.mrf.mxu0
    %8066 = vdwg.mxu0
    %8067 = vst [vmem:[#allocation11] sm:$0xff] %v7643
    %8068 = vst [vmem:[#allocation11 + $0x8] sm:$0xff] %v7645
    %8069 = vst [vmem:[#allocation11 + $0x10] sm:$0xff] %v8051
    %8070 = vst [vmem:[#allocation11 + $0x18] sm:$0xff] %v8053
    %8071 = vst [vmem:[#allocation11 + $0x20] sm:$0xff] %v7647
    %8072 = vst [vmem:[#allocation11 + $0x28] sm:$0xff] %v7649
    %8073 = vst [vmem:[#allocation11 + $0x30] sm:$0xff] %v8055
    %8074 = vst [vmem:[#allocation11 + $0x38] sm:$0xff] %v8057
    %8075 = vst [vmem:[#allocation11 + $0x40] sm:$0xf] %v7653
    %8076 = vst [vmem:[#allocation11 + $0x48] sm:$0xf] %v7655
    %8077 = vst [vmem:[#allocation11 + $0x50] sm:$0xf] %v8061
    %8078 = vst [vmem:[#allocation11 + $0x58] sm:$0xf] %v8063
    // Predicated region
    $region42: #{tpu_custom_call.1} parent=1 // pred_check
      _
    $region43: #{tpu_custom_call.1} parent=1 // pred_check_branch
      %8080 = sbr.rel (0) target = $region45
    $region44: #{tpu_custom_call.1} parent=1 // pred_region
      %s8082 = ssub.s32 1536, 1536
      %8083 = vsyncadd [#allocation4], %s8082
      %s8084 = sshll.u32 [#allocation11], 4
      %s8085 = int_to_ptr.vmem [resolvable:$true] %s8084
      %8090 = dma.vmem_to_hbm [thread:$0]  %s8085, 1536, %s5, [#allocation4], 512, 512, 32
    $region45: #{tpu_custom_call.1} parent=1 // pred_fallthru
      _
    // Predicated region
    $region46: #{tpu_custom_call.1} parent=1 // pred_check
      _
    $region47: #{tpu_custom_call.1} parent=1 // pred_check_branch
      %8092 = sbr.rel (0) target = $region49
    $region48: #{tpu_custom_call.1} parent=1 // pred_region
      %8093 = dma.done [#allocation4], 1536
    $region49: #{tpu_custom_call.1} parent=1 // pred_fallthru
      _
    %8094 = vsyncpa [#allocation3], 1
    %8095 = vsyncpa [#allocation6], 1
    %8096 = vsyncpa [#allocation9], 1
    %8097 = vsyncpa [#allocation4], 1

</llo_original>
